<compile_context>
chip_gen: v7x
topology: tpu7x:2x2x1
jax: 0.10.0
libtpu: 0.0.40
codegen_flags: <defaults>
</compile_context>

<pallas_src>
import math
from functools import partial

import numpy as np
import jax
import jax.numpy as jnp
from jax.experimental import pallas as pl
from jax.experimental.pallas import tpu as pltpu

# ----------------------------- small, deterministic config -----------------------------
VOCAB = 50          # vocab_size
EMBED = 32          # embed_size
HEADS = 4           # num_heads (decoder)
DEC_LAYERS = 2      # num_layers (decoder)
FFN = 64            # hidden_size (decoder FFN)
MAX_SEQ = 4         # max_seq_length (small -> exercises the [:, :max_seq] truncation)

IN_CH = 3
IMG = 16
PATCH = 8           # -> (16/8)^2 = 4 patches + CLS = 5 tokens
VIT_DIM = 64        # stands in for 768
VIT_HEADS = 4
VIT_LAYERS = 2
VIT_MLP = 128

LN_EPS_DEC = 1e-5   # nn.LayerNorm default
LN_EPS_VIT = 1e-12  # HF ViT layer_norm_eps

VPAD = 128          # lane-padded vocab projection width
NEG_INF = -1e30

# lane offsets inside the packed per-layer weight tensors
_V0, _V1, _V2, _V3 = 0, 3 * VIT_DIM, 4 * VIT_DIM, 4 * VIT_DIM + VIT_MLP          # qkv|wo|wm1
_D0, _D1, _D2, _D3, _D4, _D5, _D6 = (0, 3 * EMBED, 4 * EMBED, 5 * EMBED,
                                     7 * EMBED, 8 * EMBED, 8 * EMBED + FFN)       # qkv|wo|wq|wkv|wo_c|wff1


# ----------------------------------- in-kernel helpers ---------------------------------
def _gelu(x):
    # TODO(synk): HF ViT uses exact (erf) GELU; tanh approximation keeps a guaranteed EUP path.
    c = math.sqrt(2.0 / math.pi)
    return 0.5 * x * (1.0 + jnp.tanh(c * (x + 0.044715 * x * x * x)))


def _ln(x, g, b, eps):
    """LayerNorm over the last axis (eps inside rsqrt, matching nn.LayerNorm / HF ViT)."""
    mean = jnp.mean(x, axis=-1, keepdims=True)
    xc = x - mean
    var = jnp.mean(xc * xc, axis=-1, keepdims=True)
    return xc * jax.lax.rsqrt(var + eps) * g + b


def _softmax(s):
    m = jnp.max(s, axis=-1, keepdims=True)
    p = jnp.exp(s - m)
    return p * pl.reciprocal(jnp.sum(p, axis=-1, keepdims=True), approx=True)


def _mha(q, k, v, w_o, b_o, num_heads, mask):
    """Multi-head attention.  Per-head contexts are concatenated along lanes and the output
    projection is ONE (T,E)@(E,E) matmul (better MXU cadence than per-head W_o slices).
    The 1/sqrt(dh) scale is already folded into the Q projection weights at init time."""
    dh = q.shape[-1] // num_heads
    ctx = []
    for hi in range(num_heads):
        sl = slice(hi * dh, (hi + 1) * dh)
        s = jax.lax.dot_general(q[:, sl], k[:, sl], (((1,), (1,)), ((), ())),
                                preferred_element_type=jnp.float32)        # (Tq, Tk)
        p = _softmax(s + mask)
        ctx.append(jnp.dot(p, v[:, sl], preferred_element_type=jnp.float32))
    o = jnp.concatenate(ctx, axis=-1)                                       # (Tq, E)
    return jnp.dot(o, w_o, preferred_element_type=jnp.float32) + b_o


# ----------------------------------- fused kernel --------------------------------------
def _captioner_kernel(patch_ref, pw_ref, pb_ref, vwx_ref, vwm2_ref, vvec_ref, misc_ref,
                      cap_ref, aw_ref, mpb_ref, mask_ref,
                      dwx_ref, dwff2_ref, dvec_ref, fcw_ref, o_ref,
                      *, batch, n_patch, mem_len):
    D = pw_ref.shape[1]
    S = pb_ref.shape[0]                       # ViT tokens per image (incl. CLS)
    BS = batch * S
    E = aw_ref.shape[1]
    L = mem_len
    BL = batch * L
    TB = cap_ref.shape[0]
    MLP = vwm2_ref.shape[1]
    FF = dwff2_ref.shape[1]

    masks_v = mask_ref[...]
    vit_mask = masks_v[0, :BS, :BS]           # block-diagonal over images (batch-major rows)
    self_mask = masks_v[1, :TB, :TB]          # causal within each caption (time-major rows)
    cross_mask = masks_v[2, :TB, :BL]         # caption row sees only its own image's memory

    # ------------------- ViT encoder (pre-LN), whole stack resident in vregs ---------------
    pe = jnp.dot(patch_ref[...], pw_ref[...], preferred_element_type=jnp.float32)  # (B*NP, D)
    rows = []
    for b in range(batch):
        rows.append(pb_ref[0:1, :])                                   # CLS row (cls + pos[0])
        rows.append(pe[b * n_patch:(b + 1) * n_patch, :] + pb_ref[1:, :])   # + conv_b + pos
    x = jnp.concatenate(rows, axis=0)                                 # (B*S, D)

    for lp in range(vwx_ref.shape[0]):
        wx = vwx_ref[lp]                                              # (D, 3D | D | MLP)
        vv = vvec_ref[lp]                                             # (8, 3D) packed vectors
        h = _ln(x, vv[0:1, :D], vv[1:2, :D], LN_EPS_VIT)
        qkv = jnp.dot(h, wx[:, _V0:_V1], preferred_element_type=jnp.float32) + vv[2:3, :]
        x = x + _mha(qkv[:, :D], qkv[:, D:2 * D], qkv[:, 2 * D:],
                     wx[:, _V1:_V2], vv[3:4, :D], VIT_HEADS, vit_mask)
        h = _ln(x, vv[4:5, :D], vv[5:6, :D], LN_EPS_VIT)
        h = _gelu(jnp.dot(h, wx[:, _V2:_V3], preferred_element_type=jnp.float32)
                  + vv[6:7, :MLP])
        x = x + jnp.dot(h, vwm2_ref[lp], preferred_element_type=jnp.float32) + vv[7:8, :D]
    feats = _ln(x, misc_ref[0:1, :D], misc_ref[1:2, :D], LN_EPS_VIT)  # last_hidden_state

    # --------- feature adapter + decoder positional embedding (memory stays in vregs) ------
    mem_tok = jnp.concatenate([feats[b * S:b * S + L, :] for b in range(batch)], axis=0)
    mem = jnp.dot(mem_tok, aw_ref[...], preferred_element_type=jnp.float32)        # (B*L, E)
    mem = mem + jnp.concatenate([mpb_ref[0:L, :]] * batch, axis=0)    # + adapter_b + pos_emb
    # NOTE: matching the reference, caption token embeddings get NO positional encoding.

    # ------------------- Transformer decoder (post-norm), captions time-major --------------
    x = cap_ref[...]                                                  # (T*B, E)
    for lp in range(dwx_ref.shape[0]):
        wx = dwx_ref[lp]                                              # (E, packed)
        dv = dvec_ref[lp]                                             # (13, 3E) packed vectors
        # masked self-attention
        qkv = jnp.dot(x, wx[:, _D0:_D1], preferred_element_type=jnp.float32) + dv[0:1, :]
        a = _mha(qkv[:, :E], qkv[:, E:2 * E], qkv[:, 2 * E:],
                 wx[:, _D1:_D2], dv[1:2, :E], HEADS, self_mask)
        x = _ln(x + a, dv[2:3, :E], dv[3:4, :E], LN_EPS_DEC)
        # cross-attention over the image memory (fused KV projection)
        q = jnp.dot(x, wx[:, _D2:_D3], preferred_element_type=jnp.float32) + dv[4:5, :E]
        kv = jnp.dot(mem, wx[:, _D3:_D4], preferred_element_type=jnp.float32) + dv[5:6, :2 * E]
        a = _mha(q, kv[:, :E], kv[:, E:], wx[:, _D4:_D5], dv[6:7, :E], HEADS, cross_mask)
        x = _ln(x + a, dv[7:8, :E], dv[8:9, :E], LN_EPS_DEC)
        # ReLU feed-forward
        h = jnp.maximum(
            jnp.dot(x, wx[:, _D5:_D6], preferred_element_type=jnp.float32) + dv[9:10, :FF],
            0.0)
        a = jnp.dot(h, dwff2_ref[lp], preferred_element_type=jnp.float32) + dv[10:11, :E]
        x = _ln(x + a, dv[11:12, :E], dv[12:13, :E], LN_EPS_DEC)

    # lane-padded vocab projection: dense (T*B, 128) store; padding sliced off in the wrapper
    o_ref[...] = (jnp.dot(x, fcw_ref[...], preferred_element_type=jnp.float32)
                  + misc_ref[2:3, :]).astype(o_ref.dtype)


# ----------------------------------- pallas wrapper ------------------------------------
def _fs(shape):
    n = len(shape)
    return pl.BlockSpec(tuple(shape), lambda i, _n=n: (0,) * _n)


def _build_masks(B, S, L, T):
    """Additive attention masks for the batch-folded layouts, built at trace time (numpy)."""
    BS, TB, BL = B * S, T * B, B * L
    n = max(BS, TB)
    m = np.zeros((3, n, n), np.float32)
    r = np.arange(BS)
    m[0, :BS, :BS] = np.where((r[:, None] // S) == (r[None, :] // S), 0.0, NEG_INF)
    r = np.arange(TB)
    ok = ((r[:, None] % B) == (r[None, :] % B)) & ((r[None, :] // B) <= (r[:, None] // B))
    m[1, :TB, :TB] = np.where(ok, 0.0, NEG_INF)
    r, c = np.arange(TB), np.arange(BL)
    m[2, :TB, :BL] = np.where((r[:, None] % B) == (c[None, :] // L), 0.0, NEG_INF)
    return jnp.asarray(m)


def _run_captioner(patches, cap, masks, params, *, batch, n_patch, mem_len, seq_tb):
    p = params
    operands = (patches, p["patch_w"], p["embed_bias"], p["vit_wx"], p["vit_wm2"],
                p["vit_vecs"], p["misc"], cap, p["adapter_w"], p["mem_posb"], masks,
                p["dec_wx"], p["dec_wff2"], p["dec_vecs"], p["fc_w"])
    return pl.pallas_call(
        partial(_captioner_kernel, batch=batch, n_patch=n_patch, mem_len=mem_len),
        out_shape=jax.ShapeDtypeStruct((seq_tb, VPAD), jnp.float32),
        grid=(1,),
        in_specs=[_fs(op.shape) for op in operands],
        out_specs=_fs((seq_tb, VPAD)),
        compiler_params=pltpu.CompilerParams(dimension_semantics=("arbitrary",)),
    )(*operands)


# ------------------------------------- forward pass ------------------------------------
@jax.jit
def vit_transformer_forward(params, images, captions, caption_lengths):
    del caption_lengths                                  # unused by the reference forward too
    B, C, H, W = images.shape
    nh, nw = H // PATCH, W // PATCH
    NP = nh * nw
    S = NP + 1
    T = captions.shape[1]
    L = min(S, MAX_SEQ)

    # Conv2d(k=P, stride=P) unfolded into a (B*NP, C*P*P) patch matrix: batch is folded into
    # the sublane/row dimension so every matmul in the fused kernel sees B*rows of work.
    patches = images.reshape(B, C, nh, PATCH, nw, PATCH)
    patches = patches.transpose(0, 2, 4, 1, 3, 5).reshape(B * NP, C * PATCH * PATCH)

    # Caption token embeddings flattened TIME-major (row = t*B + b), so the kernel's dense
    # (T*B, VPAD) logits reshape to PyTorch's seq-first (T, B, V) for free (no transpose).
    cap = jnp.take(params["text_emb"], captions.astype(jnp.int32).T, axis=0)   # (T, B, E)
    cap = cap.reshape(T * B, EMBED)

    masks = _build_masks(B, S, L, T)                     # trace-time numpy constants

    logits = _run_captioner(patches, cap, masks, params,
                            batch=B, n_patch=NP, mem_len=L, seq_tb=T * B)      # (T*B, VPAD)
    return logits.reshape(T, B, VPAD)[:, :, :VOCAB]      # drop lane padding -> (T, B, V)


# ------------------------------------ parameter init -----------------------------------
def init_params(key):
    keys = iter(jax.random.split(key, 80))

    def nxt(shape, scale=0.02):
        return (scale * jax.random.normal(next(keys), shape)).astype(jnp.float32)

    D, E, Lv, Ld = VIT_DIM, EMBED, VIT_LAYERS, DEC_LAYERS
    NP = (IMG // PATCH) ** 2
    S = NP + 1
    vit_scale = 1.0 / math.sqrt(D // VIT_HEADS)          # folded into ViT Q projection
    dec_scale = 1.0 / math.sqrt(E // HEADS)              # folded into decoder Q projections

    # ViT patch embedding; CLS token, positional embedding and conv bias folded into embed_bias
    patch_w = nxt((IN_CH * PATCH * PATCH, D))
    patch_b = nxt((D,))
    cls_tok = nxt((1, D))
    pos_emb = nxt((S, D))
    embed_bias = jnp.concatenate([cls_tok + pos_emb[:1], pos_emb[1:] + patch_b[None, :]], 0)

    # ViT encoder layers: big matrices packed along lanes, small vectors packed in rows
    w_qkv = nxt((Lv, D, 3 * D)).at[:, :, :D].multiply(vit_scale)
    vit_wx = jnp.concatenate([w_qkv, nxt((Lv, D, D)), nxt((Lv, D, VIT_MLP))], axis=-1)
    vit_wm2 = nxt((Lv, VIT_MLP, D))

    vit_vecs = jnp.zeros((Lv, 8, 3 * D), jnp.float32)
    vit_vecs = vit_vecs.at[:, 0, :D].set(1.0)                                   # ln1 gamma
    vit_vecs = vit_vecs.at[:, 1, :D].set(nxt((Lv, D)))                          # ln1 beta
    vit_vecs = vit_vecs.at[:, 2, :].set(nxt((Lv, 3 * D)).at[:, :D].multiply(vit_scale))  # b_qkv
    vit_vecs = vit_vecs.at[:, 3, :D].set(nxt((Lv, D)))                          # attn out bias
    vit_vecs = vit_vecs.at[:, 4, :D].set(1.0)                                   # ln2 gamma
    vit_vecs = vit_vecs.at[:, 5, :D].set(nxt((Lv, D)))                          # ln2 beta
    vit_vecs = vit_vecs.at[:, 6, :VIT_MLP].set(nxt((Lv, VIT_MLP)))              # mlp1 bias
    vit_vecs = vit_vecs.at[:, 7, :D].set(nxt((Lv, D)))                          # mlp2 bias

    # final ViT LayerNorm + lane-padded fc bias packed into one small tensor
    misc = jnp.zeros((3, VPAD), jnp.float32)
    misc = misc.at[0, :D].set(1.0)                                              # final LN gamma
    misc = misc.at[1, :D].set(nxt((D,)))                                        # final LN beta
    misc = misc.at[2, :VOCAB].set(nxt((VOCAB,)))                                # fc bias

    # decoder layers
    w_qkv_s = nxt((Ld, E, 3 * E)).at[:, :, :E].multiply(dec_scale)
    dec_wx = jnp.concatenate([w_qkv_s, nxt((Ld, E, E)), nxt((Ld, E, E)) * dec_scale,
                              nxt((Ld, E, 2 * E)), nxt((Ld, E, E)), nxt((Ld, E, FFN))],
                             axis=-1)
    dec_wff2 = nxt((Ld, FFN, E))

    dec_vecs = jnp.zeros((Ld, 13, 3 * E), jnp.float32)
    dec_vecs = dec_vecs.at[:, 0, :].set(nxt((Ld, 3 * E)).at[:, :E].multiply(dec_scale))
    dec_vecs = dec_vecs.at[:, 1, :E].set(nxt((Ld, E)))                          # self out bias
    dec_vecs = dec_vecs.at[:, 2, :E].set(1.0)                                   # ln1 gamma
    dec_vecs = dec_vecs.at[:, 3, :E].set(nxt((Ld, E)))                          # ln1 beta
    dec_vecs = dec_vecs.at[:, 4, :E].set(nxt((Ld, E)) * dec_scale)              # cross q bias
    dec_vecs = dec_vecs.at[:, 5, :2 * E].set(nxt((Ld, 2 * E)))                  # cross kv bias
    dec_vecs = dec_vecs.at[:, 6, :E].set(nxt((Ld, E)))                          # cross out bias
    dec_vecs = dec_vecs.at[:, 7, :E].set(1.0)                                   # ln2 gamma
    dec_vecs = dec_vecs.at[:, 8, :E].set(nxt((Ld, E)))                          # ln2 beta
    dec_vecs = dec_vecs.at[:, 9, :FFN].set(nxt((Ld, FFN)))                      # ff1 bias
    dec_vecs = dec_vecs.at[:, 10, :E].set(nxt((Ld, E)))                         # ff2 bias
    dec_vecs = dec_vecs.at[:, 11, :E].set(1.0)                                  # ln3 gamma
    dec_vecs = dec_vecs.at[:, 12, :E].set(nxt((Ld, E)))                         # ln3 beta

    # adapter bias + decoder positional embedding folded into one (MAX_SEQ, E) tensor
    adapter_w = nxt((D, E))
    mem_posb = nxt((MAX_SEQ, E)) + nxt((E,))[None, :]

    # vocab projection padded to 128 lanes for dense stores; padding columns stay zero
    fc_w = jnp.zeros((E, VPAD), jnp.float32).at[:, :VOCAB].set(nxt((E, VOCAB)))

    return dict(patch_w=patch_w, embed_bias=embed_bias, vit_wx=vit_wx, vit_wm2=vit_wm2,
                vit_vecs=vit_vecs, misc=misc, adapter_w=adapter_w, mem_posb=mem_posb,
                text_emb=nxt((VOCAB, E)), dec_wx=dec_wx, dec_wff2=dec_wff2,
                dec_vecs=dec_vecs, fc_w=fc_w)


# ---------------------------------------- main ------------------------------------------
if __name__ == "__main__":
    key = jax.random.PRNGKey(0)
    pkey, ikey, ckey = jax.random.split(key, 3)
    params = init_params(pkey)

    B, T_CAP = 2, 6
    images = jax.random.normal(ikey, (B, IN_CH, IMG, IMG), jnp.float32)        # NCHW
    captions = jax.random.randint(ckey, (B, T_CAP), 0, VOCAB, dtype=jnp.int32)
    caption_lengths = jnp.full((B,), T_CAP, jnp.int32)

    out = vit_transformer_forward(params, images, captions, caption_lengths)
    out = jax.block_until_ready(out)
    assert out.shape == (T_CAP, B, VOCAB), out.shape
    assert bool(jnp.all(jnp.isfinite(out)))
    print("KERNEL_OK")
</pallas_src>

<mosaic_0001>
module attributes {stable_mosaic.version = 11 : i64} {
  func.func @_captioner_kernel(%arg0: i32, %arg1: memref<8x192xf32, #tpu.memory_space<vmem>>, %arg2: memref<192x64xf32, #tpu.memory_space<vmem>>, %arg3: memref<5x64xf32, #tpu.memory_space<vmem>>, %arg4: memref<2x64x384xf32, #tpu.memory_space<vmem>>, %arg5: memref<2x128x64xf32, #tpu.memory_space<vmem>>, %arg6: memref<2x8x192xf32, #tpu.memory_space<vmem>>, %arg7: memref<3x128xf32, #tpu.memory_space<vmem>>, %arg8: memref<12x32xf32, #tpu.memory_space<vmem>>, %arg9: memref<64x32xf32, #tpu.memory_space<vmem>>, %arg10: memref<4x32xf32, #tpu.memory_space<vmem>>, %arg11: memref<3x12x12xf32, #tpu.memory_space<vmem>>, %arg12: memref<2x32x320xf32, #tpu.memory_space<vmem>>, %arg13: memref<2x64x32xf32, #tpu.memory_space<vmem>>, %arg14: memref<2x13x96xf32, #tpu.memory_space<vmem>>, %arg15: memref<32x128xf32, #tpu.memory_space<vmem>>, %arg16: memref<12x128xf32, #tpu.memory_space<vmem>>) attributes {dimension_semantics = [#tpu.dimension_semantics<arbitrary>], iteration_bounds = array<i64: 1>, scalar_prefetch = 0 : i64, scratch_operands = 0 : i64, tpu.core_type = #tpu.core_type<tc>, window_params = [{pipeline_mode = #tpu.pipeline_mode<synchronous>, transform_indices = @transform_0, window_bounds = array<i64: 8, 192>}, {pipeline_mode = #tpu.pipeline_mode<synchronous>, transform_indices = @transform_1, window_bounds = array<i64: 192, 64>}, {pipeline_mode = #tpu.pipeline_mode<synchronous>, transform_indices = @transform_2, window_bounds = array<i64: 5, 64>}, {pipeline_mode = #tpu.pipeline_mode<synchronous>, transform_indices = @transform_3, window_bounds = array<i64: 2, 64, 384>}, {pipeline_mode = #tpu.pipeline_mode<synchronous>, transform_indices = @transform_4, window_bounds = array<i64: 2, 128, 64>}, {pipeline_mode = #tpu.pipeline_mode<synchronous>, transform_indices = @transform_5, window_bounds = array<i64: 2, 8, 192>}, {pipeline_mode = #tpu.pipeline_mode<synchronous>, transform_indices = @transform_6, window_bounds = array<i64: 3, 128>}, {pipeline_mode = #tpu.pipeline_mode<synchronous>, transform_indices = @transform_7, window_bounds = array<i64: 12, 32>}, {pipeline_mode = #tpu.pipeline_mode<synchronous>, transform_indices = @transform_8, window_bounds = array<i64: 64, 32>}, {pipeline_mode = #tpu.pipeline_mode<synchronous>, transform_indices = @transform_9, window_bounds = array<i64: 4, 32>}, {pipeline_mode = #tpu.pipeline_mode<synchronous>, transform_indices = @transform_10, window_bounds = array<i64: 3, 12, 12>}, {pipeline_mode = #tpu.pipeline_mode<synchronous>, transform_indices = @transform_11, window_bounds = array<i64: 2, 32, 320>}, {pipeline_mode = #tpu.pipeline_mode<synchronous>, transform_indices = @transform_12, window_bounds = array<i64: 2, 64, 32>}, {pipeline_mode = #tpu.pipeline_mode<synchronous>, transform_indices = @transform_13, window_bounds = array<i64: 2, 13, 96>}, {pipeline_mode = #tpu.pipeline_mode<synchronous>, transform_indices = @transform_14, window_bounds = array<i64: 32, 128>}, {pipeline_mode = #tpu.pipeline_mode<synchronous>, transform_indices = @transform_15, window_bounds = array<i64: 12, 128>}]} {
    %c0 = arith.constant 0 : index
    %c0_0 = arith.constant 0 : index
    %c0_1 = arith.constant 0 : index
    %0 = vector.load %arg11[%c0, %c0_0, %c0_1] : memref<3x12x12xf32, #tpu.memory_space<vmem>>, vector<3x12x12xf32>
    %1 = vector.extract_strided_slice %0 {offsets = [0, 0, 0], sizes = [1, 10, 10], strides = [1, 1, 1]} : vector<3x12x12xf32> to vector<1x10x10xf32>
    %2 = vector.shape_cast %1 : vector<1x10x10xf32> to vector<10x10xf32>
    %3 = vector.extract_strided_slice %0 {offsets = [1, 0, 0], sizes = [1, 12, 12], strides = [1, 1, 1]} : vector<3x12x12xf32> to vector<1x12x12xf32>
    %4 = vector.shape_cast %3 : vector<1x12x12xf32> to vector<12x12xf32>
    %5 = vector.extract_strided_slice %0 {offsets = [2, 0, 0], sizes = [1, 12, 8], strides = [1, 1, 1]} : vector<3x12x12xf32> to vector<1x12x8xf32>
    %6 = vector.shape_cast %5 : vector<1x12x8xf32> to vector<12x8xf32>
    %c0_2 = arith.constant 0 : index
    %c0_3 = arith.constant 0 : index
    %7 = vector.load %arg1[%c0_2, %c0_3] : memref<8x192xf32, #tpu.memory_space<vmem>>, vector<8x192xf32>
    %c0_4 = arith.constant 0 : index
    %c0_5 = arith.constant 0 : index
    %8 = vector.load %arg2[%c0_4, %c0_5] : memref<192x64xf32, #tpu.memory_space<vmem>>, vector<192x64xf32>
    %cst = arith.constant dense<0.000000e+00> : vector<8x64xf32>
    %9 = tpu.matmul %7, %8, %cst {dimension_numbers = #tpu.dot_dimension_numbers<[1], [0], [0], [1], [0, 0, 1, 1], [], []>} : vector<8x192xf32>, vector<192x64xf32>, vector<8x64xf32> -> vector<8x64xf32>
    %c0_6 = arith.constant 0 : index
    %c0_7 = arith.constant 0 : index
    %10 = vector.load %arg3[%c0_6, %c0_7] : memref<5x64xf32, #tpu.memory_space<vmem>>, vector<1x64xf32>
    %11 = vector.extract_strided_slice %9 {offsets = [0, 0], sizes = [4, 64], strides = [1, 1]} : vector<8x64xf32> to vector<4x64xf32>
    %c1 = arith.constant 1 : index
    %c0_8 = arith.constant 0 : index
    %12 = vector.load %arg3[%c1, %c0_8] : memref<5x64xf32, #tpu.memory_space<vmem>>, vector<4x64xf32>
    %13 = arith.addf %11, %12 : vector<4x64xf32>
    %c0_9 = arith.constant 0 : index
    %c0_10 = arith.constant 0 : index
    %14 = vector.load %arg3[%c0_9, %c0_10] : memref<5x64xf32, #tpu.memory_space<vmem>>, vector<1x64xf32>
    %15 = vector.extract_strided_slice %9 {offsets = [4, 0], sizes = [4, 64], strides = [1, 1]} : vector<8x64xf32> to vector<4x64xf32>
    %c1_11 = arith.constant 1 : index
    %c0_12 = arith.constant 0 : index
    %16 = vector.load %arg3[%c1_11, %c0_12] : memref<5x64xf32, #tpu.memory_space<vmem>>, vector<4x64xf32>
    %17 = arith.addf %15, %16 : vector<4x64xf32>
    %18 = tpu.concatenate %10, %13, %14, %17 in 0 : vector<1x64xf32>, vector<4x64xf32>, vector<1x64xf32>, vector<4x64xf32> -> vector<10x64xf32>
    %c0_13 = arith.constant 0 : index
    %c0_14 = arith.constant 0 : index
    %c0_15 = arith.constant 0 : index
    %19 = vector.load %arg4[%c0_13, %c0_14, %c0_15] : memref<2x64x384xf32, #tpu.memory_space<vmem>>, vector<1x64x384xf32>
    %20 = vector.shape_cast %19 : vector<1x64x384xf32> to vector<64x384xf32>
    %c0_16 = arith.constant 0 : index
    %c0_17 = arith.constant 0 : index
    %c0_18 = arith.constant 0 : index
    %21 = vector.load %arg6[%c0_16, %c0_17, %c0_18] : memref<2x8x192xf32, #tpu.memory_space<vmem>>, vector<1x8x192xf32>
    %22 = vector.shape_cast %21 : vector<1x8x192xf32> to vector<8x192xf32>
    %23 = vector.extract_strided_slice %22 {offsets = [0, 0], sizes = [1, 64], strides = [1, 1]} : vector<8x192xf32> to vector<1x64xf32>
    %24 = vector.extract_strided_slice %22 {offsets = [1, 0], sizes = [1, 64], strides = [1, 1]} : vector<8x192xf32> to vector<1x64xf32>
    %cst_19 = arith.constant dense<0.000000e+00> : vector<10xf32>
    %25 = vector.multi_reduction <add>, %18, %cst_19 [1] : vector<10x64xf32> to vector<10xf32>
    %26 = vector.shape_cast %25 : vector<10xf32> to vector<10x1xf32>
    %cst_20 = arith.constant 6.400000e+01 : f32
    %27 = vector.broadcast %cst_20 : f32 to vector<10x1xf32>
    %28 = arith.divf %26, %27 : vector<10x1xf32>
    %29 = vector.broadcast %28 : vector<10x1xf32> to vector<10x64xf32>
    %30 = arith.subf %18, %29 : vector<10x64xf32>
    %31 = arith.mulf %30, %30 : vector<10x64xf32>
    %cst_21 = arith.constant dense<0.000000e+00> : vector<10xf32>
    %32 = vector.multi_reduction <add>, %31, %cst_21 [1] : vector<10x64xf32> to vector<10xf32>
    %33 = vector.shape_cast %32 : vector<10xf32> to vector<10x1xf32>
    %cst_22 = arith.constant 6.400000e+01 : f32
    %34 = vector.broadcast %cst_22 : f32 to vector<10x1xf32>
    %35 = arith.divf %33, %34 : vector<10x1xf32>
    %cst_23 = arith.constant 9.99999996E-13 : f32
    %36 = vector.broadcast %cst_23 : f32 to vector<10x1xf32>
    %37 = arith.addf %35, %36 : vector<10x1xf32>
    %38 = math.rsqrt %37 : vector<10x1xf32>
    %39 = vector.broadcast %38 : vector<10x1xf32> to vector<10x64xf32>
    %40 = arith.mulf %30, %39 : vector<10x64xf32>
    %41 = vector.broadcast %23 : vector<1x64xf32> to vector<10x64xf32>
    %42 = arith.mulf %40, %41 : vector<10x64xf32>
    %43 = vector.broadcast %24 : vector<1x64xf32> to vector<10x64xf32>
    %44 = arith.addf %42, %43 : vector<10x64xf32>
    %45 = vector.extract_strided_slice %20 {offsets = [0, 0], sizes = [64, 192], strides = [1, 1]} : vector<64x384xf32> to vector<64x192xf32>
    %cst_24 = arith.constant dense<0.000000e+00> : vector<10x192xf32>
    %46 = tpu.matmul %44, %45, %cst_24 {dimension_numbers = #tpu.dot_dimension_numbers<[1], [0], [0], [1], [0, 0, 1, 1], [], []>} : vector<10x64xf32>, vector<64x192xf32>, vector<10x192xf32> -> vector<10x192xf32>
    %47 = vector.extract_strided_slice %22 {offsets = [2, 0], sizes = [1, 192], strides = [1, 1]} : vector<8x192xf32> to vector<1x192xf32>
    %48 = vector.broadcast %47 : vector<1x192xf32> to vector<10x192xf32>
    %49 = arith.addf %46, %48 : vector<10x192xf32>
    %50 = vector.extract_strided_slice %49 {offsets = [0, 0], sizes = [10, 64], strides = [1, 1]} : vector<10x192xf32> to vector<10x64xf32>
    %51 = vector.extract_strided_slice %49 {offsets = [0, 64], sizes = [10, 64], strides = [1, 1]} : vector<10x192xf32> to vector<10x64xf32>
    %52 = vector.extract_strided_slice %49 {offsets = [0, 128], sizes = [10, 64], strides = [1, 1]} : vector<10x192xf32> to vector<10x64xf32>
    %53 = vector.extract_strided_slice %20 {offsets = [0, 192], sizes = [64, 64], strides = [1, 1]} : vector<64x384xf32> to vector<64x64xf32>
    %54 = vector.extract_strided_slice %22 {offsets = [3, 0], sizes = [1, 64], strides = [1, 1]} : vector<8x192xf32> to vector<1x64xf32>
    %55 = vector.extract_strided_slice %50 {offsets = [0, 0], sizes = [10, 16], strides = [1, 1]} : vector<10x64xf32> to vector<10x16xf32>
    %56 = vector.extract_strided_slice %51 {offsets = [0, 0], sizes = [10, 16], strides = [1, 1]} : vector<10x64xf32> to vector<10x16xf32>
    %cst_25 = arith.constant dense<0.000000e+00> : vector<10x10xf32>
    %57 = tpu.matmul %55, %56, %cst_25 {dimension_numbers = #tpu.dot_dimension_numbers<[1], [1], [0], [0], [0, 0, 1, 0], [], []>} : vector<10x16xf32>, vector<10x16xf32>, vector<10x10xf32> -> vector<10x10xf32>
    %58 = arith.addf %57, %2 : vector<10x10xf32>
    %cst_26 = arith.constant dense<0xFF800000> : vector<10xf32>
    %59 = vector.multi_reduction <maximumf>, %58, %cst_26 [1] : vector<10x10xf32> to vector<10xf32>
    %60 = vector.shape_cast %59 : vector<10xf32> to vector<10x1xf32>
    %61 = vector.broadcast %60 : vector<10x1xf32> to vector<10x10xf32>
    %62 = arith.subf %58, %61 : vector<10x10xf32>
    %63 = math.exp %62 : vector<10x10xf32>
    %cst_27 = arith.constant dense<0.000000e+00> : vector<10xf32>
    %64 = vector.multi_reduction <add>, %63, %cst_27 [1] : vector<10x10xf32> to vector<10xf32>
    %65 = vector.shape_cast %64 : vector<10xf32> to vector<10x1xf32>
    %66 = tpu.reciprocal %65 {approx = true} : vector<10x1xf32> -> vector<10x1xf32>
    %67 = vector.broadcast %66 : vector<10x1xf32> to vector<10x10xf32>
    %68 = arith.mulf %63, %67 : vector<10x10xf32>
    %69 = vector.extract_strided_slice %52 {offsets = [0, 0], sizes = [10, 16], strides = [1, 1]} : vector<10x64xf32> to vector<10x16xf32>
    %cst_28 = arith.constant dense<0.000000e+00> : vector<10x16xf32>
    %70 = tpu.matmul %68, %69, %cst_28 {dimension_numbers = #tpu.dot_dimension_numbers<[1], [0], [0], [1], [0, 0, 1, 1], [], []>} : vector<10x10xf32>, vector<10x16xf32>, vector<10x16xf32> -> vector<10x16xf32>
    %71 = vector.extract_strided_slice %50 {offsets = [0, 16], sizes = [10, 16], strides = [1, 1]} : vector<10x64xf32> to vector<10x16xf32>
    %72 = vector.extract_strided_slice %51 {offsets = [0, 16], sizes = [10, 16], strides = [1, 1]} : vector<10x64xf32> to vector<10x16xf32>
    %cst_29 = arith.constant dense<0.000000e+00> : vector<10x10xf32>
    %73 = tpu.matmul %71, %72, %cst_29 {dimension_numbers = #tpu.dot_dimension_numbers<[1], [1], [0], [0], [0, 0, 1, 0], [], []>} : vector<10x16xf32>, vector<10x16xf32>, vector<10x10xf32> -> vector<10x10xf32>
    %74 = arith.addf %73, %2 : vector<10x10xf32>
    %cst_30 = arith.constant dense<0xFF800000> : vector<10xf32>
    %75 = vector.multi_reduction <maximumf>, %74, %cst_30 [1] : vector<10x10xf32> to vector<10xf32>
    %76 = vector.shape_cast %75 : vector<10xf32> to vector<10x1xf32>
    %77 = vector.broadcast %76 : vector<10x1xf32> to vector<10x10xf32>
    %78 = arith.subf %74, %77 : vector<10x10xf32>
    %79 = math.exp %78 : vector<10x10xf32>
    %cst_31 = arith.constant dense<0.000000e+00> : vector<10xf32>
    %80 = vector.multi_reduction <add>, %79, %cst_31 [1] : vector<10x10xf32> to vector<10xf32>
    %81 = vector.shape_cast %80 : vector<10xf32> to vector<10x1xf32>
    %82 = tpu.reciprocal %81 {approx = true} : vector<10x1xf32> -> vector<10x1xf32>
    %83 = vector.broadcast %82 : vector<10x1xf32> to vector<10x10xf32>
    %84 = arith.mulf %79, %83 : vector<10x10xf32>
    %85 = vector.extract_strided_slice %52 {offsets = [0, 16], sizes = [10, 16], strides = [1, 1]} : vector<10x64xf32> to vector<10x16xf32>
    %cst_32 = arith.constant dense<0.000000e+00> : vector<10x16xf32>
    %86 = tpu.matmul %84, %85, %cst_32 {dimension_numbers = #tpu.dot_dimension_numbers<[1], [0], [0], [1], [0, 0, 1, 1], [], []>} : vector<10x10xf32>, vector<10x16xf32>, vector<10x16xf32> -> vector<10x16xf32>
    %87 = vector.extract_strided_slice %50 {offsets = [0, 32], sizes = [10, 16], strides = [1, 1]} : vector<10x64xf32> to vector<10x16xf32>
    %88 = vector.extract_strided_slice %51 {offsets = [0, 32], sizes = [10, 16], strides = [1, 1]} : vector<10x64xf32> to vector<10x16xf32>
    %cst_33 = arith.constant dense<0.000000e+00> : vector<10x10xf32>
    %89 = tpu.matmul %87, %88, %cst_33 {dimension_numbers = #tpu.dot_dimension_numbers<[1], [1], [0], [0], [0, 0, 1, 0], [], []>} : vector<10x16xf32>, vector<10x16xf32>, vector<10x10xf32> -> vector<10x10xf32>
    %90 = arith.addf %89, %2 : vector<10x10xf32>
    %cst_34 = arith.constant dense<0xFF800000> : vector<10xf32>
    %91 = vector.multi_reduction <maximumf>, %90, %cst_34 [1] : vector<10x10xf32> to vector<10xf32>
    %92 = vector.shape_cast %91 : vector<10xf32> to vector<10x1xf32>
    %93 = vector.broadcast %92 : vector<10x1xf32> to vector<10x10xf32>
    %94 = arith.subf %90, %93 : vector<10x10xf32>
    %95 = math.exp %94 : vector<10x10xf32>
    %cst_35 = arith.constant dense<0.000000e+00> : vector<10xf32>
    %96 = vector.multi_reduction <add>, %95, %cst_35 [1] : vector<10x10xf32> to vector<10xf32>
    %97 = vector.shape_cast %96 : vector<10xf32> to vector<10x1xf32>
    %98 = tpu.reciprocal %97 {approx = true} : vector<10x1xf32> -> vector<10x1xf32>
    %99 = vector.broadcast %98 : vector<10x1xf32> to vector<10x10xf32>
    %100 = arith.mulf %95, %99 : vector<10x10xf32>
    %101 = vector.extract_strided_slice %52 {offsets = [0, 32], sizes = [10, 16], strides = [1, 1]} : vector<10x64xf32> to vector<10x16xf32>
    %cst_36 = arith.constant dense<0.000000e+00> : vector<10x16xf32>
    %102 = tpu.matmul %100, %101, %cst_36 {dimension_numbers = #tpu.dot_dimension_numbers<[1], [0], [0], [1], [0, 0, 1, 1], [], []>} : vector<10x10xf32>, vector<10x16xf32>, vector<10x16xf32> -> vector<10x16xf32>
    %103 = vector.extract_strided_slice %50 {offsets = [0, 48], sizes = [10, 16], strides = [1, 1]} : vector<10x64xf32> to vector<10x16xf32>
    %104 = vector.extract_strided_slice %51 {offsets = [0, 48], sizes = [10, 16], strides = [1, 1]} : vector<10x64xf32> to vector<10x16xf32>
    %cst_37 = arith.constant dense<0.000000e+00> : vector<10x10xf32>
    %105 = tpu.matmul %103, %104, %cst_37 {dimension_numbers = #tpu.dot_dimension_numbers<[1], [1], [0], [0], [0, 0, 1, 0], [], []>} : vector<10x16xf32>, vector<10x16xf32>, vector<10x10xf32> -> vector<10x10xf32>
    %106 = arith.addf %105, %2 : vector<10x10xf32>
    %cst_38 = arith.constant dense<0xFF800000> : vector<10xf32>
    %107 = vector.multi_reduction <maximumf>, %106, %cst_38 [1] : vector<10x10xf32> to vector<10xf32>
    %108 = vector.shape_cast %107 : vector<10xf32> to vector<10x1xf32>
    %109 = vector.broadcast %108 : vector<10x1xf32> to vector<10x10xf32>
    %110 = arith.subf %106, %109 : vector<10x10xf32>
    %111 = math.exp %110 : vector<10x10xf32>
    %cst_39 = arith.constant dense<0.000000e+00> : vector<10xf32>
    %112 = vector.multi_reduction <add>, %111, %cst_39 [1] : vector<10x10xf32> to vector<10xf32>
    %113 = vector.shape_cast %112 : vector<10xf32> to vector<10x1xf32>
    %114 = tpu.reciprocal %113 {approx = true} : vector<10x1xf32> -> vector<10x1xf32>
    %115 = vector.broadcast %114 : vector<10x1xf32> to vector<10x10xf32>
    %116 = arith.mulf %111, %115 : vector<10x10xf32>
    %117 = vector.extract_strided_slice %52 {offsets = [0, 48], sizes = [10, 16], strides = [1, 1]} : vector<10x64xf32> to vector<10x16xf32>
    %cst_40 = arith.constant dense<0.000000e+00> : vector<10x16xf32>
    %118 = tpu.matmul %116, %117, %cst_40 {dimension_numbers = #tpu.dot_dimension_numbers<[1], [0], [0], [1], [0, 0, 1, 1], [], []>} : vector<10x10xf32>, vector<10x16xf32>, vector<10x16xf32> -> vector<10x16xf32>
    %119 = tpu.concatenate %70, %86, %102, %118 in 1 : vector<10x16xf32>, vector<10x16xf32>, vector<10x16xf32>, vector<10x16xf32> -> vector<10x64xf32>
    %cst_41 = arith.constant dense<0.000000e+00> : vector<10x64xf32>
    %120 = tpu.matmul %119, %53, %cst_41 {dimension_numbers = #tpu.dot_dimension_numbers<[1], [0], [0], [1], [0, 0, 1, 1], [], []>} : vector<10x64xf32>, vector<64x64xf32>, vector<10x64xf32> -> vector<10x64xf32>
    %121 = vector.broadcast %54 : vector<1x64xf32> to vector<10x64xf32>
    %122 = arith.addf %120, %121 : vector<10x64xf32>
    %123 = arith.addf %18, %122 : vector<10x64xf32>
    %124 = vector.extract_strided_slice %22 {offsets = [4, 0], sizes = [1, 64], strides = [1, 1]} : vector<8x192xf32> to vector<1x64xf32>
    %125 = vector.extract_strided_slice %22 {offsets = [5, 0], sizes = [1, 64], strides = [1, 1]} : vector<8x192xf32> to vector<1x64xf32>
    %cst_42 = arith.constant dense<0.000000e+00> : vector<10xf32>
    %126 = vector.multi_reduction <add>, %123, %cst_42 [1] : vector<10x64xf32> to vector<10xf32>
    %127 = vector.shape_cast %126 : vector<10xf32> to vector<10x1xf32>
    %cst_43 = arith.constant 6.400000e+01 : f32
    %128 = vector.broadcast %cst_43 : f32 to vector<10x1xf32>
    %129 = arith.divf %127, %128 : vector<10x1xf32>
    %130 = vector.broadcast %129 : vector<10x1xf32> to vector<10x64xf32>
    %131 = arith.subf %123, %130 : vector<10x64xf32>
    %132 = arith.mulf %131, %131 : vector<10x64xf32>
    %cst_44 = arith.constant dense<0.000000e+00> : vector<10xf32>
    %133 = vector.multi_reduction <add>, %132, %cst_44 [1] : vector<10x64xf32> to vector<10xf32>
    %134 = vector.shape_cast %133 : vector<10xf32> to vector<10x1xf32>
    %cst_45 = arith.constant 6.400000e+01 : f32
    %135 = vector.broadcast %cst_45 : f32 to vector<10x1xf32>
    %136 = arith.divf %134, %135 : vector<10x1xf32>
    %cst_46 = arith.constant 9.99999996E-13 : f32
    %137 = vector.broadcast %cst_46 : f32 to vector<10x1xf32>
    %138 = arith.addf %136, %137 : vector<10x1xf32>
    %139 = math.rsqrt %138 : vector<10x1xf32>
    %140 = vector.broadcast %139 : vector<10x1xf32> to vector<10x64xf32>
    %141 = arith.mulf %131, %140 : vector<10x64xf32>
    %142 = vector.broadcast %124 : vector<1x64xf32> to vector<10x64xf32>
    %143 = arith.mulf %141, %142 : vector<10x64xf32>
    %144 = vector.broadcast %125 : vector<1x64xf32> to vector<10x64xf32>
    %145 = arith.addf %143, %144 : vector<10x64xf32>
    %146 = vector.extract_strided_slice %20 {offsets = [0, 256], sizes = [64, 128], strides = [1, 1]} : vector<64x384xf32> to vector<64x128xf32>
    %cst_47 = arith.constant dense<0.000000e+00> : vector<10x128xf32>
    %147 = tpu.matmul %145, %146, %cst_47 {dimension_numbers = #tpu.dot_dimension_numbers<[1], [0], [0], [1], [0, 0, 1, 1], [], []>} : vector<10x64xf32>, vector<64x128xf32>, vector<10x128xf32> -> vector<10x128xf32>
    %148 = vector.extract_strided_slice %22 {offsets = [6, 0], sizes = [1, 128], strides = [1, 1]} : vector<8x192xf32> to vector<1x128xf32>
    %149 = vector.broadcast %148 : vector<1x128xf32> to vector<10x128xf32>
    %150 = arith.addf %147, %149 : vector<10x128xf32>
    %cst_48 = arith.constant 5.000000e-01 : f32
    %151 = vector.broadcast %cst_48 : f32 to vector<10x128xf32>
    %152 = arith.mulf %151, %150 : vector<10x128xf32>
    %cst_49 = arith.constant 4.471500e-02 : f32
    %153 = vector.broadcast %cst_49 : f32 to vector<10x128xf32>
    %154 = arith.mulf %153, %150 : vector<10x128xf32>
    %155 = arith.mulf %154, %150 : vector<10x128xf32>
    %156 = arith.mulf %155, %150 : vector<10x128xf32>
    %157 = arith.addf %150, %156 : vector<10x128xf32>
    %cst_50 = arith.constant 0.797884583 : f32
    %158 = vector.broadcast %cst_50 : f32 to vector<10x128xf32>
    %159 = arith.mulf %158, %157 : vector<10x128xf32>
    %160 = math.tanh %159 : vector<10x128xf32>
    %cst_51 = arith.constant 1.000000e+00 : f32
    %161 = vector.broadcast %cst_51 : f32 to vector<10x128xf32>
    %162 = arith.addf %161, %160 : vector<10x128xf32>
    %163 = arith.mulf %152, %162 : vector<10x128xf32>
    %c0_52 = arith.constant 0 : index
    %c0_53 = arith.constant 0 : index
    %c0_54 = arith.constant 0 : index
    %164 = vector.load %arg5[%c0_52, %c0_53, %c0_54] : memref<2x128x64xf32, #tpu.memory_space<vmem>>, vector<1x128x64xf32>
    %165 = vector.shape_cast %164 : vector<1x128x64xf32> to vector<128x64xf32>
    %cst_55 = arith.constant dense<0.000000e+00> : vector<10x64xf32>
    %166 = tpu.matmul %163, %165, %cst_55 {dimension_numbers = #tpu.dot_dimension_numbers<[1], [0], [0], [1], [0, 0, 1, 1], [], []>} : vector<10x128xf32>, vector<128x64xf32>, vector<10x64xf32> -> vector<10x64xf32>
    %167 = arith.addf %123, %166 : vector<10x64xf32>
    %168 = vector.extract_strided_slice %22 {offsets = [7, 0], sizes = [1, 64], strides = [1, 1]} : vector<8x192xf32> to vector<1x64xf32>
    %169 = vector.broadcast %168 : vector<1x64xf32> to vector<10x64xf32>
    %170 = arith.addf %167, %169 : vector<10x64xf32>
    %c1_56 = arith.constant 1 : index
    %c0_57 = arith.constant 0 : index
    %c0_58 = arith.constant 0 : index
    %171 = vector.load %arg4[%c1_56, %c0_57, %c0_58] : memref<2x64x384xf32, #tpu.memory_space<vmem>>, vector<1x64x384xf32>
    %172 = vector.shape_cast %171 : vector<1x64x384xf32> to vector<64x384xf32>
    %c1_59 = arith.constant 1 : index
    %c0_60 = arith.constant 0 : index
    %c0_61 = arith.constant 0 : index
    %173 = vector.load %arg6[%c1_59, %c0_60, %c0_61] : memref<2x8x192xf32, #tpu.memory_space<vmem>>, vector<1x8x192xf32>
    %174 = vector.shape_cast %173 : vector<1x8x192xf32> to vector<8x192xf32>
    %175 = vector.extract_strided_slice %174 {offsets = [0, 0], sizes = [1, 64], strides = [1, 1]} : vector<8x192xf32> to vector<1x64xf32>
    %176 = vector.extract_strided_slice %174 {offsets = [1, 0], sizes = [1, 64], strides = [1, 1]} : vector<8x192xf32> to vector<1x64xf32>
    %cst_62 = arith.constant dense<0.000000e+00> : vector<10xf32>
    %177 = vector.multi_reduction <add>, %170, %cst_62 [1] : vector<10x64xf32> to vector<10xf32>
    %178 = vector.shape_cast %177 : vector<10xf32> to vector<10x1xf32>
    %cst_63 = arith.constant 6.400000e+01 : f32
    %179 = vector.broadcast %cst_63 : f32 to vector<10x1xf32>
    %180 = arith.divf %178, %179 : vector<10x1xf32>
    %181 = vector.broadcast %180 : vector<10x1xf32> to vector<10x64xf32>
    %182 = arith.subf %170, %181 : vector<10x64xf32>
    %183 = arith.mulf %182, %182 : vector<10x64xf32>
    %cst_64 = arith.constant dense<0.000000e+00> : vector<10xf32>
    %184 = vector.multi_reduction <add>, %183, %cst_64 [1] : vector<10x64xf32> to vector<10xf32>
    %185 = vector.shape_cast %184 : vector<10xf32> to vector<10x1xf32>
    %cst_65 = arith.constant 6.400000e+01 : f32
    %186 = vector.broadcast %cst_65 : f32 to vector<10x1xf32>
    %187 = arith.divf %185, %186 : vector<10x1xf32>
    %cst_66 = arith.constant 9.99999996E-13 : f32
    %188 = vector.broadcast %cst_66 : f32 to vector<10x1xf32>
    %189 = arith.addf %187, %188 : vector<10x1xf32>
    %190 = math.rsqrt %189 : vector<10x1xf32>
    %191 = vector.broadcast %190 : vector<10x1xf32> to vector<10x64xf32>
    %192 = arith.mulf %182, %191 : vector<10x64xf32>
    %193 = vector.broadcast %175 : vector<1x64xf32> to vector<10x64xf32>
    %194 = arith.mulf %192, %193 : vector<10x64xf32>
    %195 = vector.broadcast %176 : vector<1x64xf32> to vector<10x64xf32>
    %196 = arith.addf %194, %195 : vector<10x64xf32>
    %197 = vector.extract_strided_slice %172 {offsets = [0, 0], sizes = [64, 192], strides = [1, 1]} : vector<64x384xf32> to vector<64x192xf32>
    %cst_67 = arith.constant dense<0.000000e+00> : vector<10x192xf32>
    %198 = tpu.matmul %196, %197, %cst_67 {dimension_numbers = #tpu.dot_dimension_numbers<[1], [0], [0], [1], [0, 0, 1, 1], [], []>} : vector<10x64xf32>, vector<64x192xf32>, vector<10x192xf32> -> vector<10x192xf32>
    %199 = vector.extract_strided_slice %174 {offsets = [2, 0], sizes = [1, 192], strides = [1, 1]} : vector<8x192xf32> to vector<1x192xf32>
    %200 = vector.broadcast %199 : vector<1x192xf32> to vector<10x192xf32>
    %201 = arith.addf %198, %200 : vector<10x192xf32>
    %202 = vector.extract_strided_slice %201 {offsets = [0, 0], sizes = [10, 64], strides = [1, 1]} : vector<10x192xf32> to vector<10x64xf32>
    %203 = vector.extract_strided_slice %201 {offsets = [0, 64], sizes = [10, 64], strides = [1, 1]} : vector<10x192xf32> to vector<10x64xf32>
    %204 = vector.extract_strided_slice %201 {offsets = [0, 128], sizes = [10, 64], strides = [1, 1]} : vector<10x192xf32> to vector<10x64xf32>
    %205 = vector.extract_strided_slice %172 {offsets = [0, 192], sizes = [64, 64], strides = [1, 1]} : vector<64x384xf32> to vector<64x64xf32>
    %206 = vector.extract_strided_slice %174 {offsets = [3, 0], sizes = [1, 64], strides = [1, 1]} : vector<8x192xf32> to vector<1x64xf32>
    %207 = vector.extract_strided_slice %202 {offsets = [0, 0], sizes = [10, 16], strides = [1, 1]} : vector<10x64xf32> to vector<10x16xf32>
    %208 = vector.extract_strided_slice %203 {offsets = [0, 0], sizes = [10, 16], strides = [1, 1]} : vector<10x64xf32> to vector<10x16xf32>
    %cst_68 = arith.constant dense<0.000000e+00> : vector<10x10xf32>
    %209 = tpu.matmul %207, %208, %cst_68 {dimension_numbers = #tpu.dot_dimension_numbers<[1], [1], [0], [0], [0, 0, 1, 0], [], []>} : vector<10x16xf32>, vector<10x16xf32>, vector<10x10xf32> -> vector<10x10xf32>
    %210 = arith.addf %209, %2 : vector<10x10xf32>
    %cst_69 = arith.constant dense<0xFF800000> : vector<10xf32>
    %211 = vector.multi_reduction <maximumf>, %210, %cst_69 [1] : vector<10x10xf32> to vector<10xf32>
    %212 = vector.shape_cast %211 : vector<10xf32> to vector<10x1xf32>
    %213 = vector.broadcast %212 : vector<10x1xf32> to vector<10x10xf32>
    %214 = arith.subf %210, %213 : vector<10x10xf32>
    %215 = math.exp %214 : vector<10x10xf32>
    %cst_70 = arith.constant dense<0.000000e+00> : vector<10xf32>
    %216 = vector.multi_reduction <add>, %215, %cst_70 [1] : vector<10x10xf32> to vector<10xf32>
    %217 = vector.shape_cast %216 : vector<10xf32> to vector<10x1xf32>
    %218 = tpu.reciprocal %217 {approx = true} : vector<10x1xf32> -> vector<10x1xf32>
    %219 = vector.broadcast %218 : vector<10x1xf32> to vector<10x10xf32>
    %220 = arith.mulf %215, %219 : vector<10x10xf32>
    %221 = vector.extract_strided_slice %204 {offsets = [0, 0], sizes = [10, 16], strides = [1, 1]} : vector<10x64xf32> to vector<10x16xf32>
    %cst_71 = arith.constant dense<0.000000e+00> : vector<10x16xf32>
    %222 = tpu.matmul %220, %221, %cst_71 {dimension_numbers = #tpu.dot_dimension_numbers<[1], [0], [0], [1], [0, 0, 1, 1], [], []>} : vector<10x10xf32>, vector<10x16xf32>, vector<10x16xf32> -> vector<10x16xf32>
    %223 = vector.extract_strided_slice %202 {offsets = [0, 16], sizes = [10, 16], strides = [1, 1]} : vector<10x64xf32> to vector<10x16xf32>
    %224 = vector.extract_strided_slice %203 {offsets = [0, 16], sizes = [10, 16], strides = [1, 1]} : vector<10x64xf32> to vector<10x16xf32>
    %cst_72 = arith.constant dense<0.000000e+00> : vector<10x10xf32>
    %225 = tpu.matmul %223, %224, %cst_72 {dimension_numbers = #tpu.dot_dimension_numbers<[1], [1], [0], [0], [0, 0, 1, 0], [], []>} : vector<10x16xf32>, vector<10x16xf32>, vector<10x10xf32> -> vector<10x10xf32>
    %226 = arith.addf %225, %2 : vector<10x10xf32>
    %cst_73 = arith.constant dense<0xFF800000> : vector<10xf32>
    %227 = vector.multi_reduction <maximumf>, %226, %cst_73 [1] : vector<10x10xf32> to vector<10xf32>
    %228 = vector.shape_cast %227 : vector<10xf32> to vector<10x1xf32>
    %229 = vector.broadcast %228 : vector<10x1xf32> to vector<10x10xf32>
    %230 = arith.subf %226, %229 : vector<10x10xf32>
    %231 = math.exp %230 : vector<10x10xf32>
    %cst_74 = arith.constant dense<0.000000e+00> : vector<10xf32>
    %232 = vector.multi_reduction <add>, %231, %cst_74 [1] : vector<10x10xf32> to vector<10xf32>
    %233 = vector.shape_cast %232 : vector<10xf32> to vector<10x1xf32>
    %234 = tpu.reciprocal %233 {approx = true} : vector<10x1xf32> -> vector<10x1xf32>
    %235 = vector.broadcast %234 : vector<10x1xf32> to vector<10x10xf32>
    %236 = arith.mulf %231, %235 : vector<10x10xf32>
    %237 = vector.extract_strided_slice %204 {offsets = [0, 16], sizes = [10, 16], strides = [1, 1]} : vector<10x64xf32> to vector<10x16xf32>
    %cst_75 = arith.constant dense<0.000000e+00> : vector<10x16xf32>
    %238 = tpu.matmul %236, %237, %cst_75 {dimension_numbers = #tpu.dot_dimension_numbers<[1], [0], [0], [1], [0, 0, 1, 1], [], []>} : vector<10x10xf32>, vector<10x16xf32>, vector<10x16xf32> -> vector<10x16xf32>
    %239 = vector.extract_strided_slice %202 {offsets = [0, 32], sizes = [10, 16], strides = [1, 1]} : vector<10x64xf32> to vector<10x16xf32>
    %240 = vector.extract_strided_slice %203 {offsets = [0, 32], sizes = [10, 16], strides = [1, 1]} : vector<10x64xf32> to vector<10x16xf32>
    %cst_76 = arith.constant dense<0.000000e+00> : vector<10x10xf32>
    %241 = tpu.matmul %239, %240, %cst_76 {dimension_numbers = #tpu.dot_dimension_numbers<[1], [1], [0], [0], [0, 0, 1, 0], [], []>} : vector<10x16xf32>, vector<10x16xf32>, vector<10x10xf32> -> vector<10x10xf32>
    %242 = arith.addf %241, %2 : vector<10x10xf32>
    %cst_77 = arith.constant dense<0xFF800000> : vector<10xf32>
    %243 = vector.multi_reduction <maximumf>, %242, %cst_77 [1] : vector<10x10xf32> to vector<10xf32>
    %244 = vector.shape_cast %243 : vector<10xf32> to vector<10x1xf32>
    %245 = vector.broadcast %244 : vector<10x1xf32> to vector<10x10xf32>
    %246 = arith.subf %242, %245 : vector<10x10xf32>
    %247 = math.exp %246 : vector<10x10xf32>
    %cst_78 = arith.constant dense<0.000000e+00> : vector<10xf32>
    %248 = vector.multi_reduction <add>, %247, %cst_78 [1] : vector<10x10xf32> to vector<10xf32>
    %249 = vector.shape_cast %248 : vector<10xf32> to vector<10x1xf32>
    %250 = tpu.reciprocal %249 {approx = true} : vector<10x1xf32> -> vector<10x1xf32>
    %251 = vector.broadcast %250 : vector<10x1xf32> to vector<10x10xf32>
    %252 = arith.mulf %247, %251 : vector<10x10xf32>
    %253 = vector.extract_strided_slice %204 {offsets = [0, 32], sizes = [10, 16], strides = [1, 1]} : vector<10x64xf32> to vector<10x16xf32>
    %cst_79 = arith.constant dense<0.000000e+00> : vector<10x16xf32>
    %254 = tpu.matmul %252, %253, %cst_79 {dimension_numbers = #tpu.dot_dimension_numbers<[1], [0], [0], [1], [0, 0, 1, 1], [], []>} : vector<10x10xf32>, vector<10x16xf32>, vector<10x16xf32> -> vector<10x16xf32>
    %255 = vector.extract_strided_slice %202 {offsets = [0, 48], sizes = [10, 16], strides = [1, 1]} : vector<10x64xf32> to vector<10x16xf32>
    %256 = vector.extract_strided_slice %203 {offsets = [0, 48], sizes = [10, 16], strides = [1, 1]} : vector<10x64xf32> to vector<10x16xf32>
    %cst_80 = arith.constant dense<0.000000e+00> : vector<10x10xf32>
    %257 = tpu.matmul %255, %256, %cst_80 {dimension_numbers = #tpu.dot_dimension_numbers<[1], [1], [0], [0], [0, 0, 1, 0], [], []>} : vector<10x16xf32>, vector<10x16xf32>, vector<10x10xf32> -> vector<10x10xf32>
    %258 = arith.addf %257, %2 : vector<10x10xf32>
    %cst_81 = arith.constant dense<0xFF800000> : vector<10xf32>
    %259 = vector.multi_reduction <maximumf>, %258, %cst_81 [1] : vector<10x10xf32> to vector<10xf32>
    %260 = vector.shape_cast %259 : vector<10xf32> to vector<10x1xf32>
    %261 = vector.broadcast %260 : vector<10x1xf32> to vector<10x10xf32>
    %262 = arith.subf %258, %261 : vector<10x10xf32>
    %263 = math.exp %262 : vector<10x10xf32>
    %cst_82 = arith.constant dense<0.000000e+00> : vector<10xf32>
    %264 = vector.multi_reduction <add>, %263, %cst_82 [1] : vector<10x10xf32> to vector<10xf32>
    %265 = vector.shape_cast %264 : vector<10xf32> to vector<10x1xf32>
    %266 = tpu.reciprocal %265 {approx = true} : vector<10x1xf32> -> vector<10x1xf32>
    %267 = vector.broadcast %266 : vector<10x1xf32> to vector<10x10xf32>
    %268 = arith.mulf %263, %267 : vector<10x10xf32>
    %269 = vector.extract_strided_slice %204 {offsets = [0, 48], sizes = [10, 16], strides = [1, 1]} : vector<10x64xf32> to vector<10x16xf32>
    %cst_83 = arith.constant dense<0.000000e+00> : vector<10x16xf32>
    %270 = tpu.matmul %268, %269, %cst_83 {dimension_numbers = #tpu.dot_dimension_numbers<[1], [0], [0], [1], [0, 0, 1, 1], [], []>} : vector<10x10xf32>, vector<10x16xf32>, vector<10x16xf32> -> vector<10x16xf32>
    %271 = tpu.concatenate %222, %238, %254, %270 in 1 : vector<10x16xf32>, vector<10x16xf32>, vector<10x16xf32>, vector<10x16xf32> -> vector<10x64xf32>
    %cst_84 = arith.constant dense<0.000000e+00> : vector<10x64xf32>
    %272 = tpu.matmul %271, %205, %cst_84 {dimension_numbers = #tpu.dot_dimension_numbers<[1], [0], [0], [1], [0, 0, 1, 1], [], []>} : vector<10x64xf32>, vector<64x64xf32>, vector<10x64xf32> -> vector<10x64xf32>
    %273 = vector.broadcast %206 : vector<1x64xf32> to vector<10x64xf32>
    %274 = arith.addf %272, %273 : vector<10x64xf32>
    %275 = arith.addf %170, %274 : vector<10x64xf32>
    %276 = vector.extract_strided_slice %174 {offsets = [4, 0], sizes = [1, 64], strides = [1, 1]} : vector<8x192xf32> to vector<1x64xf32>
    %277 = vector.extract_strided_slice %174 {offsets = [5, 0], sizes = [1, 64], strides = [1, 1]} : vector<8x192xf32> to vector<1x64xf32>
    %cst_85 = arith.constant dense<0.000000e+00> : vector<10xf32>
    %278 = vector.multi_reduction <add>, %275, %cst_85 [1] : vector<10x64xf32> to vector<10xf32>
    %279 = vector.shape_cast %278 : vector<10xf32> to vector<10x1xf32>
    %cst_86 = arith.constant 6.400000e+01 : f32
    %280 = vector.broadcast %cst_86 : f32 to vector<10x1xf32>
    %281 = arith.divf %279, %280 : vector<10x1xf32>
    %282 = vector.broadcast %281 : vector<10x1xf32> to vector<10x64xf32>
    %283 = arith.subf %275, %282 : vector<10x64xf32>
    %284 = arith.mulf %283, %283 : vector<10x64xf32>
    %cst_87 = arith.constant dense<0.000000e+00> : vector<10xf32>
    %285 = vector.multi_reduction <add>, %284, %cst_87 [1] : vector<10x64xf32> to vector<10xf32>
    %286 = vector.shape_cast %285 : vector<10xf32> to vector<10x1xf32>
    %cst_88 = arith.constant 6.400000e+01 : f32
    %287 = vector.broadcast %cst_88 : f32 to vector<10x1xf32>
    %288 = arith.divf %286, %287 : vector<10x1xf32>
    %cst_89 = arith.constant 9.99999996E-13 : f32
    %289 = vector.broadcast %cst_89 : f32 to vector<10x1xf32>
    %290 = arith.addf %288, %289 : vector<10x1xf32>
    %291 = math.rsqrt %290 : vector<10x1xf32>
    %292 = vector.broadcast %291 : vector<10x1xf32> to vector<10x64xf32>
    %293 = arith.mulf %283, %292 : vector<10x64xf32>
    %294 = vector.broadcast %276 : vector<1x64xf32> to vector<10x64xf32>
    %295 = arith.mulf %293, %294 : vector<10x64xf32>
    %296 = vector.broadcast %277 : vector<1x64xf32> to vector<10x64xf32>
    %297 = arith.addf %295, %296 : vector<10x64xf32>
    %298 = vector.extract_strided_slice %172 {offsets = [0, 256], sizes = [64, 128], strides = [1, 1]} : vector<64x384xf32> to vector<64x128xf32>
    %cst_90 = arith.constant dense<0.000000e+00> : vector<10x128xf32>
    %299 = tpu.matmul %297, %298, %cst_90 {dimension_numbers = #tpu.dot_dimension_numbers<[1], [0], [0], [1], [0, 0, 1, 1], [], []>} : vector<10x64xf32>, vector<64x128xf32>, vector<10x128xf32> -> vector<10x128xf32>
    %300 = vector.extract_strided_slice %174 {offsets = [6, 0], sizes = [1, 128], strides = [1, 1]} : vector<8x192xf32> to vector<1x128xf32>
    %301 = vector.broadcast %300 : vector<1x128xf32> to vector<10x128xf32>
    %302 = arith.addf %299, %301 : vector<10x128xf32>
    %cst_91 = arith.constant 5.000000e-01 : f32
    %303 = vector.broadcast %cst_91 : f32 to vector<10x128xf32>
    %304 = arith.mulf %303, %302 : vector<10x128xf32>
    %cst_92 = arith.constant 4.471500e-02 : f32
    %305 = vector.broadcast %cst_92 : f32 to vector<10x128xf32>
    %306 = arith.mulf %305, %302 : vector<10x128xf32>
    %307 = arith.mulf %306, %302 : vector<10x128xf32>
    %308 = arith.mulf %307, %302 : vector<10x128xf32>
    %309 = arith.addf %302, %308 : vector<10x128xf32>
    %cst_93 = arith.constant 0.797884583 : f32
    %310 = vector.broadcast %cst_93 : f32 to vector<10x128xf32>
    %311 = arith.mulf %310, %309 : vector<10x128xf32>
    %312 = math.tanh %311 : vector<10x128xf32>
    %cst_94 = arith.constant 1.000000e+00 : f32
    %313 = vector.broadcast %cst_94 : f32 to vector<10x128xf32>
    %314 = arith.addf %313, %312 : vector<10x128xf32>
    %315 = arith.mulf %304, %314 : vector<10x128xf32>
    %c1_95 = arith.constant 1 : index
    %c0_96 = arith.constant 0 : index
    %c0_97 = arith.constant 0 : index
    %316 = vector.load %arg5[%c1_95, %c0_96, %c0_97] : memref<2x128x64xf32, #tpu.memory_space<vmem>>, vector<1x128x64xf32>
    %317 = vector.shape_cast %316 : vector<1x128x64xf32> to vector<128x64xf32>
    %cst_98 = arith.constant dense<0.000000e+00> : vector<10x64xf32>
    %318 = tpu.matmul %315, %317, %cst_98 {dimension_numbers = #tpu.dot_dimension_numbers<[1], [0], [0], [1], [0, 0, 1, 1], [], []>} : vector<10x128xf32>, vector<128x64xf32>, vector<10x64xf32> -> vector<10x64xf32>
    %319 = arith.addf %275, %318 : vector<10x64xf32>
    %320 = vector.extract_strided_slice %174 {offsets = [7, 0], sizes = [1, 64], strides = [1, 1]} : vector<8x192xf32> to vector<1x64xf32>
    %321 = vector.broadcast %320 : vector<1x64xf32> to vector<10x64xf32>
    %322 = arith.addf %319, %321 : vector<10x64xf32>
    %c0_99 = arith.constant 0 : index
    %c0_100 = arith.constant 0 : index
    %323 = vector.load %arg7[%c0_99, %c0_100] : memref<3x128xf32, #tpu.memory_space<vmem>>, vector<1x64xf32>
    %c1_101 = arith.constant 1 : index
    %c0_102 = arith.constant 0 : index
    %324 = vector.load %arg7[%c1_101, %c0_102] : memref<3x128xf32, #tpu.memory_space<vmem>>, vector<1x64xf32>
    %cst_103 = arith.constant dense<0.000000e+00> : vector<10xf32>
    %325 = vector.multi_reduction <add>, %322, %cst_103 [1] : vector<10x64xf32> to vector<10xf32>
    %326 = vector.shape_cast %325 : vector<10xf32> to vector<10x1xf32>
    %cst_104 = arith.constant 6.400000e+01 : f32
    %327 = vector.broadcast %cst_104 : f32 to vector<10x1xf32>
    %328 = arith.divf %326, %327 : vector<10x1xf32>
    %329 = vector.broadcast %328 : vector<10x1xf32> to vector<10x64xf32>
    %330 = arith.subf %322, %329 : vector<10x64xf32>
    %331 = arith.mulf %330, %330 : vector<10x64xf32>
    %cst_105 = arith.constant dense<0.000000e+00> : vector<10xf32>
    %332 = vector.multi_reduction <add>, %331, %cst_105 [1] : vector<10x64xf32> to vector<10xf32>
    %333 = vector.shape_cast %332 : vector<10xf32> to vector<10x1xf32>
    %cst_106 = arith.constant 6.400000e+01 : f32
    %334 = vector.broadcast %cst_106 : f32 to vector<10x1xf32>
    %335 = arith.divf %333, %334 : vector<10x1xf32>
    %cst_107 = arith.constant 9.99999996E-13 : f32
    %336 = vector.broadcast %cst_107 : f32 to vector<10x1xf32>
    %337 = arith.addf %335, %336 : vector<10x1xf32>
    %338 = math.rsqrt %337 : vector<10x1xf32>
    %339 = vector.broadcast %338 : vector<10x1xf32> to vector<10x64xf32>
    %340 = arith.mulf %330, %339 : vector<10x64xf32>
    %341 = vector.broadcast %323 : vector<1x64xf32> to vector<10x64xf32>
    %342 = arith.mulf %340, %341 : vector<10x64xf32>
    %343 = vector.broadcast %324 : vector<1x64xf32> to vector<10x64xf32>
    %344 = arith.addf %342, %343 : vector<10x64xf32>
    %345 = vector.extract_strided_slice %344 {offsets = [0, 0], sizes = [4, 64], strides = [1, 1]} : vector<10x64xf32> to vector<4x64xf32>
    %346 = vector.extract_strided_slice %344 {offsets = [5, 0], sizes = [4, 64], strides = [1, 1]} : vector<10x64xf32> to vector<4x64xf32>
    %347 = tpu.concatenate %345, %346 in 0 : vector<4x64xf32>, vector<4x64xf32> -> vector<8x64xf32>
    %c0_108 = arith.constant 0 : index
    %c0_109 = arith.constant 0 : index
    %348 = vector.load %arg9[%c0_108, %c0_109] : memref<64x32xf32, #tpu.memory_space<vmem>>, vector<64x32xf32>
    %cst_110 = arith.constant dense<0.000000e+00> : vector<8x32xf32>
    %349 = tpu.matmul %347, %348, %cst_110 {dimension_numbers = #tpu.dot_dimension_numbers<[1], [0], [0], [1], [0, 0, 1, 1], [], []>} : vector<8x64xf32>, vector<64x32xf32>, vector<8x32xf32> -> vector<8x32xf32>
    %c0_111 = arith.constant 0 : index
    %c0_112 = arith.constant 0 : index
    %350 = vector.load %arg10[%c0_111, %c0_112] : memref<4x32xf32, #tpu.memory_space<vmem>>, vector<4x32xf32>
    %351 = tpu.concatenate %350, %350 in 0 : vector<4x32xf32>, vector<4x32xf32> -> vector<8x32xf32>
    %352 = arith.addf %349, %351 : vector<8x32xf32>
    %c0_113 = arith.constant 0 : index
    %c0_114 = arith.constant 0 : index
    %353 = vector.load %arg8[%c0_113, %c0_114] : memref<12x32xf32, #tpu.memory_space<vmem>>, vector<12x32xf32>
    %c0_115 = arith.constant 0 : index
    %c0_116 = arith.constant 0 : index
    %c0_117 = arith.constant 0 : index
    %354 = vector.load %arg12[%c0_115, %c0_116, %c0_117] : memref<2x32x320xf32, #tpu.memory_space<vmem>>, vector<1x32x320xf32>
    %355 = vector.shape_cast %354 : vector<1x32x320xf32> to vector<32x320xf32>
    %c0_118 = arith.constant 0 : index
    %c0_119 = arith.constant 0 : index
    %c0_120 = arith.constant 0 : index
    %356 = vector.load %arg14[%c0_118, %c0_119, %c0_120] : memref<2x13x96xf32, #tpu.memory_space<vmem>>, vector<1x13x96xf32>
    %357 = vector.shape_cast %356 : vector<1x13x96xf32> to vector<13x96xf32>
    %358 = vector.extract_strided_slice %355 {offsets = [0, 0], sizes = [32, 96], strides = [1, 1]} : vector<32x320xf32> to vector<32x96xf32>
    %cst_121 = arith.constant dense<0.000000e+00> : vector<12x96xf32>
    %359 = tpu.matmul %353, %358, %cst_121 {dimension_numbers = #tpu.dot_dimension_numbers<[1], [0], [0], [1], [0, 0, 1, 1], [], []>} : vector<12x32xf32>, vector<32x96xf32>, vector<12x96xf32> -> vector<12x96xf32>
    %360 = vector.extract_strided_slice %357 {offsets = [0, 0], sizes = [1, 96], strides = [1, 1]} : vector<13x96xf32> to vector<1x96xf32>
    %361 = vector.broadcast %360 : vector<1x96xf32> to vector<12x96xf32>
    %362 = arith.addf %359, %361 : vector<12x96xf32>
    %363 = vector.extract_strided_slice %362 {offsets = [0, 0], sizes = [12, 32], strides = [1, 1]} : vector<12x96xf32> to vector<12x32xf32>
    %364 = vector.extract_strided_slice %362 {offsets = [0, 32], sizes = [12, 32], strides = [1, 1]} : vector<12x96xf32> to vector<12x32xf32>
    %365 = vector.extract_strided_slice %362 {offsets = [0, 64], sizes = [12, 32], strides = [1, 1]} : vector<12x96xf32> to vector<12x32xf32>
    %366 = vector.extract_strided_slice %355 {offsets = [0, 96], sizes = [32, 32], strides = [1, 1]} : vector<32x320xf32> to vector<32x32xf32>
    %367 = vector.extract_strided_slice %357 {offsets = [1, 0], sizes = [1, 32], strides = [1, 1]} : vector<13x96xf32> to vector<1x32xf32>
    %368 = vector.extract_strided_slice %363 {offsets = [0, 0], sizes = [12, 8], strides = [1, 1]} : vector<12x32xf32> to vector<12x8xf32>
    %369 = vector.extract_strided_slice %364 {offsets = [0, 0], sizes = [12, 8], strides = [1, 1]} : vector<12x32xf32> to vector<12x8xf32>
    %cst_122 = arith.constant dense<0.000000e+00> : vector<12x12xf32>
    %370 = tpu.matmul %368, %369, %cst_122 {dimension_numbers = #tpu.dot_dimension_numbers<[1], [1], [0], [0], [0, 0, 1, 0], [], []>} : vector<12x8xf32>, vector<12x8xf32>, vector<12x12xf32> -> vector<12x12xf32>
    %371 = arith.addf %370, %4 : vector<12x12xf32>
    %cst_123 = arith.constant dense<0xFF800000> : vector<12xf32>
    %372 = vector.multi_reduction <maximumf>, %371, %cst_123 [1] : vector<12x12xf32> to vector<12xf32>
    %373 = vector.shape_cast %372 : vector<12xf32> to vector<12x1xf32>
    %374 = vector.broadcast %373 : vector<12x1xf32> to vector<12x12xf32>
    %375 = arith.subf %371, %374 : vector<12x12xf32>
    %376 = math.exp %375 : vector<12x12xf32>
    %cst_124 = arith.constant dense<0.000000e+00> : vector<12xf32>
    %377 = vector.multi_reduction <add>, %376, %cst_124 [1] : vector<12x12xf32> to vector<12xf32>
    %378 = vector.shape_cast %377 : vector<12xf32> to vector<12x1xf32>
    %379 = tpu.reciprocal %378 {approx = true} : vector<12x1xf32> -> vector<12x1xf32>
    %380 = vector.broadcast %379 : vector<12x1xf32> to vector<12x12xf32>
    %381 = arith.mulf %376, %380 : vector<12x12xf32>
    %382 = vector.extract_strided_slice %365 {offsets = [0, 0], sizes = [12, 8], strides = [1, 1]} : vector<12x32xf32> to vector<12x8xf32>
    %cst_125 = arith.constant dense<0.000000e+00> : vector<12x8xf32>
    %383 = tpu.matmul %381, %382, %cst_125 {dimension_numbers = #tpu.dot_dimension_numbers<[1], [0], [0], [1], [0, 0, 1, 1], [], []>} : vector<12x12xf32>, vector<12x8xf32>, vector<12x8xf32> -> vector<12x8xf32>
    %384 = vector.extract_strided_slice %363 {offsets = [0, 8], sizes = [12, 8], strides = [1, 1]} : vector<12x32xf32> to vector<12x8xf32>
    %385 = vector.extract_strided_slice %364 {offsets = [0, 8], sizes = [12, 8], strides = [1, 1]} : vector<12x32xf32> to vector<12x8xf32>
    %cst_126 = arith.constant dense<0.000000e+00> : vector<12x12xf32>
    %386 = tpu.matmul %384, %385, %cst_126 {dimension_numbers = #tpu.dot_dimension_numbers<[1], [1], [0], [0], [0, 0, 1, 0], [], []>} : vector<12x8xf32>, vector<12x8xf32>, vector<12x12xf32> -> vector<12x12xf32>
    %387 = arith.addf %386, %4 : vector<12x12xf32>
    %cst_127 = arith.constant dense<0xFF800000> : vector<12xf32>
    %388 = vector.multi_reduction <maximumf>, %387, %cst_127 [1] : vector<12x12xf32> to vector<12xf32>
    %389 = vector.shape_cast %388 : vector<12xf32> to vector<12x1xf32>
    %390 = vector.broadcast %389 : vector<12x1xf32> to vector<12x12xf32>
    %391 = arith.subf %387, %390 : vector<12x12xf32>
    %392 = math.exp %391 : vector<12x12xf32>
    %cst_128 = arith.constant dense<0.000000e+00> : vector<12xf32>
    %393 = vector.multi_reduction <add>, %392, %cst_128 [1] : vector<12x12xf32> to vector<12xf32>
    %394 = vector.shape_cast %393 : vector<12xf32> to vector<12x1xf32>
    %395 = tpu.reciprocal %394 {approx = true} : vector<12x1xf32> -> vector<12x1xf32>
    %396 = vector.broadcast %395 : vector<12x1xf32> to vector<12x12xf32>
    %397 = arith.mulf %392, %396 : vector<12x12xf32>
    %398 = vector.extract_strided_slice %365 {offsets = [0, 8], sizes = [12, 8], strides = [1, 1]} : vector<12x32xf32> to vector<12x8xf32>
    %cst_129 = arith.constant dense<0.000000e+00> : vector<12x8xf32>
    %399 = tpu.matmul %397, %398, %cst_129 {dimension_numbers = #tpu.dot_dimension_numbers<[1], [0], [0], [1], [0, 0, 1, 1], [], []>} : vector<12x12xf32>, vector<12x8xf32>, vector<12x8xf32> -> vector<12x8xf32>
    %400 = vector.extract_strided_slice %363 {offsets = [0, 16], sizes = [12, 8], strides = [1, 1]} : vector<12x32xf32> to vector<12x8xf32>
    %401 = vector.extract_strided_slice %364 {offsets = [0, 16], sizes = [12, 8], strides = [1, 1]} : vector<12x32xf32> to vector<12x8xf32>
    %cst_130 = arith.constant dense<0.000000e+00> : vector<12x12xf32>
    %402 = tpu.matmul %400, %401, %cst_130 {dimension_numbers = #tpu.dot_dimension_numbers<[1], [1], [0], [0], [0, 0, 1, 0], [], []>} : vector<12x8xf32>, vector<12x8xf32>, vector<12x12xf32> -> vector<12x12xf32>
    %403 = arith.addf %402, %4 : vector<12x12xf32>
    %cst_131 = arith.constant dense<0xFF800000> : vector<12xf32>
    %404 = vector.multi_reduction <maximumf>, %403, %cst_131 [1] : vector<12x12xf32> to vector<12xf32>
    %405 = vector.shape_cast %404 : vector<12xf32> to vector<12x1xf32>
    %406 = vector.broadcast %405 : vector<12x1xf32> to vector<12x12xf32>
    %407 = arith.subf %403, %406 : vector<12x12xf32>
    %408 = math.exp %407 : vector<12x12xf32>
    %cst_132 = arith.constant dense<0.000000e+00> : vector<12xf32>
    %409 = vector.multi_reduction <add>, %408, %cst_132 [1] : vector<12x12xf32> to vector<12xf32>
    %410 = vector.shape_cast %409 : vector<12xf32> to vector<12x1xf32>
    %411 = tpu.reciprocal %410 {approx = true} : vector<12x1xf32> -> vector<12x1xf32>
    %412 = vector.broadcast %411 : vector<12x1xf32> to vector<12x12xf32>
    %413 = arith.mulf %408, %412 : vector<12x12xf32>
    %414 = vector.extract_strided_slice %365 {offsets = [0, 16], sizes = [12, 8], strides = [1, 1]} : vector<12x32xf32> to vector<12x8xf32>
    %cst_133 = arith.constant dense<0.000000e+00> : vector<12x8xf32>
    %415 = tpu.matmul %413, %414, %cst_133 {dimension_numbers = #tpu.dot_dimension_numbers<[1], [0], [0], [1], [0, 0, 1, 1], [], []>} : vector<12x12xf32>, vector<12x8xf32>, vector<12x8xf32> -> vector<12x8xf32>
    %416 = vector.extract_strided_slice %363 {offsets = [0, 24], sizes = [12, 8], strides = [1, 1]} : vector<12x32xf32> to vector<12x8xf32>
    %417 = vector.extract_strided_slice %364 {offsets = [0, 24], sizes = [12, 8], strides = [1, 1]} : vector<12x32xf32> to vector<12x8xf32>
    %cst_134 = arith.constant dense<0.000000e+00> : vector<12x12xf32>
    %418 = tpu.matmul %416, %417, %cst_134 {dimension_numbers = #tpu.dot_dimension_numbers<[1], [1], [0], [0], [0, 0, 1, 0], [], []>} : vector<12x8xf32>, vector<12x8xf32>, vector<12x12xf32> -> vector<12x12xf32>
    %419 = arith.addf %418, %4 : vector<12x12xf32>
    %cst_135 = arith.constant dense<0xFF800000> : vector<12xf32>
    %420 = vector.multi_reduction <maximumf>, %419, %cst_135 [1] : vector<12x12xf32> to vector<12xf32>
    %421 = vector.shape_cast %420 : vector<12xf32> to vector<12x1xf32>
    %422 = vector.broadcast %421 : vector<12x1xf32> to vector<12x12xf32>
    %423 = arith.subf %419, %422 : vector<12x12xf32>
    %424 = math.exp %423 : vector<12x12xf32>
    %cst_136 = arith.constant dense<0.000000e+00> : vector<12xf32>
    %425 = vector.multi_reduction <add>, %424, %cst_136 [1] : vector<12x12xf32> to vector<12xf32>
    %426 = vector.shape_cast %425 : vector<12xf32> to vector<12x1xf32>
    %427 = tpu.reciprocal %426 {approx = true} : vector<12x1xf32> -> vector<12x1xf32>
    %428 = vector.broadcast %427 : vector<12x1xf32> to vector<12x12xf32>
    %429 = arith.mulf %424, %428 : vector<12x12xf32>
    %430 = vector.extract_strided_slice %365 {offsets = [0, 24], sizes = [12, 8], strides = [1, 1]} : vector<12x32xf32> to vector<12x8xf32>
    %cst_137 = arith.constant dense<0.000000e+00> : vector<12x8xf32>
    %431 = tpu.matmul %429, %430, %cst_137 {dimension_numbers = #tpu.dot_dimension_numbers<[1], [0], [0], [1], [0, 0, 1, 1], [], []>} : vector<12x12xf32>, vector<12x8xf32>, vector<12x8xf32> -> vector<12x8xf32>
    %432 = tpu.concatenate %383, %399, %415, %431 in 1 : vector<12x8xf32>, vector<12x8xf32>, vector<12x8xf32>, vector<12x8xf32> -> vector<12x32xf32>
    %cst_138 = arith.constant dense<0.000000e+00> : vector<12x32xf32>
    %433 = tpu.matmul %432, %366, %cst_138 {dimension_numbers = #tpu.dot_dimension_numbers<[1], [0], [0], [1], [0, 0, 1, 1], [], []>} : vector<12x32xf32>, vector<32x32xf32>, vector<12x32xf32> -> vector<12x32xf32>
    %434 = vector.broadcast %367 : vector<1x32xf32> to vector<12x32xf32>
    %435 = arith.addf %433, %434 : vector<12x32xf32>
    %436 = arith.addf %353, %435 : vector<12x32xf32>
    %437 = vector.extract_strided_slice %357 {offsets = [2, 0], sizes = [1, 32], strides = [1, 1]} : vector<13x96xf32> to vector<1x32xf32>
    %438 = vector.extract_strided_slice %357 {offsets = [3, 0], sizes = [1, 32], strides = [1, 1]} : vector<13x96xf32> to vector<1x32xf32>
    %cst_139 = arith.constant dense<0.000000e+00> : vector<12xf32>
    %439 = vector.multi_reduction <add>, %436, %cst_139 [1] : vector<12x32xf32> to vector<12xf32>
    %440 = vector.shape_cast %439 : vector<12xf32> to vector<12x1xf32>
    %cst_140 = arith.constant 3.200000e+01 : f32
    %441 = vector.broadcast %cst_140 : f32 to vector<12x1xf32>
    %442 = arith.divf %440, %441 : vector<12x1xf32>
    %443 = vector.broadcast %442 : vector<12x1xf32> to vector<12x32xf32>
    %444 = arith.subf %436, %443 : vector<12x32xf32>
    %445 = arith.mulf %444, %444 : vector<12x32xf32>
    %cst_141 = arith.constant dense<0.000000e+00> : vector<12xf32>
    %446 = vector.multi_reduction <add>, %445, %cst_141 [1] : vector<12x32xf32> to vector<12xf32>
    %447 = vector.shape_cast %446 : vector<12xf32> to vector<12x1xf32>
    %cst_142 = arith.constant 3.200000e+01 : f32
    %448 = vector.broadcast %cst_142 : f32 to vector<12x1xf32>
    %449 = arith.divf %447, %448 : vector<12x1xf32>
    %cst_143 = arith.constant 9.99999974E-6 : f32
    %450 = vector.broadcast %cst_143 : f32 to vector<12x1xf32>
    %451 = arith.addf %449, %450 : vector<12x1xf32>
    %452 = math.rsqrt %451 : vector<12x1xf32>
    %453 = vector.broadcast %452 : vector<12x1xf32> to vector<12x32xf32>
    %454 = arith.mulf %444, %453 : vector<12x32xf32>
    %455 = vector.broadcast %437 : vector<1x32xf32> to vector<12x32xf32>
    %456 = arith.mulf %454, %455 : vector<12x32xf32>
    %457 = vector.broadcast %438 : vector<1x32xf32> to vector<12x32xf32>
    %458 = arith.addf %456, %457 : vector<12x32xf32>
    %459 = vector.extract_strided_slice %355 {offsets = [0, 128], sizes = [32, 32], strides = [1, 1]} : vector<32x320xf32> to vector<32x32xf32>
    %cst_144 = arith.constant dense<0.000000e+00> : vector<12x32xf32>
    %460 = tpu.matmul %458, %459, %cst_144 {dimension_numbers = #tpu.dot_dimension_numbers<[1], [0], [0], [1], [0, 0, 1, 1], [], []>} : vector<12x32xf32>, vector<32x32xf32>, vector<12x32xf32> -> vector<12x32xf32>
    %461 = vector.extract_strided_slice %357 {offsets = [4, 0], sizes = [1, 32], strides = [1, 1]} : vector<13x96xf32> to vector<1x32xf32>
    %462 = vector.broadcast %461 : vector<1x32xf32> to vector<12x32xf32>
    %463 = arith.addf %460, %462 : vector<12x32xf32>
    %464 = vector.extract_strided_slice %355 {offsets = [0, 160], sizes = [32, 64], strides = [1, 1]} : vector<32x320xf32> to vector<32x64xf32>
    %cst_145 = arith.constant dense<0.000000e+00> : vector<8x64xf32>
    %465 = tpu.matmul %352, %464, %cst_145 {dimension_numbers = #tpu.dot_dimension_numbers<[1], [0], [0], [1], [0, 0, 1, 1], [], []>} : vector<8x32xf32>, vector<32x64xf32>, vector<8x64xf32> -> vector<8x64xf32>
    %466 = vector.extract_strided_slice %357 {offsets = [5, 0], sizes = [1, 64], strides = [1, 1]} : vector<13x96xf32> to vector<1x64xf32>
    %467 = vector.broadcast %466 : vector<1x64xf32> to vector<8x64xf32>
    %468 = arith.addf %465, %467 : vector<8x64xf32>
    %469 = vector.extract_strided_slice %468 {offsets = [0, 0], sizes = [8, 32], strides = [1, 1]} : vector<8x64xf32> to vector<8x32xf32>
    %470 = vector.extract_strided_slice %468 {offsets = [0, 32], sizes = [8, 32], strides = [1, 1]} : vector<8x64xf32> to vector<8x32xf32>
    %471 = vector.extract_strided_slice %355 {offsets = [0, 224], sizes = [32, 32], strides = [1, 1]} : vector<32x320xf32> to vector<32x32xf32>
    %472 = vector.extract_strided_slice %357 {offsets = [6, 0], sizes = [1, 32], strides = [1, 1]} : vector<13x96xf32> to vector<1x32xf32>
    %473 = vector.extract_strided_slice %463 {offsets = [0, 0], sizes = [12, 8], strides = [1, 1]} : vector<12x32xf32> to vector<12x8xf32>
    %474 = vector.extract_strided_slice %469 {offsets = [0, 0], sizes = [8, 8], strides = [1, 1]} : vector<8x32xf32> to vector<8x8xf32>
    %cst_146 = arith.constant dense<0.000000e+00> : vector<12x8xf32>
    %475 = tpu.matmul %473, %474, %cst_146 {dimension_numbers = #tpu.dot_dimension_numbers<[1], [1], [0], [0], [0, 0, 1, 0], [], []>} : vector<12x8xf32>, vector<8x8xf32>, vector<12x8xf32> -> vector<12x8xf32>
    %476 = arith.addf %475, %6 : vector<12x8xf32>
    %cst_147 = arith.constant dense<0xFF800000> : vector<12xf32>
    %477 = vector.multi_reduction <maximumf>, %476, %cst_147 [1] : vector<12x8xf32> to vector<12xf32>
    %478 = vector.shape_cast %477 : vector<12xf32> to vector<12x1xf32>
    %479 = vector.broadcast %478 : vector<12x1xf32> to vector<12x8xf32>
    %480 = arith.subf %476, %479 : vector<12x8xf32>
    %481 = math.exp %480 : vector<12x8xf32>
    %cst_148 = arith.constant dense<0.000000e+00> : vector<12xf32>
    %482 = vector.multi_reduction <add>, %481, %cst_148 [1] : vector<12x8xf32> to vector<12xf32>
    %483 = vector.shape_cast %482 : vector<12xf32> to vector<12x1xf32>
    %484 = tpu.reciprocal %483 {approx = true} : vector<12x1xf32> -> vector<12x1xf32>
    %485 = vector.broadcast %484 : vector<12x1xf32> to vector<12x8xf32>
    %486 = arith.mulf %481, %485 : vector<12x8xf32>
    %487 = vector.extract_strided_slice %470 {offsets = [0, 0], sizes = [8, 8], strides = [1, 1]} : vector<8x32xf32> to vector<8x8xf32>
    %cst_149 = arith.constant dense<0.000000e+00> : vector<12x8xf32>
    %488 = tpu.matmul %486, %487, %cst_149 {dimension_numbers = #tpu.dot_dimension_numbers<[1], [0], [0], [1], [0, 0, 1, 1], [], []>} : vector<12x8xf32>, vector<8x8xf32>, vector<12x8xf32> -> vector<12x8xf32>
    %489 = vector.extract_strided_slice %463 {offsets = [0, 8], sizes = [12, 8], strides = [1, 1]} : vector<12x32xf32> to vector<12x8xf32>
    %490 = vector.extract_strided_slice %469 {offsets = [0, 8], sizes = [8, 8], strides = [1, 1]} : vector<8x32xf32> to vector<8x8xf32>
    %cst_150 = arith.constant dense<0.000000e+00> : vector<12x8xf32>
    %491 = tpu.matmul %489, %490, %cst_150 {dimension_numbers = #tpu.dot_dimension_numbers<[1], [1], [0], [0], [0, 0, 1, 0], [], []>} : vector<12x8xf32>, vector<8x8xf32>, vector<12x8xf32> -> vector<12x8xf32>
    %492 = arith.addf %491, %6 : vector<12x8xf32>
    %cst_151 = arith.constant dense<0xFF800000> : vector<12xf32>
    %493 = vector.multi_reduction <maximumf>, %492, %cst_151 [1] : vector<12x8xf32> to vector<12xf32>
    %494 = vector.shape_cast %493 : vector<12xf32> to vector<12x1xf32>
    %495 = vector.broadcast %494 : vector<12x1xf32> to vector<12x8xf32>
    %496 = arith.subf %492, %495 : vector<12x8xf32>
    %497 = math.exp %496 : vector<12x8xf32>
    %cst_152 = arith.constant dense<0.000000e+00> : vector<12xf32>
    %498 = vector.multi_reduction <add>, %497, %cst_152 [1] : vector<12x8xf32> to vector<12xf32>
    %499 = vector.shape_cast %498 : vector<12xf32> to vector<12x1xf32>
    %500 = tpu.reciprocal %499 {approx = true} : vector<12x1xf32> -> vector<12x1xf32>
    %501 = vector.broadcast %500 : vector<12x1xf32> to vector<12x8xf32>
    %502 = arith.mulf %497, %501 : vector<12x8xf32>
    %503 = vector.extract_strided_slice %470 {offsets = [0, 8], sizes = [8, 8], strides = [1, 1]} : vector<8x32xf32> to vector<8x8xf32>
    %cst_153 = arith.constant dense<0.000000e+00> : vector<12x8xf32>
    %504 = tpu.matmul %502, %503, %cst_153 {dimension_numbers = #tpu.dot_dimension_numbers<[1], [0], [0], [1], [0, 0, 1, 1], [], []>} : vector<12x8xf32>, vector<8x8xf32>, vector<12x8xf32> -> vector<12x8xf32>
    %505 = vector.extract_strided_slice %463 {offsets = [0, 16], sizes = [12, 8], strides = [1, 1]} : vector<12x32xf32> to vector<12x8xf32>
    %506 = vector.extract_strided_slice %469 {offsets = [0, 16], sizes = [8, 8], strides = [1, 1]} : vector<8x32xf32> to vector<8x8xf32>
    %cst_154 = arith.constant dense<0.000000e+00> : vector<12x8xf32>
    %507 = tpu.matmul %505, %506, %cst_154 {dimension_numbers = #tpu.dot_dimension_numbers<[1], [1], [0], [0], [0, 0, 1, 0], [], []>} : vector<12x8xf32>, vector<8x8xf32>, vector<12x8xf32> -> vector<12x8xf32>
    %508 = arith.addf %507, %6 : vector<12x8xf32>
    %cst_155 = arith.constant dense<0xFF800000> : vector<12xf32>
    %509 = vector.multi_reduction <maximumf>, %508, %cst_155 [1] : vector<12x8xf32> to vector<12xf32>
    %510 = vector.shape_cast %509 : vector<12xf32> to vector<12x1xf32>
    %511 = vector.broadcast %510 : vector<12x1xf32> to vector<12x8xf32>
    %512 = arith.subf %508, %511 : vector<12x8xf32>
    %513 = math.exp %512 : vector<12x8xf32>
    %cst_156 = arith.constant dense<0.000000e+00> : vector<12xf32>
    %514 = vector.multi_reduction <add>, %513, %cst_156 [1] : vector<12x8xf32> to vector<12xf32>
    %515 = vector.shape_cast %514 : vector<12xf32> to vector<12x1xf32>
    %516 = tpu.reciprocal %515 {approx = true} : vector<12x1xf32> -> vector<12x1xf32>
    %517 = vector.broadcast %516 : vector<12x1xf32> to vector<12x8xf32>
    %518 = arith.mulf %513, %517 : vector<12x8xf32>
    %519 = vector.extract_strided_slice %470 {offsets = [0, 16], sizes = [8, 8], strides = [1, 1]} : vector<8x32xf32> to vector<8x8xf32>
    %cst_157 = arith.constant dense<0.000000e+00> : vector<12x8xf32>
    %520 = tpu.matmul %518, %519, %cst_157 {dimension_numbers = #tpu.dot_dimension_numbers<[1], [0], [0], [1], [0, 0, 1, 1], [], []>} : vector<12x8xf32>, vector<8x8xf32>, vector<12x8xf32> -> vector<12x8xf32>
    %521 = vector.extract_strided_slice %463 {offsets = [0, 24], sizes = [12, 8], strides = [1, 1]} : vector<12x32xf32> to vector<12x8xf32>
    %522 = vector.extract_strided_slice %469 {offsets = [0, 24], sizes = [8, 8], strides = [1, 1]} : vector<8x32xf32> to vector<8x8xf32>
    %cst_158 = arith.constant dense<0.000000e+00> : vector<12x8xf32>
    %523 = tpu.matmul %521, %522, %cst_158 {dimension_numbers = #tpu.dot_dimension_numbers<[1], [1], [0], [0], [0, 0, 1, 0], [], []>} : vector<12x8xf32>, vector<8x8xf32>, vector<12x8xf32> -> vector<12x8xf32>
    %524 = arith.addf %523, %6 : vector<12x8xf32>
    %cst_159 = arith.constant dense<0xFF800000> : vector<12xf32>
    %525 = vector.multi_reduction <maximumf>, %524, %cst_159 [1] : vector<12x8xf32> to vector<12xf32>
    %526 = vector.shape_cast %525 : vector<12xf32> to vector<12x1xf32>
    %527 = vector.broadcast %526 : vector<12x1xf32> to vector<12x8xf32>
    %528 = arith.subf %524, %527 : vector<12x8xf32>
    %529 = math.exp %528 : vector<12x8xf32>
    %cst_160 = arith.constant dense<0.000000e+00> : vector<12xf32>
    %530 = vector.multi_reduction <add>, %529, %cst_160 [1] : vector<12x8xf32> to vector<12xf32>
    %531 = vector.shape_cast %530 : vector<12xf32> to vector<12x1xf32>
    %532 = tpu.reciprocal %531 {approx = true} : vector<12x1xf32> -> vector<12x1xf32>
    %533 = vector.broadcast %532 : vector<12x1xf32> to vector<12x8xf32>
    %534 = arith.mulf %529, %533 : vector<12x8xf32>
    %535 = vector.extract_strided_slice %470 {offsets = [0, 24], sizes = [8, 8], strides = [1, 1]} : vector<8x32xf32> to vector<8x8xf32>
    %cst_161 = arith.constant dense<0.000000e+00> : vector<12x8xf32>
    %536 = tpu.matmul %534, %535, %cst_161 {dimension_numbers = #tpu.dot_dimension_numbers<[1], [0], [0], [1], [0, 0, 1, 1], [], []>} : vector<12x8xf32>, vector<8x8xf32>, vector<12x8xf32> -> vector<12x8xf32>
    %537 = tpu.concatenate %488, %504, %520, %536 in 1 : vector<12x8xf32>, vector<12x8xf32>, vector<12x8xf32>, vector<12x8xf32> -> vector<12x32xf32>
    %cst_162 = arith.constant dense<0.000000e+00> : vector<12x32xf32>
    %538 = tpu.matmul %537, %471, %cst_162 {dimension_numbers = #tpu.dot_dimension_numbers<[1], [0], [0], [1], [0, 0, 1, 1], [], []>} : vector<12x32xf32>, vector<32x32xf32>, vector<12x32xf32> -> vector<12x32xf32>
    %539 = vector.broadcast %472 : vector<1x32xf32> to vector<12x32xf32>
    %540 = arith.addf %538, %539 : vector<12x32xf32>
    %541 = arith.addf %458, %540 : vector<12x32xf32>
    %542 = vector.extract_strided_slice %357 {offsets = [7, 0], sizes = [1, 32], strides = [1, 1]} : vector<13x96xf32> to vector<1x32xf32>
    %543 = vector.extract_strided_slice %357 {offsets = [8, 0], sizes = [1, 32], strides = [1, 1]} : vector<13x96xf32> to vector<1x32xf32>
    %cst_163 = arith.constant dense<0.000000e+00> : vector<12xf32>
    %544 = vector.multi_reduction <add>, %541, %cst_163 [1] : vector<12x32xf32> to vector<12xf32>
    %545 = vector.shape_cast %544 : vector<12xf32> to vector<12x1xf32>
    %cst_164 = arith.constant 3.200000e+01 : f32
    %546 = vector.broadcast %cst_164 : f32 to vector<12x1xf32>
    %547 = arith.divf %545, %546 : vector<12x1xf32>
    %548 = vector.broadcast %547 : vector<12x1xf32> to vector<12x32xf32>
    %549 = arith.subf %541, %548 : vector<12x32xf32>
    %550 = arith.mulf %549, %549 : vector<12x32xf32>
    %cst_165 = arith.constant dense<0.000000e+00> : vector<12xf32>
    %551 = vector.multi_reduction <add>, %550, %cst_165 [1] : vector<12x32xf32> to vector<12xf32>
    %552 = vector.shape_cast %551 : vector<12xf32> to vector<12x1xf32>
    %cst_166 = arith.constant 3.200000e+01 : f32
    %553 = vector.broadcast %cst_166 : f32 to vector<12x1xf32>
    %554 = arith.divf %552, %553 : vector<12x1xf32>
    %cst_167 = arith.constant 9.99999974E-6 : f32
    %555 = vector.broadcast %cst_167 : f32 to vector<12x1xf32>
    %556 = arith.addf %554, %555 : vector<12x1xf32>
    %557 = math.rsqrt %556 : vector<12x1xf32>
    %558 = vector.broadcast %557 : vector<12x1xf32> to vector<12x32xf32>
    %559 = arith.mulf %549, %558 : vector<12x32xf32>
    %560 = vector.broadcast %542 : vector<1x32xf32> to vector<12x32xf32>
    %561 = arith.mulf %559, %560 : vector<12x32xf32>
    %562 = vector.broadcast %543 : vector<1x32xf32> to vector<12x32xf32>
    %563 = arith.addf %561, %562 : vector<12x32xf32>
    %564 = vector.extract_strided_slice %355 {offsets = [0, 256], sizes = [32, 64], strides = [1, 1]} : vector<32x320xf32> to vector<32x64xf32>
    %cst_168 = arith.constant dense<0.000000e+00> : vector<12x64xf32>
    %565 = tpu.matmul %563, %564, %cst_168 {dimension_numbers = #tpu.dot_dimension_numbers<[1], [0], [0], [1], [0, 0, 1, 1], [], []>} : vector<12x32xf32>, vector<32x64xf32>, vector<12x64xf32> -> vector<12x64xf32>
    %566 = vector.extract_strided_slice %357 {offsets = [9, 0], sizes = [1, 64], strides = [1, 1]} : vector<13x96xf32> to vector<1x64xf32>
    %567 = vector.broadcast %566 : vector<1x64xf32> to vector<12x64xf32>
    %568 = arith.addf %565, %567 : vector<12x64xf32>
    %cst_169 = arith.constant 0.000000e+00 : f32
    %569 = vector.broadcast %cst_169 : f32 to vector<12x64xf32>
    %570 = arith.maximumf %568, %569 : vector<12x64xf32>
    %c0_170 = arith.constant 0 : index
    %c0_171 = arith.constant 0 : index
    %c0_172 = arith.constant 0 : index
    %571 = vector.load %arg13[%c0_170, %c0_171, %c0_172] : memref<2x64x32xf32, #tpu.memory_space<vmem>>, vector<1x64x32xf32>
    %572 = vector.shape_cast %571 : vector<1x64x32xf32> to vector<64x32xf32>
    %cst_173 = arith.constant dense<0.000000e+00> : vector<12x32xf32>
    %573 = tpu.matmul %570, %572, %cst_173 {dimension_numbers = #tpu.dot_dimension_numbers<[1], [0], [0], [1], [0, 0, 1, 1], [], []>} : vector<12x64xf32>, vector<64x32xf32>, vector<12x32xf32> -> vector<12x32xf32>
    %574 = vector.extract_strided_slice %357 {offsets = [10, 0], sizes = [1, 32], strides = [1, 1]} : vector<13x96xf32> to vector<1x32xf32>
    %575 = vector.broadcast %574 : vector<1x32xf32> to vector<12x32xf32>
    %576 = arith.addf %573, %575 : vector<12x32xf32>
    %577 = arith.addf %563, %576 : vector<12x32xf32>
    %578 = vector.extract_strided_slice %357 {offsets = [11, 0], sizes = [1, 32], strides = [1, 1]} : vector<13x96xf32> to vector<1x32xf32>
    %579 = vector.extract_strided_slice %357 {offsets = [12, 0], sizes = [1, 32], strides = [1, 1]} : vector<13x96xf32> to vector<1x32xf32>
    %cst_174 = arith.constant dense<0.000000e+00> : vector<12xf32>
    %580 = vector.multi_reduction <add>, %577, %cst_174 [1] : vector<12x32xf32> to vector<12xf32>
    %581 = vector.shape_cast %580 : vector<12xf32> to vector<12x1xf32>
    %cst_175 = arith.constant 3.200000e+01 : f32
    %582 = vector.broadcast %cst_175 : f32 to vector<12x1xf32>
    %583 = arith.divf %581, %582 : vector<12x1xf32>
    %584 = vector.broadcast %583 : vector<12x1xf32> to vector<12x32xf32>
    %585 = arith.subf %577, %584 : vector<12x32xf32>
    %586 = arith.mulf %585, %585 : vector<12x32xf32>
    %cst_176 = arith.constant dense<0.000000e+00> : vector<12xf32>
    %587 = vector.multi_reduction <add>, %586, %cst_176 [1] : vector<12x32xf32> to vector<12xf32>
    %588 = vector.shape_cast %587 : vector<12xf32> to vector<12x1xf32>
    %cst_177 = arith.constant 3.200000e+01 : f32
    %589 = vector.broadcast %cst_177 : f32 to vector<12x1xf32>
    %590 = arith.divf %588, %589 : vector<12x1xf32>
    %cst_178 = arith.constant 9.99999974E-6 : f32
    %591 = vector.broadcast %cst_178 : f32 to vector<12x1xf32>
    %592 = arith.addf %590, %591 : vector<12x1xf32>
    %593 = math.rsqrt %592 : vector<12x1xf32>
    %594 = vector.broadcast %593 : vector<12x1xf32> to vector<12x32xf32>
    %595 = arith.mulf %585, %594 : vector<12x32xf32>
    %596 = vector.broadcast %578 : vector<1x32xf32> to vector<12x32xf32>
    %597 = arith.mulf %595, %596 : vector<12x32xf32>
    %598 = vector.broadcast %579 : vector<1x32xf32> to vector<12x32xf32>
    %599 = arith.addf %597, %598 : vector<12x32xf32>
    %c1_179 = arith.constant 1 : index
    %c0_180 = arith.constant 0 : index
    %c0_181 = arith.constant 0 : index
    %600 = vector.load %arg12[%c1_179, %c0_180, %c0_181] : memref<2x32x320xf32, #tpu.memory_space<vmem>>, vector<1x32x320xf32>
    %601 = vector.shape_cast %600 : vector<1x32x320xf32> to vector<32x320xf32>
    %c1_182 = arith.constant 1 : index
    %c0_183 = arith.constant 0 : index
    %c0_184 = arith.constant 0 : index
    %602 = vector.load %arg14[%c1_182, %c0_183, %c0_184] : memref<2x13x96xf32, #tpu.memory_space<vmem>>, vector<1x13x96xf32>
    %603 = vector.shape_cast %602 : vector<1x13x96xf32> to vector<13x96xf32>
    %604 = vector.extract_strided_slice %601 {offsets = [0, 0], sizes = [32, 96], strides = [1, 1]} : vector<32x320xf32> to vector<32x96xf32>
    %cst_185 = arith.constant dense<0.000000e+00> : vector<12x96xf32>
    %605 = tpu.matmul %599, %604, %cst_185 {dimension_numbers = #tpu.dot_dimension_numbers<[1], [0], [0], [1], [0, 0, 1, 1], [], []>} : vector<12x32xf32>, vector<32x96xf32>, vector<12x96xf32> -> vector<12x96xf32>
    %606 = vector.extract_strided_slice %603 {offsets = [0, 0], sizes = [1, 96], strides = [1, 1]} : vector<13x96xf32> to vector<1x96xf32>
    %607 = vector.broadcast %606 : vector<1x96xf32> to vector<12x96xf32>
    %608 = arith.addf %605, %607 : vector<12x96xf32>
    %609 = vector.extract_strided_slice %608 {offsets = [0, 0], sizes = [12, 32], strides = [1, 1]} : vector<12x96xf32> to vector<12x32xf32>
    %610 = vector.extract_strided_slice %608 {offsets = [0, 32], sizes = [12, 32], strides = [1, 1]} : vector<12x96xf32> to vector<12x32xf32>
    %611 = vector.extract_strided_slice %608 {offsets = [0, 64], sizes = [12, 32], strides = [1, 1]} : vector<12x96xf32> to vector<12x32xf32>
    %612 = vector.extract_strided_slice %601 {offsets = [0, 96], sizes = [32, 32], strides = [1, 1]} : vector<32x320xf32> to vector<32x32xf32>
    %613 = vector.extract_strided_slice %603 {offsets = [1, 0], sizes = [1, 32], strides = [1, 1]} : vector<13x96xf32> to vector<1x32xf32>
    %614 = vector.extract_strided_slice %609 {offsets = [0, 0], sizes = [12, 8], strides = [1, 1]} : vector<12x32xf32> to vector<12x8xf32>
    %615 = vector.extract_strided_slice %610 {offsets = [0, 0], sizes = [12, 8], strides = [1, 1]} : vector<12x32xf32> to vector<12x8xf32>
    %cst_186 = arith.constant dense<0.000000e+00> : vector<12x12xf32>
    %616 = tpu.matmul %614, %615, %cst_186 {dimension_numbers = #tpu.dot_dimension_numbers<[1], [1], [0], [0], [0, 0, 1, 0], [], []>} : vector<12x8xf32>, vector<12x8xf32>, vector<12x12xf32> -> vector<12x12xf32>
    %617 = arith.addf %616, %4 : vector<12x12xf32>
    %cst_187 = arith.constant dense<0xFF800000> : vector<12xf32>
    %618 = vector.multi_reduction <maximumf>, %617, %cst_187 [1] : vector<12x12xf32> to vector<12xf32>
    %619 = vector.shape_cast %618 : vector<12xf32> to vector<12x1xf32>
    %620 = vector.broadcast %619 : vector<12x1xf32> to vector<12x12xf32>
    %621 = arith.subf %617, %620 : vector<12x12xf32>
    %622 = math.exp %621 : vector<12x12xf32>
    %cst_188 = arith.constant dense<0.000000e+00> : vector<12xf32>
    %623 = vector.multi_reduction <add>, %622, %cst_188 [1] : vector<12x12xf32> to vector<12xf32>
    %624 = vector.shape_cast %623 : vector<12xf32> to vector<12x1xf32>
    %625 = tpu.reciprocal %624 {approx = true} : vector<12x1xf32> -> vector<12x1xf32>
    %626 = vector.broadcast %625 : vector<12x1xf32> to vector<12x12xf32>
    %627 = arith.mulf %622, %626 : vector<12x12xf32>
    %628 = vector.extract_strided_slice %611 {offsets = [0, 0], sizes = [12, 8], strides = [1, 1]} : vector<12x32xf32> to vector<12x8xf32>
    %cst_189 = arith.constant dense<0.000000e+00> : vector<12x8xf32>
    %629 = tpu.matmul %627, %628, %cst_189 {dimension_numbers = #tpu.dot_dimension_numbers<[1], [0], [0], [1], [0, 0, 1, 1], [], []>} : vector<12x12xf32>, vector<12x8xf32>, vector<12x8xf32> -> vector<12x8xf32>
    %630 = vector.extract_strided_slice %609 {offsets = [0, 8], sizes = [12, 8], strides = [1, 1]} : vector<12x32xf32> to vector<12x8xf32>
    %631 = vector.extract_strided_slice %610 {offsets = [0, 8], sizes = [12, 8], strides = [1, 1]} : vector<12x32xf32> to vector<12x8xf32>
    %cst_190 = arith.constant dense<0.000000e+00> : vector<12x12xf32>
    %632 = tpu.matmul %630, %631, %cst_190 {dimension_numbers = #tpu.dot_dimension_numbers<[1], [1], [0], [0], [0, 0, 1, 0], [], []>} : vector<12x8xf32>, vector<12x8xf32>, vector<12x12xf32> -> vector<12x12xf32>
    %633 = arith.addf %632, %4 : vector<12x12xf32>
    %cst_191 = arith.constant dense<0xFF800000> : vector<12xf32>
    %634 = vector.multi_reduction <maximumf>, %633, %cst_191 [1] : vector<12x12xf32> to vector<12xf32>
    %635 = vector.shape_cast %634 : vector<12xf32> to vector<12x1xf32>
    %636 = vector.broadcast %635 : vector<12x1xf32> to vector<12x12xf32>
    %637 = arith.subf %633, %636 : vector<12x12xf32>
    %638 = math.exp %637 : vector<12x12xf32>
    %cst_192 = arith.constant dense<0.000000e+00> : vector<12xf32>
    %639 = vector.multi_reduction <add>, %638, %cst_192 [1] : vector<12x12xf32> to vector<12xf32>
    %640 = vector.shape_cast %639 : vector<12xf32> to vector<12x1xf32>
    %641 = tpu.reciprocal %640 {approx = true} : vector<12x1xf32> -> vector<12x1xf32>
    %642 = vector.broadcast %641 : vector<12x1xf32> to vector<12x12xf32>
    %643 = arith.mulf %638, %642 : vector<12x12xf32>
    %644 = vector.extract_strided_slice %611 {offsets = [0, 8], sizes = [12, 8], strides = [1, 1]} : vector<12x32xf32> to vector<12x8xf32>
    %cst_193 = arith.constant dense<0.000000e+00> : vector<12x8xf32>
    %645 = tpu.matmul %643, %644, %cst_193 {dimension_numbers = #tpu.dot_dimension_numbers<[1], [0], [0], [1], [0, 0, 1, 1], [], []>} : vector<12x12xf32>, vector<12x8xf32>, vector<12x8xf32> -> vector<12x8xf32>
    %646 = vector.extract_strided_slice %609 {offsets = [0, 16], sizes = [12, 8], strides = [1, 1]} : vector<12x32xf32> to vector<12x8xf32>
    %647 = vector.extract_strided_slice %610 {offsets = [0, 16], sizes = [12, 8], strides = [1, 1]} : vector<12x32xf32> to vector<12x8xf32>
    %cst_194 = arith.constant dense<0.000000e+00> : vector<12x12xf32>
    %648 = tpu.matmul %646, %647, %cst_194 {dimension_numbers = #tpu.dot_dimension_numbers<[1], [1], [0], [0], [0, 0, 1, 0], [], []>} : vector<12x8xf32>, vector<12x8xf32>, vector<12x12xf32> -> vector<12x12xf32>
    %649 = arith.addf %648, %4 : vector<12x12xf32>
    %cst_195 = arith.constant dense<0xFF800000> : vector<12xf32>
    %650 = vector.multi_reduction <maximumf>, %649, %cst_195 [1] : vector<12x12xf32> to vector<12xf32>
    %651 = vector.shape_cast %650 : vector<12xf32> to vector<12x1xf32>
    %652 = vector.broadcast %651 : vector<12x1xf32> to vector<12x12xf32>
    %653 = arith.subf %649, %652 : vector<12x12xf32>
    %654 = math.exp %653 : vector<12x12xf32>
    %cst_196 = arith.constant dense<0.000000e+00> : vector<12xf32>
    %655 = vector.multi_reduction <add>, %654, %cst_196 [1] : vector<12x12xf32> to vector<12xf32>
    %656 = vector.shape_cast %655 : vector<12xf32> to vector<12x1xf32>
    %657 = tpu.reciprocal %656 {approx = true} : vector<12x1xf32> -> vector<12x1xf32>
    %658 = vector.broadcast %657 : vector<12x1xf32> to vector<12x12xf32>
    %659 = arith.mulf %654, %658 : vector<12x12xf32>
    %660 = vector.extract_strided_slice %611 {offsets = [0, 16], sizes = [12, 8], strides = [1, 1]} : vector<12x32xf32> to vector<12x8xf32>
    %cst_197 = arith.constant dense<0.000000e+00> : vector<12x8xf32>
    %661 = tpu.matmul %659, %660, %cst_197 {dimension_numbers = #tpu.dot_dimension_numbers<[1], [0], [0], [1], [0, 0, 1, 1], [], []>} : vector<12x12xf32>, vector<12x8xf32>, vector<12x8xf32> -> vector<12x8xf32>
    %662 = vector.extract_strided_slice %609 {offsets = [0, 24], sizes = [12, 8], strides = [1, 1]} : vector<12x32xf32> to vector<12x8xf32>
    %663 = vector.extract_strided_slice %610 {offsets = [0, 24], sizes = [12, 8], strides = [1, 1]} : vector<12x32xf32> to vector<12x8xf32>
    %cst_198 = arith.constant dense<0.000000e+00> : vector<12x12xf32>
    %664 = tpu.matmul %662, %663, %cst_198 {dimension_numbers = #tpu.dot_dimension_numbers<[1], [1], [0], [0], [0, 0, 1, 0], [], []>} : vector<12x8xf32>, vector<12x8xf32>, vector<12x12xf32> -> vector<12x12xf32>
    %665 = arith.addf %664, %4 : vector<12x12xf32>
    %cst_199 = arith.constant dense<0xFF800000> : vector<12xf32>
    %666 = vector.multi_reduction <maximumf>, %665, %cst_199 [1] : vector<12x12xf32> to vector<12xf32>
    %667 = vector.shape_cast %666 : vector<12xf32> to vector<12x1xf32>
    %668 = vector.broadcast %667 : vector<12x1xf32> to vector<12x12xf32>
    %669 = arith.subf %665, %668 : vector<12x12xf32>
    %670 = math.exp %669 : vector<12x12xf32>
    %cst_200 = arith.constant dense<0.000000e+00> : vector<12xf32>
    %671 = vector.multi_reduction <add>, %670, %cst_200 [1] : vector<12x12xf32> to vector<12xf32>
    %672 = vector.shape_cast %671 : vector<12xf32> to vector<12x1xf32>
    %673 = tpu.reciprocal %672 {approx = true} : vector<12x1xf32> -> vector<12x1xf32>
    %674 = vector.broadcast %673 : vector<12x1xf32> to vector<12x12xf32>
    %675 = arith.mulf %670, %674 : vector<12x12xf32>
    %676 = vector.extract_strided_slice %611 {offsets = [0, 24], sizes = [12, 8], strides = [1, 1]} : vector<12x32xf32> to vector<12x8xf32>
    %cst_201 = arith.constant dense<0.000000e+00> : vector<12x8xf32>
    %677 = tpu.matmul %675, %676, %cst_201 {dimension_numbers = #tpu.dot_dimension_numbers<[1], [0], [0], [1], [0, 0, 1, 1], [], []>} : vector<12x12xf32>, vector<12x8xf32>, vector<12x8xf32> -> vector<12x8xf32>
    %678 = tpu.concatenate %629, %645, %661, %677 in 1 : vector<12x8xf32>, vector<12x8xf32>, vector<12x8xf32>, vector<12x8xf32> -> vector<12x32xf32>
    %cst_202 = arith.constant dense<0.000000e+00> : vector<12x32xf32>
    %679 = tpu.matmul %678, %612, %cst_202 {dimension_numbers = #tpu.dot_dimension_numbers<[1], [0], [0], [1], [0, 0, 1, 1], [], []>} : vector<12x32xf32>, vector<32x32xf32>, vector<12x32xf32> -> vector<12x32xf32>
    %680 = vector.broadcast %613 : vector<1x32xf32> to vector<12x32xf32>
    %681 = arith.addf %679, %680 : vector<12x32xf32>
    %682 = arith.addf %599, %681 : vector<12x32xf32>
    %683 = vector.extract_strided_slice %603 {offsets = [2, 0], sizes = [1, 32], strides = [1, 1]} : vector<13x96xf32> to vector<1x32xf32>
    %684 = vector.extract_strided_slice %603 {offsets = [3, 0], sizes = [1, 32], strides = [1, 1]} : vector<13x96xf32> to vector<1x32xf32>
    %cst_203 = arith.constant dense<0.000000e+00> : vector<12xf32>
    %685 = vector.multi_reduction <add>, %682, %cst_203 [1] : vector<12x32xf32> to vector<12xf32>
    %686 = vector.shape_cast %685 : vector<12xf32> to vector<12x1xf32>
    %cst_204 = arith.constant 3.200000e+01 : f32
    %687 = vector.broadcast %cst_204 : f32 to vector<12x1xf32>
    %688 = arith.divf %686, %687 : vector<12x1xf32>
    %689 = vector.broadcast %688 : vector<12x1xf32> to vector<12x32xf32>
    %690 = arith.subf %682, %689 : vector<12x32xf32>
    %691 = arith.mulf %690, %690 : vector<12x32xf32>
    %cst_205 = arith.constant dense<0.000000e+00> : vector<12xf32>
    %692 = vector.multi_reduction <add>, %691, %cst_205 [1] : vector<12x32xf32> to vector<12xf32>
    %693 = vector.shape_cast %692 : vector<12xf32> to vector<12x1xf32>
    %cst_206 = arith.constant 3.200000e+01 : f32
    %694 = vector.broadcast %cst_206 : f32 to vector<12x1xf32>
    %695 = arith.divf %693, %694 : vector<12x1xf32>
    %cst_207 = arith.constant 9.99999974E-6 : f32
    %696 = vector.broadcast %cst_207 : f32 to vector<12x1xf32>
    %697 = arith.addf %695, %696 : vector<12x1xf32>
    %698 = math.rsqrt %697 : vector<12x1xf32>
    %699 = vector.broadcast %698 : vector<12x1xf32> to vector<12x32xf32>
    %700 = arith.mulf %690, %699 : vector<12x32xf32>
    %701 = vector.broadcast %683 : vector<1x32xf32> to vector<12x32xf32>
    %702 = arith.mulf %700, %701 : vector<12x32xf32>
    %703 = vector.broadcast %684 : vector<1x32xf32> to vector<12x32xf32>
    %704 = arith.addf %702, %703 : vector<12x32xf32>
    %705 = vector.extract_strided_slice %601 {offsets = [0, 128], sizes = [32, 32], strides = [1, 1]} : vector<32x320xf32> to vector<32x32xf32>
    %cst_208 = arith.constant dense<0.000000e+00> : vector<12x32xf32>
    %706 = tpu.matmul %704, %705, %cst_208 {dimension_numbers = #tpu.dot_dimension_numbers<[1], [0], [0], [1], [0, 0, 1, 1], [], []>} : vector<12x32xf32>, vector<32x32xf32>, vector<12x32xf32> -> vector<12x32xf32>
    %707 = vector.extract_strided_slice %603 {offsets = [4, 0], sizes = [1, 32], strides = [1, 1]} : vector<13x96xf32> to vector<1x32xf32>
    %708 = vector.broadcast %707 : vector<1x32xf32> to vector<12x32xf32>
    %709 = arith.addf %706, %708 : vector<12x32xf32>
    %710 = vector.extract_strided_slice %601 {offsets = [0, 160], sizes = [32, 64], strides = [1, 1]} : vector<32x320xf32> to vector<32x64xf32>
    %cst_209 = arith.constant dense<0.000000e+00> : vector<8x64xf32>
    %711 = tpu.matmul %352, %710, %cst_209 {dimension_numbers = #tpu.dot_dimension_numbers<[1], [0], [0], [1], [0, 0, 1, 1], [], []>} : vector<8x32xf32>, vector<32x64xf32>, vector<8x64xf32> -> vector<8x64xf32>
    %712 = vector.extract_strided_slice %603 {offsets = [5, 0], sizes = [1, 64], strides = [1, 1]} : vector<13x96xf32> to vector<1x64xf32>
    %713 = vector.broadcast %712 : vector<1x64xf32> to vector<8x64xf32>
    %714 = arith.addf %711, %713 : vector<8x64xf32>
    %715 = vector.extract_strided_slice %714 {offsets = [0, 0], sizes = [8, 32], strides = [1, 1]} : vector<8x64xf32> to vector<8x32xf32>
    %716 = vector.extract_strided_slice %714 {offsets = [0, 32], sizes = [8, 32], strides = [1, 1]} : vector<8x64xf32> to vector<8x32xf32>
    %717 = vector.extract_strided_slice %601 {offsets = [0, 224], sizes = [32, 32], strides = [1, 1]} : vector<32x320xf32> to vector<32x32xf32>
    %718 = vector.extract_strided_slice %603 {offsets = [6, 0], sizes = [1, 32], strides = [1, 1]} : vector<13x96xf32> to vector<1x32xf32>
    %719 = vector.extract_strided_slice %709 {offsets = [0, 0], sizes = [12, 8], strides = [1, 1]} : vector<12x32xf32> to vector<12x8xf32>
    %720 = vector.extract_strided_slice %715 {offsets = [0, 0], sizes = [8, 8], strides = [1, 1]} : vector<8x32xf32> to vector<8x8xf32>
    %cst_210 = arith.constant dense<0.000000e+00> : vector<12x8xf32>
    %721 = tpu.matmul %719, %720, %cst_210 {dimension_numbers = #tpu.dot_dimension_numbers<[1], [1], [0], [0], [0, 0, 1, 0], [], []>} : vector<12x8xf32>, vector<8x8xf32>, vector<12x8xf32> -> vector<12x8xf32>
    %722 = arith.addf %721, %6 : vector<12x8xf32>
    %cst_211 = arith.constant dense<0xFF800000> : vector<12xf32>
    %723 = vector.multi_reduction <maximumf>, %722, %cst_211 [1] : vector<12x8xf32> to vector<12xf32>
    %724 = vector.shape_cast %723 : vector<12xf32> to vector<12x1xf32>
    %725 = vector.broadcast %724 : vector<12x1xf32> to vector<12x8xf32>
    %726 = arith.subf %722, %725 : vector<12x8xf32>
    %727 = math.exp %726 : vector<12x8xf32>
    %cst_212 = arith.constant dense<0.000000e+00> : vector<12xf32>
    %728 = vector.multi_reduction <add>, %727, %cst_212 [1] : vector<12x8xf32> to vector<12xf32>
    %729 = vector.shape_cast %728 : vector<12xf32> to vector<12x1xf32>
    %730 = tpu.reciprocal %729 {approx = true} : vector<12x1xf32> -> vector<12x1xf32>
    %731 = vector.broadcast %730 : vector<12x1xf32> to vector<12x8xf32>
    %732 = arith.mulf %727, %731 : vector<12x8xf32>
    %733 = vector.extract_strided_slice %716 {offsets = [0, 0], sizes = [8, 8], strides = [1, 1]} : vector<8x32xf32> to vector<8x8xf32>
    %cst_213 = arith.constant dense<0.000000e+00> : vector<12x8xf32>
    %734 = tpu.matmul %732, %733, %cst_213 {dimension_numbers = #tpu.dot_dimension_numbers<[1], [0], [0], [1], [0, 0, 1, 1], [], []>} : vector<12x8xf32>, vector<8x8xf32>, vector<12x8xf32> -> vector<12x8xf32>
    %735 = vector.extract_strided_slice %709 {offsets = [0, 8], sizes = [12, 8], strides = [1, 1]} : vector<12x32xf32> to vector<12x8xf32>
    %736 = vector.extract_strided_slice %715 {offsets = [0, 8], sizes = [8, 8], strides = [1, 1]} : vector<8x32xf32> to vector<8x8xf32>
    %cst_214 = arith.constant dense<0.000000e+00> : vector<12x8xf32>
    %737 = tpu.matmul %735, %736, %cst_214 {dimension_numbers = #tpu.dot_dimension_numbers<[1], [1], [0], [0], [0, 0, 1, 0], [], []>} : vector<12x8xf32>, vector<8x8xf32>, vector<12x8xf32> -> vector<12x8xf32>
    %738 = arith.addf %737, %6 : vector<12x8xf32>
    %cst_215 = arith.constant dense<0xFF800000> : vector<12xf32>
    %739 = vector.multi_reduction <maximumf>, %738, %cst_215 [1] : vector<12x8xf32> to vector<12xf32>
    %740 = vector.shape_cast %739 : vector<12xf32> to vector<12x1xf32>
    %741 = vector.broadcast %740 : vector<12x1xf32> to vector<12x8xf32>
    %742 = arith.subf %738, %741 : vector<12x8xf32>
    %743 = math.exp %742 : vector<12x8xf32>
    %cst_216 = arith.constant dense<0.000000e+00> : vector<12xf32>
    %744 = vector.multi_reduction <add>, %743, %cst_216 [1] : vector<12x8xf32> to vector<12xf32>
    %745 = vector.shape_cast %744 : vector<12xf32> to vector<12x1xf32>
    %746 = tpu.reciprocal %745 {approx = true} : vector<12x1xf32> -> vector<12x1xf32>
    %747 = vector.broadcast %746 : vector<12x1xf32> to vector<12x8xf32>
    %748 = arith.mulf %743, %747 : vector<12x8xf32>
    %749 = vector.extract_strided_slice %716 {offsets = [0, 8], sizes = [8, 8], strides = [1, 1]} : vector<8x32xf32> to vector<8x8xf32>
    %cst_217 = arith.constant dense<0.000000e+00> : vector<12x8xf32>
    %750 = tpu.matmul %748, %749, %cst_217 {dimension_numbers = #tpu.dot_dimension_numbers<[1], [0], [0], [1], [0, 0, 1, 1], [], []>} : vector<12x8xf32>, vector<8x8xf32>, vector<12x8xf32> -> vector<12x8xf32>
    %751 = vector.extract_strided_slice %709 {offsets = [0, 16], sizes = [12, 8], strides = [1, 1]} : vector<12x32xf32> to vector<12x8xf32>
    %752 = vector.extract_strided_slice %715 {offsets = [0, 16], sizes = [8, 8], strides = [1, 1]} : vector<8x32xf32> to vector<8x8xf32>
    %cst_218 = arith.constant dense<0.000000e+00> : vector<12x8xf32>
    %753 = tpu.matmul %751, %752, %cst_218 {dimension_numbers = #tpu.dot_dimension_numbers<[1], [1], [0], [0], [0, 0, 1, 0], [], []>} : vector<12x8xf32>, vector<8x8xf32>, vector<12x8xf32> -> vector<12x8xf32>
    %754 = arith.addf %753, %6 : vector<12x8xf32>
    %cst_219 = arith.constant dense<0xFF800000> : vector<12xf32>
    %755 = vector.multi_reduction <maximumf>, %754, %cst_219 [1] : vector<12x8xf32> to vector<12xf32>
    %756 = vector.shape_cast %755 : vector<12xf32> to vector<12x1xf32>
    %757 = vector.broadcast %756 : vector<12x1xf32> to vector<12x8xf32>
    %758 = arith.subf %754, %757 : vector<12x8xf32>
    %759 = math.exp %758 : vector<12x8xf32>
    %cst_220 = arith.constant dense<0.000000e+00> : vector<12xf32>
    %760 = vector.multi_reduction <add>, %759, %cst_220 [1] : vector<12x8xf32> to vector<12xf32>
    %761 = vector.shape_cast %760 : vector<12xf32> to vector<12x1xf32>
    %762 = tpu.reciprocal %761 {approx = true} : vector<12x1xf32> -> vector<12x1xf32>
    %763 = vector.broadcast %762 : vector<12x1xf32> to vector<12x8xf32>
    %764 = arith.mulf %759, %763 : vector<12x8xf32>
    %765 = vector.extract_strided_slice %716 {offsets = [0, 16], sizes = [8, 8], strides = [1, 1]} : vector<8x32xf32> to vector<8x8xf32>
    %cst_221 = arith.constant dense<0.000000e+00> : vector<12x8xf32>
    %766 = tpu.matmul %764, %765, %cst_221 {dimension_numbers = #tpu.dot_dimension_numbers<[1], [0], [0], [1], [0, 0, 1, 1], [], []>} : vector<12x8xf32>, vector<8x8xf32>, vector<12x8xf32> -> vector<12x8xf32>
    %767 = vector.extract_strided_slice %709 {offsets = [0, 24], sizes = [12, 8], strides = [1, 1]} : vector<12x32xf32> to vector<12x8xf32>
    %768 = vector.extract_strided_slice %715 {offsets = [0, 24], sizes = [8, 8], strides = [1, 1]} : vector<8x32xf32> to vector<8x8xf32>
    %cst_222 = arith.constant dense<0.000000e+00> : vector<12x8xf32>
    %769 = tpu.matmul %767, %768, %cst_222 {dimension_numbers = #tpu.dot_dimension_numbers<[1], [1], [0], [0], [0, 0, 1, 0], [], []>} : vector<12x8xf32>, vector<8x8xf32>, vector<12x8xf32> -> vector<12x8xf32>
    %770 = arith.addf %769, %6 : vector<12x8xf32>
    %cst_223 = arith.constant dense<0xFF800000> : vector<12xf32>
    %771 = vector.multi_reduction <maximumf>, %770, %cst_223 [1] : vector<12x8xf32> to vector<12xf32>
    %772 = vector.shape_cast %771 : vector<12xf32> to vector<12x1xf32>
    %773 = vector.broadcast %772 : vector<12x1xf32> to vector<12x8xf32>
    %774 = arith.subf %770, %773 : vector<12x8xf32>
    %775 = math.exp %774 : vector<12x8xf32>
    %cst_224 = arith.constant dense<0.000000e+00> : vector<12xf32>
    %776 = vector.multi_reduction <add>, %775, %cst_224 [1] : vector<12x8xf32> to vector<12xf32>
    %777 = vector.shape_cast %776 : vector<12xf32> to vector<12x1xf32>
    %778 = tpu.reciprocal %777 {approx = true} : vector<12x1xf32> -> vector<12x1xf32>
    %779 = vector.broadcast %778 : vector<12x1xf32> to vector<12x8xf32>
    %780 = arith.mulf %775, %779 : vector<12x8xf32>
    %781 = vector.extract_strided_slice %716 {offsets = [0, 24], sizes = [8, 8], strides = [1, 1]} : vector<8x32xf32> to vector<8x8xf32>
    %cst_225 = arith.constant dense<0.000000e+00> : vector<12x8xf32>
    %782 = tpu.matmul %780, %781, %cst_225 {dimension_numbers = #tpu.dot_dimension_numbers<[1], [0], [0], [1], [0, 0, 1, 1], [], []>} : vector<12x8xf32>, vector<8x8xf32>, vector<12x8xf32> -> vector<12x8xf32>
    %783 = tpu.concatenate %734, %750, %766, %782 in 1 : vector<12x8xf32>, vector<12x8xf32>, vector<12x8xf32>, vector<12x8xf32> -> vector<12x32xf32>
    %cst_226 = arith.constant dense<0.000000e+00> : vector<12x32xf32>
    %784 = tpu.matmul %783, %717, %cst_226 {dimension_numbers = #tpu.dot_dimension_numbers<[1], [0], [0], [1], [0, 0, 1, 1], [], []>} : vector<12x32xf32>, vector<32x32xf32>, vector<12x32xf32> -> vector<12x32xf32>
    %785 = vector.broadcast %718 : vector<1x32xf32> to vector<12x32xf32>
    %786 = arith.addf %784, %785 : vector<12x32xf32>
    %787 = arith.addf %704, %786 : vector<12x32xf32>
    %788 = vector.extract_strided_slice %603 {offsets = [7, 0], sizes = [1, 32], strides = [1, 1]} : vector<13x96xf32> to vector<1x32xf32>
    %789 = vector.extract_strided_slice %603 {offsets = [8, 0], sizes = [1, 32], strides = [1, 1]} : vector<13x96xf32> to vector<1x32xf32>
    %cst_227 = arith.constant dense<0.000000e+00> : vector<12xf32>
    %790 = vector.multi_reduction <add>, %787, %cst_227 [1] : vector<12x32xf32> to vector<12xf32>
    %791 = vector.shape_cast %790 : vector<12xf32> to vector<12x1xf32>
    %cst_228 = arith.constant 3.200000e+01 : f32
    %792 = vector.broadcast %cst_228 : f32 to vector<12x1xf32>
    %793 = arith.divf %791, %792 : vector<12x1xf32>
    %794 = vector.broadcast %793 : vector<12x1xf32> to vector<12x32xf32>
    %795 = arith.subf %787, %794 : vector<12x32xf32>
    %796 = arith.mulf %795, %795 : vector<12x32xf32>
    %cst_229 = arith.constant dense<0.000000e+00> : vector<12xf32>
    %797 = vector.multi_reduction <add>, %796, %cst_229 [1] : vector<12x32xf32> to vector<12xf32>
    %798 = vector.shape_cast %797 : vector<12xf32> to vector<12x1xf32>
    %cst_230 = arith.constant 3.200000e+01 : f32
    %799 = vector.broadcast %cst_230 : f32 to vector<12x1xf32>
    %800 = arith.divf %798, %799 : vector<12x1xf32>
    %cst_231 = arith.constant 9.99999974E-6 : f32
    %801 = vector.broadcast %cst_231 : f32 to vector<12x1xf32>
    %802 = arith.addf %800, %801 : vector<12x1xf32>
    %803 = math.rsqrt %802 : vector<12x1xf32>
    %804 = vector.broadcast %803 : vector<12x1xf32> to vector<12x32xf32>
    %805 = arith.mulf %795, %804 : vector<12x32xf32>
    %806 = vector.broadcast %788 : vector<1x32xf32> to vector<12x32xf32>
    %807 = arith.mulf %805, %806 : vector<12x32xf32>
    %808 = vector.broadcast %789 : vector<1x32xf32> to vector<12x32xf32>
    %809 = arith.addf %807, %808 : vector<12x32xf32>
    %810 = vector.extract_strided_slice %601 {offsets = [0, 256], sizes = [32, 64], strides = [1, 1]} : vector<32x320xf32> to vector<32x64xf32>
    %cst_232 = arith.constant dense<0.000000e+00> : vector<12x64xf32>
    %811 = tpu.matmul %809, %810, %cst_232 {dimension_numbers = #tpu.dot_dimension_numbers<[1], [0], [0], [1], [0, 0, 1, 1], [], []>} : vector<12x32xf32>, vector<32x64xf32>, vector<12x64xf32> -> vector<12x64xf32>
    %812 = vector.extract_strided_slice %603 {offsets = [9, 0], sizes = [1, 64], strides = [1, 1]} : vector<13x96xf32> to vector<1x64xf32>
    %813 = vector.broadcast %812 : vector<1x64xf32> to vector<12x64xf32>
    %814 = arith.addf %811, %813 : vector<12x64xf32>
    %cst_233 = arith.constant 0.000000e+00 : f32
    %815 = vector.broadcast %cst_233 : f32 to vector<12x64xf32>
    %816 = arith.maximumf %814, %815 : vector<12x64xf32>
    %c1_234 = arith.constant 1 : index
    %c0_235 = arith.constant 0 : index
    %c0_236 = arith.constant 0 : index
    %817 = vector.load %arg13[%c1_234, %c0_235, %c0_236] : memref<2x64x32xf32, #tpu.memory_space<vmem>>, vector<1x64x32xf32>
    %818 = vector.shape_cast %817 : vector<1x64x32xf32> to vector<64x32xf32>
    %cst_237 = arith.constant dense<0.000000e+00> : vector<12x32xf32>
    %819 = tpu.matmul %816, %818, %cst_237 {dimension_numbers = #tpu.dot_dimension_numbers<[1], [0], [0], [1], [0, 0, 1, 1], [], []>} : vector<12x64xf32>, vector<64x32xf32>, vector<12x32xf32> -> vector<12x32xf32>
    %820 = vector.extract_strided_slice %603 {offsets = [10, 0], sizes = [1, 32], strides = [1, 1]} : vector<13x96xf32> to vector<1x32xf32>
    %821 = vector.broadcast %820 : vector<1x32xf32> to vector<12x32xf32>
    %822 = arith.addf %819, %821 : vector<12x32xf32>
    %823 = arith.addf %809, %822 : vector<12x32xf32>
    %824 = vector.extract_strided_slice %603 {offsets = [11, 0], sizes = [1, 32], strides = [1, 1]} : vector<13x96xf32> to vector<1x32xf32>
    %825 = vector.extract_strided_slice %603 {offsets = [12, 0], sizes = [1, 32], strides = [1, 1]} : vector<13x96xf32> to vector<1x32xf32>
    %cst_238 = arith.constant dense<0.000000e+00> : vector<12xf32>
    %826 = vector.multi_reduction <add>, %823, %cst_238 [1] : vector<12x32xf32> to vector<12xf32>
    %827 = vector.shape_cast %826 : vector<12xf32> to vector<12x1xf32>
    %cst_239 = arith.constant 3.200000e+01 : f32
    %828 = vector.broadcast %cst_239 : f32 to vector<12x1xf32>
    %829 = arith.divf %827, %828 : vector<12x1xf32>
    %830 = vector.broadcast %829 : vector<12x1xf32> to vector<12x32xf32>
    %831 = arith.subf %823, %830 : vector<12x32xf32>
    %832 = arith.mulf %831, %831 : vector<12x32xf32>
    %cst_240 = arith.constant dense<0.000000e+00> : vector<12xf32>
    %833 = vector.multi_reduction <add>, %832, %cst_240 [1] : vector<12x32xf32> to vector<12xf32>
    %834 = vector.shape_cast %833 : vector<12xf32> to vector<12x1xf32>
    %cst_241 = arith.constant 3.200000e+01 : f32
    %835 = vector.broadcast %cst_241 : f32 to vector<12x1xf32>
    %836 = arith.divf %834, %835 : vector<12x1xf32>
    %cst_242 = arith.constant 9.99999974E-6 : f32
    %837 = vector.broadcast %cst_242 : f32 to vector<12x1xf32>
    %838 = arith.addf %836, %837 : vector<12x1xf32>
    %839 = math.rsqrt %838 : vector<12x1xf32>
    %840 = vector.broadcast %839 : vector<12x1xf32> to vector<12x32xf32>
    %841 = arith.mulf %831, %840 : vector<12x32xf32>
    %842 = vector.broadcast %824 : vector<1x32xf32> to vector<12x32xf32>
    %843 = arith.mulf %841, %842 : vector<12x32xf32>
    %844 = vector.broadcast %825 : vector<1x32xf32> to vector<12x32xf32>
    %845 = arith.addf %843, %844 : vector<12x32xf32>
    %c0_243 = arith.constant 0 : index
    %c0_244 = arith.constant 0 : index
    %846 = vector.load %arg15[%c0_243, %c0_244] : memref<32x128xf32, #tpu.memory_space<vmem>>, vector<32x128xf32>
    %cst_245 = arith.constant dense<0.000000e+00> : vector<12x128xf32>
    %847 = tpu.matmul %845, %846, %cst_245 {dimension_numbers = #tpu.dot_dimension_numbers<[1], [0], [0], [1], [0, 0, 1, 1], [], []>} : vector<12x32xf32>, vector<32x128xf32>, vector<12x128xf32> -> vector<12x128xf32>
    %c2 = arith.constant 2 : index
    %c0_246 = arith.constant 0 : index
    %848 = vector.load %arg7[%c2, %c0_246] : memref<3x128xf32, #tpu.memory_space<vmem>>, vector<1x128xf32>
    %849 = vector.broadcast %848 : vector<1x128xf32> to vector<12x128xf32>
    %850 = arith.addf %847, %849 : vector<12x128xf32>
    %c0_247 = arith.constant 0 : index
    %c0_248 = arith.constant 0 : index
    %851 = vector.load %arg16[%c0_247, %c0_248] : memref<12x128xf32, #tpu.memory_space<vmem>>, vector<12x128xf32>
    tpu.vector_store %arg16[%c0_247, %c0_248], %850 {strides = array<i32>} : memref<12x128xf32, #tpu.memory_space<vmem>>, vector<12x128xf32>,
    return
  }
  func.func @transform_0(%arg0: i32) -> (i32, i32) {
    %c0_i32 = arith.constant 0 : i32
    %c0_i32_0 = arith.constant 0 : i32
    %c0_i32_1 = arith.constant 0 : i32
    return %c0_i32, %c0_i32_0 : i32, i32
  }
  func.func @transform_1(%arg0: i32) -> (i32, i32) {
    %c0_i32 = arith.constant 0 : i32
    %c0_i32_0 = arith.constant 0 : i32
    %c0_i32_1 = arith.constant 0 : i32
    return %c0_i32, %c0_i32_0 : i32, i32
  }
  func.func @transform_2(%arg0: i32) -> (i32, i32) {
    %c0_i32 = arith.constant 0 : i32
    %c0_i32_0 = arith.constant 0 : i32
    %c0_i32_1 = arith.constant 0 : i32
    return %c0_i32, %c0_i32_0 : i32, i32
  }
  func.func @transform_3(%arg0: i32) -> (i32, i32, i32) {
    %c0_i32 = arith.constant 0 : i32
    %c0_i32_0 = arith.constant 0 : i32
    %c0_i32_1 = arith.constant 0 : i32
    %c0_i32_2 = arith.constant 0 : i32
    return %c0_i32, %c0_i32_0, %c0_i32_1 : i32, i32, i32
  }
  func.func @transform_4(%arg0: i32) -> (i32, i32, i32) {
    %c0_i32 = arith.constant 0 : i32
    %c0_i32_0 = arith.constant 0 : i32
    %c0_i32_1 = arith.constant 0 : i32
    %c0_i32_2 = arith.constant 0 : i32
    return %c0_i32, %c0_i32_0, %c0_i32_1 : i32, i32, i32
  }
  func.func @transform_5(%arg0: i32) -> (i32, i32, i32) {
    %c0_i32 = arith.constant 0 : i32
    %c0_i32_0 = arith.constant 0 : i32
    %c0_i32_1 = arith.constant 0 : i32
    %c0_i32_2 = arith.constant 0 : i32
    return %c0_i32, %c0_i32_0, %c0_i32_1 : i32, i32, i32
  }
  func.func @transform_6(%arg0: i32) -> (i32, i32) {
    %c0_i32 = arith.constant 0 : i32
    %c0_i32_0 = arith.constant 0 : i32
    %c0_i32_1 = arith.constant 0 : i32
    return %c0_i32, %c0_i32_0 : i32, i32
  }
  func.func @transform_7(%arg0: i32) -> (i32, i32) {
    %c0_i32 = arith.constant 0 : i32
    %c0_i32_0 = arith.constant 0 : i32
    %c0_i32_1 = arith.constant 0 : i32
    return %c0_i32, %c0_i32_0 : i32, i32
  }
  func.func @transform_8(%arg0: i32) -> (i32, i32) {
    %c0_i32 = arith.constant 0 : i32
    %c0_i32_0 = arith.constant 0 : i32
    %c0_i32_1 = arith.constant 0 : i32
    return %c0_i32, %c0_i32_0 : i32, i32
  }
  func.func @transform_9(%arg0: i32) -> (i32, i32) {
    %c0_i32 = arith.constant 0 : i32
    %c0_i32_0 = arith.constant 0 : i32
    %c0_i32_1 = arith.constant 0 : i32
    return %c0_i32, %c0_i32_0 : i32, i32
  }
  func.func @transform_10(%arg0: i32) -> (i32, i32, i32) {
    %c0_i32 = arith.constant 0 : i32
    %c0_i32_0 = arith.constant 0 : i32
    %c0_i32_1 = arith.constant 0 : i32
    %c0_i32_2 = arith.constant 0 : i32
    return %c0_i32, %c0_i32_0, %c0_i32_1 : i32, i32, i32
  }
  func.func @transform_11(%arg0: i32) -> (i32, i32, i32) {
    %c0_i32 = arith.constant 0 : i32
    %c0_i32_0 = arith.constant 0 : i32
    %c0_i32_1 = arith.constant 0 : i32
    %c0_i32_2 = arith.constant 0 : i32
    return %c0_i32, %c0_i32_0, %c0_i32_1 : i32, i32, i32
  }
  func.func @transform_12(%arg0: i32) -> (i32, i32, i32) {
    %c0_i32 = arith.constant 0 : i32
    %c0_i32_0 = arith.constant 0 : i32
    %c0_i32_1 = arith.constant 0 : i32
    %c0_i32_2 = arith.constant 0 : i32
    return %c0_i32, %c0_i32_0, %c0_i32_1 : i32, i32, i32
  }
  func.func @transform_13(%arg0: i32) -> (i32, i32, i32) {
    %c0_i32 = arith.constant 0 : i32
    %c0_i32_0 = arith.constant 0 : i32
    %c0_i32_1 = arith.constant 0 : i32
    %c0_i32_2 = arith.constant 0 : i32
    return %c0_i32, %c0_i32_0, %c0_i32_1 : i32, i32, i32
  }
  func.func @transform_14(%arg0: i32) -> (i32, i32) {
    %c0_i32 = arith.constant 0 : i32
    %c0_i32_0 = arith.constant 0 : i32
    %c0_i32_1 = arith.constant 0 : i32
    return %c0_i32, %c0_i32_0 : i32, i32
  }
  func.func @transform_15(%arg0: i32) -> (i32, i32) {
    %c0_i32 = arith.constant 0 : i32
    %c0_i32_0 = arith.constant 0 : i32
    %c0_i32_1 = arith.constant 0 : i32
    return %c0_i32, %c0_i32_0 : i32, i32
  }
}

</mosaic_0001>

<llo_original>
// kernel: vit_transformer_forward.1
$region0: #{vit_transformer_forward.1}
  #allocation0 [shape = 'u32[]', space=smem, size = 0x4, offset = 0x4, fixed_abs, tag = 'smem constant byte address 0x4 - core index']
  #allocation1 [shape = 'u32[144,128]{1,0:T(1,128)}', space=vmem, size = 0x12000, scoped, tag = 'internal scratch']
  %s0 = inlined_call_operand.vmem [shape: f32[8,192], index: 0, kind: input, shape index: {}]
  %s1 = inlined_call_operand.vmem [shape: f32[192,64], index: 1, kind: input, shape index: {}]
  %s2 = inlined_call_operand.vmem [shape: f32[5,64], index: 2, kind: input, shape index: {}]
  %s3 = inlined_call_operand.vmem [shape: f32[2,64,384], index: 3, kind: input, shape index: {}]
  %s4 = inlined_call_operand.vmem [shape: f32[2,128,64], index: 4, kind: input, shape index: {}]
  %s5 = inlined_call_operand.vmem [shape: f32[2,8,192], index: 5, kind: input, shape index: {}]
  %s6 = inlined_call_operand.vmem [shape: f32[3,128], index: 6, kind: input, shape index: {}]
  %s7 = inlined_call_operand.vmem [shape: f32[12,32], index: 7, kind: input, shape index: {}]
  %s8 = inlined_call_operand.vmem [shape: f32[64,32], index: 8, kind: input, shape index: {}]
  %s9 = inlined_call_operand.vmem [shape: f32[4,32], index: 9, kind: input, shape index: {}]
  %s10 = inlined_call_operand.vmem [shape: f32[3,12,12], index: 10, kind: input, shape index: {}]
  %s11 = inlined_call_operand.vmem [shape: f32[2,32,320], index: 11, kind: input, shape index: {}]
  %s12 = inlined_call_operand.vmem [shape: f32[2,64,32], index: 12, kind: input, shape index: {}]
  %s13 = inlined_call_operand.vmem [shape: f32[2,13,96], index: 13, kind: input, shape index: {}]
  %s14 = inlined_call_operand.vmem [shape: f32[32,128], index: 14, kind: input, shape index: {}]
  %s15 = inlined_call_operand.vmem [shape: f32[12,128], index: 15, kind: output, shape index: {}]
  %s16 = sld [smem:[#allocation0]]
  $region70: #{vit_transformer_forward.1} parent=0
    _
  %s18 = ssub.s32 1, %s16
  %s19 = scalar_select 0, %s18, %s16
  // Predicated region
  $region2: #{vit_transformer_forward.1} parent=0 // pred_check
    _
  $region3: #{vit_transformer_forward.1} parent=0 // pred_check_branch
    %21 = sbr.rel (0) target = $region5
  $region4: #{vit_transformer_forward.1} parent=0 // pred_region
    _
  $region5: #{vit_transformer_forward.1} parent=0 // pred_fallthru
    _
  // Predicated region
  $region6: #{vit_transformer_forward.1} parent=0 // pred_check
    _
  $region7: #{vit_transformer_forward.1} parent=0 // pred_check_branch
    %23 = sbr.rel (0) target = $region9
  $region8: #{vit_transformer_forward.1} parent=0 // pred_region
    _
  $region9: #{vit_transformer_forward.1} parent=0 // pred_fallthru
    _
  // Predicated region
  $region10: #{vit_transformer_forward.1} parent=0 // pred_check
    _
  $region11: #{vit_transformer_forward.1} parent=0 // pred_check_branch
    %25 = sbr.rel (0) target = $region13
  $region12: #{vit_transformer_forward.1} parent=0 // pred_region
    _
  $region13: #{vit_transformer_forward.1} parent=0 // pred_fallthru
    _
  // Predicated region
  $region14: #{vit_transformer_forward.1} parent=0 // pred_check
    _
  $region15: #{vit_transformer_forward.1} parent=0 // pred_check_branch
    %27 = sbr.rel (0) target = $region17
  $region16: #{vit_transformer_forward.1} parent=0 // pred_region
    _
  $region17: #{vit_transformer_forward.1} parent=0 // pred_fallthru
    _
  // Predicated region
  $region18: #{vit_transformer_forward.1} parent=0 // pred_check
    _
  $region19: #{vit_transformer_forward.1} parent=0 // pred_check_branch
    %29 = sbr.rel (0) target = $region21
  $region20: #{vit_transformer_forward.1} parent=0 // pred_region
    _
  $region21: #{vit_transformer_forward.1} parent=0 // pred_fallthru
    _
  // Predicated region
  $region22: #{vit_transformer_forward.1} parent=0 // pred_check
    _
  $region23: #{vit_transformer_forward.1} parent=0 // pred_check_branch
    %31 = sbr.rel (0) target = $region25
  $region24: #{vit_transformer_forward.1} parent=0 // pred_region
    _
  $region25: #{vit_transformer_forward.1} parent=0 // pred_fallthru
    _
  // Predicated region
  $region26: #{vit_transformer_forward.1} parent=0 // pred_check
    _
  $region27: #{vit_transformer_forward.1} parent=0 // pred_check_branch
    %33 = sbr.rel (0) target = $region29
  $region28: #{vit_transformer_forward.1} parent=0 // pred_region
    _
  $region29: #{vit_transformer_forward.1} parent=0 // pred_fallthru
    _
  // Predicated region
  $region30: #{vit_transformer_forward.1} parent=0 // pred_check
    _
  $region31: #{vit_transformer_forward.1} parent=0 // pred_check_branch
    %35 = sbr.rel (0) target = $region33
  $region32: #{vit_transformer_forward.1} parent=0 // pred_region
    _
  $region33: #{vit_transformer_forward.1} parent=0 // pred_fallthru
    _
  // Predicated region
  $region34: #{vit_transformer_forward.1} parent=0 // pred_check
    _
  $region35: #{vit_transformer_forward.1} parent=0 // pred_check_branch
    %37 = sbr.rel (0) target = $region37
  $region36: #{vit_transformer_forward.1} parent=0 // pred_region
    _
  $region37: #{vit_transformer_forward.1} parent=0 // pred_fallthru
    _
  // Predicated region
  $region38: #{vit_transformer_forward.1} parent=0 // pred_check
    _
  $region39: #{vit_transformer_forward.1} parent=0 // pred_check_branch
    %39 = sbr.rel (0) target = $region41
  $region40: #{vit_transformer_forward.1} parent=0 // pred_region
    _
  $region41: #{vit_transformer_forward.1} parent=0 // pred_fallthru
    _
  // Predicated region
  $region42: #{vit_transformer_forward.1} parent=0 // pred_check
    _
  $region43: #{vit_transformer_forward.1} parent=0 // pred_check_branch
    %41 = sbr.rel (0) target = $region45
  $region44: #{vit_transformer_forward.1} parent=0 // pred_region
    _
  $region45: #{vit_transformer_forward.1} parent=0 // pred_fallthru
    _
  // Predicated region
  $region46: #{vit_transformer_forward.1} parent=0 // pred_check
    _
  $region47: #{vit_transformer_forward.1} parent=0 // pred_check_branch
    %43 = sbr.rel (0) target = $region49
  $region48: #{vit_transformer_forward.1} parent=0 // pred_region
    _
  $region49: #{vit_transformer_forward.1} parent=0 // pred_fallthru
    _
  // Predicated region
  $region50: #{vit_transformer_forward.1} parent=0 // pred_check
    _
  $region51: #{vit_transformer_forward.1} parent=0 // pred_check_branch
    %45 = sbr.rel (0) target = $region53
  $region52: #{vit_transformer_forward.1} parent=0 // pred_region
    _
  $region53: #{vit_transformer_forward.1} parent=0 // pred_fallthru
    _
  // Predicated region
  $region54: #{vit_transformer_forward.1} parent=0 // pred_check
    _
  $region55: #{vit_transformer_forward.1} parent=0 // pred_check_branch
    %47 = sbr.rel (0) target = $region57
  $region56: #{vit_transformer_forward.1} parent=0 // pred_region
    _
  $region57: #{vit_transformer_forward.1} parent=0 // pred_fallthru
    _
  // Predicated region
  $region58: #{vit_transformer_forward.1} parent=0 // pred_check
    _
  $region59: #{vit_transformer_forward.1} parent=0 // pred_check_branch
    %49 = sbr.rel (0) target = $region61
  $region60: #{vit_transformer_forward.1} parent=0 // pred_region
    _
  $region61: #{vit_transformer_forward.1} parent=0 // pred_fallthru
    _
  %v50 = vld [vmem:[%s10] sm:$0xff]
  %v51 = vld [vmem:[%s10 + $0x8] sm:$0xf]
  %v52 = vld [vmem:[%s10 + $0x10] sm:$0xff]
  %v53 = vld [vmem:[%s10 + $0x18] sm:$0xf]
  %v54 = vld [vmem:[%s10 + $0x20] sm:$0xff]
  %v55 = vld [vmem:[%s10 + $0x28] sm:$0xf]
  %v56 = vld [vmem:[%s0] sm:$0xff]
  %v57 = vld [vmem:[%s0 + $0x8] sm:$0xff]
  %v58 = vld [vmem:[%s1] sm:$0xff]
  %v59 = vld [vmem:[%s1 + $0x8] sm:$0xff]
  %v60 = vld [vmem:[%s1 + $0x10] sm:$0xff]
  %v61 = vld [vmem:[%s1 + $0x18] sm:$0xff]
  %v62 = vld [vmem:[%s1 + $0x20] sm:$0xff]
  %v63 = vld [vmem:[%s1 + $0x28] sm:$0xff]
  %v64 = vld [vmem:[%s1 + $0x30] sm:$0xff]
  %v65 = vld [vmem:[%s1 + $0x38] sm:$0xff]
  %v66 = vld [vmem:[%s1 + $0x40] sm:$0xff]
  %v67 = vld [vmem:[%s1 + $0x48] sm:$0xff]
  %v68 = vld [vmem:[%s1 + $0x50] sm:$0xff]
  %v69 = vld [vmem:[%s1 + $0x58] sm:$0xff]
  %v70 = vld [vmem:[%s1 + $0x60] sm:$0xff]
  %v71 = vld [vmem:[%s1 + $0x68] sm:$0xff]
  %v72 = vld [vmem:[%s1 + $0x70] sm:$0xff]
  %v73 = vld [vmem:[%s1 + $0x78] sm:$0xff]
  %v74 = vld [vmem:[%s1 + $0x80] sm:$0xff]
  %v75 = vld [vmem:[%s1 + $0x88] sm:$0xff]
  %v76 = vld [vmem:[%s1 + $0x90] sm:$0xff]
  %v77 = vld [vmem:[%s1 + $0x98] sm:$0xff]
  %v78 = vld [vmem:[%s1 + $0xa0] sm:$0xff]
  %v79 = vld [vmem:[%s1 + $0xa8] sm:$0xff]
  %v80 = vld [vmem:[%s1 + $0xb0] sm:$0xff]
  %v81 = vld [vmem:[%s1 + $0xb8] sm:$0xff]
  %vm82 = vcmask 523264
  %v84 = vsel %vm82, %v57, 0
  %86 = vmatprep.subr.mxu0 0.0
  %87 = vmatpush1.msra.mxu0 %v58
  %88 = vmatprep.subr.mxu0 0.0
  %89 = vmatpush1.msra.mxu0 %v59
  %90 = vmatprep.subr.mxu0 0.0
  %91 = vmatpush1.msra.mxu0 %v60
  %92 = vmatprep.subr.mxu0 0.0
  %93 = vmatpush1.msra.mxu0 %v61
  %94 = vmatprep.subr.mxu0 0.0
  %95 = vmatpush1.msra.mxu0 %v62
  %96 = vmatprep.subr.mxu0 0.0
  %97 = vmatpush1.msra.mxu0 %v63
  %98 = vmatprep.subr.mxu0 0.0
  %99 = vmatpush1.msra.mxu0 %v64
  %100 = vmatprep.subr.mxu0 0.0
  %101 = vmatpush1.msra.mxu0 %v65
  %102 = vmatprep.subr.mxu0 0.0
  %103 = vmatpush1.msra.mxu0 %v66
  %104 = vmatprep.subr.mxu0 0.0
  %105 = vmatpush1.msra.mxu0 %v67
  %106 = vmatprep.subr.mxu0 0.0
  %107 = vmatpush1.msra.mxu0 %v68
  %108 = vmatprep.subr.mxu0 0.0
  %109 = vmatpush1.msra.mxu0 %v69
  %110 = vmatprep.subr.mxu0 0.0
  %111 = vmatpush1.msra.mxu0 %v70
  %112 = vmatprep.subr.mxu0 0.0
  %113 = vmatpush1.msra.mxu0 %v71
  %114 = vmatprep.subr.mxu0 0.0
  %115 = vmatpush1.msra.mxu0 %v72
  %116 = vmatprep.subr.mxu0 0.0
  %117 = vmatpush1.msra.mxu0 %v73
  %118 = vmatprep.subr.mxu0 0.0
  %119 = vmatpush1.msra.mxu0 %v74
  %120 = vmatprep.subr.mxu0 0.0
  %121 = vmatpush1.msra.mxu0 %v75
  %122 = vmatprep.subr.mxu0 0.0
  %123 = vmatpush1.msra.mxu0 %v76
  %124 = vmatprep.subr.mxu0 0.0
  %125 = vmatpush1.msra.mxu0 %v77
  %126 = vmatprep.subr.mxu0 0.0
  %127 = vmatpush1.msra.mxu0 %v78
  %128 = vmatprep.subr.mxu0 0.0
  %129 = vmatpush1.msra.mxu0 %v79
  %130 = vmatprep.subr.mxu0 0.0
  %131 = vmatpush1.msra.mxu0 %v80
  %132 = vmatprep.subr.mxu0 0.0
  %133 = vmatpush1.msra.mxu0 %v81
  %134 = vmatprep.subr.mxu0 0.0
  %135 = vmatpush1.msra.mxu0 0.0
  %136 = vmatprep.subr.mxu0 0.0
  %137 = vmatpush1.msra.mxu0 0.0
  %138 = vmatprep.subr.mxu0 0.0
  %139 = vmatpush1.msra.mxu0 0.0
  %140 = vmatprep.subr.mxu0 0.0
  %141 = vmatpush1.msra.mxu0 0.0
  %142 = vmatprep.subr.mxu0 0.0
  %143 = vmatpush1.msra.mxu0 0.0
  %144 = vmatprep.subr.mxu0 0.0
  %145 = vmatpush1.msra.mxu0 0.0
  %146 = vmatprep.subr.mxu0 0.0
  %147 = vmatpush1.msra.mxu0 0.0
  %148 = vmatprep.subr.mxu0 0.0
  %149 = vmatpush1.msra.mxu0 0.0
  %150 = vmatprep.mubr.f32.mxu0 %v84
  %151 = vmatmul.mubr.f32.gmra.mrb[0].mxu0 %v56
  %v152 = vpop.f32.mrb[0].mxu0
  %v153 = vadd.f32 0.0, %v152
  %v154 = vpop.f32.mrb[0].mxu0
  %155 = vdwg.mxu0
  %v156 = vld [vmem:[%s2] sm:$0x1]
  %v157 = vld [vmem:[%s2 + $0x1] sm:$0xf]
  %v158 = vadd.f32 %v153, %v157
  %v160 = vrot.slane %v157, 4
  %v162 = vadd.f32 %v153, %v160
  %v164 = vrot.slane %v158, 7
  %v167 = vrot.slane %v156, 3
  %v170 = vrot.slane %v162, 6
  %vm172 = vcmask 1040384
  %v173 = vsel %vm172, %v156, %v164
  %vm174 = vcmask 1044480
  %v175 = vsel %vm174, %v173, %v167
  %vm176 = vcmask 1045504
  %v177 = vsel %vm176, %v175, %v170
  %v178 = vld [vmem:[%s3] sm:$0xff]
  %v179 = vld [vmem:[%s3 + $0x8] sm:$0xff]
  %v180 = vld [vmem:[%s3 + $0x10] sm:$0xff]
  %v181 = vld [vmem:[%s3 + $0x18] sm:$0xff]
  %v182 = vld [vmem:[%s3 + $0x20] sm:$0xff]
  %v183 = vld [vmem:[%s3 + $0x28] sm:$0xff]
  %v184 = vld [vmem:[%s3 + $0x30] sm:$0xff]
  %v185 = vld [vmem:[%s3 + $0x38] sm:$0xff]
  %v186 = vld [vmem:[%s3 + $0x40] sm:$0xff]
  %v187 = vld [vmem:[%s3 + $0x48] sm:$0xff]
  %v188 = vld [vmem:[%s3 + $0x50] sm:$0xff]
  %v189 = vld [vmem:[%s3 + $0x58] sm:$0xff]
  %v190 = vld [vmem:[%s3 + $0x60] sm:$0xff]
  %v191 = vld [vmem:[%s3 + $0x68] sm:$0xff]
  %v192 = vld [vmem:[%s3 + $0x70] sm:$0xff]
  %v193 = vld [vmem:[%s3 + $0x78] sm:$0xff]
  %v194 = vld [vmem:[%s3 + $0x80] sm:$0xff]
  %v195 = vld [vmem:[%s3 + $0x88] sm:$0xff]
  %v196 = vld [vmem:[%s3 + $0x90] sm:$0xff]
  %v197 = vld [vmem:[%s3 + $0x98] sm:$0xff]
  %v198 = vld [vmem:[%s3 + $0xa0] sm:$0xff]
  %v199 = vld [vmem:[%s3 + $0xa8] sm:$0xff]
  %v200 = vld [vmem:[%s3 + $0xb0] sm:$0xff]
  %v201 = vld [vmem:[%s3 + $0xb8] sm:$0xff]
  %v202 = vld [vmem:[%s5] sm:$0xff]
  %v203 = vld [vmem:[%s5 + $0x8] sm:$0xff]
  %v204 = vsel %vm82, %v177, 0.0
  %205 = vadd.xlane.f32.xlu0 %v204
  %v206 = vpop.xlane.xlu0 %205
  %vm207 = vcmask 517120
  %v208 = vsel %vm207, %v170, 0.0
  %209 = vadd.xlane.f32.xlu0 %v208
  %v210 = vpop.xlane.xlu0 %209
  %v211 = vrcp.pop 64.0
  %v212 = vmul.f32 %v206, %v211
  %v213 = vmul.f32 %v210, %v211
  %v214 = vsub.f32 %v177, %v212
  %v215 = vsub.f32 %v170, %v213
  %v216 = vmul.f32 %v214, %v214
  %v217 = vmul.f32 %v215, %v215
  %v218 = vsel %vm82, %v216, 0.0
  %219 = vadd.xlane.f32.xlu0 %v218
  %v220 = vpop.xlane.xlu0 %219
  %v221 = vsel %vm207, %v217, 0.0
  %222 = vadd.xlane.f32.xlu0 %v221
  %v223 = vpop.xlane.xlu0 %222
  %v224 = vmul.f32 %v220, %v211
  %v225 = vmul.f32 %v223, %v211
  %v226 = vadd.f32 %v224, 1e-12
  %v227 = vadd.f32 %v225, 1e-12
  %v228 = vrsqrt.pop %v226
  %v229 = vrsqrt.pop %v227
  %v230 = vmul.f32 %v214, %v228
  %v231 = vmul.f32 %v215, %v229
  %v232 = vlaneseq
  %v233 = vshrl.u32 %v232, 7
  %v234 = vsub.s32 0, %v233
  %v235 = vrot.slane %v202, %v234
  %v236 = vmul.f32 %v230, %v235
  %v237 = vmul.f32 %v231, %v235
  %v238 = vlaneseq
  %v239 = vshrl.u32 %v238, 7
  %v240 = vsub.s32 1, %v239
  %v241 = vrot.slane %v202, %v240
  %v242 = vadd.f32 %v236, %v241
  %v243 = vadd.f32 %v237, %v241
  %v244 = vlaneseq
  %v245 = vshrl.u32 %v244, 7
  %v246 = vsub.s32 2, %v245
  %v247 = vrot.slane %v202, %v246
  %v248 = vlaneseq
  %v249 = vshrl.u32 %v248, 7
  %v250 = vsub.s32 2, %v249
  %v251 = vrot.slane %v203, %v250
  %v253 = vsel %vm82, %v242, 0
  %v256 = vsel %vm82, %v243, 0
  %258 = vmatprep.subr.mxu0 %v179
  %259 = vmatpush1.msra.mxu0 %v178
  %260 = vmatprep.subr.mxu0 %v182
  %261 = vmatpush1.msra.mxu0 %v181
  %262 = vmatprep.subr.mxu0 %v185
  %263 = vmatpush1.msra.mxu0 %v184
  %264 = vmatprep.subr.mxu0 %v188
  %265 = vmatpush1.msra.mxu0 %v187
  %266 = vmatprep.subr.mxu0 %v191
  %267 = vmatpush1.msra.mxu0 %v190
  %268 = vmatprep.subr.mxu0 %v194
  %269 = vmatpush1.msra.mxu0 %v193
  %270 = vmatprep.subr.mxu0 %v197
  %271 = vmatpush1.msra.mxu0 %v196
  %272 = vmatprep.subr.mxu0 %v200
  %273 = vmatpush1.msra.mxu0 %v199
  %274 = vmatprep.subr.mxu0 0.0
  %275 = vmatpush1.msra.mxu0 0.0
  %276 = vmatprep.subr.mxu0 0.0
  %277 = vmatpush1.msra.mxu0 0.0
  %278 = vmatprep.subr.mxu0 0.0
  %279 = vmatpush1.msra.mxu0 0.0
  %280 = vmatprep.subr.mxu0 0.0
  %281 = vmatpush1.msra.mxu0 0.0
  %282 = vmatprep.subr.mxu0 0.0
  %283 = vmatpush1.msra.mxu0 0.0
  %284 = vmatprep.subr.mxu0 0.0
  %285 = vmatpush1.msra.mxu0 0.0
  %286 = vmatprep.subr.mxu0 0.0
  %287 = vmatpush1.msra.mxu0 0.0
  %288 = vmatprep.subr.mxu0 0.0
  %289 = vmatpush1.msra.mxu0 0.0
  %290 = vmatprep.subr.mxu0 0.0
  %291 = vmatpush1.msra.mxu0 0.0
  %292 = vmatprep.subr.mxu0 0.0
  %293 = vmatpush1.msra.mxu0 0.0
  %294 = vmatprep.subr.mxu0 0.0
  %295 = vmatpush1.msra.mxu0 0.0
  %296 = vmatprep.subr.mxu0 0.0
  %297 = vmatpush1.msra.mxu0 0.0
  %298 = vmatprep.subr.mxu0 0.0
  %299 = vmatpush1.msra.mxu0 0.0
  %300 = vmatprep.subr.mxu0 0.0
  %301 = vmatpush1.msra.mxu0 0.0
  %302 = vmatprep.subr.mxu0 0.0
  %303 = vmatpush1.msra.mxu0 0.0
  %304 = vmatprep.subr.mxu0 0.0
  %305 = vmatpush1.msra.mxu0 0.0
  %306 = vmatprep.subr.mxu0 0.0
  %307 = vmatpush1.msra.mxu0 0.0
  %308 = vmatprep.subr.mxu0 0.0
  %309 = vmatpush1.msra.mxu0 0.0
  %310 = vmatprep.subr.mxu0 0.0
  %311 = vmatpush1.msra.mxu0 0.0
  %312 = vmatprep.subr.mxu0 0.0
  %313 = vmatpush1.msra.mxu0 0.0
  %314 = vmatprep.subr.mxu0 0.0
  %315 = vmatpush1.msra.mxu0 0.0
  %316 = vmatprep.subr.mxu0 0.0
  %317 = vmatpush1.msra.mxu0 0.0
  %318 = vmatprep.subr.mxu0 0.0
  %319 = vmatpush1.msra.mxu0 0.0
  %320 = vmatprep.subr.mxu0 0.0
  %321 = vmatpush1.msra.mxu0 0.0
  %322 = vmatprep.mubr.f32.mxu0 0.0
  %323 = vmatmul.mubr.f32.gmra.mrb[0].mxu0 %v253
  %v324 = vpop.f32.mrb[0].mxu0
  %v325 = vadd.f32 %v247, %v324
  %v326 = vpop.f32.mrb[0].mxu0
  %v327 = vadd.f32 %v251, %v326
  %328 = vmatprep.mubr.f32.mxu0 0.0
  %329 = vmatmul.mubr.f32.gmra.mrb[0].mxu0 %v256
  %v330 = vpop.f32.mrb[0].mxu0
  %v331 = vadd.f32 %v247, %v330
  %v332 = vpop.f32.mrb[0].mxu0
  %v333 = vadd.f32 %v251, %v332
  %334 = vdwg.mxu0
  %337 = vrot.lane.b32.xlu0 %v325, 64
  %v338 = vpop.permute.xlu0 %337
  %339 = vrot.lane.b32.xlu0 %v331, 64
  %v340 = vpop.permute.xlu0 %339
  %vm341 = vcmask 130048
  %v342 = vsel %vm341, %v325, 0
  %v344 = vsel %vm341, %v331, 0
  %v346 = vsel %vm341, %v338, 0
  %v348 = vsel %vm341, %v340, 0
  %350 = vmatprep.subr.mxu0 0.0
  %351 = vmatpush1.xpose.msra.mxu0 %v346
  %352 = vmatprep.subr.mxu0 0.0
  %353 = vmatpush1.xpose.msra.mxu0 %v348
  %354 = vmatprep.subr.mxu0 0.0
  %355 = vmatpush1.xpose.msra.mxu0 0.0
  %356 = vmatprep.subr.mxu0 0.0
  %357 = vmatpush1.xpose.msra.mxu0 0.0
  %358 = vmatprep.subr.mxu0 0.0
  %359 = vmatpush1.xpose.msra.mxu0 0.0
  %360 = vmatprep.subr.mxu0 0.0
  %361 = vmatpush1.xpose.msra.mxu0 0.0
  %362 = vmatprep.subr.mxu0 0.0
  %363 = vmatpush1.xpose.msra.mxu0 0.0
  %364 = vmatprep.subr.mxu0 0.0
  %365 = vmatpush1.xpose.msra.mxu0 0.0
  %366 = vmatprep.subr.mxu0 0.0
  %367 = vmatpush1.xpose.msra.mxu0 0.0
  %368 = vmatprep.subr.mxu0 0.0
  %369 = vmatpush1.xpose.msra.mxu0 0.0
  %370 = vmatprep.subr.mxu0 0.0
  %371 = vmatpush1.xpose.msra.mxu0 0.0
  %372 = vmatprep.subr.mxu0 0.0
  %373 = vmatpush1.xpose.msra.mxu0 0.0
  %374 = vmatprep.subr.mxu0 0.0
  %375 = vmatpush1.xpose.msra.mxu0 0.0
  %376 = vmatprep.subr.mxu0 0.0
  %377 = vmatpush1.xpose.msra.mxu0 0.0
  %378 = vmatprep.subr.mxu0 0.0
  %379 = vmatpush1.xpose.msra.mxu0 0.0
  %380 = vmatprep.subr.mxu0 0.0
  %381 = vmatpush1.xpose.msra.mxu0 0.0
  %382 = vmatprep.subr.mxu0 0.0
  %383 = vmatpush1.xpose.msra.mxu0 0.0
  %384 = vmatprep.subr.mxu0 0.0
  %385 = vmatpush1.xpose.msra.mxu0 0.0
  %386 = vmatprep.subr.mxu0 0.0
  %387 = vmatpush1.xpose.msra.mxu0 0.0
  %388 = vmatprep.subr.mxu0 0.0
  %389 = vmatpush1.xpose.msra.mxu0 0.0
  %390 = vmatprep.subr.mxu0 0.0
  %391 = vmatpush1.xpose.msra.mxu0 0.0
  %392 = vmatprep.subr.mxu0 0.0
  %393 = vmatpush1.xpose.msra.mxu0 0.0
  %394 = vmatprep.subr.mxu0 0.0
  %395 = vmatpush1.xpose.msra.mxu0 0.0
  %396 = vmatprep.subr.mxu0 0.0
  %397 = vmatpush1.xpose.msra.mxu0 0.0
  %398 = vmatprep.subr.mxu0 0.0
  %399 = vmatpush1.xpose.msra.mxu0 0.0
  %400 = vmatprep.subr.mxu0 0.0
  %401 = vmatpush1.xpose.msra.mxu0 0.0
  %402 = vmatprep.subr.mxu0 0.0
  %403 = vmatpush1.xpose.msra.mxu0 0.0
  %404 = vmatprep.subr.mxu0 0.0
  %405 = vmatpush1.xpose.msra.mxu0 0.0
  %406 = vmatprep.subr.mxu0 0.0
  %407 = vmatpush1.xpose.msra.mxu0 0.0
  %408 = vmatprep.subr.mxu0 0.0
  %409 = vmatpush1.xpose.msra.mxu0 0.0
  %410 = vmatprep.subr.mxu0 0.0
  %411 = vmatpush1.xpose.msra.mxu0 0.0
  %412 = vmatprep.subr.mxu0 0.0
  %413 = vmatpush1.xpose.msra.mxu0 0.0
  %414 = vmatprep.mubr.f32.mxu0 0.0
  %415 = vmatmul.mubr.f32.gmra.mrb[0].mxu0 %v342
  %v416 = vpop.f32.mrb[0].mxu0
  %v417 = vadd.f32 %v50, %v416
  %v418 = vpop.f32.mrb[0].mxu0
  %419 = vmatprep.mubr.f32.mxu0 0.0
  %420 = vmatmul.mubr.f32.gmra.mrb[0].mxu0 %v344
  %v421 = vpop.f32.mrb[0].mxu0
  %v422 = vadd.f32 %v51, %v421
  %v423 = vpop.f32.mrb[0].mxu0
  %424 = vdwg.mxu0
  %vm425 = vcmask 80896
  %v426 = vsel %vm425, %v417, -inf
  %427 = vmax.xlane.f32.xlu0 %v426
  %v428 = vpop.xlane.xlu0 %427
  %vm429 = vcmask 74752
  %v430 = vsel %vm429, %v422, -inf
  %431 = vmax.xlane.f32.xlu0 %v430
  %v432 = vpop.xlane.xlu0 %431
  %v433 = vsub.f32 %v417, %v428
  %v434 = vsub.f32 %v422, %v432
  %v435 = vmul.f32 %v433, 1.442695
  %v436 = vpow.pop %v435
  %v437 = vmul.f32 %v434, 1.442695
  %v438 = vpow.pop %v437
  %v439 = vsel %vm425, %v436, 0.0
  %440 = vadd.xlane.f32.xlu0 %v439
  %v441 = vpop.xlane.xlu0 %440
  %v442 = vsel %vm429, %v438, 0.0
  %443 = vadd.xlane.f32.xlu0 %v442
  %v444 = vpop.xlane.xlu0 %443
  %v445 = vrcp.pop %v441
  %v446 = vrcp.pop %v444
  %v447 = vmul.f32 %v436, %v445
  %v448 = vmul.f32 %v438, %v446
  %v450 = vsel %vm425, %v447, 0
  %v453 = vsel %vm425, %v448, 0
  %vm455 = vcmask 1041408
  %v457 = vsel %vm455, %v333, 0
  %459 = vmatprep.subr.mxu0 0.0
  %460 = vmatpush1.msra.mxu0 %v327
  %461 = vmatprep.subr.mxu0 0.0
  %462 = vmatpush1.msra.mxu0 %v457
  %463 = vmatprep.subr.mxu0 0.0
  %464 = vmatpush1.msra.mxu0 0.0
  %465 = vmatprep.subr.mxu0 0.0
  %466 = vmatpush1.msra.mxu0 0.0
  %467 = vmatprep.subr.mxu0 0.0
  %468 = vmatpush1.msra.mxu0 0.0
  %469 = vmatprep.subr.mxu0 0.0
  %470 = vmatpush1.msra.mxu0 0.0
  %471 = vmatprep.subr.mxu0 0.0
  %472 = vmatpush1.msra.mxu0 0.0
  %473 = vmatprep.subr.mxu0 0.0
  %474 = vmatpush1.msra.mxu0 0.0
  %475 = vmatprep.subr.mxu0 0.0
  %476 = vmatpush1.msra.mxu0 0.0
  %477 = vmatprep.subr.mxu0 0.0
  %478 = vmatpush1.msra.mxu0 0.0
  %479 = vmatprep.subr.mxu0 0.0
  %480 = vmatpush1.msra.mxu0 0.0
  %481 = vmatprep.subr.mxu0 0.0
  %482 = vmatpush1.msra.mxu0 0.0
  %483 = vmatprep.subr.mxu0 0.0
  %484 = vmatpush1.msra.mxu0 0.0
  %485 = vmatprep.subr.mxu0 0.0
  %486 = vmatpush1.msra.mxu0 0.0
  %487 = vmatprep.subr.mxu0 0.0
  %488 = vmatpush1.msra.mxu0 0.0
  %489 = vmatprep.subr.mxu0 0.0
  %490 = vmatpush1.msra.mxu0 0.0
  %491 = vmatprep.subr.mxu0 0.0
  %492 = vmatpush1.msra.mxu0 0.0
  %493 = vmatprep.subr.mxu0 0.0
  %494 = vmatpush1.msra.mxu0 0.0
  %495 = vmatprep.subr.mxu0 0.0
  %496 = vmatpush1.msra.mxu0 0.0
  %497 = vmatprep.subr.mxu0 0.0
  %498 = vmatpush1.msra.mxu0 0.0
  %499 = vmatprep.subr.mxu0 0.0
  %500 = vmatpush1.msra.mxu0 0.0
  %501 = vmatprep.subr.mxu0 0.0
  %502 = vmatpush1.msra.mxu0 0.0
  %503 = vmatprep.subr.mxu0 0.0
  %504 = vmatpush1.msra.mxu0 0.0
  %505 = vmatprep.subr.mxu0 0.0
  %506 = vmatpush1.msra.mxu0 0.0
  %507 = vmatprep.subr.mxu0 0.0
  %508 = vmatpush1.msra.mxu0 0.0
  %509 = vmatprep.subr.mxu0 0.0
  %510 = vmatpush1.msra.mxu0 0.0
  %511 = vmatprep.subr.mxu0 0.0
  %512 = vmatpush1.msra.mxu0 0.0
  %513 = vmatprep.subr.mxu0 0.0
  %514 = vmatpush1.msra.mxu0 0.0
  %515 = vmatprep.subr.mxu0 0.0
  %516 = vmatpush1.msra.mxu0 0.0
  %517 = vmatprep.subr.mxu0 0.0
  %518 = vmatpush1.msra.mxu0 0.0
  %519 = vmatprep.subr.mxu0 0.0
  %520 = vmatpush1.msra.mxu0 0.0
  %521 = vmatprep.subr.mxu0 0.0
  %522 = vmatpush1.msra.mxu0 0.0
  %523 = vmatprep.mubr.f32.mxu0 0.0
  %524 = vmatmul.mubr.f32.gmra.mrb[0].mxu0 %v450
  %v525 = vpop.f32.mrb[0].mxu0
  %v526 = vadd.f32 0.0, %v525
  %v527 = vpop.f32.mrb[0].mxu0
  %528 = vmatprep.mubr.f32.mxu0 0.0
  %529 = vmatmul.mubr.f32.gmra.mrb[0].mxu0 %v453
  %v530 = vpop.f32.mrb[0].mxu0
  %v531 = vadd.f32 0.0, %v530
  %v532 = vpop.f32.mrb[0].mxu0
  %533 = vdwg.mxu0
  %534 = vrot.lane.b32.xlu0 %v325, 112
  %v535 = vpop.permute.xlu0 %534
  %536 = vrot.lane.b32.xlu0 %v331, 112
  %v537 = vpop.permute.xlu0 %536
  %538 = vrot.lane.b32.xlu0 %v325, 48
  %v539 = vpop.permute.xlu0 %538
  %540 = vrot.lane.b32.xlu0 %v331, 48
  %v541 = vpop.permute.xlu0 %540
  %v542 = vsel %vm341, %v535, 0
  %v544 = vsel %vm341, %v537, 0
  %v546 = vsel %vm341, %v539, 0
  %v548 = vsel %vm341, %v541, 0
  %550 = vmatprep.subr.mxu0 0.0
  %551 = vmatpush1.xpose.msra.mxu0 %v546
  %552 = vmatprep.subr.mxu0 0.0
  %553 = vmatpush1.xpose.msra.mxu0 %v548
  %554 = vmatprep.subr.mxu0 0.0
  %555 = vmatpush1.xpose.msra.mxu0 0.0
  %556 = vmatprep.subr.mxu0 0.0
  %557 = vmatpush1.xpose.msra.mxu0 0.0
  %558 = vmatprep.subr.mxu0 0.0
  %559 = vmatpush1.xpose.msra.mxu0 0.0
  %560 = vmatprep.subr.mxu0 0.0
  %561 = vmatpush1.xpose.msra.mxu0 0.0
  %562 = vmatprep.subr.mxu0 0.0
  %563 = vmatpush1.xpose.msra.mxu0 0.0
  %564 = vmatprep.subr.mxu0 0.0
  %565 = vmatpush1.xpose.msra.mxu0 0.0
  %566 = vmatprep.subr.mxu0 0.0
  %567 = vmatpush1.xpose.msra.mxu0 0.0
  %568 = vmatprep.subr.mxu0 0.0
  %569 = vmatpush1.xpose.msra.mxu0 0.0
  %570 = vmatprep.subr.mxu0 0.0
  %571 = vmatpush1.xpose.msra.mxu0 0.0
  %572 = vmatprep.subr.mxu0 0.0
  %573 = vmatpush1.xpose.msra.mxu0 0.0
  %574 = vmatprep.subr.mxu0 0.0
  %575 = vmatpush1.xpose.msra.mxu0 0.0
  %576 = vmatprep.subr.mxu0 0.0
  %577 = vmatpush1.xpose.msra.mxu0 0.0
  %578 = vmatprep.subr.mxu0 0.0
  %579 = vmatpush1.xpose.msra.mxu0 0.0
  %580 = vmatprep.subr.mxu0 0.0
  %581 = vmatpush1.xpose.msra.mxu0 0.0
  %582 = vmatprep.subr.mxu0 0.0
  %583 = vmatpush1.xpose.msra.mxu0 0.0
  %584 = vmatprep.subr.mxu0 0.0
  %585 = vmatpush1.xpose.msra.mxu0 0.0
  %586 = vmatprep.subr.mxu0 0.0
  %587 = vmatpush1.xpose.msra.mxu0 0.0
  %588 = vmatprep.subr.mxu0 0.0
  %589 = vmatpush1.xpose.msra.mxu0 0.0
  %590 = vmatprep.subr.mxu0 0.0
  %591 = vmatpush1.xpose.msra.mxu0 0.0
  %592 = vmatprep.subr.mxu0 0.0
  %593 = vmatpush1.xpose.msra.mxu0 0.0
  %594 = vmatprep.subr.mxu0 0.0
  %595 = vmatpush1.xpose.msra.mxu0 0.0
  %596 = vmatprep.subr.mxu0 0.0
  %597 = vmatpush1.xpose.msra.mxu0 0.0
  %598 = vmatprep.subr.mxu0 0.0
  %599 = vmatpush1.xpose.msra.mxu0 0.0
  %600 = vmatprep.subr.mxu0 0.0
  %601 = vmatpush1.xpose.msra.mxu0 0.0
  %602 = vmatprep.subr.mxu0 0.0
  %603 = vmatpush1.xpose.msra.mxu0 0.0
  %604 = vmatprep.subr.mxu0 0.0
  %605 = vmatpush1.xpose.msra.mxu0 0.0
  %606 = vmatprep.subr.mxu0 0.0
  %607 = vmatpush1.xpose.msra.mxu0 0.0
  %608 = vmatprep.subr.mxu0 0.0
  %609 = vmatpush1.xpose.msra.mxu0 0.0
  %610 = vmatprep.subr.mxu0 0.0
  %611 = vmatpush1.xpose.msra.mxu0 0.0
  %612 = vmatprep.subr.mxu0 0.0
  %613 = vmatpush1.xpose.msra.mxu0 0.0
  %614 = vmatprep.mubr.f32.mxu0 0.0
  %615 = vmatmul.mubr.f32.gmra.mrb[0].mxu0 %v542
  %v616 = vpop.f32.mrb[0].mxu0
  %v617 = vadd.f32 %v50, %v616
  %v618 = vpop.f32.mrb[0].mxu0
  %619 = vmatprep.mubr.f32.mxu0 0.0
  %620 = vmatmul.mubr.f32.gmra.mrb[0].mxu0 %v544
  %v621 = vpop.f32.mrb[0].mxu0
  %v622 = vadd.f32 %v51, %v621
  %v623 = vpop.f32.mrb[0].mxu0
  %624 = vdwg.mxu0
  %v625 = vsel %vm425, %v617, -inf
  %626 = vmax.xlane.f32.xlu0 %v625
  %v627 = vpop.xlane.xlu0 %626
  %v628 = vsel %vm429, %v622, -inf
  %629 = vmax.xlane.f32.xlu0 %v628
  %v630 = vpop.xlane.xlu0 %629
  %v631 = vsub.f32 %v617, %v627
  %v632 = vsub.f32 %v622, %v630
  %v633 = vmul.f32 %v631, 1.442695
  %v634 = vpow.pop %v633
  %v635 = vmul.f32 %v632, 1.442695
  %v636 = vpow.pop %v635
  %v637 = vsel %vm425, %v634, 0.0
  %638 = vadd.xlane.f32.xlu0 %v637
  %v639 = vpop.xlane.xlu0 %638
  %v640 = vsel %vm429, %v636, 0.0
  %641 = vadd.xlane.f32.xlu0 %v640
  %v642 = vpop.xlane.xlu0 %641
  %v643 = vrcp.pop %v639
  %v644 = vrcp.pop %v642
  %v645 = vmul.f32 %v634, %v643
  %v646 = vmul.f32 %v636, %v644
  %648 = vrot.lane.b32.xlu0 %v327, 112
  %v649 = vpop.permute.xlu0 %648
  %650 = vrot.lane.b32.xlu0 %v333, 112
  %v651 = vpop.permute.xlu0 %650
  %v654 = vsel %vm425, %v645, 0
  %v657 = vsel %vm425, %v646, 0
  %v659 = vsel %vm455, %v651, 0
  %661 = vmatprep.subr.mxu0 0.0
  %662 = vmatpush1.msra.mxu0 %v649
  %663 = vmatprep.subr.mxu0 0.0
  %664 = vmatpush1.msra.mxu0 %v659
  %665 = vmatprep.subr.mxu0 0.0
  %666 = vmatpush1.msra.mxu0 0.0
  %667 = vmatprep.subr.mxu0 0.0
  %668 = vmatpush1.msra.mxu0 0.0
  %669 = vmatprep.subr.mxu0 0.0
  %670 = vmatpush1.msra.mxu0 0.0
  %671 = vmatprep.subr.mxu0 0.0
  %672 = vmatpush1.msra.mxu0 0.0
  %673 = vmatprep.subr.mxu0 0.0
  %674 = vmatpush1.msra.mxu0 0.0
  %675 = vmatprep.subr.mxu0 0.0
  %676 = vmatpush1.msra.mxu0 0.0
  %677 = vmatprep.subr.mxu0 0.0
  %678 = vmatpush1.msra.mxu0 0.0
  %679 = vmatprep.subr.mxu0 0.0
  %680 = vmatpush1.msra.mxu0 0.0
  %681 = vmatprep.subr.mxu0 0.0
  %682 = vmatpush1.msra.mxu0 0.0
  %683 = vmatprep.subr.mxu0 0.0
  %684 = vmatpush1.msra.mxu0 0.0
  %685 = vmatprep.subr.mxu0 0.0
  %686 = vmatpush1.msra.mxu0 0.0
  %687 = vmatprep.subr.mxu0 0.0
  %688 = vmatpush1.msra.mxu0 0.0
  %689 = vmatprep.subr.mxu0 0.0
  %690 = vmatpush1.msra.mxu0 0.0
  %691 = vmatprep.subr.mxu0 0.0
  %692 = vmatpush1.msra.mxu0 0.0
  %693 = vmatprep.subr.mxu0 0.0
  %694 = vmatpush1.msra.mxu0 0.0
  %695 = vmatprep.subr.mxu0 0.0
  %696 = vmatpush1.msra.mxu0 0.0
  %697 = vmatprep.subr.mxu0 0.0
  %698 = vmatpush1.msra.mxu0 0.0
  %699 = vmatprep.subr.mxu0 0.0
  %700 = vmatpush1.msra.mxu0 0.0
  %701 = vmatprep.subr.mxu0 0.0
  %702 = vmatpush1.msra.mxu0 0.0
  %703 = vmatprep.subr.mxu0 0.0
  %704 = vmatpush1.msra.mxu0 0.0
  %705 = vmatprep.subr.mxu0 0.0
  %706 = vmatpush1.msra.mxu0 0.0
  %707 = vmatprep.subr.mxu0 0.0
  %708 = vmatpush1.msra.mxu0 0.0
  %709 = vmatprep.subr.mxu0 0.0
  %710 = vmatpush1.msra.mxu0 0.0
  %711 = vmatprep.subr.mxu0 0.0
  %712 = vmatpush1.msra.mxu0 0.0
  %713 = vmatprep.subr.mxu0 0.0
  %714 = vmatpush1.msra.mxu0 0.0
  %715 = vmatprep.subr.mxu0 0.0
  %716 = vmatpush1.msra.mxu0 0.0
  %717 = vmatprep.subr.mxu0 0.0
  %718 = vmatpush1.msra.mxu0 0.0
  %719 = vmatprep.subr.mxu0 0.0
  %720 = vmatpush1.msra.mxu0 0.0
  %721 = vmatprep.subr.mxu0 0.0
  %722 = vmatpush1.msra.mxu0 0.0
  %723 = vmatprep.subr.mxu0 0.0
  %724 = vmatpush1.msra.mxu0 0.0
  %725 = vmatprep.mubr.f32.mxu0 0.0
  %726 = vmatmul.mubr.f32.gmra.mrb[0].mxu0 %v654
  %v727 = vpop.f32.mrb[0].mxu0
  %v728 = vadd.f32 0.0, %v727
  %v729 = vpop.f32.mrb[0].mxu0
  %730 = vmatprep.mubr.f32.mxu0 0.0
  %731 = vmatmul.mubr.f32.gmra.mrb[0].mxu0 %v657
  %v732 = vpop.f32.mrb[0].mxu0
  %v733 = vadd.f32 0.0, %v732
  %v734 = vpop.f32.mrb[0].mxu0
  %735 = vdwg.mxu0
  %736 = vrot.lane.b32.xlu0 %v325, 96
  %v737 = vpop.permute.xlu0 %736
  %738 = vrot.lane.b32.xlu0 %v331, 96
  %v739 = vpop.permute.xlu0 %738
  %740 = vrot.lane.b32.xlu0 %v325, 32
  %v741 = vpop.permute.xlu0 %740
  %742 = vrot.lane.b32.xlu0 %v331, 32
  %v743 = vpop.permute.xlu0 %742
  %v744 = vsel %vm341, %v737, 0
  %v746 = vsel %vm341, %v739, 0
  %v748 = vsel %vm341, %v741, 0
  %v750 = vsel %vm341, %v743, 0
  %752 = vmatprep.subr.mxu0 0.0
  %753 = vmatpush1.xpose.msra.mxu0 %v748
  %754 = vmatprep.subr.mxu0 0.0
  %755 = vmatpush1.xpose.msra.mxu0 %v750
  %756 = vmatprep.subr.mxu0 0.0
  %757 = vmatpush1.xpose.msra.mxu0 0.0
  %758 = vmatprep.subr.mxu0 0.0
  %759 = vmatpush1.xpose.msra.mxu0 0.0
  %760 = vmatprep.subr.mxu0 0.0
  %761 = vmatpush1.xpose.msra.mxu0 0.0
  %762 = vmatprep.subr.mxu0 0.0
  %763 = vmatpush1.xpose.msra.mxu0 0.0
  %764 = vmatprep.subr.mxu0 0.0
  %765 = vmatpush1.xpose.msra.mxu0 0.0
  %766 = vmatprep.subr.mxu0 0.0
  %767 = vmatpush1.xpose.msra.mxu0 0.0
  %768 = vmatprep.subr.mxu0 0.0
  %769 = vmatpush1.xpose.msra.mxu0 0.0
  %770 = vmatprep.subr.mxu0 0.0
  %771 = vmatpush1.xpose.msra.mxu0 0.0
  %772 = vmatprep.subr.mxu0 0.0
  %773 = vmatpush1.xpose.msra.mxu0 0.0
  %774 = vmatprep.subr.mxu0 0.0
  %775 = vmatpush1.xpose.msra.mxu0 0.0
  %776 = vmatprep.subr.mxu0 0.0
  %777 = vmatpush1.xpose.msra.mxu0 0.0
  %778 = vmatprep.subr.mxu0 0.0
  %779 = vmatpush1.xpose.msra.mxu0 0.0
  %780 = vmatprep.subr.mxu0 0.0
  %781 = vmatpush1.xpose.msra.mxu0 0.0
  %782 = vmatprep.subr.mxu0 0.0
  %783 = vmatpush1.xpose.msra.mxu0 0.0
  %784 = vmatprep.subr.mxu0 0.0
  %785 = vmatpush1.xpose.msra.mxu0 0.0
  %786 = vmatprep.subr.mxu0 0.0
  %787 = vmatpush1.xpose.msra.mxu0 0.0
  %788 = vmatprep.subr.mxu0 0.0
  %789 = vmatpush1.xpose.msra.mxu0 0.0
  %790 = vmatprep.subr.mxu0 0.0
  %791 = vmatpush1.xpose.msra.mxu0 0.0
  %792 = vmatprep.subr.mxu0 0.0
  %793 = vmatpush1.xpose.msra.mxu0 0.0
  %794 = vmatprep.subr.mxu0 0.0
  %795 = vmatpush1.xpose.msra.mxu0 0.0
  %796 = vmatprep.subr.mxu0 0.0
  %797 = vmatpush1.xpose.msra.mxu0 0.0
  %798 = vmatprep.subr.mxu0 0.0
  %799 = vmatpush1.xpose.msra.mxu0 0.0
  %800 = vmatprep.subr.mxu0 0.0
  %801 = vmatpush1.xpose.msra.mxu0 0.0
  %802 = vmatprep.subr.mxu0 0.0
  %803 = vmatpush1.xpose.msra.mxu0 0.0
  %804 = vmatprep.subr.mxu0 0.0
  %805 = vmatpush1.xpose.msra.mxu0 0.0
  %806 = vmatprep.subr.mxu0 0.0
  %807 = vmatpush1.xpose.msra.mxu0 0.0
  %808 = vmatprep.subr.mxu0 0.0
  %809 = vmatpush1.xpose.msra.mxu0 0.0
  %810 = vmatprep.subr.mxu0 0.0
  %811 = vmatpush1.xpose.msra.mxu0 0.0
  %812 = vmatprep.subr.mxu0 0.0
  %813 = vmatpush1.xpose.msra.mxu0 0.0
  %814 = vmatprep.subr.mxu0 0.0
  %815 = vmatpush1.xpose.msra.mxu0 0.0
  %816 = vmatprep.mubr.f32.mxu0 0.0
  %817 = vmatmul.mubr.f32.gmra.mrb[0].mxu0 %v744
  %v818 = vpop.f32.mrb[0].mxu0
  %v819 = vadd.f32 %v50, %v818
  %v820 = vpop.f32.mrb[0].mxu0
  %821 = vmatprep.mubr.f32.mxu0 0.0
  %822 = vmatmul.mubr.f32.gmra.mrb[0].mxu0 %v746
  %v823 = vpop.f32.mrb[0].mxu0
  %v824 = vadd.f32 %v51, %v823
  %v825 = vpop.f32.mrb[0].mxu0
  %826 = vdwg.mxu0
  %v827 = vsel %vm425, %v819, -inf
  %828 = vmax.xlane.f32.xlu0 %v827
  %v829 = vpop.xlane.xlu0 %828
  %v830 = vsel %vm429, %v824, -inf
  %831 = vmax.xlane.f32.xlu0 %v830
  %v832 = vpop.xlane.xlu0 %831
  %v833 = vsub.f32 %v819, %v829
  %v834 = vsub.f32 %v824, %v832
  %v835 = vmul.f32 %v833, 1.442695
  %v836 = vpow.pop %v835
  %v837 = vmul.f32 %v834, 1.442695
  %v838 = vpow.pop %v837
  %v839 = vsel %vm425, %v836, 0.0
  %840 = vadd.xlane.f32.xlu0 %v839
  %v841 = vpop.xlane.xlu0 %840
  %v842 = vsel %vm429, %v838, 0.0
  %843 = vadd.xlane.f32.xlu0 %v842
  %v844 = vpop.xlane.xlu0 %843
  %v845 = vrcp.pop %v841
  %v846 = vrcp.pop %v844
  %v847 = vmul.f32 %v836, %v845
  %v848 = vmul.f32 %v838, %v846
  %849 = vrot.lane.b32.xlu0 %v327, 96
  %v850 = vpop.permute.xlu0 %849
  %851 = vrot.lane.b32.xlu0 %v333, 96
  %v852 = vpop.permute.xlu0 %851
  %v855 = vsel %vm425, %v847, 0
  %v858 = vsel %vm425, %v848, 0
  %v860 = vsel %vm455, %v852, 0
  %862 = vmatprep.subr.mxu0 0.0
  %863 = vmatpush1.msra.mxu0 %v850
  %864 = vmatprep.subr.mxu0 0.0
  %865 = vmatpush1.msra.mxu0 %v860
  %866 = vmatprep.subr.mxu0 0.0
  %867 = vmatpush1.msra.mxu0 0.0
  %868 = vmatprep.subr.mxu0 0.0
  %869 = vmatpush1.msra.mxu0 0.0
  %870 = vmatprep.subr.mxu0 0.0
  %871 = vmatpush1.msra.mxu0 0.0
  %872 = vmatprep.subr.mxu0 0.0
  %873 = vmatpush1.msra.mxu0 0.0
  %874 = vmatprep.subr.mxu0 0.0
  %875 = vmatpush1.msra.mxu0 0.0
  %876 = vmatprep.subr.mxu0 0.0
  %877 = vmatpush1.msra.mxu0 0.0
  %878 = vmatprep.subr.mxu0 0.0
  %879 = vmatpush1.msra.mxu0 0.0
  %880 = vmatprep.subr.mxu0 0.0
  %881 = vmatpush1.msra.mxu0 0.0
  %882 = vmatprep.subr.mxu0 0.0
  %883 = vmatpush1.msra.mxu0 0.0
  %884 = vmatprep.subr.mxu0 0.0
  %885 = vmatpush1.msra.mxu0 0.0
  %886 = vmatprep.subr.mxu0 0.0
  %887 = vmatpush1.msra.mxu0 0.0
  %888 = vmatprep.subr.mxu0 0.0
  %889 = vmatpush1.msra.mxu0 0.0
  %890 = vmatprep.subr.mxu0 0.0
  %891 = vmatpush1.msra.mxu0 0.0
  %892 = vmatprep.subr.mxu0 0.0
  %893 = vmatpush1.msra.mxu0 0.0
  %894 = vmatprep.subr.mxu0 0.0
  %895 = vmatpush1.msra.mxu0 0.0
  %896 = vmatprep.subr.mxu0 0.0
  %897 = vmatpush1.msra.mxu0 0.0
  %898 = vmatprep.subr.mxu0 0.0
  %899 = vmatpush1.msra.mxu0 0.0
  %900 = vmatprep.subr.mxu0 0.0
  %901 = vmatpush1.msra.mxu0 0.0
  %902 = vmatprep.subr.mxu0 0.0
  %903 = vmatpush1.msra.mxu0 0.0
  %904 = vmatprep.subr.mxu0 0.0
  %905 = vmatpush1.msra.mxu0 0.0
  %906 = vmatprep.subr.mxu0 0.0
  %907 = vmatpush1.msra.mxu0 0.0
  %908 = vmatprep.subr.mxu0 0.0
  %909 = vmatpush1.msra.mxu0 0.0
  %910 = vmatprep.subr.mxu0 0.0
  %911 = vmatpush1.msra.mxu0 0.0
  %912 = vmatprep.subr.mxu0 0.0
  %913 = vmatpush1.msra.mxu0 0.0
  %914 = vmatprep.subr.mxu0 0.0
  %915 = vmatpush1.msra.mxu0 0.0
  %916 = vmatprep.subr.mxu0 0.0
  %917 = vmatpush1.msra.mxu0 0.0
  %918 = vmatprep.subr.mxu0 0.0
  %919 = vmatpush1.msra.mxu0 0.0
  %920 = vmatprep.subr.mxu0 0.0
  %921 = vmatpush1.msra.mxu0 0.0
  %922 = vmatprep.subr.mxu0 0.0
  %923 = vmatpush1.msra.mxu0 0.0
  %924 = vmatprep.subr.mxu0 0.0
  %925 = vmatpush1.msra.mxu0 0.0
  %926 = vmatprep.mubr.f32.mxu0 0.0
  %927 = vmatmul.mubr.f32.gmra.mrb[0].mxu0 %v855
  %v928 = vpop.f32.mrb[0].mxu0
  %v929 = vadd.f32 0.0, %v928
  %v930 = vpop.f32.mrb[0].mxu0
  %931 = vmatprep.mubr.f32.mxu0 0.0
  %932 = vmatmul.mubr.f32.gmra.mrb[0].mxu0 %v858
  %v933 = vpop.f32.mrb[0].mxu0
  %v934 = vadd.f32 0.0, %v933
  %v935 = vpop.f32.mrb[0].mxu0
  %936 = vdwg.mxu0
  %937 = vrot.lane.b32.xlu0 %v325, 80
  %v938 = vpop.permute.xlu0 %937
  %939 = vrot.lane.b32.xlu0 %v331, 80
  %v940 = vpop.permute.xlu0 %939
  %941 = vrot.lane.b32.xlu0 %v325, 16
  %v942 = vpop.permute.xlu0 %941
  %943 = vrot.lane.b32.xlu0 %v331, 16
  %v944 = vpop.permute.xlu0 %943
  %v945 = vsel %vm341, %v938, 0
  %v947 = vsel %vm341, %v940, 0
  %v949 = vsel %vm341, %v942, 0
  %v951 = vsel %vm341, %v944, 0
  %953 = vmatprep.subr.mxu0 0.0
  %954 = vmatpush1.xpose.msra.mxu0 %v949
  %955 = vmatprep.subr.mxu0 0.0
  %956 = vmatpush1.xpose.msra.mxu0 %v951
  %957 = vmatprep.subr.mxu0 0.0
  %958 = vmatpush1.xpose.msra.mxu0 0.0
  %959 = vmatprep.subr.mxu0 0.0
  %960 = vmatpush1.xpose.msra.mxu0 0.0
  %961 = vmatprep.subr.mxu0 0.0
  %962 = vmatpush1.xpose.msra.mxu0 0.0
  %963 = vmatprep.subr.mxu0 0.0
  %964 = vmatpush1.xpose.msra.mxu0 0.0
  %965 = vmatprep.subr.mxu0 0.0
  %966 = vmatpush1.xpose.msra.mxu0 0.0
  %967 = vmatprep.subr.mxu0 0.0
  %968 = vmatpush1.xpose.msra.mxu0 0.0
  %969 = vmatprep.subr.mxu0 0.0
  %970 = vmatpush1.xpose.msra.mxu0 0.0
  %971 = vmatprep.subr.mxu0 0.0
  %972 = vmatpush1.xpose.msra.mxu0 0.0
  %973 = vmatprep.subr.mxu0 0.0
  %974 = vmatpush1.xpose.msra.mxu0 0.0
  %975 = vmatprep.subr.mxu0 0.0
  %976 = vmatpush1.xpose.msra.mxu0 0.0
  %977 = vmatprep.subr.mxu0 0.0
  %978 = vmatpush1.xpose.msra.mxu0 0.0
  %979 = vmatprep.subr.mxu0 0.0
  %980 = vmatpush1.xpose.msra.mxu0 0.0
  %981 = vmatprep.subr.mxu0 0.0
  %982 = vmatpush1.xpose.msra.mxu0 0.0
  %983 = vmatprep.subr.mxu0 0.0
  %984 = vmatpush1.xpose.msra.mxu0 0.0
  %985 = vmatprep.subr.mxu0 0.0
  %986 = vmatpush1.xpose.msra.mxu0 0.0
  %987 = vmatprep.subr.mxu0 0.0
  %988 = vmatpush1.xpose.msra.mxu0 0.0
  %989 = vmatprep.subr.mxu0 0.0
  %990 = vmatpush1.xpose.msra.mxu0 0.0
  %991 = vmatprep.subr.mxu0 0.0
  %992 = vmatpush1.xpose.msra.mxu0 0.0
  %993 = vmatprep.subr.mxu0 0.0
  %994 = vmatpush1.xpose.msra.mxu0 0.0
  %995 = vmatprep.subr.mxu0 0.0
  %996 = vmatpush1.xpose.msra.mxu0 0.0
  %997 = vmatprep.subr.mxu0 0.0
  %998 = vmatpush1.xpose.msra.mxu0 0.0
  %999 = vmatprep.subr.mxu0 0.0
  %1000 = vmatpush1.xpose.msra.mxu0 0.0
  %1001 = vmatprep.subr.mxu0 0.0
  %1002 = vmatpush1.xpose.msra.mxu0 0.0
  %1003 = vmatprep.subr.mxu0 0.0
  %1004 = vmatpush1.xpose.msra.mxu0 0.0
  %1005 = vmatprep.subr.mxu0 0.0
  %1006 = vmatpush1.xpose.msra.mxu0 0.0
  %1007 = vmatprep.subr.mxu0 0.0
  %1008 = vmatpush1.xpose.msra.mxu0 0.0
  %1009 = vmatprep.subr.mxu0 0.0
  %1010 = vmatpush1.xpose.msra.mxu0 0.0
  %1011 = vmatprep.subr.mxu0 0.0
  %1012 = vmatpush1.xpose.msra.mxu0 0.0
  %1013 = vmatprep.subr.mxu0 0.0
  %1014 = vmatpush1.xpose.msra.mxu0 0.0
  %1015 = vmatprep.subr.mxu0 0.0
  %1016 = vmatpush1.xpose.msra.mxu0 0.0
  %1017 = vmatprep.mubr.f32.mxu0 0.0
  %1018 = vmatmul.mubr.f32.gmra.mrb[0].mxu0 %v945
  %v1019 = vpop.f32.mrb[0].mxu0
  %v1020 = vadd.f32 %v50, %v1019
  %v1021 = vpop.f32.mrb[0].mxu0
  %1022 = vmatprep.mubr.f32.mxu0 0.0
  %1023 = vmatmul.mubr.f32.gmra.mrb[0].mxu0 %v947
  %v1024 = vpop.f32.mrb[0].mxu0
  %v1025 = vadd.f32 %v51, %v1024
  %v1026 = vpop.f32.mrb[0].mxu0
  %1027 = vdwg.mxu0
  %v1028 = vsel %vm425, %v1020, -inf
  %1029 = vmax.xlane.f32.xlu0 %v1028
  %v1030 = vpop.xlane.xlu0 %1029
  %v1031 = vsel %vm429, %v1025, -inf
  %1032 = vmax.xlane.f32.xlu0 %v1031
  %v1033 = vpop.xlane.xlu0 %1032
  %v1034 = vsub.f32 %v1020, %v1030
  %v1035 = vsub.f32 %v1025, %v1033
  %v1036 = vmul.f32 %v1034, 1.442695
  %v1037 = vpow.pop %v1036
  %v1038 = vmul.f32 %v1035, 1.442695
  %v1039 = vpow.pop %v1038
  %v1040 = vsel %vm425, %v1037, 0.0
  %1041 = vadd.xlane.f32.xlu0 %v1040
  %v1042 = vpop.xlane.xlu0 %1041
  %v1043 = vsel %vm429, %v1039, 0.0
  %1044 = vadd.xlane.f32.xlu0 %v1043
  %v1045 = vpop.xlane.xlu0 %1044
  %v1046 = vrcp.pop %v1042
  %v1047 = vrcp.pop %v1045
  %v1048 = vmul.f32 %v1037, %v1046
  %v1049 = vmul.f32 %v1039, %v1047
  %1050 = vrot.lane.b32.xlu0 %v327, 80
  %v1051 = vpop.permute.xlu0 %1050
  %1052 = vrot.lane.b32.xlu0 %v333, 80
  %v1053 = vpop.permute.xlu0 %1052
  %v1056 = vsel %vm425, %v1048, 0
  %v1059 = vsel %vm425, %v1049, 0
  %v1061 = vsel %vm455, %v1053, 0
  %1063 = vmatprep.subr.mxu0 0.0
  %1064 = vmatpush1.msra.mxu0 %v1051
  %1065 = vmatprep.subr.mxu0 0.0
  %1066 = vmatpush1.msra.mxu0 %v1061
  %1067 = vmatprep.subr.mxu0 0.0
  %1068 = vmatpush1.msra.mxu0 0.0
  %1069 = vmatprep.subr.mxu0 0.0
  %1070 = vmatpush1.msra.mxu0 0.0
  %1071 = vmatprep.subr.mxu0 0.0
  %1072 = vmatpush1.msra.mxu0 0.0
  %1073 = vmatprep.subr.mxu0 0.0
  %1074 = vmatpush1.msra.mxu0 0.0
  %1075 = vmatprep.subr.mxu0 0.0
  %1076 = vmatpush1.msra.mxu0 0.0
  %1077 = vmatprep.subr.mxu0 0.0
  %1078 = vmatpush1.msra.mxu0 0.0
  %1079 = vmatprep.subr.mxu0 0.0
  %1080 = vmatpush1.msra.mxu0 0.0
  %1081 = vmatprep.subr.mxu0 0.0
  %1082 = vmatpush1.msra.mxu0 0.0
  %1083 = vmatprep.subr.mxu0 0.0
  %1084 = vmatpush1.msra.mxu0 0.0
  %1085 = vmatprep.subr.mxu0 0.0
  %1086 = vmatpush1.msra.mxu0 0.0
  %1087 = vmatprep.subr.mxu0 0.0
  %1088 = vmatpush1.msra.mxu0 0.0
  %1089 = vmatprep.subr.mxu0 0.0
  %1090 = vmatpush1.msra.mxu0 0.0
  %1091 = vmatprep.subr.mxu0 0.0
  %1092 = vmatpush1.msra.mxu0 0.0
  %1093 = vmatprep.subr.mxu0 0.0
  %1094 = vmatpush1.msra.mxu0 0.0
  %1095 = vmatprep.subr.mxu0 0.0
  %1096 = vmatpush1.msra.mxu0 0.0
  %1097 = vmatprep.subr.mxu0 0.0
  %1098 = vmatpush1.msra.mxu0 0.0
  %1099 = vmatprep.subr.mxu0 0.0
  %1100 = vmatpush1.msra.mxu0 0.0
  %1101 = vmatprep.subr.mxu0 0.0
  %1102 = vmatpush1.msra.mxu0 0.0
  %1103 = vmatprep.subr.mxu0 0.0
  %1104 = vmatpush1.msra.mxu0 0.0
  %1105 = vmatprep.subr.mxu0 0.0
  %1106 = vmatpush1.msra.mxu0 0.0
  %1107 = vmatprep.subr.mxu0 0.0
  %1108 = vmatpush1.msra.mxu0 0.0
  %1109 = vmatprep.subr.mxu0 0.0
  %1110 = vmatpush1.msra.mxu0 0.0
  %1111 = vmatprep.subr.mxu0 0.0
  %1112 = vmatpush1.msra.mxu0 0.0
  %1113 = vmatprep.subr.mxu0 0.0
  %1114 = vmatpush1.msra.mxu0 0.0
  %1115 = vmatprep.subr.mxu0 0.0
  %1116 = vmatpush1.msra.mxu0 0.0
  %1117 = vmatprep.subr.mxu0 0.0
  %1118 = vmatpush1.msra.mxu0 0.0
  %1119 = vmatprep.subr.mxu0 0.0
  %1120 = vmatpush1.msra.mxu0 0.0
  %1121 = vmatprep.subr.mxu0 0.0
  %1122 = vmatpush1.msra.mxu0 0.0
  %1123 = vmatprep.subr.mxu0 0.0
  %1124 = vmatpush1.msra.mxu0 0.0
  %1125 = vmatprep.subr.mxu0 0.0
  %1126 = vmatpush1.msra.mxu0 0.0
  %1127 = vmatprep.mubr.f32.mxu0 0.0
  %1128 = vmatmul.mubr.f32.gmra.mrb[0].mxu0 %v1056
  %v1129 = vpop.f32.mrb[0].mxu0
  %v1130 = vadd.f32 0.0, %v1129
  %v1131 = vpop.f32.mrb[0].mxu0
  %1132 = vmatprep.mubr.f32.mxu0 0.0
  %1133 = vmatmul.mubr.f32.gmra.mrb[0].mxu0 %v1059
  %v1134 = vpop.f32.mrb[0].mxu0
  %v1135 = vadd.f32 0.0, %v1134
  %v1136 = vpop.f32.mrb[0].mxu0
  %1137 = vdwg.mxu0
  %1140 = vrot.lane.b32.xlu0 %v728, 16
  %v1141 = vpop.permute.xlu0 %1140
  %1142 = vrot.lane.b32.xlu0 %v733, 16
  %v1143 = vpop.permute.xlu0 %1142
  %1148 = vrot.lane.b32.xlu0 %v929, 32
  %v1149 = vpop.permute.xlu0 %1148
  %1150 = vrot.lane.b32.xlu0 %v934, 32
  %v1151 = vpop.permute.xlu0 %1150
  %1156 = vrot.lane.b32.xlu0 %v1130, 48
  %v1157 = vpop.permute.xlu0 %1156
  %1158 = vrot.lane.b32.xlu0 %v1135, 48
  %v1159 = vpop.permute.xlu0 %1158
  %v1162 = vsel %vm341, %v526, %v1141
  %v1163 = vsel %vm341, %v531, %v1143
  %vm1164 = vcmask 261120
  %v1165 = vsel %vm1164, %v1162, %v1149
  %v1166 = vsel %vm1164, %v1163, %v1151
  %vm1167 = vcmask 392192
  %v1168 = vsel %vm1167, %v1165, %v1157
  %v1169 = vsel %vm1167, %v1166, %v1159
  %v1170 = vlaneseq
  %v1171 = vshrl.u32 %v1170, 7
  %v1172 = vsub.s32 3, %v1171
  %v1173 = vrot.slane %v202, %v1172
  %1182 = vrot.lane.b32.xlu0 %v179, 64
  %v1183 = vpop.permute.xlu0 %1182
  %1184 = vrot.lane.b32.xlu0 %v182, 64
  %v1185 = vpop.permute.xlu0 %1184
  %1186 = vrot.lane.b32.xlu0 %v185, 64
  %v1187 = vpop.permute.xlu0 %1186
  %1188 = vrot.lane.b32.xlu0 %v188, 64
  %v1189 = vpop.permute.xlu0 %1188
  %1190 = vrot.lane.b32.xlu0 %v191, 64
  %v1191 = vpop.permute.xlu0 %1190
  %1192 = vrot.lane.b32.xlu0 %v194, 64
  %v1193 = vpop.permute.xlu0 %1192
  %1194 = vrot.lane.b32.xlu0 %v197, 64
  %v1195 = vpop.permute.xlu0 %1194
  %1196 = vrot.lane.b32.xlu0 %v200, 64
  %v1197 = vpop.permute.xlu0 %1196
  %v1207 = vsel %vm82, %v1168, 0
  %v1210 = vsel %vm82, %v1169, 0
  %1212 = vmatprep.subr.mxu0 0.0
  %1213 = vmatpush1.msra.mxu0 %v1183
  %1214 = vmatprep.subr.mxu0 0.0
  %1215 = vmatpush1.msra.mxu0 %v1185
  %1216 = vmatprep.subr.mxu0 0.0
  %1217 = vmatpush1.msra.mxu0 %v1187
  %1218 = vmatprep.subr.mxu0 0.0
  %1219 = vmatpush1.msra.mxu0 %v1189
  %1220 = vmatprep.subr.mxu0 0.0
  %1221 = vmatpush1.msra.mxu0 %v1191
  %1222 = vmatprep.subr.mxu0 0.0
  %1223 = vmatpush1.msra.mxu0 %v1193
  %1224 = vmatprep.subr.mxu0 0.0
  %1225 = vmatpush1.msra.mxu0 %v1195
  %1226 = vmatprep.subr.mxu0 0.0
  %1227 = vmatpush1.msra.mxu0 %v1197
  %1228 = vmatprep.subr.mxu0 0.0
  %1229 = vmatpush1.msra.mxu0 0.0
  %1230 = vmatprep.subr.mxu0 0.0
  %1231 = vmatpush1.msra.mxu0 0.0
  %1232 = vmatprep.subr.mxu0 0.0
  %1233 = vmatpush1.msra.mxu0 0.0
  %1234 = vmatprep.subr.mxu0 0.0
  %1235 = vmatpush1.msra.mxu0 0.0
  %1236 = vmatprep.subr.mxu0 0.0
  %1237 = vmatpush1.msra.mxu0 0.0
  %1238 = vmatprep.subr.mxu0 0.0
  %1239 = vmatpush1.msra.mxu0 0.0
  %1240 = vmatprep.subr.mxu0 0.0
  %1241 = vmatpush1.msra.mxu0 0.0
  %1242 = vmatprep.subr.mxu0 0.0
  %1243 = vmatpush1.msra.mxu0 0.0
  %1244 = vmatprep.subr.mxu0 0.0
  %1245 = vmatpush1.msra.mxu0 0.0
  %1246 = vmatprep.subr.mxu0 0.0
  %1247 = vmatpush1.msra.mxu0 0.0
  %1248 = vmatprep.subr.mxu0 0.0
  %1249 = vmatpush1.msra.mxu0 0.0
  %1250 = vmatprep.subr.mxu0 0.0
  %1251 = vmatpush1.msra.mxu0 0.0
  %1252 = vmatprep.subr.mxu0 0.0
  %1253 = vmatpush1.msra.mxu0 0.0
  %1254 = vmatprep.subr.mxu0 0.0
  %1255 = vmatpush1.msra.mxu0 0.0
  %1256 = vmatprep.subr.mxu0 0.0
  %1257 = vmatpush1.msra.mxu0 0.0
  %1258 = vmatprep.subr.mxu0 0.0
  %1259 = vmatpush1.msra.mxu0 0.0
  %1260 = vmatprep.subr.mxu0 0.0
  %1261 = vmatpush1.msra.mxu0 0.0
  %1262 = vmatprep.subr.mxu0 0.0
  %1263 = vmatpush1.msra.mxu0 0.0
  %1264 = vmatprep.subr.mxu0 0.0
  %1265 = vmatpush1.msra.mxu0 0.0
  %1266 = vmatprep.subr.mxu0 0.0
  %1267 = vmatpush1.msra.mxu0 0.0
  %1268 = vmatprep.subr.mxu0 0.0
  %1269 = vmatpush1.msra.mxu0 0.0
  %1270 = vmatprep.subr.mxu0 0.0
  %1271 = vmatpush1.msra.mxu0 0.0
  %1272 = vmatprep.subr.mxu0 0.0
  %1273 = vmatpush1.msra.mxu0 0.0
  %1274 = vmatprep.subr.mxu0 0.0
  %1275 = vmatpush1.msra.mxu0 0.0
  %1276 = vmatprep.mubr.f32.mxu0 0.0
  %1277 = vmatmul.mubr.f32.gmra.mrb[0].mxu0 %v1207
  %v1278 = vpop.f32.mrb[0].mxu0
  %v1279 = vadd.f32 %v1173, %v1278
  %v1280 = vpop.f32.mrb[0].mxu0
  %1281 = vmatprep.mubr.f32.mxu0 0.0
  %1282 = vmatmul.mubr.f32.gmra.mrb[0].mxu0 %v1210
  %v1283 = vpop.f32.mrb[0].mxu0
  %v1284 = vadd.f32 %v1173, %v1283
  %v1285 = vpop.f32.mrb[0].mxu0
  %1286 = vdwg.mxu0
  %v1287 = vadd.f32 %v177, %v1279
  %v1288 = vadd.f32 %v170, %v1284
  %v1289 = vsel %vm82, %v1287, 0.0
  %1290 = vadd.xlane.f32.xlu0 %v1289
  %v1291 = vpop.xlane.xlu0 %1290
  %v1292 = vsel %vm207, %v1288, 0.0
  %1293 = vadd.xlane.f32.xlu0 %v1292
  %v1294 = vpop.xlane.xlu0 %1293
  %v1295 = vmul.f32 %v1291, %v211
  %v1296 = vmul.f32 %v1294, %v211
  %v1297 = vsub.f32 %v1287, %v1295
  %v1298 = vsub.f32 %v1288, %v1296
  %v1299 = vmul.f32 %v1297, %v1297
  %v1300 = vmul.f32 %v1298, %v1298
  %v1301 = vsel %vm82, %v1299, 0.0
  %1302 = vadd.xlane.f32.xlu0 %v1301
  %v1303 = vpop.xlane.xlu0 %1302
  %v1304 = vsel %vm207, %v1300, 0.0
  %1305 = vadd.xlane.f32.xlu0 %v1304
  %v1306 = vpop.xlane.xlu0 %1305
  %v1307 = vmul.f32 %v1303, %v211
  %v1308 = vmul.f32 %v1306, %v211
  %v1309 = vadd.f32 %v1307, 1e-12
  %v1310 = vadd.f32 %v1308, 1e-12
  %v1311 = vrsqrt.pop %v1309
  %v1312 = vrsqrt.pop %v1310
  %v1313 = vmul.f32 %v1297, %v1311
  %v1314 = vmul.f32 %v1298, %v1312
  %v1315 = vlaneseq
  %v1316 = vshrl.u32 %v1315, 7
  %v1317 = vsub.s32 4, %v1316
  %v1318 = vrot.slane %v202, %v1317
  %v1319 = vmul.f32 %v1313, %v1318
  %v1320 = vmul.f32 %v1314, %v1318
  %v1321 = vlaneseq
  %v1322 = vshrl.u32 %v1321, 7
  %v1323 = vsub.s32 5, %v1322
  %v1324 = vrot.slane %v202, %v1323
  %v1325 = vadd.f32 %v1319, %v1324
  %v1326 = vadd.f32 %v1320, %v1324
  %v1327 = vlaneseq
  %v1328 = vshrl.u32 %v1327, 7
  %v1329 = vsub.s32 6, %v1328
  %v1330 = vrot.slane %v202, %v1329
  %v1332 = vsel %vm82, %v1325, 0
  %v1335 = vsel %vm82, %v1326, 0
  %1337 = vmatprep.subr.mxu0 0.0
  %1338 = vmatpush1.msra.mxu0 %v180
  %1339 = vmatprep.subr.mxu0 0.0
  %1340 = vmatpush1.msra.mxu0 %v183
  %1341 = vmatprep.subr.mxu0 0.0
  %1342 = vmatpush1.msra.mxu0 %v186
  %1343 = vmatprep.subr.mxu0 0.0
  %1344 = vmatpush1.msra.mxu0 %v189
  %1345 = vmatprep.subr.mxu0 0.0
  %1346 = vmatpush1.msra.mxu0 %v192
  %1347 = vmatprep.subr.mxu0 0.0
  %1348 = vmatpush1.msra.mxu0 %v195
  %1349 = vmatprep.subr.mxu0 0.0
  %1350 = vmatpush1.msra.mxu0 %v198
  %1351 = vmatprep.subr.mxu0 0.0
  %1352 = vmatpush1.msra.mxu0 %v201
  %1353 = vmatprep.subr.mxu0 0.0
  %1354 = vmatpush1.msra.mxu0 0.0
  %1355 = vmatprep.subr.mxu0 0.0
  %1356 = vmatpush1.msra.mxu0 0.0
  %1357 = vmatprep.subr.mxu0 0.0
  %1358 = vmatpush1.msra.mxu0 0.0
  %1359 = vmatprep.subr.mxu0 0.0
  %1360 = vmatpush1.msra.mxu0 0.0
  %1361 = vmatprep.subr.mxu0 0.0
  %1362 = vmatpush1.msra.mxu0 0.0
  %1363 = vmatprep.subr.mxu0 0.0
  %1364 = vmatpush1.msra.mxu0 0.0
  %1365 = vmatprep.subr.mxu0 0.0
  %1366 = vmatpush1.msra.mxu0 0.0
  %1367 = vmatprep.subr.mxu0 0.0
  %1368 = vmatpush1.msra.mxu0 0.0
  %1369 = vmatprep.subr.mxu0 0.0
  %1370 = vmatpush1.msra.mxu0 0.0
  %1371 = vmatprep.subr.mxu0 0.0
  %1372 = vmatpush1.msra.mxu0 0.0
  %1373 = vmatprep.subr.mxu0 0.0
  %1374 = vmatpush1.msra.mxu0 0.0
  %1375 = vmatprep.subr.mxu0 0.0
  %1376 = vmatpush1.msra.mxu0 0.0
  %1377 = vmatprep.subr.mxu0 0.0
  %1378 = vmatpush1.msra.mxu0 0.0
  %1379 = vmatprep.subr.mxu0 0.0
  %1380 = vmatpush1.msra.mxu0 0.0
  %1381 = vmatprep.subr.mxu0 0.0
  %1382 = vmatpush1.msra.mxu0 0.0
  %1383 = vmatprep.subr.mxu0 0.0
  %1384 = vmatpush1.msra.mxu0 0.0
  %1385 = vmatprep.subr.mxu0 0.0
  %1386 = vmatpush1.msra.mxu0 0.0
  %1387 = vmatprep.subr.mxu0 0.0
  %1388 = vmatpush1.msra.mxu0 0.0
  %1389 = vmatprep.subr.mxu0 0.0
  %1390 = vmatpush1.msra.mxu0 0.0
  %1391 = vmatprep.subr.mxu0 0.0
  %1392 = vmatpush1.msra.mxu0 0.0
  %1393 = vmatprep.subr.mxu0 0.0
  %1394 = vmatpush1.msra.mxu0 0.0
  %1395 = vmatprep.subr.mxu0 0.0
  %1396 = vmatpush1.msra.mxu0 0.0
  %1397 = vmatprep.subr.mxu0 0.0
  %1398 = vmatpush1.msra.mxu0 0.0
  %1399 = vmatprep.subr.mxu0 0.0
  %1400 = vmatpush1.msra.mxu0 0.0
  %1401 = vmatprep.mubr.f32.mxu0 0.0
  %1402 = vmatmul.mubr.f32.gmra.mrb[0].mxu0 %v1332
  %v1403 = vpop.f32.mrb[0].mxu0
  %v1404 = vadd.f32 %v1330, %v1403
  %v1405 = vpop.f32.mrb[0].mxu0
  %1406 = vmatprep.mubr.f32.mxu0 0.0
  %1407 = vmatmul.mubr.f32.gmra.mrb[0].mxu0 %v1335
  %v1408 = vpop.f32.mrb[0].mxu0
  %v1409 = vadd.f32 %v1330, %v1408
  %v1410 = vpop.f32.mrb[0].mxu0
  %1411 = vdwg.mxu0
  %v1412 = vmul.f32 %v1404, 0.5
  %v1413 = vmul.f32 %v1409, 0.5
  %v1414 = vmul.f32 %v1404, 0.044715
  %v1415 = vmul.f32 %v1409, 0.044715
  %v1416 = vmul.f32 %v1414, %v1404
  %v1417 = vmul.f32 %v1415, %v1409
  %v1418 = vmul.f32 %v1416, %v1404
  %v1419 = vmul.f32 %v1417, %v1409
  %v1420 = vadd.f32 %v1404, %v1418
  %v1421 = vadd.f32 %v1409, %v1419
  %v1422 = vmul.f32 %v1420, 0.7978846
  %v1423 = vmul.f32 %v1421, 0.7978846
  %v1424 = vtanh.pop %v1422
  %v1425 = vtanh.pop %v1423
  %v1426 = vadd.f32 %v1424, 1.0
  %v1427 = vadd.f32 %v1425, 1.0
  %v1428 = vmul.f32 %v1412, %v1426
  %v1429 = vmul.f32 %v1413, %v1427
  %v1430 = vld [vmem:[%s4] sm:$0xff]
  %v1431 = vld [vmem:[%s4 + $0x8] sm:$0xff]
  %v1432 = vld [vmem:[%s4 + $0x10] sm:$0xff]
  %v1433 = vld [vmem:[%s4 + $0x18] sm:$0xff]
  %v1434 = vld [vmem:[%s4 + $0x20] sm:$0xff]
  %v1435 = vld [vmem:[%s4 + $0x28] sm:$0xff]
  %v1436 = vld [vmem:[%s4 + $0x30] sm:$0xff]
  %v1437 = vld [vmem:[%s4 + $0x38] sm:$0xff]
  %v1438 = vld [vmem:[%s4 + $0x40] sm:$0xff]
  %v1439 = vld [vmem:[%s4 + $0x48] sm:$0xff]
  %v1440 = vld [vmem:[%s4 + $0x50] sm:$0xff]
  %v1441 = vld [vmem:[%s4 + $0x58] sm:$0xff]
  %v1442 = vld [vmem:[%s4 + $0x60] sm:$0xff]
  %v1443 = vld [vmem:[%s4 + $0x68] sm:$0xff]
  %v1444 = vld [vmem:[%s4 + $0x70] sm:$0xff]
  %v1445 = vld [vmem:[%s4 + $0x78] sm:$0xff]
  %1446 = vmatprep.subr.mxu0 0.0
  %1447 = vmatpush1.msra.mxu0 %v1430
  %1448 = vmatprep.subr.mxu0 0.0
  %1449 = vmatpush1.msra.mxu0 %v1431
  %1450 = vmatprep.subr.mxu0 0.0
  %1451 = vmatpush1.msra.mxu0 %v1432
  %1452 = vmatprep.subr.mxu0 0.0
  %1453 = vmatpush1.msra.mxu0 %v1433
  %1454 = vmatprep.subr.mxu0 0.0
  %1455 = vmatpush1.msra.mxu0 %v1434
  %1456 = vmatprep.subr.mxu0 0.0
  %1457 = vmatpush1.msra.mxu0 %v1435
  %1458 = vmatprep.subr.mxu0 0.0
  %1459 = vmatpush1.msra.mxu0 %v1436
  %1460 = vmatprep.subr.mxu0 0.0
  %1461 = vmatpush1.msra.mxu0 %v1437
  %1462 = vmatprep.subr.mxu0 0.0
  %1463 = vmatpush1.msra.mxu0 %v1438
  %1464 = vmatprep.subr.mxu0 0.0
  %1465 = vmatpush1.msra.mxu0 %v1439
  %1466 = vmatprep.subr.mxu0 0.0
  %1467 = vmatpush1.msra.mxu0 %v1440
  %1468 = vmatprep.subr.mxu0 0.0
  %1469 = vmatpush1.msra.mxu0 %v1441
  %1470 = vmatprep.subr.mxu0 0.0
  %1471 = vmatpush1.msra.mxu0 %v1442
  %1472 = vmatprep.subr.mxu0 0.0
  %1473 = vmatpush1.msra.mxu0 %v1443
  %1474 = vmatprep.subr.mxu0 0.0
  %1475 = vmatpush1.msra.mxu0 %v1444
  %1476 = vmatprep.subr.mxu0 0.0
  %1477 = vmatpush1.msra.mxu0 %v1445
  %1478 = vmatprep.subr.mxu0 0.0
  %1479 = vmatpush1.msra.mxu0 0.0
  %1480 = vmatprep.subr.mxu0 0.0
  %1481 = vmatpush1.msra.mxu0 0.0
  %1482 = vmatprep.subr.mxu0 0.0
  %1483 = vmatpush1.msra.mxu0 0.0
  %1484 = vmatprep.subr.mxu0 0.0
  %1485 = vmatpush1.msra.mxu0 0.0
  %1486 = vmatprep.subr.mxu0 0.0
  %1487 = vmatpush1.msra.mxu0 0.0
  %1488 = vmatprep.subr.mxu0 0.0
  %1489 = vmatpush1.msra.mxu0 0.0
  %1490 = vmatprep.subr.mxu0 0.0
  %1491 = vmatpush1.msra.mxu0 0.0
  %1492 = vmatprep.subr.mxu0 0.0
  %1493 = vmatpush1.msra.mxu0 0.0
  %1494 = vmatprep.subr.mxu0 0.0
  %1495 = vmatpush1.msra.mxu0 0.0
  %1496 = vmatprep.subr.mxu0 0.0
  %1497 = vmatpush1.msra.mxu0 0.0
  %1498 = vmatprep.subr.mxu0 0.0
  %1499 = vmatpush1.msra.mxu0 0.0
  %1500 = vmatprep.subr.mxu0 0.0
  %1501 = vmatpush1.msra.mxu0 0.0
  %1502 = vmatprep.subr.mxu0 0.0
  %1503 = vmatpush1.msra.mxu0 0.0
  %1504 = vmatprep.subr.mxu0 0.0
  %1505 = vmatpush1.msra.mxu0 0.0
  %1506 = vmatprep.subr.mxu0 0.0
  %1507 = vmatpush1.msra.mxu0 0.0
  %1508 = vmatprep.subr.mxu0 0.0
  %1509 = vmatpush1.msra.mxu0 0.0
  %1510 = vmatprep.mubr.f32.mxu0 0.0
  %1511 = vmatmul.mubr.f32.gmra.mrb[0].mxu0 %v1428
  %v1512 = vpop.f32.mrb[0].mxu0
  %v1513 = vadd.f32 0.0, %v1512
  %v1514 = vpop.f32.mrb[0].mxu0
  %1515 = vmatprep.mubr.f32.mxu0 0.0
  %1516 = vmatmul.mubr.f32.gmra.mrb[0].mxu0 %v1429
  %v1517 = vpop.f32.mrb[0].mxu0
  %v1518 = vadd.f32 0.0, %v1517
  %v1519 = vpop.f32.mrb[0].mxu0
  %1520 = vdwg.mxu0
  %v1521 = vadd.f32 %v1287, %v1513
  %v1522 = vadd.f32 %v1288, %v1518
  %v1523 = vlaneseq
  %v1524 = vshrl.u32 %v1523, 7
  %v1525 = vsub.s32 7, %v1524
  %v1526 = vrot.slane %v202, %v1525
  %v1527 = vadd.f32 %v1521, %v1526
  %v1528 = vadd.f32 %v1522, %v1526
  %s1529 = scalar_lea.vmem %s3, 192
  %v1530 = vld [vmem:[%s1529] sm:$0xff]
  %v1531 = vld [vmem:[%s1529 + $0x8] sm:$0xff]
  %v1532 = vld [vmem:[%s1529 + $0x10] sm:$0xff]
  %v1533 = vld [vmem:[%s1529 + $0x18] sm:$0xff]
  %v1534 = vld [vmem:[%s1529 + $0x20] sm:$0xff]
  %v1535 = vld [vmem:[%s1529 + $0x28] sm:$0xff]
  %v1536 = vld [vmem:[%s1529 + $0x30] sm:$0xff]
  %v1537 = vld [vmem:[%s1529 + $0x38] sm:$0xff]
  %v1538 = vld [vmem:[%s1529 + $0x40] sm:$0xff]
  %v1539 = vld [vmem:[%s1529 + $0x48] sm:$0xff]
  %v1540 = vld [vmem:[%s1529 + $0x50] sm:$0xff]
  %v1541 = vld [vmem:[%s1529 + $0x58] sm:$0xff]
  %v1542 = vld [vmem:[%s1529 + $0x60] sm:$0xff]
  %v1543 = vld [vmem:[%s1529 + $0x68] sm:$0xff]
  %v1544 = vld [vmem:[%s1529 + $0x70] sm:$0xff]
  %v1545 = vld [vmem:[%s1529 + $0x78] sm:$0xff]
  %v1546 = vld [vmem:[%s1529 + $0x80] sm:$0xff]
  %v1547 = vld [vmem:[%s1529 + $0x88] sm:$0xff]
  %v1548 = vld [vmem:[%s1529 + $0x90] sm:$0xff]
  %v1549 = vld [vmem:[%s1529 + $0x98] sm:$0xff]
  %v1550 = vld [vmem:[%s1529 + $0xa0] sm:$0xff]
  %v1551 = vld [vmem:[%s1529 + $0xa8] sm:$0xff]
  %v1552 = vld [vmem:[%s1529 + $0xb0] sm:$0xff]
  %v1553 = vld [vmem:[%s1529 + $0xb8] sm:$0xff]
  %s1554 = scalar_lea.vmem %s5, 16
  %v1555 = vld [vmem:[%s1554] sm:$0xff]
  %v1556 = vld [vmem:[%s1554 + $0x8] sm:$0xff]
  %v1557 = vsel %vm82, %v1527, 0.0
  %1558 = vadd.xlane.f32.xlu0 %v1557
  %v1559 = vpop.xlane.xlu0 %1558
  %v1560 = vsel %vm207, %v1528, 0.0
  %1561 = vadd.xlane.f32.xlu0 %v1560
  %v1562 = vpop.xlane.xlu0 %1561
  %v1563 = vmul.f32 %v1559, %v211
  %v1564 = vmul.f32 %v1562, %v211
  %v1565 = vsub.f32 %v1527, %v1563
  %v1566 = vsub.f32 %v1528, %v1564
  %v1567 = vmul.f32 %v1565, %v1565
  %v1568 = vmul.f32 %v1566, %v1566
  %v1569 = vsel %vm82, %v1567, 0.0
  %1570 = vadd.xlane.f32.xlu0 %v1569
  %v1571 = vpop.xlane.xlu0 %1570
  %v1572 = vsel %vm207, %v1568, 0.0
  %1573 = vadd.xlane.f32.xlu0 %v1572
  %v1574 = vpop.xlane.xlu0 %1573
  %v1575 = vmul.f32 %v1571, %v211
  %v1576 = vmul.f32 %v1574, %v211
  %v1577 = vadd.f32 %v1575, 1e-12
  %v1578 = vadd.f32 %v1576, 1e-12
  %v1579 = vrsqrt.pop %v1577
  %v1580 = vrsqrt.pop %v1578
  %v1581 = vmul.f32 %v1565, %v1579
  %v1582 = vmul.f32 %v1566, %v1580
  %v1583 = vlaneseq
  %v1584 = vshrl.u32 %v1583, 7
  %v1585 = vsub.s32 0, %v1584
  %v1586 = vrot.slane %v1555, %v1585
  %v1587 = vmul.f32 %v1581, %v1586
  %v1588 = vmul.f32 %v1582, %v1586
  %v1589 = vlaneseq
  %v1590 = vshrl.u32 %v1589, 7
  %v1591 = vsub.s32 1, %v1590
  %v1592 = vrot.slane %v1555, %v1591
  %v1593 = vadd.f32 %v1587, %v1592
  %v1594 = vadd.f32 %v1588, %v1592
  %v1595 = vlaneseq
  %v1596 = vshrl.u32 %v1595, 7
  %v1597 = vsub.s32 2, %v1596
  %v1598 = vrot.slane %v1555, %v1597
  %v1599 = vlaneseq
  %v1600 = vshrl.u32 %v1599, 7
  %v1601 = vsub.s32 2, %v1600
  %v1602 = vrot.slane %v1556, %v1601
  %v1604 = vsel %vm82, %v1593, 0
  %v1607 = vsel %vm82, %v1594, 0
  %1609 = vmatprep.subr.mxu0 %v1531
  %1610 = vmatpush1.msra.mxu0 %v1530
  %1611 = vmatprep.subr.mxu0 %v1534
  %1612 = vmatpush1.msra.mxu0 %v1533
  %1613 = vmatprep.subr.mxu0 %v1537
  %1614 = vmatpush1.msra.mxu0 %v1536
  %1615 = vmatprep.subr.mxu0 %v1540
  %1616 = vmatpush1.msra.mxu0 %v1539
  %1617 = vmatprep.subr.mxu0 %v1543
  %1618 = vmatpush1.msra.mxu0 %v1542
  %1619 = vmatprep.subr.mxu0 %v1546
  %1620 = vmatpush1.msra.mxu0 %v1545
  %1621 = vmatprep.subr.mxu0 %v1549
  %1622 = vmatpush1.msra.mxu0 %v1548
  %1623 = vmatprep.subr.mxu0 %v1552
  %1624 = vmatpush1.msra.mxu0 %v1551
  %1625 = vmatprep.subr.mxu0 0.0
  %1626 = vmatpush1.msra.mxu0 0.0
  %1627 = vmatprep.subr.mxu0 0.0
  %1628 = vmatpush1.msra.mxu0 0.0
  %1629 = vmatprep.subr.mxu0 0.0
  %1630 = vmatpush1.msra.mxu0 0.0
  %1631 = vmatprep.subr.mxu0 0.0
  %1632 = vmatpush1.msra.mxu0 0.0
  %1633 = vmatprep.subr.mxu0 0.0
  %1634 = vmatpush1.msra.mxu0 0.0
  %1635 = vmatprep.subr.mxu0 0.0
  %1636 = vmatpush1.msra.mxu0 0.0
  %1637 = vmatprep.subr.mxu0 0.0
  %1638 = vmatpush1.msra.mxu0 0.0
  %1639 = vmatprep.subr.mxu0 0.0
  %1640 = vmatpush1.msra.mxu0 0.0
  %1641 = vmatprep.subr.mxu0 0.0
  %1642 = vmatpush1.msra.mxu0 0.0
  %1643 = vmatprep.subr.mxu0 0.0
  %1644 = vmatpush1.msra.mxu0 0.0
  %1645 = vmatprep.subr.mxu0 0.0
  %1646 = vmatpush1.msra.mxu0 0.0
  %1647 = vmatprep.subr.mxu0 0.0
  %1648 = vmatpush1.msra.mxu0 0.0
  %1649 = vmatprep.subr.mxu0 0.0
  %1650 = vmatpush1.msra.mxu0 0.0
  %1651 = vmatprep.subr.mxu0 0.0
  %1652 = vmatpush1.msra.mxu0 0.0
  %1653 = vmatprep.subr.mxu0 0.0
  %1654 = vmatpush1.msra.mxu0 0.0
  %1655 = vmatprep.subr.mxu0 0.0
  %1656 = vmatpush1.msra.mxu0 0.0
  %1657 = vmatprep.subr.mxu0 0.0
  %1658 = vmatpush1.msra.mxu0 0.0
  %1659 = vmatprep.subr.mxu0 0.0
  %1660 = vmatpush1.msra.mxu0 0.0
  %1661 = vmatprep.subr.mxu0 0.0
  %1662 = vmatpush1.msra.mxu0 0.0
  %1663 = vmatprep.subr.mxu0 0.0
  %1664 = vmatpush1.msra.mxu0 0.0
  %1665 = vmatprep.subr.mxu0 0.0
  %1666 = vmatpush1.msra.mxu0 0.0
  %1667 = vmatprep.subr.mxu0 0.0
  %1668 = vmatpush1.msra.mxu0 0.0
  %1669 = vmatprep.subr.mxu0 0.0
  %1670 = vmatpush1.msra.mxu0 0.0
  %1671 = vmatprep.subr.mxu0 0.0
  %1672 = vmatpush1.msra.mxu0 0.0
  %1673 = vmatprep.mubr.f32.mxu0 0.0
  %1674 = vmatmul.mubr.f32.gmra.mrb[0].mxu0 %v1604
  %v1675 = vpop.f32.mrb[0].mxu0
  %v1676 = vadd.f32 %v1598, %v1675
  %v1677 = vpop.f32.mrb[0].mxu0
  %v1678 = vadd.f32 %v1602, %v1677
  %1679 = vmatprep.mubr.f32.mxu0 0.0
  %1680 = vmatmul.mubr.f32.gmra.mrb[0].mxu0 %v1607
  %v1681 = vpop.f32.mrb[0].mxu0
  %v1682 = vadd.f32 %v1598, %v1681
  %v1683 = vpop.f32.mrb[0].mxu0
  %v1684 = vadd.f32 %v1602, %v1683
  %1685 = vdwg.mxu0
  %1688 = vrot.lane.b32.xlu0 %v1676, 64
  %v1689 = vpop.permute.xlu0 %1688
  %1690 = vrot.lane.b32.xlu0 %v1682, 64
  %v1691 = vpop.permute.xlu0 %1690
  %v1692 = vsel %vm341, %v1676, 0
  %v1694 = vsel %vm341, %v1682, 0
  %v1696 = vsel %vm341, %v1689, 0
  %v1698 = vsel %vm341, %v1691, 0
  %1700 = vmatprep.subr.mxu0 0.0
  %1701 = vmatpush1.xpose.msra.mxu0 %v1696
  %1702 = vmatprep.subr.mxu0 0.0
  %1703 = vmatpush1.xpose.msra.mxu0 %v1698
  %1704 = vmatprep.subr.mxu0 0.0
  %1705 = vmatpush1.xpose.msra.mxu0 0.0
  %1706 = vmatprep.subr.mxu0 0.0
  %1707 = vmatpush1.xpose.msra.mxu0 0.0
  %1708 = vmatprep.subr.mxu0 0.0
  %1709 = vmatpush1.xpose.msra.mxu0 0.0
  %1710 = vmatprep.subr.mxu0 0.0
  %1711 = vmatpush1.xpose.msra.mxu0 0.0
  %1712 = vmatprep.subr.mxu0 0.0
  %1713 = vmatpush1.xpose.msra.mxu0 0.0
  %1714 = vmatprep.subr.mxu0 0.0
  %1715 = vmatpush1.xpose.msra.mxu0 0.0
  %1716 = vmatprep.subr.mxu0 0.0
  %1717 = vmatpush1.xpose.msra.mxu0 0.0
  %1718 = vmatprep.subr.mxu0 0.0
  %1719 = vmatpush1.xpose.msra.mxu0 0.0
  %1720 = vmatprep.subr.mxu0 0.0
  %1721 = vmatpush1.xpose.msra.mxu0 0.0
  %1722 = vmatprep.subr.mxu0 0.0
  %1723 = vmatpush1.xpose.msra.mxu0 0.0
  %1724 = vmatprep.subr.mxu0 0.0
  %1725 = vmatpush1.xpose.msra.mxu0 0.0
  %1726 = vmatprep.subr.mxu0 0.0
  %1727 = vmatpush1.xpose.msra.mxu0 0.0
  %1728 = vmatprep.subr.mxu0 0.0
  %1729 = vmatpush1.xpose.msra.mxu0 0.0
  %1730 = vmatprep.subr.mxu0 0.0
  %1731 = vmatpush1.xpose.msra.mxu0 0.0
  %1732 = vmatprep.subr.mxu0 0.0
  %1733 = vmatpush1.xpose.msra.mxu0 0.0
  %1734 = vmatprep.subr.mxu0 0.0
  %1735 = vmatpush1.xpose.msra.mxu0 0.0
  %1736 = vmatprep.subr.mxu0 0.0
  %1737 = vmatpush1.xpose.msra.mxu0 0.0
  %1738 = vmatprep.subr.mxu0 0.0
  %1739 = vmatpush1.xpose.msra.mxu0 0.0
  %1740 = vmatprep.subr.mxu0 0.0
  %1741 = vmatpush1.xpose.msra.mxu0 0.0
  %1742 = vmatprep.subr.mxu0 0.0
  %1743 = vmatpush1.xpose.msra.mxu0 0.0
  %1744 = vmatprep.subr.mxu0 0.0
  %1745 = vmatpush1.xpose.msra.mxu0 0.0
  %1746 = vmatprep.subr.mxu0 0.0
  %1747 = vmatpush1.xpose.msra.mxu0 0.0
  %1748 = vmatprep.subr.mxu0 0.0
  %1749 = vmatpush1.xpose.msra.mxu0 0.0
  %1750 = vmatprep.subr.mxu0 0.0
  %1751 = vmatpush1.xpose.msra.mxu0 0.0
  %1752 = vmatprep.subr.mxu0 0.0
  %1753 = vmatpush1.xpose.msra.mxu0 0.0
  %1754 = vmatprep.subr.mxu0 0.0
  %1755 = vmatpush1.xpose.msra.mxu0 0.0
  %1756 = vmatprep.subr.mxu0 0.0
  %1757 = vmatpush1.xpose.msra.mxu0 0.0
  %1758 = vmatprep.subr.mxu0 0.0
  %1759 = vmatpush1.xpose.msra.mxu0 0.0
  %1760 = vmatprep.subr.mxu0 0.0
  %1761 = vmatpush1.xpose.msra.mxu0 0.0
  %1762 = vmatprep.subr.mxu0 0.0
  %1763 = vmatpush1.xpose.msra.mxu0 0.0
  %1764 = vmatprep.mubr.f32.mxu0 0.0
  %1765 = vmatmul.mubr.f32.gmra.mrb[0].mxu0 %v1692
  %v1766 = vpop.f32.mrb[0].mxu0
  %v1767 = vadd.f32 %v50, %v1766
  %v1768 = vpop.f32.mrb[0].mxu0
  %1769 = vmatprep.mubr.f32.mxu0 0.0
  %1770 = vmatmul.mubr.f32.gmra.mrb[0].mxu0 %v1694
  %v1771 = vpop.f32.mrb[0].mxu0
  %v1772 = vadd.f32 %v51, %v1771
  %v1773 = vpop.f32.mrb[0].mxu0
  %1774 = vdwg.mxu0
  %v1775 = vsel %vm425, %v1767, -inf
  %1776 = vmax.xlane.f32.xlu0 %v1775
  %v1777 = vpop.xlane.xlu0 %1776
  %v1778 = vsel %vm429, %v1772, -inf
  %1779 = vmax.xlane.f32.xlu0 %v1778
  %v1780 = vpop.xlane.xlu0 %1779
  %v1781 = vsub.f32 %v1767, %v1777
  %v1782 = vsub.f32 %v1772, %v1780
  %v1783 = vmul.f32 %v1781, 1.442695
  %v1784 = vpow.pop %v1783
  %v1785 = vmul.f32 %v1782, 1.442695
  %v1786 = vpow.pop %v1785
  %v1787 = vsel %vm425, %v1784, 0.0
  %1788 = vadd.xlane.f32.xlu0 %v1787
  %v1789 = vpop.xlane.xlu0 %1788
  %v1790 = vsel %vm429, %v1786, 0.0
  %1791 = vadd.xlane.f32.xlu0 %v1790
  %v1792 = vpop.xlane.xlu0 %1791
  %v1793 = vrcp.pop %v1789
  %v1794 = vrcp.pop %v1792
  %v1795 = vmul.f32 %v1784, %v1793
  %v1796 = vmul.f32 %v1786, %v1794
  %v1798 = vsel %vm425, %v1795, 0
  %v1801 = vsel %vm425, %v1796, 0
  %v1804 = vsel %vm455, %v1684, 0
  %1806 = vmatprep.subr.mxu0 0.0
  %1807 = vmatpush1.msra.mxu0 %v1678
  %1808 = vmatprep.subr.mxu0 0.0
  %1809 = vmatpush1.msra.mxu0 %v1804
  %1810 = vmatprep.subr.mxu0 0.0
  %1811 = vmatpush1.msra.mxu0 0.0
  %1812 = vmatprep.subr.mxu0 0.0
  %1813 = vmatpush1.msra.mxu0 0.0
  %1814 = vmatprep.subr.mxu0 0.0
  %1815 = vmatpush1.msra.mxu0 0.0
  %1816 = vmatprep.subr.mxu0 0.0
  %1817 = vmatpush1.msra.mxu0 0.0
  %1818 = vmatprep.subr.mxu0 0.0
  %1819 = vmatpush1.msra.mxu0 0.0
  %1820 = vmatprep.subr.mxu0 0.0
  %1821 = vmatpush1.msra.mxu0 0.0
  %1822 = vmatprep.subr.mxu0 0.0
  %1823 = vmatpush1.msra.mxu0 0.0
  %1824 = vmatprep.subr.mxu0 0.0
  %1825 = vmatpush1.msra.mxu0 0.0
  %1826 = vmatprep.subr.mxu0 0.0
  %1827 = vmatpush1.msra.mxu0 0.0
  %1828 = vmatprep.subr.mxu0 0.0
  %1829 = vmatpush1.msra.mxu0 0.0
  %1830 = vmatprep.subr.mxu0 0.0
  %1831 = vmatpush1.msra.mxu0 0.0
  %1832 = vmatprep.subr.mxu0 0.0
  %1833 = vmatpush1.msra.mxu0 0.0
  %1834 = vmatprep.subr.mxu0 0.0
  %1835 = vmatpush1.msra.mxu0 0.0
  %1836 = vmatprep.subr.mxu0 0.0
  %1837 = vmatpush1.msra.mxu0 0.0
  %1838 = vmatprep.subr.mxu0 0.0
  %1839 = vmatpush1.msra.mxu0 0.0
  %1840 = vmatprep.subr.mxu0 0.0
  %1841 = vmatpush1.msra.mxu0 0.0
  %1842 = vmatprep.subr.mxu0 0.0
  %1843 = vmatpush1.msra.mxu0 0.0
  %1844 = vmatprep.subr.mxu0 0.0
  %1845 = vmatpush1.msra.mxu0 0.0
  %1846 = vmatprep.subr.mxu0 0.0
  %1847 = vmatpush1.msra.mxu0 0.0
  %1848 = vmatprep.subr.mxu0 0.0
  %1849 = vmatpush1.msra.mxu0 0.0
  %1850 = vmatprep.subr.mxu0 0.0
  %1851 = vmatpush1.msra.mxu0 0.0
  %1852 = vmatprep.subr.mxu0 0.0
  %1853 = vmatpush1.msra.mxu0 0.0
  %1854 = vmatprep.subr.mxu0 0.0
  %1855 = vmatpush1.msra.mxu0 0.0
  %1856 = vmatprep.subr.mxu0 0.0
  %1857 = vmatpush1.msra.mxu0 0.0
  %1858 = vmatprep.subr.mxu0 0.0
  %1859 = vmatpush1.msra.mxu0 0.0
  %1860 = vmatprep.subr.mxu0 0.0
  %1861 = vmatpush1.msra.mxu0 0.0
  %1862 = vmatprep.subr.mxu0 0.0
  %1863 = vmatpush1.msra.mxu0 0.0
  %1864 = vmatprep.subr.mxu0 0.0
  %1865 = vmatpush1.msra.mxu0 0.0
  %1866 = vmatprep.subr.mxu0 0.0
  %1867 = vmatpush1.msra.mxu0 0.0
  %1868 = vmatprep.subr.mxu0 0.0
  %1869 = vmatpush1.msra.mxu0 0.0
  %1870 = vmatprep.mubr.f32.mxu0 0.0
  %1871 = vmatmul.mubr.f32.gmra.mrb[0].mxu0 %v1798
  %v1872 = vpop.f32.mrb[0].mxu0
  %v1873 = vadd.f32 0.0, %v1872
  %v1874 = vpop.f32.mrb[0].mxu0
  %1875 = vmatprep.mubr.f32.mxu0 0.0
  %1876 = vmatmul.mubr.f32.gmra.mrb[0].mxu0 %v1801
  %v1877 = vpop.f32.mrb[0].mxu0
  %v1878 = vadd.f32 0.0, %v1877
  %v1879 = vpop.f32.mrb[0].mxu0
  %1880 = vdwg.mxu0
  %1881 = vrot.lane.b32.xlu0 %v1676, 112
  %v1882 = vpop.permute.xlu0 %1881
  %1883 = vrot.lane.b32.xlu0 %v1682, 112
  %v1884 = vpop.permute.xlu0 %1883
  %1885 = vrot.lane.b32.xlu0 %v1676, 48
  %v1886 = vpop.permute.xlu0 %1885
  %1887 = vrot.lane.b32.xlu0 %v1682, 48
  %v1888 = vpop.permute.xlu0 %1887
  %v1889 = vsel %vm341, %v1882, 0
  %v1891 = vsel %vm341, %v1884, 0
  %v1893 = vsel %vm341, %v1886, 0
  %v1895 = vsel %vm341, %v1888, 0
  %1897 = vmatprep.subr.mxu0 0.0
  %1898 = vmatpush1.xpose.msra.mxu0 %v1893
  %1899 = vmatprep.subr.mxu0 0.0
  %1900 = vmatpush1.xpose.msra.mxu0 %v1895
  %1901 = vmatprep.subr.mxu0 0.0
  %1902 = vmatpush1.xpose.msra.mxu0 0.0
  %1903 = vmatprep.subr.mxu0 0.0
  %1904 = vmatpush1.xpose.msra.mxu0 0.0
  %1905 = vmatprep.subr.mxu0 0.0
  %1906 = vmatpush1.xpose.msra.mxu0 0.0
  %1907 = vmatprep.subr.mxu0 0.0
  %1908 = vmatpush1.xpose.msra.mxu0 0.0
  %1909 = vmatprep.subr.mxu0 0.0
  %1910 = vmatpush1.xpose.msra.mxu0 0.0
  %1911 = vmatprep.subr.mxu0 0.0
  %1912 = vmatpush1.xpose.msra.mxu0 0.0
  %1913 = vmatprep.subr.mxu0 0.0
  %1914 = vmatpush1.xpose.msra.mxu0 0.0
  %1915 = vmatprep.subr.mxu0 0.0
  %1916 = vmatpush1.xpose.msra.mxu0 0.0
  %1917 = vmatprep.subr.mxu0 0.0
  %1918 = vmatpush1.xpose.msra.mxu0 0.0
  %1919 = vmatprep.subr.mxu0 0.0
  %1920 = vmatpush1.xpose.msra.mxu0 0.0
  %1921 = vmatprep.subr.mxu0 0.0
  %1922 = vmatpush1.xpose.msra.mxu0 0.0
  %1923 = vmatprep.subr.mxu0 0.0
  %1924 = vmatpush1.xpose.msra.mxu0 0.0
  %1925 = vmatprep.subr.mxu0 0.0
  %1926 = vmatpush1.xpose.msra.mxu0 0.0
  %1927 = vmatprep.subr.mxu0 0.0
  %1928 = vmatpush1.xpose.msra.mxu0 0.0
  %1929 = vmatprep.subr.mxu0 0.0
  %1930 = vmatpush1.xpose.msra.mxu0 0.0
  %1931 = vmatprep.subr.mxu0 0.0
  %1932 = vmatpush1.xpose.msra.mxu0 0.0
  %1933 = vmatprep.subr.mxu0 0.0
  %1934 = vmatpush1.xpose.msra.mxu0 0.0
  %1935 = vmatprep.subr.mxu0 0.0
  %1936 = vmatpush1.xpose.msra.mxu0 0.0
  %1937 = vmatprep.subr.mxu0 0.0
  %1938 = vmatpush1.xpose.msra.mxu0 0.0
  %1939 = vmatprep.subr.mxu0 0.0
  %1940 = vmatpush1.xpose.msra.mxu0 0.0
  %1941 = vmatprep.subr.mxu0 0.0
  %1942 = vmatpush1.xpose.msra.mxu0 0.0
  %1943 = vmatprep.subr.mxu0 0.0
  %1944 = vmatpush1.xpose.msra.mxu0 0.0
  %1945 = vmatprep.subr.mxu0 0.0
  %1946 = vmatpush1.xpose.msra.mxu0 0.0
  %1947 = vmatprep.subr.mxu0 0.0
  %1948 = vmatpush1.xpose.msra.mxu0 0.0
  %1949 = vmatprep.subr.mxu0 0.0
  %1950 = vmatpush1.xpose.msra.mxu0 0.0
  %1951 = vmatprep.subr.mxu0 0.0
  %1952 = vmatpush1.xpose.msra.mxu0 0.0
  %1953 = vmatprep.subr.mxu0 0.0
  %1954 = vmatpush1.xpose.msra.mxu0 0.0
  %1955 = vmatprep.subr.mxu0 0.0
  %1956 = vmatpush1.xpose.msra.mxu0 0.0
  %1957 = vmatprep.subr.mxu0 0.0
  %1958 = vmatpush1.xpose.msra.mxu0 0.0
  %1959 = vmatprep.subr.mxu0 0.0
  %1960 = vmatpush1.xpose.msra.mxu0 0.0
  %1961 = vmatprep.mubr.f32.mxu0 0.0
  %1962 = vmatmul.mubr.f32.gmra.mrb[0].mxu0 %v1889
  %v1963 = vpop.f32.mrb[0].mxu0
  %v1964 = vadd.f32 %v50, %v1963
  %v1965 = vpop.f32.mrb[0].mxu0
  %1966 = vmatprep.mubr.f32.mxu0 0.0
  %1967 = vmatmul.mubr.f32.gmra.mrb[0].mxu0 %v1891
  %v1968 = vpop.f32.mrb[0].mxu0
  %v1969 = vadd.f32 %v51, %v1968
  %v1970 = vpop.f32.mrb[0].mxu0
  %1971 = vdwg.mxu0
  %v1972 = vsel %vm425, %v1964, -inf
  %1973 = vmax.xlane.f32.xlu0 %v1972
  %v1974 = vpop.xlane.xlu0 %1973
  %v1975 = vsel %vm429, %v1969, -inf
  %1976 = vmax.xlane.f32.xlu0 %v1975
  %v1977 = vpop.xlane.xlu0 %1976
  %v1978 = vsub.f32 %v1964, %v1974
  %v1979 = vsub.f32 %v1969, %v1977
  %v1980 = vmul.f32 %v1978, 1.442695
  %v1981 = vpow.pop %v1980
  %v1982 = vmul.f32 %v1979, 1.442695
  %v1983 = vpow.pop %v1982
  %v1984 = vsel %vm425, %v1981, 0.0
  %1985 = vadd.xlane.f32.xlu0 %v1984
  %v1986 = vpop.xlane.xlu0 %1985
  %v1987 = vsel %vm429, %v1983, 0.0
  %1988 = vadd.xlane.f32.xlu0 %v1987
  %v1989 = vpop.xlane.xlu0 %1988
  %v1990 = vrcp.pop %v1986
  %v1991 = vrcp.pop %v1989
  %v1992 = vmul.f32 %v1981, %v1990
  %v1993 = vmul.f32 %v1983, %v1991
  %1995 = vrot.lane.b32.xlu0 %v1678, 112
  %v1996 = vpop.permute.xlu0 %1995
  %1997 = vrot.lane.b32.xlu0 %v1684, 112
  %v1998 = vpop.permute.xlu0 %1997
  %v2001 = vsel %vm425, %v1992, 0
  %v2004 = vsel %vm425, %v1993, 0
  %v2006 = vsel %vm455, %v1998, 0
  %2008 = vmatprep.subr.mxu0 0.0
  %2009 = vmatpush1.msra.mxu0 %v1996
  %2010 = vmatprep.subr.mxu0 0.0
  %2011 = vmatpush1.msra.mxu0 %v2006
  %2012 = vmatprep.subr.mxu0 0.0
  %2013 = vmatpush1.msra.mxu0 0.0
  %2014 = vmatprep.subr.mxu0 0.0
  %2015 = vmatpush1.msra.mxu0 0.0
  %2016 = vmatprep.subr.mxu0 0.0
  %2017 = vmatpush1.msra.mxu0 0.0
  %2018 = vmatprep.subr.mxu0 0.0
  %2019 = vmatpush1.msra.mxu0 0.0
  %2020 = vmatprep.subr.mxu0 0.0
  %2021 = vmatpush1.msra.mxu0 0.0
  %2022 = vmatprep.subr.mxu0 0.0
  %2023 = vmatpush1.msra.mxu0 0.0
  %2024 = vmatprep.subr.mxu0 0.0
  %2025 = vmatpush1.msra.mxu0 0.0
  %2026 = vmatprep.subr.mxu0 0.0
  %2027 = vmatpush1.msra.mxu0 0.0
  %2028 = vmatprep.subr.mxu0 0.0
  %2029 = vmatpush1.msra.mxu0 0.0
  %2030 = vmatprep.subr.mxu0 0.0
  %2031 = vmatpush1.msra.mxu0 0.0
  %2032 = vmatprep.subr.mxu0 0.0
  %2033 = vmatpush1.msra.mxu0 0.0
  %2034 = vmatprep.subr.mxu0 0.0
  %2035 = vmatpush1.msra.mxu0 0.0
  %2036 = vmatprep.subr.mxu0 0.0
  %2037 = vmatpush1.msra.mxu0 0.0
  %2038 = vmatprep.subr.mxu0 0.0
  %2039 = vmatpush1.msra.mxu0 0.0
  %2040 = vmatprep.subr.mxu0 0.0
  %2041 = vmatpush1.msra.mxu0 0.0
  %2042 = vmatprep.subr.mxu0 0.0
  %2043 = vmatpush1.msra.mxu0 0.0
  %2044 = vmatprep.subr.mxu0 0.0
  %2045 = vmatpush1.msra.mxu0 0.0
  %2046 = vmatprep.subr.mxu0 0.0
  %2047 = vmatpush1.msra.mxu0 0.0
  %2048 = vmatprep.subr.mxu0 0.0
  %2049 = vmatpush1.msra.mxu0 0.0
  %2050 = vmatprep.subr.mxu0 0.0
  %2051 = vmatpush1.msra.mxu0 0.0
  %2052 = vmatprep.subr.mxu0 0.0
  %2053 = vmatpush1.msra.mxu0 0.0
  %2054 = vmatprep.subr.mxu0 0.0
  %2055 = vmatpush1.msra.mxu0 0.0
  %2056 = vmatprep.subr.mxu0 0.0
  %2057 = vmatpush1.msra.mxu0 0.0
  %2058 = vmatprep.subr.mxu0 0.0
  %2059 = vmatpush1.msra.mxu0 0.0
  %2060 = vmatprep.subr.mxu0 0.0
  %2061 = vmatpush1.msra.mxu0 0.0
  %2062 = vmatprep.subr.mxu0 0.0
  %2063 = vmatpush1.msra.mxu0 0.0
  %2064 = vmatprep.subr.mxu0 0.0
  %2065 = vmatpush1.msra.mxu0 0.0
  %2066 = vmatprep.subr.mxu0 0.0
  %2067 = vmatpush1.msra.mxu0 0.0
  %2068 = vmatprep.subr.mxu0 0.0
  %2069 = vmatpush1.msra.mxu0 0.0
  %2070 = vmatprep.subr.mxu0 0.0
  %2071 = vmatpush1.msra.mxu0 0.0
  %2072 = vmatprep.mubr.f32.mxu0 0.0
  %2073 = vmatmul.mubr.f32.gmra.mrb[0].mxu0 %v2001
  %v2074 = vpop.f32.mrb[0].mxu0
  %v2075 = vadd.f32 0.0, %v2074
  %v2076 = vpop.f32.mrb[0].mxu0
  %2077 = vmatprep.mubr.f32.mxu0 0.0
  %2078 = vmatmul.mubr.f32.gmra.mrb[0].mxu0 %v2004
  %v2079 = vpop.f32.mrb[0].mxu0
  %v2080 = vadd.f32 0.0, %v2079
  %v2081 = vpop.f32.mrb[0].mxu0
  %2082 = vdwg.mxu0
  %2083 = vrot.lane.b32.xlu0 %v1676, 96
  %v2084 = vpop.permute.xlu0 %2083
  %2085 = vrot.lane.b32.xlu0 %v1682, 96
  %v2086 = vpop.permute.xlu0 %2085
  %2087 = vrot.lane.b32.xlu0 %v1676, 32
  %v2088 = vpop.permute.xlu0 %2087
  %2089 = vrot.lane.b32.xlu0 %v1682, 32
  %v2090 = vpop.permute.xlu0 %2089
  %v2091 = vsel %vm341, %v2084, 0
  %v2093 = vsel %vm341, %v2086, 0
  %v2095 = vsel %vm341, %v2088, 0
  %v2097 = vsel %vm341, %v2090, 0
  %2099 = vmatprep.subr.mxu0 0.0
  %2100 = vmatpush1.xpose.msra.mxu0 %v2095
  %2101 = vmatprep.subr.mxu0 0.0
  %2102 = vmatpush1.xpose.msra.mxu0 %v2097
  %2103 = vmatprep.subr.mxu0 0.0
  %2104 = vmatpush1.xpose.msra.mxu0 0.0
  %2105 = vmatprep.subr.mxu0 0.0
  %2106 = vmatpush1.xpose.msra.mxu0 0.0
  %2107 = vmatprep.subr.mxu0 0.0
  %2108 = vmatpush1.xpose.msra.mxu0 0.0
  %2109 = vmatprep.subr.mxu0 0.0
  %2110 = vmatpush1.xpose.msra.mxu0 0.0
  %2111 = vmatprep.subr.mxu0 0.0
  %2112 = vmatpush1.xpose.msra.mxu0 0.0
  %2113 = vmatprep.subr.mxu0 0.0
  %2114 = vmatpush1.xpose.msra.mxu0 0.0
  %2115 = vmatprep.subr.mxu0 0.0
  %2116 = vmatpush1.xpose.msra.mxu0 0.0
  %2117 = vmatprep.subr.mxu0 0.0
  %2118 = vmatpush1.xpose.msra.mxu0 0.0
  %2119 = vmatprep.subr.mxu0 0.0
  %2120 = vmatpush1.xpose.msra.mxu0 0.0
  %2121 = vmatprep.subr.mxu0 0.0
  %2122 = vmatpush1.xpose.msra.mxu0 0.0
  %2123 = vmatprep.subr.mxu0 0.0
  %2124 = vmatpush1.xpose.msra.mxu0 0.0
  %2125 = vmatprep.subr.mxu0 0.0
  %2126 = vmatpush1.xpose.msra.mxu0 0.0
  %2127 = vmatprep.subr.mxu0 0.0
  %2128 = vmatpush1.xpose.msra.mxu0 0.0
  %2129 = vmatprep.subr.mxu0 0.0
  %2130 = vmatpush1.xpose.msra.mxu0 0.0
  %2131 = vmatprep.subr.mxu0 0.0
  %2132 = vmatpush1.xpose.msra.mxu0 0.0
  %2133 = vmatprep.subr.mxu0 0.0
  %2134 = vmatpush1.xpose.msra.mxu0 0.0
  %2135 = vmatprep.subr.mxu0 0.0
  %2136 = vmatpush1.xpose.msra.mxu0 0.0
  %2137 = vmatprep.subr.mxu0 0.0
  %2138 = vmatpush1.xpose.msra.mxu0 0.0
  %2139 = vmatprep.subr.mxu0 0.0
  %2140 = vmatpush1.xpose.msra.mxu0 0.0
  %2141 = vmatprep.subr.mxu0 0.0
  %2142 = vmatpush1.xpose.msra.mxu0 0.0
  %2143 = vmatprep.subr.mxu0 0.0
  %2144 = vmatpush1.xpose.msra.mxu0 0.0
  %2145 = vmatprep.subr.mxu0 0.0
  %2146 = vmatpush1.xpose.msra.mxu0 0.0
  %2147 = vmatprep.subr.mxu0 0.0
  %2148 = vmatpush1.xpose.msra.mxu0 0.0
  %2149 = vmatprep.subr.mxu0 0.0
  %2150 = vmatpush1.xpose.msra.mxu0 0.0
  %2151 = vmatprep.subr.mxu0 0.0
  %2152 = vmatpush1.xpose.msra.mxu0 0.0
  %2153 = vmatprep.subr.mxu0 0.0
  %2154 = vmatpush1.xpose.msra.mxu0 0.0
  %2155 = vmatprep.subr.mxu0 0.0
  %2156 = vmatpush1.xpose.msra.mxu0 0.0
  %2157 = vmatprep.subr.mxu0 0.0
  %2158 = vmatpush1.xpose.msra.mxu0 0.0
  %2159 = vmatprep.subr.mxu0 0.0
  %2160 = vmatpush1.xpose.msra.mxu0 0.0
  %2161 = vmatprep.subr.mxu0 0.0
  %2162 = vmatpush1.xpose.msra.mxu0 0.0
  %2163 = vmatprep.mubr.f32.mxu0 0.0
  %2164 = vmatmul.mubr.f32.gmra.mrb[0].mxu0 %v2091
  %v2165 = vpop.f32.mrb[0].mxu0
  %v2166 = vadd.f32 %v50, %v2165
  %v2167 = vpop.f32.mrb[0].mxu0
  %2168 = vmatprep.mubr.f32.mxu0 0.0
  %2169 = vmatmul.mubr.f32.gmra.mrb[0].mxu0 %v2093
  %v2170 = vpop.f32.mrb[0].mxu0
  %v2171 = vadd.f32 %v51, %v2170
  %v2172 = vpop.f32.mrb[0].mxu0
  %2173 = vdwg.mxu0
  %v2174 = vsel %vm425, %v2166, -inf
  %2175 = vmax.xlane.f32.xlu0 %v2174
  %v2176 = vpop.xlane.xlu0 %2175
  %v2177 = vsel %vm429, %v2171, -inf
  %2178 = vmax.xlane.f32.xlu0 %v2177
  %v2179 = vpop.xlane.xlu0 %2178
  %v2180 = vsub.f32 %v2166, %v2176
  %v2181 = vsub.f32 %v2171, %v2179
  %v2182 = vmul.f32 %v2180, 1.442695
  %v2183 = vpow.pop %v2182
  %v2184 = vmul.f32 %v2181, 1.442695
  %v2185 = vpow.pop %v2184
  %v2186 = vsel %vm425, %v2183, 0.0
  %2187 = vadd.xlane.f32.xlu0 %v2186
  %v2188 = vpop.xlane.xlu0 %2187
  %v2189 = vsel %vm429, %v2185, 0.0
  %2190 = vadd.xlane.f32.xlu0 %v2189
  %v2191 = vpop.xlane.xlu0 %2190
  %v2192 = vrcp.pop %v2188
  %v2193 = vrcp.pop %v2191
  %v2194 = vmul.f32 %v2183, %v2192
  %v2195 = vmul.f32 %v2185, %v2193
  %2196 = vrot.lane.b32.xlu0 %v1678, 96
  %v2197 = vpop.permute.xlu0 %2196
  %2198 = vrot.lane.b32.xlu0 %v1684, 96
  %v2199 = vpop.permute.xlu0 %2198
  %v2202 = vsel %vm425, %v2194, 0
  %v2205 = vsel %vm425, %v2195, 0
  %v2207 = vsel %vm455, %v2199, 0
  %2209 = vmatprep.subr.mxu0 0.0
  %2210 = vmatpush1.msra.mxu0 %v2197
  %2211 = vmatprep.subr.mxu0 0.0
  %2212 = vmatpush1.msra.mxu0 %v2207
  %2213 = vmatprep.subr.mxu0 0.0
  %2214 = vmatpush1.msra.mxu0 0.0
  %2215 = vmatprep.subr.mxu0 0.0
  %2216 = vmatpush1.msra.mxu0 0.0
  %2217 = vmatprep.subr.mxu0 0.0
  %2218 = vmatpush1.msra.mxu0 0.0
  %2219 = vmatprep.subr.mxu0 0.0
  %2220 = vmatpush1.msra.mxu0 0.0
  %2221 = vmatprep.subr.mxu0 0.0
  %2222 = vmatpush1.msra.mxu0 0.0
  %2223 = vmatprep.subr.mxu0 0.0
  %2224 = vmatpush1.msra.mxu0 0.0
  %2225 = vmatprep.subr.mxu0 0.0
  %2226 = vmatpush1.msra.mxu0 0.0
  %2227 = vmatprep.subr.mxu0 0.0
  %2228 = vmatpush1.msra.mxu0 0.0
  %2229 = vmatprep.subr.mxu0 0.0
  %2230 = vmatpush1.msra.mxu0 0.0
  %2231 = vmatprep.subr.mxu0 0.0
  %2232 = vmatpush1.msra.mxu0 0.0
  %2233 = vmatprep.subr.mxu0 0.0
  %2234 = vmatpush1.msra.mxu0 0.0
  %2235 = vmatprep.subr.mxu0 0.0
  %2236 = vmatpush1.msra.mxu0 0.0
  %2237 = vmatprep.subr.mxu0 0.0
  %2238 = vmatpush1.msra.mxu0 0.0
  %2239 = vmatprep.subr.mxu0 0.0
  %2240 = vmatpush1.msra.mxu0 0.0
  %2241 = vmatprep.subr.mxu0 0.0
  %2242 = vmatpush1.msra.mxu0 0.0
  %2243 = vmatprep.subr.mxu0 0.0
  %2244 = vmatpush1.msra.mxu0 0.0
  %2245 = vmatprep.subr.mxu0 0.0
  %2246 = vmatpush1.msra.mxu0 0.0
  %2247 = vmatprep.subr.mxu0 0.0
  %2248 = vmatpush1.msra.mxu0 0.0
  %2249 = vmatprep.subr.mxu0 0.0
  %2250 = vmatpush1.msra.mxu0 0.0
  %2251 = vmatprep.subr.mxu0 0.0
  %2252 = vmatpush1.msra.mxu0 0.0
  %2253 = vmatprep.subr.mxu0 0.0
  %2254 = vmatpush1.msra.mxu0 0.0
  %2255 = vmatprep.subr.mxu0 0.0
  %2256 = vmatpush1.msra.mxu0 0.0
  %2257 = vmatprep.subr.mxu0 0.0
  %2258 = vmatpush1.msra.mxu0 0.0
  %2259 = vmatprep.subr.mxu0 0.0
  %2260 = vmatpush1.msra.mxu0 0.0
  %2261 = vmatprep.subr.mxu0 0.0
  %2262 = vmatpush1.msra.mxu0 0.0
  %2263 = vmatprep.subr.mxu0 0.0
  %2264 = vmatpush1.msra.mxu0 0.0
  %2265 = vmatprep.subr.mxu0 0.0
  %2266 = vmatpush1.msra.mxu0 0.0
  %2267 = vmatprep.subr.mxu0 0.0
  %2268 = vmatpush1.msra.mxu0 0.0
  %2269 = vmatprep.subr.mxu0 0.0
  %2270 = vmatpush1.msra.mxu0 0.0
  %2271 = vmatprep.subr.mxu0 0.0
  %2272 = vmatpush1.msra.mxu0 0.0
  %2273 = vmatprep.mubr.f32.mxu0 0.0
  %2274 = vmatmul.mubr.f32.gmra.mrb[0].mxu0 %v2202
  %v2275 = vpop.f32.mrb[0].mxu0
  %v2276 = vadd.f32 0.0, %v2275
  %v2277 = vpop.f32.mrb[0].mxu0
  %2278 = vmatprep.mubr.f32.mxu0 0.0
  %2279 = vmatmul.mubr.f32.gmra.mrb[0].mxu0 %v2205
  %v2280 = vpop.f32.mrb[0].mxu0
  %v2281 = vadd.f32 0.0, %v2280
  %v2282 = vpop.f32.mrb[0].mxu0
  %2283 = vdwg.mxu0
  %2284 = vrot.lane.b32.xlu0 %v1676, 80
  %v2285 = vpop.permute.xlu0 %2284
  %2286 = vrot.lane.b32.xlu0 %v1682, 80
  %v2287 = vpop.permute.xlu0 %2286
  %2288 = vrot.lane.b32.xlu0 %v1676, 16
  %v2289 = vpop.permute.xlu0 %2288
  %2290 = vrot.lane.b32.xlu0 %v1682, 16
  %v2291 = vpop.permute.xlu0 %2290
  %v2292 = vsel %vm341, %v2285, 0
  %v2294 = vsel %vm341, %v2287, 0
  %v2296 = vsel %vm341, %v2289, 0
  %v2298 = vsel %vm341, %v2291, 0
  %2300 = vmatprep.subr.mxu0 0.0
  %2301 = vmatpush1.xpose.msra.mxu0 %v2296
  %2302 = vmatprep.subr.mxu0 0.0
  %2303 = vmatpush1.xpose.msra.mxu0 %v2298
  %2304 = vmatprep.subr.mxu0 0.0
  %2305 = vmatpush1.xpose.msra.mxu0 0.0
  %2306 = vmatprep.subr.mxu0 0.0
  %2307 = vmatpush1.xpose.msra.mxu0 0.0
  %2308 = vmatprep.subr.mxu0 0.0
  %2309 = vmatpush1.xpose.msra.mxu0 0.0
  %2310 = vmatprep.subr.mxu0 0.0
  %2311 = vmatpush1.xpose.msra.mxu0 0.0
  %2312 = vmatprep.subr.mxu0 0.0
  %2313 = vmatpush1.xpose.msra.mxu0 0.0
  %2314 = vmatprep.subr.mxu0 0.0
  %2315 = vmatpush1.xpose.msra.mxu0 0.0
  %2316 = vmatprep.subr.mxu0 0.0
  %2317 = vmatpush1.xpose.msra.mxu0 0.0
  %2318 = vmatprep.subr.mxu0 0.0
  %2319 = vmatpush1.xpose.msra.mxu0 0.0
  %2320 = vmatprep.subr.mxu0 0.0
  %2321 = vmatpush1.xpose.msra.mxu0 0.0
  %2322 = vmatprep.subr.mxu0 0.0
  %2323 = vmatpush1.xpose.msra.mxu0 0.0
  %2324 = vmatprep.subr.mxu0 0.0
  %2325 = vmatpush1.xpose.msra.mxu0 0.0
  %2326 = vmatprep.subr.mxu0 0.0
  %2327 = vmatpush1.xpose.msra.mxu0 0.0
  %2328 = vmatprep.subr.mxu0 0.0
  %2329 = vmatpush1.xpose.msra.mxu0 0.0
  %2330 = vmatprep.subr.mxu0 0.0
  %2331 = vmatpush1.xpose.msra.mxu0 0.0
  %2332 = vmatprep.subr.mxu0 0.0
  %2333 = vmatpush1.xpose.msra.mxu0 0.0
  %2334 = vmatprep.subr.mxu0 0.0
  %2335 = vmatpush1.xpose.msra.mxu0 0.0
  %2336 = vmatprep.subr.mxu0 0.0
  %2337 = vmatpush1.xpose.msra.mxu0 0.0
  %2338 = vmatprep.subr.mxu0 0.0
  %2339 = vmatpush1.xpose.msra.mxu0 0.0
  %2340 = vmatprep.subr.mxu0 0.0
  %2341 = vmatpush1.xpose.msra.mxu0 0.0
  %2342 = vmatprep.subr.mxu0 0.0
  %2343 = vmatpush1.xpose.msra.mxu0 0.0
  %2344 = vmatprep.subr.mxu0 0.0
  %2345 = vmatpush1.xpose.msra.mxu0 0.0
  %2346 = vmatprep.subr.mxu0 0.0
  %2347 = vmatpush1.xpose.msra.mxu0 0.0
  %2348 = vmatprep.subr.mxu0 0.0
  %2349 = vmatpush1.xpose.msra.mxu0 0.0
  %2350 = vmatprep.subr.mxu0 0.0
  %2351 = vmatpush1.xpose.msra.mxu0 0.0
  %2352 = vmatprep.subr.mxu0 0.0
  %2353 = vmatpush1.xpose.msra.mxu0 0.0
  %2354 = vmatprep.subr.mxu0 0.0
  %2355 = vmatpush1.xpose.msra.mxu0 0.0
  %2356 = vmatprep.subr.mxu0 0.0
  %2357 = vmatpush1.xpose.msra.mxu0 0.0
  %2358 = vmatprep.subr.mxu0 0.0
  %2359 = vmatpush1.xpose.msra.mxu0 0.0
  %2360 = vmatprep.subr.mxu0 0.0
  %2361 = vmatpush1.xpose.msra.mxu0 0.0
  %2362 = vmatprep.subr.mxu0 0.0
  %2363 = vmatpush1.xpose.msra.mxu0 0.0
  %2364 = vmatprep.mubr.f32.mxu0 0.0
  %2365 = vmatmul.mubr.f32.gmra.mrb[0].mxu0 %v2292
  %v2366 = vpop.f32.mrb[0].mxu0
  %v2367 = vadd.f32 %v50, %v2366
  %v2368 = vpop.f32.mrb[0].mxu0
  %2369 = vmatprep.mubr.f32.mxu0 0.0
  %2370 = vmatmul.mubr.f32.gmra.mrb[0].mxu0 %v2294
  %v2371 = vpop.f32.mrb[0].mxu0
  %v2372 = vadd.f32 %v51, %v2371
  %v2373 = vpop.f32.mrb[0].mxu0
  %2374 = vdwg.mxu0
  %v2375 = vsel %vm425, %v2367, -inf
  %2376 = vmax.xlane.f32.xlu0 %v2375
  %v2377 = vpop.xlane.xlu0 %2376
  %v2378 = vsel %vm429, %v2372, -inf
  %2379 = vmax.xlane.f32.xlu0 %v2378
  %v2380 = vpop.xlane.xlu0 %2379
  %v2381 = vsub.f32 %v2367, %v2377
  %v2382 = vsub.f32 %v2372, %v2380
  %v2383 = vmul.f32 %v2381, 1.442695
  %v2384 = vpow.pop %v2383
  %v2385 = vmul.f32 %v2382, 1.442695
  %v2386 = vpow.pop %v2385
  %v2387 = vsel %vm425, %v2384, 0.0
  %2388 = vadd.xlane.f32.xlu0 %v2387
  %v2389 = vpop.xlane.xlu0 %2388
  %v2390 = vsel %vm429, %v2386, 0.0
  %2391 = vadd.xlane.f32.xlu0 %v2390
  %v2392 = vpop.xlane.xlu0 %2391
  %v2393 = vrcp.pop %v2389
  %v2394 = vrcp.pop %v2392
  %v2395 = vmul.f32 %v2384, %v2393
  %v2396 = vmul.f32 %v2386, %v2394
  %2397 = vrot.lane.b32.xlu0 %v1678, 80
  %v2398 = vpop.permute.xlu0 %2397
  %2399 = vrot.lane.b32.xlu0 %v1684, 80
  %v2400 = vpop.permute.xlu0 %2399
  %v2403 = vsel %vm425, %v2395, 0
  %v2406 = vsel %vm425, %v2396, 0
  %v2408 = vsel %vm455, %v2400, 0
  %2410 = vmatprep.subr.mxu0 0.0
  %2411 = vmatpush1.msra.mxu0 %v2398
  %2412 = vmatprep.subr.mxu0 0.0
  %2413 = vmatpush1.msra.mxu0 %v2408
  %2414 = vmatprep.subr.mxu0 0.0
  %2415 = vmatpush1.msra.mxu0 0.0
  %2416 = vmatprep.subr.mxu0 0.0
  %2417 = vmatpush1.msra.mxu0 0.0
  %2418 = vmatprep.subr.mxu0 0.0
  %2419 = vmatpush1.msra.mxu0 0.0
  %2420 = vmatprep.subr.mxu0 0.0
  %2421 = vmatpush1.msra.mxu0 0.0
  %2422 = vmatprep.subr.mxu0 0.0
  %2423 = vmatpush1.msra.mxu0 0.0
  %2424 = vmatprep.subr.mxu0 0.0
  %2425 = vmatpush1.msra.mxu0 0.0
  %2426 = vmatprep.subr.mxu0 0.0
  %2427 = vmatpush1.msra.mxu0 0.0
  %2428 = vmatprep.subr.mxu0 0.0
  %2429 = vmatpush1.msra.mxu0 0.0
  %2430 = vmatprep.subr.mxu0 0.0
  %2431 = vmatpush1.msra.mxu0 0.0
  %2432 = vmatprep.subr.mxu0 0.0
  %2433 = vmatpush1.msra.mxu0 0.0
  %2434 = vmatprep.subr.mxu0 0.0
  %2435 = vmatpush1.msra.mxu0 0.0
  %2436 = vmatprep.subr.mxu0 0.0
  %2437 = vmatpush1.msra.mxu0 0.0
  %2438 = vmatprep.subr.mxu0 0.0
  %2439 = vmatpush1.msra.mxu0 0.0
  %2440 = vmatprep.subr.mxu0 0.0
  %2441 = vmatpush1.msra.mxu0 0.0
  %2442 = vmatprep.subr.mxu0 0.0
  %2443 = vmatpush1.msra.mxu0 0.0
  %2444 = vmatprep.subr.mxu0 0.0
  %2445 = vmatpush1.msra.mxu0 0.0
  %2446 = vmatprep.subr.mxu0 0.0
  %2447 = vmatpush1.msra.mxu0 0.0
  %2448 = vmatprep.subr.mxu0 0.0
  %2449 = vmatpush1.msra.mxu0 0.0
  %2450 = vmatprep.subr.mxu0 0.0
  %2451 = vmatpush1.msra.mxu0 0.0
  %2452 = vmatprep.subr.mxu0 0.0
  %2453 = vmatpush1.msra.mxu0 0.0
  %2454 = vmatprep.subr.mxu0 0.0
  %2455 = vmatpush1.msra.mxu0 0.0
  %2456 = vmatprep.subr.mxu0 0.0
  %2457 = vmatpush1.msra.mxu0 0.0
  %2458 = vmatprep.subr.mxu0 0.0
  %2459 = vmatpush1.msra.mxu0 0.0
  %2460 = vmatprep.subr.mxu0 0.0
  %2461 = vmatpush1.msra.mxu0 0.0
  %2462 = vmatprep.subr.mxu0 0.0
  %2463 = vmatpush1.msra.mxu0 0.0
  %2464 = vmatprep.subr.mxu0 0.0
  %2465 = vmatpush1.msra.mxu0 0.0
  %2466 = vmatprep.subr.mxu0 0.0
  %2467 = vmatpush1.msra.mxu0 0.0
  %2468 = vmatprep.subr.mxu0 0.0
  %2469 = vmatpush1.msra.mxu0 0.0
  %2470 = vmatprep.subr.mxu0 0.0
  %2471 = vmatpush1.msra.mxu0 0.0
  %2472 = vmatprep.subr.mxu0 0.0
  %2473 = vmatpush1.msra.mxu0 0.0
  %2474 = vmatprep.mubr.f32.mxu0 0.0
  %2475 = vmatmul.mubr.f32.gmra.mrb[0].mxu0 %v2403
  %v2476 = vpop.f32.mrb[0].mxu0
  %v2477 = vadd.f32 0.0, %v2476
  %v2478 = vpop.f32.mrb[0].mxu0
  %2479 = vmatprep.mubr.f32.mxu0 0.0
  %2480 = vmatmul.mubr.f32.gmra.mrb[0].mxu0 %v2406
  %v2481 = vpop.f32.mrb[0].mxu0
  %v2482 = vadd.f32 0.0, %v2481
  %v2483 = vpop.f32.mrb[0].mxu0
  %2484 = vdwg.mxu0
  %2487 = vrot.lane.b32.xlu0 %v2075, 16
  %v2488 = vpop.permute.xlu0 %2487
  %2489 = vrot.lane.b32.xlu0 %v2080, 16
  %v2490 = vpop.permute.xlu0 %2489
  %2495 = vrot.lane.b32.xlu0 %v2276, 32
  %v2496 = vpop.permute.xlu0 %2495
  %2497 = vrot.lane.b32.xlu0 %v2281, 32
  %v2498 = vpop.permute.xlu0 %2497
  %2503 = vrot.lane.b32.xlu0 %v2477, 48
  %v2504 = vpop.permute.xlu0 %2503
  %2505 = vrot.lane.b32.xlu0 %v2482, 48
  %v2506 = vpop.permute.xlu0 %2505
  %v2509 = vsel %vm341, %v1873, %v2488
  %v2510 = vsel %vm341, %v1878, %v2490
  %v2511 = vsel %vm1164, %v2509, %v2496
  %v2512 = vsel %vm1164, %v2510, %v2498
  %v2513 = vsel %vm1167, %v2511, %v2504
  %v2514 = vsel %vm1167, %v2512, %v2506
  %v2515 = vlaneseq
  %v2516 = vshrl.u32 %v2515, 7
  %v2517 = vsub.s32 3, %v2516
  %v2518 = vrot.slane %v1555, %v2517
  %2527 = vrot.lane.b32.xlu0 %v1531, 64
  %v2528 = vpop.permute.xlu0 %2527
  %2529 = vrot.lane.b32.xlu0 %v1534, 64
  %v2530 = vpop.permute.xlu0 %2529
  %2531 = vrot.lane.b32.xlu0 %v1537, 64
  %v2532 = vpop.permute.xlu0 %2531
  %2533 = vrot.lane.b32.xlu0 %v1540, 64
  %v2534 = vpop.permute.xlu0 %2533
  %2535 = vrot.lane.b32.xlu0 %v1543, 64
  %v2536 = vpop.permute.xlu0 %2535
  %2537 = vrot.lane.b32.xlu0 %v1546, 64
  %v2538 = vpop.permute.xlu0 %2537
  %2539 = vrot.lane.b32.xlu0 %v1549, 64
  %v2540 = vpop.permute.xlu0 %2539
  %2541 = vrot.lane.b32.xlu0 %v1552, 64
  %v2542 = vpop.permute.xlu0 %2541
  %v2552 = vsel %vm82, %v2513, 0
  %v2555 = vsel %vm82, %v2514, 0
  %2557 = vmatprep.subr.mxu0 0.0
  %2558 = vmatpush1.msra.mxu0 %v2528
  %2559 = vmatprep.subr.mxu0 0.0
  %2560 = vmatpush1.msra.mxu0 %v2530
  %2561 = vmatprep.subr.mxu0 0.0
  %2562 = vmatpush1.msra.mxu0 %v2532
  %2563 = vmatprep.subr.mxu0 0.0
  %2564 = vmatpush1.msra.mxu0 %v2534
  %2565 = vmatprep.subr.mxu0 0.0
  %2566 = vmatpush1.msra.mxu0 %v2536
  %2567 = vmatprep.subr.mxu0 0.0
  %2568 = vmatpush1.msra.mxu0 %v2538
  %2569 = vmatprep.subr.mxu0 0.0
  %2570 = vmatpush1.msra.mxu0 %v2540
  %2571 = vmatprep.subr.mxu0 0.0
  %2572 = vmatpush1.msra.mxu0 %v2542
  %2573 = vmatprep.subr.mxu0 0.0
  %2574 = vmatpush1.msra.mxu0 0.0
  %2575 = vmatprep.subr.mxu0 0.0
  %2576 = vmatpush1.msra.mxu0 0.0
  %2577 = vmatprep.subr.mxu0 0.0
  %2578 = vmatpush1.msra.mxu0 0.0
  %2579 = vmatprep.subr.mxu0 0.0
  %2580 = vmatpush1.msra.mxu0 0.0
  %2581 = vmatprep.subr.mxu0 0.0
  %2582 = vmatpush1.msra.mxu0 0.0
  %2583 = vmatprep.subr.mxu0 0.0
  %2584 = vmatpush1.msra.mxu0 0.0
  %2585 = vmatprep.subr.mxu0 0.0
  %2586 = vmatpush1.msra.mxu0 0.0
  %2587 = vmatprep.subr.mxu0 0.0
  %2588 = vmatpush1.msra.mxu0 0.0
  %2589 = vmatprep.subr.mxu0 0.0
  %2590 = vmatpush1.msra.mxu0 0.0
  %2591 = vmatprep.subr.mxu0 0.0
  %2592 = vmatpush1.msra.mxu0 0.0
  %2593 = vmatprep.subr.mxu0 0.0
  %2594 = vmatpush1.msra.mxu0 0.0
  %2595 = vmatprep.subr.mxu0 0.0
  %2596 = vmatpush1.msra.mxu0 0.0
  %2597 = vmatprep.subr.mxu0 0.0
  %2598 = vmatpush1.msra.mxu0 0.0
  %2599 = vmatprep.subr.mxu0 0.0
  %2600 = vmatpush1.msra.mxu0 0.0
  %2601 = vmatprep.subr.mxu0 0.0
  %2602 = vmatpush1.msra.mxu0 0.0
  %2603 = vmatprep.subr.mxu0 0.0
  %2604 = vmatpush1.msra.mxu0 0.0
  %2605 = vmatprep.subr.mxu0 0.0
  %2606 = vmatpush1.msra.mxu0 0.0
  %2607 = vmatprep.subr.mxu0 0.0
  %2608 = vmatpush1.msra.mxu0 0.0
  %2609 = vmatprep.subr.mxu0 0.0
  %2610 = vmatpush1.msra.mxu0 0.0
  %2611 = vmatprep.subr.mxu0 0.0
  %2612 = vmatpush1.msra.mxu0 0.0
  %2613 = vmatprep.subr.mxu0 0.0
  %2614 = vmatpush1.msra.mxu0 0.0
  %2615 = vmatprep.subr.mxu0 0.0
  %2616 = vmatpush1.msra.mxu0 0.0
  %2617 = vmatprep.subr.mxu0 0.0
  %2618 = vmatpush1.msra.mxu0 0.0
  %2619 = vmatprep.subr.mxu0 0.0
  %2620 = vmatpush1.msra.mxu0 0.0
  %2621 = vmatprep.mubr.f32.mxu0 0.0
  %2622 = vmatmul.mubr.f32.gmra.mrb[0].mxu0 %v2552
  %v2623 = vpop.f32.mrb[0].mxu0
  %v2624 = vadd.f32 %v2518, %v2623
  %v2625 = vpop.f32.mrb[0].mxu0
  %2626 = vmatprep.mubr.f32.mxu0 0.0
  %2627 = vmatmul.mubr.f32.gmra.mrb[0].mxu0 %v2555
  %v2628 = vpop.f32.mrb[0].mxu0
  %v2629 = vadd.f32 %v2518, %v2628
  %v2630 = vpop.f32.mrb[0].mxu0
  %2631 = vdwg.mxu0
  %v2632 = vadd.f32 %v1527, %v2624
  %v2633 = vadd.f32 %v1528, %v2629
  %v2634 = vsel %vm82, %v2632, 0.0
  %2635 = vadd.xlane.f32.xlu0 %v2634
  %v2636 = vpop.xlane.xlu0 %2635
  %v2637 = vsel %vm207, %v2633, 0.0
  %2638 = vadd.xlane.f32.xlu0 %v2637
  %v2639 = vpop.xlane.xlu0 %2638
  %v2640 = vmul.f32 %v2636, %v211
  %v2641 = vmul.f32 %v2639, %v211
  %v2642 = vsub.f32 %v2632, %v2640
  %v2643 = vsub.f32 %v2633, %v2641
  %v2644 = vmul.f32 %v2642, %v2642
  %v2645 = vmul.f32 %v2643, %v2643
  %v2646 = vsel %vm82, %v2644, 0.0
  %2647 = vadd.xlane.f32.xlu0 %v2646
  %v2648 = vpop.xlane.xlu0 %2647
  %v2649 = vsel %vm207, %v2645, 0.0
  %2650 = vadd.xlane.f32.xlu0 %v2649
  %v2651 = vpop.xlane.xlu0 %2650
  %v2652 = vmul.f32 %v2648, %v211
  %v2653 = vmul.f32 %v2651, %v211
  %v2654 = vadd.f32 %v2652, 1e-12
  %v2655 = vadd.f32 %v2653, 1e-12
  %v2656 = vrsqrt.pop %v2654
  %v2657 = vrsqrt.pop %v2655
  %v2658 = vmul.f32 %v2642, %v2656
  %v2659 = vmul.f32 %v2643, %v2657
  %v2660 = vlaneseq
  %v2661 = vshrl.u32 %v2660, 7
  %v2662 = vsub.s32 4, %v2661
  %v2663 = vrot.slane %v1555, %v2662
  %v2664 = vmul.f32 %v2658, %v2663
  %v2665 = vmul.f32 %v2659, %v2663
  %v2666 = vlaneseq
  %v2667 = vshrl.u32 %v2666, 7
  %v2668 = vsub.s32 5, %v2667
  %v2669 = vrot.slane %v1555, %v2668
  %v2670 = vadd.f32 %v2664, %v2669
  %v2671 = vadd.f32 %v2665, %v2669
  %v2672 = vlaneseq
  %v2673 = vshrl.u32 %v2672, 7
  %v2674 = vsub.s32 6, %v2673
  %v2675 = vrot.slane %v1555, %v2674
  %v2677 = vsel %vm82, %v2670, 0
  %v2680 = vsel %vm82, %v2671, 0
  %2682 = vmatprep.subr.mxu0 0.0
  %2683 = vmatpush1.msra.mxu0 %v1532
  %2684 = vmatprep.subr.mxu0 0.0
  %2685 = vmatpush1.msra.mxu0 %v1535
  %2686 = vmatprep.subr.mxu0 0.0
  %2687 = vmatpush1.msra.mxu0 %v1538
  %2688 = vmatprep.subr.mxu0 0.0
  %2689 = vmatpush1.msra.mxu0 %v1541
  %2690 = vmatprep.subr.mxu0 0.0
  %2691 = vmatpush1.msra.mxu0 %v1544
  %2692 = vmatprep.subr.mxu0 0.0
  %2693 = vmatpush1.msra.mxu0 %v1547
  %2694 = vmatprep.subr.mxu0 0.0
  %2695 = vmatpush1.msra.mxu0 %v1550
  %2696 = vmatprep.subr.mxu0 0.0
  %2697 = vmatpush1.msra.mxu0 %v1553
  %2698 = vmatprep.subr.mxu0 0.0
  %2699 = vmatpush1.msra.mxu0 0.0
  %2700 = vmatprep.subr.mxu0 0.0
  %2701 = vmatpush1.msra.mxu0 0.0
  %2702 = vmatprep.subr.mxu0 0.0
  %2703 = vmatpush1.msra.mxu0 0.0
  %2704 = vmatprep.subr.mxu0 0.0
  %2705 = vmatpush1.msra.mxu0 0.0
  %2706 = vmatprep.subr.mxu0 0.0
  %2707 = vmatpush1.msra.mxu0 0.0
  %2708 = vmatprep.subr.mxu0 0.0
  %2709 = vmatpush1.msra.mxu0 0.0
  %2710 = vmatprep.subr.mxu0 0.0
  %2711 = vmatpush1.msra.mxu0 0.0
  %2712 = vmatprep.subr.mxu0 0.0
  %2713 = vmatpush1.msra.mxu0 0.0
  %2714 = vmatprep.subr.mxu0 0.0
  %2715 = vmatpush1.msra.mxu0 0.0
  %2716 = vmatprep.subr.mxu0 0.0
  %2717 = vmatpush1.msra.mxu0 0.0
  %2718 = vmatprep.subr.mxu0 0.0
  %2719 = vmatpush1.msra.mxu0 0.0
  %2720 = vmatprep.subr.mxu0 0.0
  %2721 = vmatpush1.msra.mxu0 0.0
  %2722 = vmatprep.subr.mxu0 0.0
  %2723 = vmatpush1.msra.mxu0 0.0
  %2724 = vmatprep.subr.mxu0 0.0
  %2725 = vmatpush1.msra.mxu0 0.0
  %2726 = vmatprep.subr.mxu0 0.0
  %2727 = vmatpush1.msra.mxu0 0.0
  %2728 = vmatprep.subr.mxu0 0.0
  %2729 = vmatpush1.msra.mxu0 0.0
  %2730 = vmatprep.subr.mxu0 0.0
  %2731 = vmatpush1.msra.mxu0 0.0
  %2732 = vmatprep.subr.mxu0 0.0
  %2733 = vmatpush1.msra.mxu0 0.0
  %2734 = vmatprep.subr.mxu0 0.0
  %2735 = vmatpush1.msra.mxu0 0.0
  %2736 = vmatprep.subr.mxu0 0.0
  %2737 = vmatpush1.msra.mxu0 0.0
  %2738 = vmatprep.subr.mxu0 0.0
  %2739 = vmatpush1.msra.mxu0 0.0
  %2740 = vmatprep.subr.mxu0 0.0
  %2741 = vmatpush1.msra.mxu0 0.0
  %2742 = vmatprep.subr.mxu0 0.0
  %2743 = vmatpush1.msra.mxu0 0.0
  %2744 = vmatprep.subr.mxu0 0.0
  %2745 = vmatpush1.msra.mxu0 0.0
  %2746 = vmatprep.mubr.f32.mxu0 0.0
  %2747 = vmatmul.mubr.f32.gmra.mrb[0].mxu0 %v2677
  %v2748 = vpop.f32.mrb[0].mxu0
  %v2749 = vadd.f32 %v2675, %v2748
  %v2750 = vpop.f32.mrb[0].mxu0
  %2751 = vmatprep.mubr.f32.mxu0 0.0
  %2752 = vmatmul.mubr.f32.gmra.mrb[0].mxu0 %v2680
  %v2753 = vpop.f32.mrb[0].mxu0
  %v2754 = vadd.f32 %v2675, %v2753
  %v2755 = vpop.f32.mrb[0].mxu0
  %2756 = vdwg.mxu0
  %v2757 = vmul.f32 %v2749, 0.5
  %v2758 = vmul.f32 %v2754, 0.5
  %v2759 = vmul.f32 %v2749, 0.044715
  %v2760 = vmul.f32 %v2754, 0.044715
  %v2761 = vmul.f32 %v2759, %v2749
  %v2762 = vmul.f32 %v2760, %v2754
  %v2763 = vmul.f32 %v2761, %v2749
  %v2764 = vmul.f32 %v2762, %v2754
  %v2765 = vadd.f32 %v2749, %v2763
  %v2766 = vadd.f32 %v2754, %v2764
  %v2767 = vmul.f32 %v2765, 0.7978846
  %v2768 = vmul.f32 %v2766, 0.7978846
  %v2769 = vtanh.pop %v2767
  %v2770 = vtanh.pop %v2768
  %v2771 = vadd.f32 %v2769, 1.0
  %v2772 = vadd.f32 %v2770, 1.0
  %v2773 = vmul.f32 %v2757, %v2771
  %v2774 = vmul.f32 %v2758, %v2772
  %s2775 = scalar_lea.vmem %s4, 128
  %v2776 = vld [vmem:[%s2775] sm:$0xff]
  %v2777 = vld [vmem:[%s2775 + $0x8] sm:$0xff]
  %v2778 = vld [vmem:[%s2775 + $0x10] sm:$0xff]
  %v2779 = vld [vmem:[%s2775 + $0x18] sm:$0xff]
  %v2780 = vld [vmem:[%s2775 + $0x20] sm:$0xff]
  %v2781 = vld [vmem:[%s2775 + $0x28] sm:$0xff]
  %v2782 = vld [vmem:[%s2775 + $0x30] sm:$0xff]
  %v2783 = vld [vmem:[%s2775 + $0x38] sm:$0xff]
  %v2784 = vld [vmem:[%s2775 + $0x40] sm:$0xff]
  %v2785 = vld [vmem:[%s2775 + $0x48] sm:$0xff]
  %v2786 = vld [vmem:[%s2775 + $0x50] sm:$0xff]
  %v2787 = vld [vmem:[%s2775 + $0x58] sm:$0xff]
  %v2788 = vld [vmem:[%s2775 + $0x60] sm:$0xff]
  %v2789 = vld [vmem:[%s2775 + $0x68] sm:$0xff]
  %v2790 = vld [vmem:[%s2775 + $0x70] sm:$0xff]
  %v2791 = vld [vmem:[%s2775 + $0x78] sm:$0xff]
  %2792 = vmatprep.subr.mxu0 0.0
  %2793 = vmatpush1.msra.mxu0 %v2776
  %2794 = vmatprep.subr.mxu0 0.0
  %2795 = vmatpush1.msra.mxu0 %v2777
  %2796 = vmatprep.subr.mxu0 0.0
  %2797 = vmatpush1.msra.mxu0 %v2778
  %2798 = vmatprep.subr.mxu0 0.0
  %2799 = vmatpush1.msra.mxu0 %v2779
  %2800 = vmatprep.subr.mxu0 0.0
  %2801 = vmatpush1.msra.mxu0 %v2780
  %2802 = vmatprep.subr.mxu0 0.0
  %2803 = vmatpush1.msra.mxu0 %v2781
  %2804 = vmatprep.subr.mxu0 0.0
  %2805 = vmatpush1.msra.mxu0 %v2782
  %2806 = vmatprep.subr.mxu0 0.0
  %2807 = vmatpush1.msra.mxu0 %v2783
  %2808 = vmatprep.subr.mxu0 0.0
  %2809 = vmatpush1.msra.mxu0 %v2784
  %2810 = vmatprep.subr.mxu0 0.0
  %2811 = vmatpush1.msra.mxu0 %v2785
  %2812 = vmatprep.subr.mxu0 0.0
  %2813 = vmatpush1.msra.mxu0 %v2786
  %2814 = vmatprep.subr.mxu0 0.0
  %2815 = vmatpush1.msra.mxu0 %v2787
  %2816 = vmatprep.subr.mxu0 0.0
  %2817 = vmatpush1.msra.mxu0 %v2788
  %2818 = vmatprep.subr.mxu0 0.0
  %2819 = vmatpush1.msra.mxu0 %v2789
  %2820 = vmatprep.subr.mxu0 0.0
  %2821 = vmatpush1.msra.mxu0 %v2790
  %2822 = vmatprep.subr.mxu0 0.0
  %2823 = vmatpush1.msra.mxu0 %v2791
  %2824 = vmatprep.subr.mxu0 0.0
  %2825 = vmatpush1.msra.mxu0 0.0
  %2826 = vmatprep.subr.mxu0 0.0
  %2827 = vmatpush1.msra.mxu0 0.0
  %2828 = vmatprep.subr.mxu0 0.0
  %2829 = vmatpush1.msra.mxu0 0.0
  %2830 = vmatprep.subr.mxu0 0.0
  %2831 = vmatpush1.msra.mxu0 0.0
  %2832 = vmatprep.subr.mxu0 0.0
  %2833 = vmatpush1.msra.mxu0 0.0
  %2834 = vmatprep.subr.mxu0 0.0
  %2835 = vmatpush1.msra.mxu0 0.0
  %2836 = vmatprep.subr.mxu0 0.0
  %2837 = vmatpush1.msra.mxu0 0.0
  %2838 = vmatprep.subr.mxu0 0.0
  %2839 = vmatpush1.msra.mxu0 0.0
  %2840 = vmatprep.subr.mxu0 0.0
  %2841 = vmatpush1.msra.mxu0 0.0
  %2842 = vmatprep.subr.mxu0 0.0
  %2843 = vmatpush1.msra.mxu0 0.0
  %2844 = vmatprep.subr.mxu0 0.0
  %2845 = vmatpush1.msra.mxu0 0.0
  %2846 = vmatprep.subr.mxu0 0.0
  %2847 = vmatpush1.msra.mxu0 0.0
  %2848 = vmatprep.subr.mxu0 0.0
  %2849 = vmatpush1.msra.mxu0 0.0
  %2850 = vmatprep.subr.mxu0 0.0
  %2851 = vmatpush1.msra.mxu0 0.0
  %2852 = vmatprep.subr.mxu0 0.0
  %2853 = vmatpush1.msra.mxu0 0.0
  %2854 = vmatprep.subr.mxu0 0.0
  %2855 = vmatpush1.msra.mxu0 0.0
  %2856 = vmatprep.mubr.f32.mxu0 0.0
  %2857 = vmatmul.mubr.f32.gmra.mrb[0].mxu0 %v2773
  %v2858 = vpop.f32.mrb[0].mxu0
  %v2859 = vadd.f32 0.0, %v2858
  %v2860 = vpop.f32.mrb[0].mxu0
  %2861 = vmatprep.mubr.f32.mxu0 0.0
  %2862 = vmatmul.mubr.f32.gmra.mrb[0].mxu0 %v2774
  %v2863 = vpop.f32.mrb[0].mxu0
  %v2864 = vadd.f32 0.0, %v2863
  %v2865 = vpop.f32.mrb[0].mxu0
  %2866 = vdwg.mxu0
  %v2867 = vadd.f32 %v2632, %v2859
  %v2868 = vadd.f32 %v2633, %v2864
  %v2869 = vlaneseq
  %v2870 = vshrl.u32 %v2869, 7
  %v2871 = vsub.s32 7, %v2870
  %v2872 = vrot.slane %v1555, %v2871
  %v2873 = vadd.f32 %v2867, %v2872
  %v2874 = vadd.f32 %v2868, %v2872
  %v2875 = vld [vmem:[%s6] sm:$0x1]
  %v2876 = vld [vmem:[%s6 + $0x1] sm:$0x1]
  %v2877 = vsel %vm82, %v2873, 0.0
  %2878 = vadd.xlane.f32.xlu0 %v2877
  %v2879 = vpop.xlane.xlu0 %2878
  %v2880 = vsel %vm207, %v2874, 0.0
  %2881 = vadd.xlane.f32.xlu0 %v2880
  %v2882 = vpop.xlane.xlu0 %2881
  %v2883 = vmul.f32 %v2879, %v211
  %v2884 = vmul.f32 %v2882, %v211
  %v2885 = vsub.f32 %v2873, %v2883
  %v2886 = vsub.f32 %v2874, %v2884
  %v2887 = vmul.f32 %v2885, %v2885
  %v2888 = vmul.f32 %v2886, %v2886
  %v2889 = vsel %vm82, %v2887, 0.0
  %2890 = vadd.xlane.f32.xlu0 %v2889
  %v2891 = vpop.xlane.xlu0 %2890
  %v2892 = vsel %vm207, %v2888, 0.0
  %2893 = vadd.xlane.f32.xlu0 %v2892
  %v2894 = vpop.xlane.xlu0 %2893
  %v2895 = vmul.f32 %v2891, %v211
  %v2896 = vmul.f32 %v2894, %v211
  %v2897 = vadd.f32 %v2895, 1e-12
  %v2898 = vadd.f32 %v2896, 1e-12
  %v2899 = vrsqrt.pop %v2897
  %v2900 = vrsqrt.pop %v2898
  %v2901 = vmul.f32 %v2885, %v2899
  %v2902 = vmul.f32 %v2886, %v2900
  %v2903 = vlaneseq
  %v2904 = vshrl.u32 %v2903, 7
  %v2905 = vsub.s32 0, %v2904
  %v2906 = vrot.slane %v2875, %v2905
  %v2907 = vmul.f32 %v2901, %v2906
  %v2908 = vmul.f32 %v2902, %v2906
  %v2909 = vlaneseq
  %v2910 = vshrl.u32 %v2909, 7
  %v2911 = vsub.s32 0, %v2910
  %v2912 = vrot.slane %v2876, %v2911
  %v2913 = vadd.f32 %v2907, %v2912
  %v2914 = vadd.f32 %v2908, %v2912
  %vm2917 = vcmask 1046528
  %v2918 = vrot.slane %v2913, 1
  %v2919 = vrot.slane %v2914, 1
  %v2920 = vsel %vm2917, %v2918, %v2919
  %vm2922 = vcmask 1043456
  %v2923 = vsel %vm2922, %v2913, %v2920
  %v2924 = vld [vmem:[%s8] sm:$0xff]
  %v2925 = vld [vmem:[%s8 + $0x8] sm:$0xff]
  %v2926 = vld [vmem:[%s8 + $0x10] sm:$0xff]
  %v2927 = vld [vmem:[%s8 + $0x18] sm:$0xff]
  %v2928 = vld [vmem:[%s8 + $0x20] sm:$0xff]
  %v2929 = vld [vmem:[%s8 + $0x28] sm:$0xff]
  %v2930 = vld [vmem:[%s8 + $0x30] sm:$0xff]
  %v2931 = vld [vmem:[%s8 + $0x38] sm:$0xff]
  %v2932 = vld [vmem:[%s9] sm:$0xf]
  %v2934 = vrot.slane %v2932, 4
  %v2936 = vsel %vm2922, %v2932, %v2934
  %v2938 = vsel %vm82, %v2923, 0
  %2940 = vmatprep.subr.mxu0 0.0
  %2941 = vmatpush1.msra.mxu0 %v2924
  %2942 = vmatprep.subr.mxu0 0.0
  %2943 = vmatpush1.msra.mxu0 %v2925
  %2944 = vmatprep.subr.mxu0 0.0
  %2945 = vmatpush1.msra.mxu0 %v2926
  %2946 = vmatprep.subr.mxu0 0.0
  %2947 = vmatpush1.msra.mxu0 %v2927
  %2948 = vmatprep.subr.mxu0 0.0
  %2949 = vmatpush1.msra.mxu0 %v2928
  %2950 = vmatprep.subr.mxu0 0.0
  %2951 = vmatpush1.msra.mxu0 %v2929
  %2952 = vmatprep.subr.mxu0 0.0
  %2953 = vmatpush1.msra.mxu0 %v2930
  %2954 = vmatprep.subr.mxu0 0.0
  %2955 = vmatpush1.msra.mxu0 %v2931
  %2956 = vmatprep.subr.mxu0 0.0
  %2957 = vmatpush1.msra.mxu0 0.0
  %2958 = vmatprep.subr.mxu0 0.0
  %2959 = vmatpush1.msra.mxu0 0.0
  %2960 = vmatprep.subr.mxu0 0.0
  %2961 = vmatpush1.msra.mxu0 0.0
  %2962 = vmatprep.subr.mxu0 0.0
  %2963 = vmatpush1.msra.mxu0 0.0
  %2964 = vmatprep.subr.mxu0 0.0
  %2965 = vmatpush1.msra.mxu0 0.0
  %2966 = vmatprep.subr.mxu0 0.0
  %2967 = vmatpush1.msra.mxu0 0.0
  %2968 = vmatprep.subr.mxu0 0.0
  %2969 = vmatpush1.msra.mxu0 0.0
  %2970 = vmatprep.subr.mxu0 0.0
  %2971 = vmatpush1.msra.mxu0 0.0
  %2972 = vmatprep.subr.mxu0 0.0
  %2973 = vmatpush1.msra.mxu0 0.0
  %2974 = vmatprep.subr.mxu0 0.0
  %2975 = vmatpush1.msra.mxu0 0.0
  %2976 = vmatprep.subr.mxu0 0.0
  %2977 = vmatpush1.msra.mxu0 0.0
  %2978 = vmatprep.subr.mxu0 0.0
  %2979 = vmatpush1.msra.mxu0 0.0
  %2980 = vmatprep.subr.mxu0 0.0
  %2981 = vmatpush1.msra.mxu0 0.0
  %2982 = vmatprep.subr.mxu0 0.0
  %2983 = vmatpush1.msra.mxu0 0.0
  %2984 = vmatprep.subr.mxu0 0.0
  %2985 = vmatpush1.msra.mxu0 0.0
  %2986 = vmatprep.subr.mxu0 0.0
  %2987 = vmatpush1.msra.mxu0 0.0
  %2988 = vmatprep.subr.mxu0 0.0
  %2989 = vmatpush1.msra.mxu0 0.0
  %2990 = vmatprep.subr.mxu0 0.0
  %2991 = vmatpush1.msra.mxu0 0.0
  %2992 = vmatprep.subr.mxu0 0.0
  %2993 = vmatpush1.msra.mxu0 0.0
  %2994 = vmatprep.subr.mxu0 0.0
  %2995 = vmatpush1.msra.mxu0 0.0
  %2996 = vmatprep.subr.mxu0 0.0
  %2997 = vmatpush1.msra.mxu0 0.0
  %2998 = vmatprep.subr.mxu0 0.0
  %2999 = vmatpush1.msra.mxu0 0.0
  %3000 = vmatprep.subr.mxu0 0.0
  %3001 = vmatpush1.msra.mxu0 0.0
  %3002 = vmatprep.subr.mxu0 0.0
  %3003 = vmatpush1.msra.mxu0 0.0
  %3004 = vmatprep.mubr.f32.mxu0 0.0
  %3005 = vmatmul.mubr.f32.gmra.mrb[0].mxu0 %v2938
  %v3006 = vpop.f32.mrb[0].mxu0
  %v3007 = vadd.f32 %v2936, %v3006
  %v3008 = vpop.f32.mrb[0].mxu0
  %3009 = vdwg.mxu0
  %v3010 = vld [vmem:[%s7] sm:$0xff]
  %v3011 = vld [vmem:[%s7 + $0x8] sm:$0xf]
  %v3012 = vld [vmem:[%s11] sm:$0xff]
  %v3013 = vld [vmem:[%s11 + $0x8] sm:$0xff]
  %v3014 = vld [vmem:[%s11 + $0x10] sm:$0xff]
  %v3015 = vld [vmem:[%s11 + $0x18] sm:$0xff]
  %v3016 = vld [vmem:[%s11 + $0x20] sm:$0xff]
  %v3017 = vld [vmem:[%s11 + $0x28] sm:$0xff]
  %v3018 = vld [vmem:[%s11 + $0x30] sm:$0xff]
  %v3019 = vld [vmem:[%s11 + $0x38] sm:$0xff]
  %v3020 = vld [vmem:[%s11 + $0x40] sm:$0xff]
  %v3021 = vld [vmem:[%s11 + $0x48] sm:$0xff]
  %v3022 = vld [vmem:[%s11 + $0x50] sm:$0xff]
  %v3023 = vld [vmem:[%s11 + $0x58] sm:$0xff]
  %v3024 = vld [vmem:[%s13] sm:$0xff]
  %v3025 = vld [vmem:[%s13 + $0x8] sm:$0x1f]
  %v3026 = vlaneseq
  %v3027 = vshrl.u32 %v3026, 7
  %v3028 = vsub.s32 0, %v3027
  %v3029 = vrot.slane %v3024, %v3028
  %v3031 = vsel %vm1164, %v3010, 0
  %v3034 = vsel %vm1164, %v3011, 0
  %3036 = vmatprep.subr.mxu0 0.0
  %3037 = vmatpush1.msra.mxu0 %v3012
  %3038 = vmatprep.subr.mxu0 0.0
  %3039 = vmatpush1.msra.mxu0 %v3015
  %3040 = vmatprep.subr.mxu0 0.0
  %3041 = vmatpush1.msra.mxu0 %v3018
  %3042 = vmatprep.subr.mxu0 0.0
  %3043 = vmatpush1.msra.mxu0 %v3021
  %3044 = vmatprep.subr.mxu0 0.0
  %3045 = vmatpush1.msra.mxu0 0.0
  %3046 = vmatprep.subr.mxu0 0.0
  %3047 = vmatpush1.msra.mxu0 0.0
  %3048 = vmatprep.subr.mxu0 0.0
  %3049 = vmatpush1.msra.mxu0 0.0
  %3050 = vmatprep.subr.mxu0 0.0
  %3051 = vmatpush1.msra.mxu0 0.0
  %3052 = vmatprep.subr.mxu0 0.0
  %3053 = vmatpush1.msra.mxu0 0.0
  %3054 = vmatprep.subr.mxu0 0.0
  %3055 = vmatpush1.msra.mxu0 0.0
  %3056 = vmatprep.subr.mxu0 0.0
  %3057 = vmatpush1.msra.mxu0 0.0
  %3058 = vmatprep.subr.mxu0 0.0
  %3059 = vmatpush1.msra.mxu0 0.0
  %3060 = vmatprep.subr.mxu0 0.0
  %3061 = vmatpush1.msra.mxu0 0.0
  %3062 = vmatprep.subr.mxu0 0.0
  %3063 = vmatpush1.msra.mxu0 0.0
  %3064 = vmatprep.subr.mxu0 0.0
  %3065 = vmatpush1.msra.mxu0 0.0
  %3066 = vmatprep.subr.mxu0 0.0
  %3067 = vmatpush1.msra.mxu0 0.0
  %3068 = vmatprep.subr.mxu0 0.0
  %3069 = vmatpush1.msra.mxu0 0.0
  %3070 = vmatprep.subr.mxu0 0.0
  %3071 = vmatpush1.msra.mxu0 0.0
  %3072 = vmatprep.subr.mxu0 0.0
  %3073 = vmatpush1.msra.mxu0 0.0
  %3074 = vmatprep.subr.mxu0 0.0
  %3075 = vmatpush1.msra.mxu0 0.0
  %3076 = vmatprep.subr.mxu0 0.0
  %3077 = vmatpush1.msra.mxu0 0.0
  %3078 = vmatprep.subr.mxu0 0.0
  %3079 = vmatpush1.msra.mxu0 0.0
  %3080 = vmatprep.subr.mxu0 0.0
  %3081 = vmatpush1.msra.mxu0 0.0
  %3082 = vmatprep.subr.mxu0 0.0
  %3083 = vmatpush1.msra.mxu0 0.0
  %3084 = vmatprep.subr.mxu0 0.0
  %3085 = vmatpush1.msra.mxu0 0.0
  %3086 = vmatprep.subr.mxu0 0.0
  %3087 = vmatpush1.msra.mxu0 0.0
  %3088 = vmatprep.subr.mxu0 0.0
  %3089 = vmatpush1.msra.mxu0 0.0
  %3090 = vmatprep.subr.mxu0 0.0
  %3091 = vmatpush1.msra.mxu0 0.0
  %3092 = vmatprep.subr.mxu0 0.0
  %3093 = vmatpush1.msra.mxu0 0.0
  %3094 = vmatprep.subr.mxu0 0.0
  %3095 = vmatpush1.msra.mxu0 0.0
  %3096 = vmatprep.subr.mxu0 0.0
  %3097 = vmatpush1.msra.mxu0 0.0
  %3098 = vmatprep.subr.mxu0 0.0
  %3099 = vmatpush1.msra.mxu0 0.0
  %3100 = vmatprep.mubr.f32.mxu0 0.0
  %3101 = vmatmul.mubr.f32.gmra.mrb[0].mxu0 %v3031
  %v3102 = vpop.f32.mrb[0].mxu0
  %v3103 = vadd.f32 %v3029, %v3102
  %v3104 = vpop.f32.mrb[0].mxu0
  %3105 = vmatprep.mubr.f32.mxu0 0.0
  %3106 = vmatmul.mubr.f32.gmra.mrb[0].mxu0 %v3034
  %v3107 = vpop.f32.mrb[0].mxu0
  %v3108 = vadd.f32 %v3029, %v3107
  %v3109 = vpop.f32.mrb[0].mxu0
  %3110 = vdwg.mxu0
  %3113 = vrot.lane.b32.xlu0 %v3103, 96
  %v3114 = vpop.permute.xlu0 %3113
  %3115 = vrot.lane.b32.xlu0 %v3108, 96
  %v3116 = vpop.permute.xlu0 %3115
  %vm3117 = vcmask 64512
  %v3118 = vsel %vm3117, %v3103, 0
  %v3120 = vsel %vm3117, %v3108, 0
  %v3122 = vsel %vm3117, %v3114, 0
  %v3124 = vsel %vm3117, %v3116, 0
  %3126 = vmatprep.subr.mxu0 0.0
  %3127 = vmatpush1.xpose.msra.mxu0 %v3122
  %3128 = vmatprep.subr.mxu0 0.0
  %3129 = vmatpush1.xpose.msra.mxu0 %v3124
  %3130 = vmatprep.subr.mxu0 0.0
  %3131 = vmatpush1.xpose.msra.mxu0 0.0
  %3132 = vmatprep.subr.mxu0 0.0
  %3133 = vmatpush1.xpose.msra.mxu0 0.0
  %3134 = vmatprep.subr.mxu0 0.0
  %3135 = vmatpush1.xpose.msra.mxu0 0.0
  %3136 = vmatprep.subr.mxu0 0.0
  %3137 = vmatpush1.xpose.msra.mxu0 0.0
  %3138 = vmatprep.subr.mxu0 0.0
  %3139 = vmatpush1.xpose.msra.mxu0 0.0
  %3140 = vmatprep.subr.mxu0 0.0
  %3141 = vmatpush1.xpose.msra.mxu0 0.0
  %3142 = vmatprep.subr.mxu0 0.0
  %3143 = vmatpush1.xpose.msra.mxu0 0.0
  %3144 = vmatprep.subr.mxu0 0.0
  %3145 = vmatpush1.xpose.msra.mxu0 0.0
  %3146 = vmatprep.subr.mxu0 0.0
  %3147 = vmatpush1.xpose.msra.mxu0 0.0
  %3148 = vmatprep.subr.mxu0 0.0
  %3149 = vmatpush1.xpose.msra.mxu0 0.0
  %3150 = vmatprep.subr.mxu0 0.0
  %3151 = vmatpush1.xpose.msra.mxu0 0.0
  %3152 = vmatprep.subr.mxu0 0.0
  %3153 = vmatpush1.xpose.msra.mxu0 0.0
  %3154 = vmatprep.subr.mxu0 0.0
  %3155 = vmatpush1.xpose.msra.mxu0 0.0
  %3156 = vmatprep.subr.mxu0 0.0
  %3157 = vmatpush1.xpose.msra.mxu0 0.0
  %3158 = vmatprep.subr.mxu0 0.0
  %3159 = vmatpush1.xpose.msra.mxu0 0.0
  %3160 = vmatprep.subr.mxu0 0.0
  %3161 = vmatpush1.xpose.msra.mxu0 0.0
  %3162 = vmatprep.subr.mxu0 0.0
  %3163 = vmatpush1.xpose.msra.mxu0 0.0
  %3164 = vmatprep.subr.mxu0 0.0
  %3165 = vmatpush1.xpose.msra.mxu0 0.0
  %3166 = vmatprep.subr.mxu0 0.0
  %3167 = vmatpush1.xpose.msra.mxu0 0.0
  %3168 = vmatprep.subr.mxu0 0.0
  %3169 = vmatpush1.xpose.msra.mxu0 0.0
  %3170 = vmatprep.subr.mxu0 0.0
  %3171 = vmatpush1.xpose.msra.mxu0 0.0
  %3172 = vmatprep.subr.mxu0 0.0
  %3173 = vmatpush1.xpose.msra.mxu0 0.0
  %3174 = vmatprep.subr.mxu0 0.0
  %3175 = vmatpush1.xpose.msra.mxu0 0.0
  %3176 = vmatprep.subr.mxu0 0.0
  %3177 = vmatpush1.xpose.msra.mxu0 0.0
  %3178 = vmatprep.subr.mxu0 0.0
  %3179 = vmatpush1.xpose.msra.mxu0 0.0
  %3180 = vmatprep.subr.mxu0 0.0
  %3181 = vmatpush1.xpose.msra.mxu0 0.0
  %3182 = vmatprep.subr.mxu0 0.0
  %3183 = vmatpush1.xpose.msra.mxu0 0.0
  %3184 = vmatprep.subr.mxu0 0.0
  %3185 = vmatpush1.xpose.msra.mxu0 0.0
  %3186 = vmatprep.subr.mxu0 0.0
  %3187 = vmatpush1.xpose.msra.mxu0 0.0
  %3188 = vmatprep.subr.mxu0 0.0
  %3189 = vmatpush1.xpose.msra.mxu0 0.0
  %3190 = vmatprep.mubr.f32.mxu0 0.0
  %3191 = vmatmul.mubr.f32.gmra.mrb[0].mxu0 %v3118
  %v3192 = vpop.f32.mrb[0].mxu0
  %v3193 = vadd.f32 %v52, %v3192
  %v3194 = vpop.f32.mrb[0].mxu0
  %3195 = vmatprep.mubr.f32.mxu0 0.0
  %3196 = vmatmul.mubr.f32.gmra.mrb[0].mxu0 %v3120
  %v3197 = vpop.f32.mrb[0].mxu0
  %v3198 = vadd.f32 %v53, %v3197
  %v3199 = vpop.f32.mrb[0].mxu0
  %3200 = vdwg.mxu0
  %vm3201 = vcmask 97280
  %v3202 = vsel %vm3201, %v3193, -inf
  %3203 = vmax.xlane.f32.xlu0 %v3202
  %v3204 = vpop.xlane.xlu0 %3203
  %vm3205 = vcmask 93184
  %v3206 = vsel %vm3205, %v3198, -inf
  %3207 = vmax.xlane.f32.xlu0 %v3206
  %v3208 = vpop.xlane.xlu0 %3207
  %v3209 = vsub.f32 %v3193, %v3204
  %v3210 = vsub.f32 %v3198, %v3208
  %v3211 = vmul.f32 %v3209, 1.442695
  %v3212 = vpow.pop %v3211
  %v3213 = vmul.f32 %v3210, 1.442695
  %v3214 = vpow.pop %v3213
  %v3215 = vsel %vm3201, %v3212, 0.0
  %3216 = vadd.xlane.f32.xlu0 %v3215
  %v3217 = vpop.xlane.xlu0 %3216
  %v3218 = vsel %vm3205, %v3214, 0.0
  %3219 = vadd.xlane.f32.xlu0 %v3218
  %v3220 = vpop.xlane.xlu0 %3219
  %v3221 = vrcp.pop %v3217
  %v3222 = vrcp.pop %v3220
  %v3223 = vmul.f32 %v3212, %v3221
  %v3224 = vmul.f32 %v3214, %v3222
  %3225 = vrot.lane.b32.xlu0 %v3103, 64
  %v3226 = vpop.permute.xlu0 %3225
  %3227 = vrot.lane.b32.xlu0 %v3108, 64
  %v3228 = vpop.permute.xlu0 %3227
  %v3231 = vsel %vm3201, %v3223, 0
  %v3234 = vsel %vm3201, %v3224, 0
  %v3236 = vsel %vm2922, %v3228, 0
  %3238 = vmatprep.subr.mxu0 0.0
  %3239 = vmatpush1.msra.mxu0 %v3226
  %3240 = vmatprep.subr.mxu0 0.0
  %3241 = vmatpush1.msra.mxu0 %v3236
  %3242 = vmatprep.subr.mxu0 0.0
  %3243 = vmatpush1.msra.mxu0 0.0
  %3244 = vmatprep.subr.mxu0 0.0
  %3245 = vmatpush1.msra.mxu0 0.0
  %3246 = vmatprep.subr.mxu0 0.0
  %3247 = vmatpush1.msra.mxu0 0.0
  %3248 = vmatprep.subr.mxu0 0.0
  %3249 = vmatpush1.msra.mxu0 0.0
  %3250 = vmatprep.subr.mxu0 0.0
  %3251 = vmatpush1.msra.mxu0 0.0
  %3252 = vmatprep.subr.mxu0 0.0
  %3253 = vmatpush1.msra.mxu0 0.0
  %3254 = vmatprep.subr.mxu0 0.0
  %3255 = vmatpush1.msra.mxu0 0.0
  %3256 = vmatprep.subr.mxu0 0.0
  %3257 = vmatpush1.msra.mxu0 0.0
  %3258 = vmatprep.subr.mxu0 0.0
  %3259 = vmatpush1.msra.mxu0 0.0
  %3260 = vmatprep.subr.mxu0 0.0
  %3261 = vmatpush1.msra.mxu0 0.0
  %3262 = vmatprep.subr.mxu0 0.0
  %3263 = vmatpush1.msra.mxu0 0.0
  %3264 = vmatprep.subr.mxu0 0.0
  %3265 = vmatpush1.msra.mxu0 0.0
  %3266 = vmatprep.subr.mxu0 0.0
  %3267 = vmatpush1.msra.mxu0 0.0
  %3268 = vmatprep.subr.mxu0 0.0
  %3269 = vmatpush1.msra.mxu0 0.0
  %3270 = vmatprep.subr.mxu0 0.0
  %3271 = vmatpush1.msra.mxu0 0.0
  %3272 = vmatprep.subr.mxu0 0.0
  %3273 = vmatpush1.msra.mxu0 0.0
  %3274 = vmatprep.subr.mxu0 0.0
  %3275 = vmatpush1.msra.mxu0 0.0
  %3276 = vmatprep.subr.mxu0 0.0
  %3277 = vmatpush1.msra.mxu0 0.0
  %3278 = vmatprep.subr.mxu0 0.0
  %3279 = vmatpush1.msra.mxu0 0.0
  %3280 = vmatprep.subr.mxu0 0.0
  %3281 = vmatpush1.msra.mxu0 0.0
  %3282 = vmatprep.subr.mxu0 0.0
  %3283 = vmatpush1.msra.mxu0 0.0
  %3284 = vmatprep.subr.mxu0 0.0
  %3285 = vmatpush1.msra.mxu0 0.0
  %3286 = vmatprep.subr.mxu0 0.0
  %3287 = vmatpush1.msra.mxu0 0.0
  %3288 = vmatprep.subr.mxu0 0.0
  %3289 = vmatpush1.msra.mxu0 0.0
  %3290 = vmatprep.subr.mxu0 0.0
  %3291 = vmatpush1.msra.mxu0 0.0
  %3292 = vmatprep.subr.mxu0 0.0
  %3293 = vmatpush1.msra.mxu0 0.0
  %3294 = vmatprep.subr.mxu0 0.0
  %3295 = vmatpush1.msra.mxu0 0.0
  %3296 = vmatprep.subr.mxu0 0.0
  %3297 = vmatpush1.msra.mxu0 0.0
  %3298 = vmatprep.subr.mxu0 0.0
  %3299 = vmatpush1.msra.mxu0 0.0
  %3300 = vmatprep.subr.mxu0 0.0
  %3301 = vmatpush1.msra.mxu0 0.0
  %3302 = vmatprep.mubr.f32.mxu0 0.0
  %3303 = vmatmul.mubr.f32.gmra.mrb[0].mxu0 %v3231
  %v3304 = vpop.f32.mrb[0].mxu0
  %v3305 = vadd.f32 0.0, %v3304
  %v3306 = vpop.f32.mrb[0].mxu0
  %3307 = vmatprep.mubr.f32.mxu0 0.0
  %3308 = vmatmul.mubr.f32.gmra.mrb[0].mxu0 %v3234
  %v3309 = vpop.f32.mrb[0].mxu0
  %v3310 = vadd.f32 0.0, %v3309
  %v3311 = vpop.f32.mrb[0].mxu0
  %3312 = vdwg.mxu0
  %3313 = vrot.lane.b32.xlu0 %v3103, 120
  %v3314 = vpop.permute.xlu0 %3313
  %3315 = vrot.lane.b32.xlu0 %v3108, 120
  %v3316 = vpop.permute.xlu0 %3315
  %3317 = vrot.lane.b32.xlu0 %v3103, 88
  %v3318 = vpop.permute.xlu0 %3317
  %3319 = vrot.lane.b32.xlu0 %v3108, 88
  %v3320 = vpop.permute.xlu0 %3319
  %v3321 = vsel %vm3117, %v3314, 0
  %v3323 = vsel %vm3117, %v3316, 0
  %v3325 = vsel %vm3117, %v3318, 0
  %v3327 = vsel %vm3117, %v3320, 0
  %3329 = vmatprep.subr.mxu0 0.0
  %3330 = vmatpush1.xpose.msra.mxu0 %v3325
  %3331 = vmatprep.subr.mxu0 0.0
  %3332 = vmatpush1.xpose.msra.mxu0 %v3327
  %3333 = vmatprep.subr.mxu0 0.0
  %3334 = vmatpush1.xpose.msra.mxu0 0.0
  %3335 = vmatprep.subr.mxu0 0.0
  %3336 = vmatpush1.xpose.msra.mxu0 0.0
  %3337 = vmatprep.subr.mxu0 0.0
  %3338 = vmatpush1.xpose.msra.mxu0 0.0
  %3339 = vmatprep.subr.mxu0 0.0
  %3340 = vmatpush1.xpose.msra.mxu0 0.0
  %3341 = vmatprep.subr.mxu0 0.0
  %3342 = vmatpush1.xpose.msra.mxu0 0.0
  %3343 = vmatprep.subr.mxu0 0.0
  %3344 = vmatpush1.xpose.msra.mxu0 0.0
  %3345 = vmatprep.subr.mxu0 0.0
  %3346 = vmatpush1.xpose.msra.mxu0 0.0
  %3347 = vmatprep.subr.mxu0 0.0
  %3348 = vmatpush1.xpose.msra.mxu0 0.0
  %3349 = vmatprep.subr.mxu0 0.0
  %3350 = vmatpush1.xpose.msra.mxu0 0.0
  %3351 = vmatprep.subr.mxu0 0.0
  %3352 = vmatpush1.xpose.msra.mxu0 0.0
  %3353 = vmatprep.subr.mxu0 0.0
  %3354 = vmatpush1.xpose.msra.mxu0 0.0
  %3355 = vmatprep.subr.mxu0 0.0
  %3356 = vmatpush1.xpose.msra.mxu0 0.0
  %3357 = vmatprep.subr.mxu0 0.0
  %3358 = vmatpush1.xpose.msra.mxu0 0.0
  %3359 = vmatprep.subr.mxu0 0.0
  %3360 = vmatpush1.xpose.msra.mxu0 0.0
  %3361 = vmatprep.subr.mxu0 0.0
  %3362 = vmatpush1.xpose.msra.mxu0 0.0
  %3363 = vmatprep.subr.mxu0 0.0
  %3364 = vmatpush1.xpose.msra.mxu0 0.0
  %3365 = vmatprep.subr.mxu0 0.0
  %3366 = vmatpush1.xpose.msra.mxu0 0.0
  %3367 = vmatprep.subr.mxu0 0.0
  %3368 = vmatpush1.xpose.msra.mxu0 0.0
  %3369 = vmatprep.subr.mxu0 0.0
  %3370 = vmatpush1.xpose.msra.mxu0 0.0
  %3371 = vmatprep.subr.mxu0 0.0
  %3372 = vmatpush1.xpose.msra.mxu0 0.0
  %3373 = vmatprep.subr.mxu0 0.0
  %3374 = vmatpush1.xpose.msra.mxu0 0.0
  %3375 = vmatprep.subr.mxu0 0.0
  %3376 = vmatpush1.xpose.msra.mxu0 0.0
  %3377 = vmatprep.subr.mxu0 0.0
  %3378 = vmatpush1.xpose.msra.mxu0 0.0
  %3379 = vmatprep.subr.mxu0 0.0
  %3380 = vmatpush1.xpose.msra.mxu0 0.0
  %3381 = vmatprep.subr.mxu0 0.0
  %3382 = vmatpush1.xpose.msra.mxu0 0.0
  %3383 = vmatprep.subr.mxu0 0.0
  %3384 = vmatpush1.xpose.msra.mxu0 0.0
  %3385 = vmatprep.subr.mxu0 0.0
  %3386 = vmatpush1.xpose.msra.mxu0 0.0
  %3387 = vmatprep.subr.mxu0 0.0
  %3388 = vmatpush1.xpose.msra.mxu0 0.0
  %3389 = vmatprep.subr.mxu0 0.0
  %3390 = vmatpush1.xpose.msra.mxu0 0.0
  %3391 = vmatprep.subr.mxu0 0.0
  %3392 = vmatpush1.xpose.msra.mxu0 0.0
  %3393 = vmatprep.mubr.f32.mxu0 0.0
  %3394 = vmatmul.mubr.f32.gmra.mrb[0].mxu0 %v3321
  %v3395 = vpop.f32.mrb[0].mxu0
  %v3396 = vadd.f32 %v52, %v3395
  %v3397 = vpop.f32.mrb[0].mxu0
  %3398 = vmatprep.mubr.f32.mxu0 0.0
  %3399 = vmatmul.mubr.f32.gmra.mrb[0].mxu0 %v3323
  %v3400 = vpop.f32.mrb[0].mxu0
  %v3401 = vadd.f32 %v53, %v3400
  %v3402 = vpop.f32.mrb[0].mxu0
  %3403 = vdwg.mxu0
  %v3404 = vsel %vm3201, %v3396, -inf
  %3405 = vmax.xlane.f32.xlu0 %v3404
  %v3406 = vpop.xlane.xlu0 %3405
  %v3407 = vsel %vm3205, %v3401, -inf
  %3408 = vmax.xlane.f32.xlu0 %v3407
  %v3409 = vpop.xlane.xlu0 %3408
  %v3410 = vsub.f32 %v3396, %v3406
  %v3411 = vsub.f32 %v3401, %v3409
  %v3412 = vmul.f32 %v3410, 1.442695
  %v3413 = vpow.pop %v3412
  %v3414 = vmul.f32 %v3411, 1.442695
  %v3415 = vpow.pop %v3414
  %v3416 = vsel %vm3201, %v3413, 0.0
  %3417 = vadd.xlane.f32.xlu0 %v3416
  %v3418 = vpop.xlane.xlu0 %3417
  %v3419 = vsel %vm3205, %v3415, 0.0
  %3420 = vadd.xlane.f32.xlu0 %v3419
  %v3421 = vpop.xlane.xlu0 %3420
  %v3422 = vrcp.pop %v3418
  %v3423 = vrcp.pop %v3421
  %v3424 = vmul.f32 %v3413, %v3422
  %v3425 = vmul.f32 %v3415, %v3423
  %3426 = vrot.lane.b32.xlu0 %v3103, 56
  %v3427 = vpop.permute.xlu0 %3426
  %3428 = vrot.lane.b32.xlu0 %v3108, 56
  %v3429 = vpop.permute.xlu0 %3428
  %v3432 = vsel %vm3201, %v3424, 0
  %v3435 = vsel %vm3201, %v3425, 0
  %v3437 = vsel %vm2922, %v3429, 0
  %3439 = vmatprep.subr.mxu0 0.0
  %3440 = vmatpush1.msra.mxu0 %v3427
  %3441 = vmatprep.subr.mxu0 0.0
  %3442 = vmatpush1.msra.mxu0 %v3437
  %3443 = vmatprep.subr.mxu0 0.0
  %3444 = vmatpush1.msra.mxu0 0.0
  %3445 = vmatprep.subr.mxu0 0.0
  %3446 = vmatpush1.msra.mxu0 0.0
  %3447 = vmatprep.subr.mxu0 0.0
  %3448 = vmatpush1.msra.mxu0 0.0
  %3449 = vmatprep.subr.mxu0 0.0
  %3450 = vmatpush1.msra.mxu0 0.0
  %3451 = vmatprep.subr.mxu0 0.0
  %3452 = vmatpush1.msra.mxu0 0.0
  %3453 = vmatprep.subr.mxu0 0.0
  %3454 = vmatpush1.msra.mxu0 0.0
  %3455 = vmatprep.subr.mxu0 0.0
  %3456 = vmatpush1.msra.mxu0 0.0
  %3457 = vmatprep.subr.mxu0 0.0
  %3458 = vmatpush1.msra.mxu0 0.0
  %3459 = vmatprep.subr.mxu0 0.0
  %3460 = vmatpush1.msra.mxu0 0.0
  %3461 = vmatprep.subr.mxu0 0.0
  %3462 = vmatpush1.msra.mxu0 0.0
  %3463 = vmatprep.subr.mxu0 0.0
  %3464 = vmatpush1.msra.mxu0 0.0
  %3465 = vmatprep.subr.mxu0 0.0
  %3466 = vmatpush1.msra.mxu0 0.0
  %3467 = vmatprep.subr.mxu0 0.0
  %3468 = vmatpush1.msra.mxu0 0.0
  %3469 = vmatprep.subr.mxu0 0.0
  %3470 = vmatpush1.msra.mxu0 0.0
  %3471 = vmatprep.subr.mxu0 0.0
  %3472 = vmatpush1.msra.mxu0 0.0
  %3473 = vmatprep.subr.mxu0 0.0
  %3474 = vmatpush1.msra.mxu0 0.0
  %3475 = vmatprep.subr.mxu0 0.0
  %3476 = vmatpush1.msra.mxu0 0.0
  %3477 = vmatprep.subr.mxu0 0.0
  %3478 = vmatpush1.msra.mxu0 0.0
  %3479 = vmatprep.subr.mxu0 0.0
  %3480 = vmatpush1.msra.mxu0 0.0
  %3481 = vmatprep.subr.mxu0 0.0
  %3482 = vmatpush1.msra.mxu0 0.0
  %3483 = vmatprep.subr.mxu0 0.0
  %3484 = vmatpush1.msra.mxu0 0.0
  %3485 = vmatprep.subr.mxu0 0.0
  %3486 = vmatpush1.msra.mxu0 0.0
  %3487 = vmatprep.subr.mxu0 0.0
  %3488 = vmatpush1.msra.mxu0 0.0
  %3489 = vmatprep.subr.mxu0 0.0
  %3490 = vmatpush1.msra.mxu0 0.0
  %3491 = vmatprep.subr.mxu0 0.0
  %3492 = vmatpush1.msra.mxu0 0.0
  %3493 = vmatprep.subr.mxu0 0.0
  %3494 = vmatpush1.msra.mxu0 0.0
  %3495 = vmatprep.subr.mxu0 0.0
  %3496 = vmatpush1.msra.mxu0 0.0
  %3497 = vmatprep.subr.mxu0 0.0
  %3498 = vmatpush1.msra.mxu0 0.0
  %3499 = vmatprep.subr.mxu0 0.0
  %3500 = vmatpush1.msra.mxu0 0.0
  %3501 = vmatprep.subr.mxu0 0.0
  %3502 = vmatpush1.msra.mxu0 0.0
  %3503 = vmatprep.mubr.f32.mxu0 0.0
  %3504 = vmatmul.mubr.f32.gmra.mrb[0].mxu0 %v3432
  %v3505 = vpop.f32.mrb[0].mxu0
  %v3506 = vadd.f32 0.0, %v3505
  %v3507 = vpop.f32.mrb[0].mxu0
  %3508 = vmatprep.mubr.f32.mxu0 0.0
  %3509 = vmatmul.mubr.f32.gmra.mrb[0].mxu0 %v3435
  %v3510 = vpop.f32.mrb[0].mxu0
  %v3511 = vadd.f32 0.0, %v3510
  %v3512 = vpop.f32.mrb[0].mxu0
  %3513 = vdwg.mxu0
  %3514 = vrot.lane.b32.xlu0 %v3103, 112
  %v3515 = vpop.permute.xlu0 %3514
  %3516 = vrot.lane.b32.xlu0 %v3108, 112
  %v3517 = vpop.permute.xlu0 %3516
  %3518 = vrot.lane.b32.xlu0 %v3103, 80
  %v3519 = vpop.permute.xlu0 %3518
  %3520 = vrot.lane.b32.xlu0 %v3108, 80
  %v3521 = vpop.permute.xlu0 %3520
  %v3522 = vsel %vm3117, %v3515, 0
  %v3524 = vsel %vm3117, %v3517, 0
  %v3526 = vsel %vm3117, %v3519, 0
  %v3528 = vsel %vm3117, %v3521, 0
  %3530 = vmatprep.subr.mxu0 0.0
  %3531 = vmatpush1.xpose.msra.mxu0 %v3526
  %3532 = vmatprep.subr.mxu0 0.0
  %3533 = vmatpush1.xpose.msra.mxu0 %v3528
  %3534 = vmatprep.subr.mxu0 0.0
  %3535 = vmatpush1.xpose.msra.mxu0 0.0
  %3536 = vmatprep.subr.mxu0 0.0
  %3537 = vmatpush1.xpose.msra.mxu0 0.0
  %3538 = vmatprep.subr.mxu0 0.0
  %3539 = vmatpush1.xpose.msra.mxu0 0.0
  %3540 = vmatprep.subr.mxu0 0.0
  %3541 = vmatpush1.xpose.msra.mxu0 0.0
  %3542 = vmatprep.subr.mxu0 0.0
  %3543 = vmatpush1.xpose.msra.mxu0 0.0
  %3544 = vmatprep.subr.mxu0 0.0
  %3545 = vmatpush1.xpose.msra.mxu0 0.0
  %3546 = vmatprep.subr.mxu0 0.0
  %3547 = vmatpush1.xpose.msra.mxu0 0.0
  %3548 = vmatprep.subr.mxu0 0.0
  %3549 = vmatpush1.xpose.msra.mxu0 0.0
  %3550 = vmatprep.subr.mxu0 0.0
  %3551 = vmatpush1.xpose.msra.mxu0 0.0
  %3552 = vmatprep.subr.mxu0 0.0
  %3553 = vmatpush1.xpose.msra.mxu0 0.0
  %3554 = vmatprep.subr.mxu0 0.0
  %3555 = vmatpush1.xpose.msra.mxu0 0.0
  %3556 = vmatprep.subr.mxu0 0.0
  %3557 = vmatpush1.xpose.msra.mxu0 0.0
  %3558 = vmatprep.subr.mxu0 0.0
  %3559 = vmatpush1.xpose.msra.mxu0 0.0
  %3560 = vmatprep.subr.mxu0 0.0
  %3561 = vmatpush1.xpose.msra.mxu0 0.0
  %3562 = vmatprep.subr.mxu0 0.0
  %3563 = vmatpush1.xpose.msra.mxu0 0.0
  %3564 = vmatprep.subr.mxu0 0.0
  %3565 = vmatpush1.xpose.msra.mxu0 0.0
  %3566 = vmatprep.subr.mxu0 0.0
  %3567 = vmatpush1.xpose.msra.mxu0 0.0
  %3568 = vmatprep.subr.mxu0 0.0
  %3569 = vmatpush1.xpose.msra.mxu0 0.0
  %3570 = vmatprep.subr.mxu0 0.0
  %3571 = vmatpush1.xpose.msra.mxu0 0.0
  %3572 = vmatprep.subr.mxu0 0.0
  %3573 = vmatpush1.xpose.msra.mxu0 0.0
  %3574 = vmatprep.subr.mxu0 0.0
  %3575 = vmatpush1.xpose.msra.mxu0 0.0
  %3576 = vmatprep.subr.mxu0 0.0
  %3577 = vmatpush1.xpose.msra.mxu0 0.0
  %3578 = vmatprep.subr.mxu0 0.0
  %3579 = vmatpush1.xpose.msra.mxu0 0.0
  %3580 = vmatprep.subr.mxu0 0.0
  %3581 = vmatpush1.xpose.msra.mxu0 0.0
  %3582 = vmatprep.subr.mxu0 0.0
  %3583 = vmatpush1.xpose.msra.mxu0 0.0
  %3584 = vmatprep.subr.mxu0 0.0
  %3585 = vmatpush1.xpose.msra.mxu0 0.0
  %3586 = vmatprep.subr.mxu0 0.0
  %3587 = vmatpush1.xpose.msra.mxu0 0.0
  %3588 = vmatprep.subr.mxu0 0.0
  %3589 = vmatpush1.xpose.msra.mxu0 0.0
  %3590 = vmatprep.subr.mxu0 0.0
  %3591 = vmatpush1.xpose.msra.mxu0 0.0
  %3592 = vmatprep.subr.mxu0 0.0
  %3593 = vmatpush1.xpose.msra.mxu0 0.0
  %3594 = vmatprep.mubr.f32.mxu0 0.0
  %3595 = vmatmul.mubr.f32.gmra.mrb[0].mxu0 %v3522
  %v3596 = vpop.f32.mrb[0].mxu0
  %v3597 = vadd.f32 %v52, %v3596
  %v3598 = vpop.f32.mrb[0].mxu0
  %3599 = vmatprep.mubr.f32.mxu0 0.0
  %3600 = vmatmul.mubr.f32.gmra.mrb[0].mxu0 %v3524
  %v3601 = vpop.f32.mrb[0].mxu0
  %v3602 = vadd.f32 %v53, %v3601
  %v3603 = vpop.f32.mrb[0].mxu0
  %3604 = vdwg.mxu0
  %v3605 = vsel %vm3201, %v3597, -inf
  %3606 = vmax.xlane.f32.xlu0 %v3605
  %v3607 = vpop.xlane.xlu0 %3606
  %v3608 = vsel %vm3205, %v3602, -inf
  %3609 = vmax.xlane.f32.xlu0 %v3608
  %v3610 = vpop.xlane.xlu0 %3609
  %v3611 = vsub.f32 %v3597, %v3607
  %v3612 = vsub.f32 %v3602, %v3610
  %v3613 = vmul.f32 %v3611, 1.442695
  %v3614 = vpow.pop %v3613
  %v3615 = vmul.f32 %v3612, 1.442695
  %v3616 = vpow.pop %v3615
  %v3617 = vsel %vm3201, %v3614, 0.0
  %3618 = vadd.xlane.f32.xlu0 %v3617
  %v3619 = vpop.xlane.xlu0 %3618
  %v3620 = vsel %vm3205, %v3616, 0.0
  %3621 = vadd.xlane.f32.xlu0 %v3620
  %v3622 = vpop.xlane.xlu0 %3621
  %v3623 = vrcp.pop %v3619
  %v3624 = vrcp.pop %v3622
  %v3625 = vmul.f32 %v3614, %v3623
  %v3626 = vmul.f32 %v3616, %v3624
  %3627 = vrot.lane.b32.xlu0 %v3103, 48
  %v3628 = vpop.permute.xlu0 %3627
  %3629 = vrot.lane.b32.xlu0 %v3108, 48
  %v3630 = vpop.permute.xlu0 %3629
  %v3633 = vsel %vm3201, %v3625, 0
  %v3636 = vsel %vm3201, %v3626, 0
  %v3638 = vsel %vm2922, %v3630, 0
  %3640 = vmatprep.subr.mxu0 0.0
  %3641 = vmatpush1.msra.mxu0 %v3628
  %3642 = vmatprep.subr.mxu0 0.0
  %3643 = vmatpush1.msra.mxu0 %v3638
  %3644 = vmatprep.subr.mxu0 0.0
  %3645 = vmatpush1.msra.mxu0 0.0
  %3646 = vmatprep.subr.mxu0 0.0
  %3647 = vmatpush1.msra.mxu0 0.0
  %3648 = vmatprep.subr.mxu0 0.0
  %3649 = vmatpush1.msra.mxu0 0.0
  %3650 = vmatprep.subr.mxu0 0.0
  %3651 = vmatpush1.msra.mxu0 0.0
  %3652 = vmatprep.subr.mxu0 0.0
  %3653 = vmatpush1.msra.mxu0 0.0
  %3654 = vmatprep.subr.mxu0 0.0
  %3655 = vmatpush1.msra.mxu0 0.0
  %3656 = vmatprep.subr.mxu0 0.0
  %3657 = vmatpush1.msra.mxu0 0.0
  %3658 = vmatprep.subr.mxu0 0.0
  %3659 = vmatpush1.msra.mxu0 0.0
  %3660 = vmatprep.subr.mxu0 0.0
  %3661 = vmatpush1.msra.mxu0 0.0
  %3662 = vmatprep.subr.mxu0 0.0
  %3663 = vmatpush1.msra.mxu0 0.0
  %3664 = vmatprep.subr.mxu0 0.0
  %3665 = vmatpush1.msra.mxu0 0.0
  %3666 = vmatprep.subr.mxu0 0.0
  %3667 = vmatpush1.msra.mxu0 0.0
  %3668 = vmatprep.subr.mxu0 0.0
  %3669 = vmatpush1.msra.mxu0 0.0
  %3670 = vmatprep.subr.mxu0 0.0
  %3671 = vmatpush1.msra.mxu0 0.0
  %3672 = vmatprep.subr.mxu0 0.0
  %3673 = vmatpush1.msra.mxu0 0.0
  %3674 = vmatprep.subr.mxu0 0.0
  %3675 = vmatpush1.msra.mxu0 0.0
  %3676 = vmatprep.subr.mxu0 0.0
  %3677 = vmatpush1.msra.mxu0 0.0
  %3678 = vmatprep.subr.mxu0 0.0
  %3679 = vmatpush1.msra.mxu0 0.0
  %3680 = vmatprep.subr.mxu0 0.0
  %3681 = vmatpush1.msra.mxu0 0.0
  %3682 = vmatprep.subr.mxu0 0.0
  %3683 = vmatpush1.msra.mxu0 0.0
  %3684 = vmatprep.subr.mxu0 0.0
  %3685 = vmatpush1.msra.mxu0 0.0
  %3686 = vmatprep.subr.mxu0 0.0
  %3687 = vmatpush1.msra.mxu0 0.0
  %3688 = vmatprep.subr.mxu0 0.0
  %3689 = vmatpush1.msra.mxu0 0.0
  %3690 = vmatprep.subr.mxu0 0.0
  %3691 = vmatpush1.msra.mxu0 0.0
  %3692 = vmatprep.subr.mxu0 0.0
  %3693 = vmatpush1.msra.mxu0 0.0
  %3694 = vmatprep.subr.mxu0 0.0
  %3695 = vmatpush1.msra.mxu0 0.0
  %3696 = vmatprep.subr.mxu0 0.0
  %3697 = vmatpush1.msra.mxu0 0.0
  %3698 = vmatprep.subr.mxu0 0.0
  %3699 = vmatpush1.msra.mxu0 0.0
  %3700 = vmatprep.subr.mxu0 0.0
  %3701 = vmatpush1.msra.mxu0 0.0
  %3702 = vmatprep.subr.mxu0 0.0
  %3703 = vmatpush1.msra.mxu0 0.0
  %3704 = vmatprep.mubr.f32.mxu0 0.0
  %3705 = vmatmul.mubr.f32.gmra.mrb[0].mxu0 %v3633
  %v3706 = vpop.f32.mrb[0].mxu0
  %v3707 = vadd.f32 0.0, %v3706
  %v3708 = vpop.f32.mrb[0].mxu0
  %3709 = vmatprep.mubr.f32.mxu0 0.0
  %3710 = vmatmul.mubr.f32.gmra.mrb[0].mxu0 %v3636
  %v3711 = vpop.f32.mrb[0].mxu0
  %v3712 = vadd.f32 0.0, %v3711
  %v3713 = vpop.f32.mrb[0].mxu0
  %3714 = vdwg.mxu0
  %3715 = vrot.lane.b32.xlu0 %v3103, 104
  %v3716 = vpop.permute.xlu0 %3715
  %3717 = vrot.lane.b32.xlu0 %v3108, 104
  %v3718 = vpop.permute.xlu0 %3717
  %3719 = vrot.lane.b32.xlu0 %v3103, 72
  %v3720 = vpop.permute.xlu0 %3719
  %3721 = vrot.lane.b32.xlu0 %v3108, 72
  %v3722 = vpop.permute.xlu0 %3721
  %v3723 = vsel %vm3117, %v3716, 0
  %v3725 = vsel %vm3117, %v3718, 0
  %v3727 = vsel %vm3117, %v3720, 0
  %v3729 = vsel %vm3117, %v3722, 0
  %3731 = vmatprep.subr.mxu0 0.0
  %3732 = vmatpush1.xpose.msra.mxu0 %v3727
  %3733 = vmatprep.subr.mxu0 0.0
  %3734 = vmatpush1.xpose.msra.mxu0 %v3729
  %3735 = vmatprep.subr.mxu0 0.0
  %3736 = vmatpush1.xpose.msra.mxu0 0.0
  %3737 = vmatprep.subr.mxu0 0.0
  %3738 = vmatpush1.xpose.msra.mxu0 0.0
  %3739 = vmatprep.subr.mxu0 0.0
  %3740 = vmatpush1.xpose.msra.mxu0 0.0
  %3741 = vmatprep.subr.mxu0 0.0
  %3742 = vmatpush1.xpose.msra.mxu0 0.0
  %3743 = vmatprep.subr.mxu0 0.0
  %3744 = vmatpush1.xpose.msra.mxu0 0.0
  %3745 = vmatprep.subr.mxu0 0.0
  %3746 = vmatpush1.xpose.msra.mxu0 0.0
  %3747 = vmatprep.subr.mxu0 0.0
  %3748 = vmatpush1.xpose.msra.mxu0 0.0
  %3749 = vmatprep.subr.mxu0 0.0
  %3750 = vmatpush1.xpose.msra.mxu0 0.0
  %3751 = vmatprep.subr.mxu0 0.0
  %3752 = vmatpush1.xpose.msra.mxu0 0.0
  %3753 = vmatprep.subr.mxu0 0.0
  %3754 = vmatpush1.xpose.msra.mxu0 0.0
  %3755 = vmatprep.subr.mxu0 0.0
  %3756 = vmatpush1.xpose.msra.mxu0 0.0
  %3757 = vmatprep.subr.mxu0 0.0
  %3758 = vmatpush1.xpose.msra.mxu0 0.0
  %3759 = vmatprep.subr.mxu0 0.0
  %3760 = vmatpush1.xpose.msra.mxu0 0.0
  %3761 = vmatprep.subr.mxu0 0.0
  %3762 = vmatpush1.xpose.msra.mxu0 0.0
  %3763 = vmatprep.subr.mxu0 0.0
  %3764 = vmatpush1.xpose.msra.mxu0 0.0
  %3765 = vmatprep.subr.mxu0 0.0
  %3766 = vmatpush1.xpose.msra.mxu0 0.0
  %3767 = vmatprep.subr.mxu0 0.0
  %3768 = vmatpush1.xpose.msra.mxu0 0.0
  %3769 = vmatprep.subr.mxu0 0.0
  %3770 = vmatpush1.xpose.msra.mxu0 0.0
  %3771 = vmatprep.subr.mxu0 0.0
  %3772 = vmatpush1.xpose.msra.mxu0 0.0
  %3773 = vmatprep.subr.mxu0 0.0
  %3774 = vmatpush1.xpose.msra.mxu0 0.0
  %3775 = vmatprep.subr.mxu0 0.0
  %3776 = vmatpush1.xpose.msra.mxu0 0.0
  %3777 = vmatprep.subr.mxu0 0.0
  %3778 = vmatpush1.xpose.msra.mxu0 0.0
  %3779 = vmatprep.subr.mxu0 0.0
  %3780 = vmatpush1.xpose.msra.mxu0 0.0
  %3781 = vmatprep.subr.mxu0 0.0
  %3782 = vmatpush1.xpose.msra.mxu0 0.0
  %3783 = vmatprep.subr.mxu0 0.0
  %3784 = vmatpush1.xpose.msra.mxu0 0.0
  %3785 = vmatprep.subr.mxu0 0.0
  %3786 = vmatpush1.xpose.msra.mxu0 0.0
  %3787 = vmatprep.subr.mxu0 0.0
  %3788 = vmatpush1.xpose.msra.mxu0 0.0
  %3789 = vmatprep.subr.mxu0 0.0
  %3790 = vmatpush1.xpose.msra.mxu0 0.0
  %3791 = vmatprep.subr.mxu0 0.0
  %3792 = vmatpush1.xpose.msra.mxu0 0.0
  %3793 = vmatprep.subr.mxu0 0.0
  %3794 = vmatpush1.xpose.msra.mxu0 0.0
  %3795 = vmatprep.mubr.f32.mxu0 0.0
  %3796 = vmatmul.mubr.f32.gmra.mrb[0].mxu0 %v3723
  %v3797 = vpop.f32.mrb[0].mxu0
  %v3798 = vadd.f32 %v52, %v3797
  %v3799 = vpop.f32.mrb[0].mxu0
  %3800 = vmatprep.mubr.f32.mxu0 0.0
  %3801 = vmatmul.mubr.f32.gmra.mrb[0].mxu0 %v3725
  %v3802 = vpop.f32.mrb[0].mxu0
  %v3803 = vadd.f32 %v53, %v3802
  %v3804 = vpop.f32.mrb[0].mxu0
  %3805 = vdwg.mxu0
  %v3806 = vsel %vm3201, %v3798, -inf
  %3807 = vmax.xlane.f32.xlu0 %v3806
  %v3808 = vpop.xlane.xlu0 %3807
  %v3809 = vsel %vm3205, %v3803, -inf
  %3810 = vmax.xlane.f32.xlu0 %v3809
  %v3811 = vpop.xlane.xlu0 %3810
  %v3812 = vsub.f32 %v3798, %v3808
  %v3813 = vsub.f32 %v3803, %v3811
  %v3814 = vmul.f32 %v3812, 1.442695
  %v3815 = vpow.pop %v3814
  %v3816 = vmul.f32 %v3813, 1.442695
  %v3817 = vpow.pop %v3816
  %v3818 = vsel %vm3201, %v3815, 0.0
  %3819 = vadd.xlane.f32.xlu0 %v3818
  %v3820 = vpop.xlane.xlu0 %3819
  %v3821 = vsel %vm3205, %v3817, 0.0
  %3822 = vadd.xlane.f32.xlu0 %v3821
  %v3823 = vpop.xlane.xlu0 %3822
  %v3824 = vrcp.pop %v3820
  %v3825 = vrcp.pop %v3823
  %v3826 = vmul.f32 %v3815, %v3824
  %v3827 = vmul.f32 %v3817, %v3825
  %3828 = vrot.lane.b32.xlu0 %v3103, 40
  %v3829 = vpop.permute.xlu0 %3828
  %3830 = vrot.lane.b32.xlu0 %v3108, 40
  %v3831 = vpop.permute.xlu0 %3830
  %v3834 = vsel %vm3201, %v3826, 0
  %v3837 = vsel %vm3201, %v3827, 0
  %v3839 = vsel %vm2922, %v3831, 0
  %3841 = vmatprep.subr.mxu0 0.0
  %3842 = vmatpush1.msra.mxu0 %v3829
  %3843 = vmatprep.subr.mxu0 0.0
  %3844 = vmatpush1.msra.mxu0 %v3839
  %3845 = vmatprep.subr.mxu0 0.0
  %3846 = vmatpush1.msra.mxu0 0.0
  %3847 = vmatprep.subr.mxu0 0.0
  %3848 = vmatpush1.msra.mxu0 0.0
  %3849 = vmatprep.subr.mxu0 0.0
  %3850 = vmatpush1.msra.mxu0 0.0
  %3851 = vmatprep.subr.mxu0 0.0
  %3852 = vmatpush1.msra.mxu0 0.0
  %3853 = vmatprep.subr.mxu0 0.0
  %3854 = vmatpush1.msra.mxu0 0.0
  %3855 = vmatprep.subr.mxu0 0.0
  %3856 = vmatpush1.msra.mxu0 0.0
  %3857 = vmatprep.subr.mxu0 0.0
  %3858 = vmatpush1.msra.mxu0 0.0
  %3859 = vmatprep.subr.mxu0 0.0
  %3860 = vmatpush1.msra.mxu0 0.0
  %3861 = vmatprep.subr.mxu0 0.0
  %3862 = vmatpush1.msra.mxu0 0.0
  %3863 = vmatprep.subr.mxu0 0.0
  %3864 = vmatpush1.msra.mxu0 0.0
  %3865 = vmatprep.subr.mxu0 0.0
  %3866 = vmatpush1.msra.mxu0 0.0
  %3867 = vmatprep.subr.mxu0 0.0
  %3868 = vmatpush1.msra.mxu0 0.0
  %3869 = vmatprep.subr.mxu0 0.0
  %3870 = vmatpush1.msra.mxu0 0.0
  %3871 = vmatprep.subr.mxu0 0.0
  %3872 = vmatpush1.msra.mxu0 0.0
  %3873 = vmatprep.subr.mxu0 0.0
  %3874 = vmatpush1.msra.mxu0 0.0
  %3875 = vmatprep.subr.mxu0 0.0
  %3876 = vmatpush1.msra.mxu0 0.0
  %3877 = vmatprep.subr.mxu0 0.0
  %3878 = vmatpush1.msra.mxu0 0.0
  %3879 = vmatprep.subr.mxu0 0.0
  %3880 = vmatpush1.msra.mxu0 0.0
  %3881 = vmatprep.subr.mxu0 0.0
  %3882 = vmatpush1.msra.mxu0 0.0
  %3883 = vmatprep.subr.mxu0 0.0
  %3884 = vmatpush1.msra.mxu0 0.0
  %3885 = vmatprep.subr.mxu0 0.0
  %3886 = vmatpush1.msra.mxu0 0.0
  %3887 = vmatprep.subr.mxu0 0.0
  %3888 = vmatpush1.msra.mxu0 0.0
  %3889 = vmatprep.subr.mxu0 0.0
  %3890 = vmatpush1.msra.mxu0 0.0
  %3891 = vmatprep.subr.mxu0 0.0
  %3892 = vmatpush1.msra.mxu0 0.0
  %3893 = vmatprep.subr.mxu0 0.0
  %3894 = vmatpush1.msra.mxu0 0.0
  %3895 = vmatprep.subr.mxu0 0.0
  %3896 = vmatpush1.msra.mxu0 0.0
  %3897 = vmatprep.subr.mxu0 0.0
  %3898 = vmatpush1.msra.mxu0 0.0
  %3899 = vmatprep.subr.mxu0 0.0
  %3900 = vmatpush1.msra.mxu0 0.0
  %3901 = vmatprep.subr.mxu0 0.0
  %3902 = vmatpush1.msra.mxu0 0.0
  %3903 = vmatprep.subr.mxu0 0.0
  %3904 = vmatpush1.msra.mxu0 0.0
  %3905 = vmatprep.mubr.f32.mxu0 0.0
  %3906 = vmatmul.mubr.f32.gmra.mrb[0].mxu0 %v3834
  %v3907 = vpop.f32.mrb[0].mxu0
  %v3908 = vadd.f32 0.0, %v3907
  %v3909 = vpop.f32.mrb[0].mxu0
  %3910 = vmatprep.mubr.f32.mxu0 0.0
  %3911 = vmatmul.mubr.f32.gmra.mrb[0].mxu0 %v3837
  %v3912 = vpop.f32.mrb[0].mxu0
  %v3913 = vadd.f32 0.0, %v3912
  %v3914 = vpop.f32.mrb[0].mxu0
  %3915 = vdwg.mxu0
  %3918 = vrot.lane.b32.xlu0 %v3506, 8
  %v3919 = vpop.permute.xlu0 %3918
  %3920 = vrot.lane.b32.xlu0 %v3511, 8
  %v3921 = vpop.permute.xlu0 %3920
  %3926 = vrot.lane.b32.xlu0 %v3707, 16
  %v3927 = vpop.permute.xlu0 %3926
  %3928 = vrot.lane.b32.xlu0 %v3712, 16
  %v3929 = vpop.permute.xlu0 %3928
  %3934 = vrot.lane.b32.xlu0 %v3908, 24
  %v3935 = vpop.permute.xlu0 %3934
  %3936 = vrot.lane.b32.xlu0 %v3913, 24
  %v3937 = vpop.permute.xlu0 %3936
  %v3940 = vsel %vm3117, %v3305, %v3919
  %v3941 = vsel %vm3117, %v3310, %v3921
  %v3942 = vsel %vm341, %v3940, %v3927
  %v3943 = vsel %vm341, %v3941, %v3929
  %vm3944 = vcmask 195584
  %v3945 = vsel %vm3944, %v3942, %v3935
  %v3946 = vsel %vm3944, %v3943, %v3937
  %v3947 = vlaneseq
  %v3948 = vshrl.u32 %v3947, 7
  %v3949 = vsub.s32 1, %v3948
  %v3950 = vrot.slane %v3024, %v3949
  %3955 = vrot.lane.b32.xlu0 %v3012, 32
  %v3956 = vpop.permute.xlu0 %3955
  %3957 = vrot.lane.b32.xlu0 %v3015, 32
  %v3958 = vpop.permute.xlu0 %3957
  %3959 = vrot.lane.b32.xlu0 %v3018, 32
  %v3960 = vpop.permute.xlu0 %3959
  %3961 = vrot.lane.b32.xlu0 %v3021, 32
  %v3962 = vpop.permute.xlu0 %3961
  %v3968 = vsel %vm1164, %v3945, 0
  %v3971 = vsel %vm1164, %v3946, 0
  %3973 = vmatprep.subr.mxu0 0.0
  %3974 = vmatpush1.msra.mxu0 %v3956
  %3975 = vmatprep.subr.mxu0 0.0
  %3976 = vmatpush1.msra.mxu0 %v3958
  %3977 = vmatprep.subr.mxu0 0.0
  %3978 = vmatpush1.msra.mxu0 %v3960
  %3979 = vmatprep.subr.mxu0 0.0
  %3980 = vmatpush1.msra.mxu0 %v3962
  %3981 = vmatprep.subr.mxu0 0.0
  %3982 = vmatpush1.msra.mxu0 0.0
  %3983 = vmatprep.subr.mxu0 0.0
  %3984 = vmatpush1.msra.mxu0 0.0
  %3985 = vmatprep.subr.mxu0 0.0
  %3986 = vmatpush1.msra.mxu0 0.0
  %3987 = vmatprep.subr.mxu0 0.0
  %3988 = vmatpush1.msra.mxu0 0.0
  %3989 = vmatprep.subr.mxu0 0.0
  %3990 = vmatpush1.msra.mxu0 0.0
  %3991 = vmatprep.subr.mxu0 0.0
  %3992 = vmatpush1.msra.mxu0 0.0
  %3993 = vmatprep.subr.mxu0 0.0
  %3994 = vmatpush1.msra.mxu0 0.0
  %3995 = vmatprep.subr.mxu0 0.0
  %3996 = vmatpush1.msra.mxu0 0.0
  %3997 = vmatprep.subr.mxu0 0.0
  %3998 = vmatpush1.msra.mxu0 0.0
  %3999 = vmatprep.subr.mxu0 0.0
  %4000 = vmatpush1.msra.mxu0 0.0
  %4001 = vmatprep.subr.mxu0 0.0
  %4002 = vmatpush1.msra.mxu0 0.0
  %4003 = vmatprep.subr.mxu0 0.0
  %4004 = vmatpush1.msra.mxu0 0.0
  %4005 = vmatprep.subr.mxu0 0.0
  %4006 = vmatpush1.msra.mxu0 0.0
  %4007 = vmatprep.subr.mxu0 0.0
  %4008 = vmatpush1.msra.mxu0 0.0
  %4009 = vmatprep.subr.mxu0 0.0
  %4010 = vmatpush1.msra.mxu0 0.0
  %4011 = vmatprep.subr.mxu0 0.0
  %4012 = vmatpush1.msra.mxu0 0.0
  %4013 = vmatprep.subr.mxu0 0.0
  %4014 = vmatpush1.msra.mxu0 0.0
  %4015 = vmatprep.subr.mxu0 0.0
  %4016 = vmatpush1.msra.mxu0 0.0
  %4017 = vmatprep.subr.mxu0 0.0
  %4018 = vmatpush1.msra.mxu0 0.0
  %4019 = vmatprep.subr.mxu0 0.0
  %4020 = vmatpush1.msra.mxu0 0.0
  %4021 = vmatprep.subr.mxu0 0.0
  %4022 = vmatpush1.msra.mxu0 0.0
  %4023 = vmatprep.subr.mxu0 0.0
  %4024 = vmatpush1.msra.mxu0 0.0
  %4025 = vmatprep.subr.mxu0 0.0
  %4026 = vmatpush1.msra.mxu0 0.0
  %4027 = vmatprep.subr.mxu0 0.0
  %4028 = vmatpush1.msra.mxu0 0.0
  %4029 = vmatprep.subr.mxu0 0.0
  %4030 = vmatpush1.msra.mxu0 0.0
  %4031 = vmatprep.subr.mxu0 0.0
  %4032 = vmatpush1.msra.mxu0 0.0
  %4033 = vmatprep.subr.mxu0 0.0
  %4034 = vmatpush1.msra.mxu0 0.0
  %4035 = vmatprep.subr.mxu0 0.0
  %4036 = vmatpush1.msra.mxu0 0.0
  %4037 = vmatprep.mubr.f32.mxu0 0.0
  %4038 = vmatmul.mubr.f32.gmra.mrb[0].mxu0 %v3968
  %v4039 = vpop.f32.mrb[0].mxu0
  %v4040 = vadd.f32 %v3950, %v4039
  %v4041 = vpop.f32.mrb[0].mxu0
  %4042 = vmatprep.mubr.f32.mxu0 0.0
  %4043 = vmatmul.mubr.f32.gmra.mrb[0].mxu0 %v3971
  %v4044 = vpop.f32.mrb[0].mxu0
  %v4045 = vadd.f32 %v3950, %v4044
  %v4046 = vpop.f32.mrb[0].mxu0
  %4047 = vdwg.mxu0
  %v4048 = vadd.f32 %v3010, %v4040
  %v4049 = vadd.f32 %v3011, %v4045
  %v4050 = vsel %vm1164, %v4048, 0.0
  %4051 = vadd.xlane.f32.xlu0 %v4050
  %v4052 = vpop.xlane.xlu0 %4051
  %vm4053 = vcmask 257024
  %v4054 = vsel %vm4053, %v4049, 0.0
  %4055 = vadd.xlane.f32.xlu0 %v4054
  %v4056 = vpop.xlane.xlu0 %4055
  %v4057 = vrcp.pop 32.0
  %v4058 = vmul.f32 %v4052, %v4057
  %v4059 = vmul.f32 %v4056, %v4057
  %v4060 = vsub.f32 %v4048, %v4058
  %v4061 = vsub.f32 %v4049, %v4059
  %v4062 = vmul.f32 %v4060, %v4060
  %v4063 = vmul.f32 %v4061, %v4061
  %v4064 = vsel %vm1164, %v4062, 0.0
  %4065 = vadd.xlane.f32.xlu0 %v4064
  %v4066 = vpop.xlane.xlu0 %4065
  %v4067 = vsel %vm4053, %v4063, 0.0
  %4068 = vadd.xlane.f32.xlu0 %v4067
  %v4069 = vpop.xlane.xlu0 %4068
  %v4070 = vmul.f32 %v4066, %v4057
  %v4071 = vmul.f32 %v4069, %v4057
  %v4072 = vadd.f32 %v4070, 1e-05
  %v4073 = vadd.f32 %v4071, 1e-05
  %v4074 = vrsqrt.pop %v4072
  %v4075 = vrsqrt.pop %v4073
  %v4076 = vmul.f32 %v4060, %v4074
  %v4077 = vmul.f32 %v4061, %v4075
  %v4078 = vlaneseq
  %v4079 = vshrl.u32 %v4078, 7
  %v4080 = vsub.s32 2, %v4079
  %v4081 = vrot.slane %v3024, %v4080
  %v4082 = vmul.f32 %v4076, %v4081
  %v4083 = vmul.f32 %v4077, %v4081
  %v4084 = vlaneseq
  %v4085 = vshrl.u32 %v4084, 7
  %v4086 = vsub.s32 3, %v4085
  %v4087 = vrot.slane %v3024, %v4086
  %v4088 = vadd.f32 %v4082, %v4087
  %v4089 = vadd.f32 %v4083, %v4087
  %v4090 = vlaneseq
  %v4091 = vshrl.u32 %v4090, 7
  %v4092 = vsub.s32 4, %v4091
  %v4093 = vrot.slane %v3024, %v4092
  %v4095 = vsel %vm1164, %v4088, 0
  %v4098 = vsel %vm1164, %v4089, 0
  %4100 = vmatprep.subr.mxu0 0.0
  %4101 = vmatpush1.msra.mxu0 %v3013
  %4102 = vmatprep.subr.mxu0 0.0
  %4103 = vmatpush1.msra.mxu0 %v3016
  %4104 = vmatprep.subr.mxu0 0.0
  %4105 = vmatpush1.msra.mxu0 %v3019
  %4106 = vmatprep.subr.mxu0 0.0
  %4107 = vmatpush1.msra.mxu0 %v3022
  %4108 = vmatprep.subr.mxu0 0.0
  %4109 = vmatpush1.msra.mxu0 0.0
  %4110 = vmatprep.subr.mxu0 0.0
  %4111 = vmatpush1.msra.mxu0 0.0
  %4112 = vmatprep.subr.mxu0 0.0
  %4113 = vmatpush1.msra.mxu0 0.0
  %4114 = vmatprep.subr.mxu0 0.0
  %4115 = vmatpush1.msra.mxu0 0.0
  %4116 = vmatprep.subr.mxu0 0.0
  %4117 = vmatpush1.msra.mxu0 0.0
  %4118 = vmatprep.subr.mxu0 0.0
  %4119 = vmatpush1.msra.mxu0 0.0
  %4120 = vmatprep.subr.mxu0 0.0
  %4121 = vmatpush1.msra.mxu0 0.0
  %4122 = vmatprep.subr.mxu0 0.0
  %4123 = vmatpush1.msra.mxu0 0.0
  %4124 = vmatprep.subr.mxu0 0.0
  %4125 = vmatpush1.msra.mxu0 0.0
  %4126 = vmatprep.subr.mxu0 0.0
  %4127 = vmatpush1.msra.mxu0 0.0
  %4128 = vmatprep.subr.mxu0 0.0
  %4129 = vmatpush1.msra.mxu0 0.0
  %4130 = vmatprep.subr.mxu0 0.0
  %4131 = vmatpush1.msra.mxu0 0.0
  %4132 = vmatprep.subr.mxu0 0.0
  %4133 = vmatpush1.msra.mxu0 0.0
  %4134 = vmatprep.subr.mxu0 0.0
  %4135 = vmatpush1.msra.mxu0 0.0
  %4136 = vmatprep.subr.mxu0 0.0
  %4137 = vmatpush1.msra.mxu0 0.0
  %4138 = vmatprep.subr.mxu0 0.0
  %4139 = vmatpush1.msra.mxu0 0.0
  %4140 = vmatprep.subr.mxu0 0.0
  %4141 = vmatpush1.msra.mxu0 0.0
  %4142 = vmatprep.subr.mxu0 0.0
  %4143 = vmatpush1.msra.mxu0 0.0
  %4144 = vmatprep.subr.mxu0 0.0
  %4145 = vmatpush1.msra.mxu0 0.0
  %4146 = vmatprep.subr.mxu0 0.0
  %4147 = vmatpush1.msra.mxu0 0.0
  %4148 = vmatprep.subr.mxu0 0.0
  %4149 = vmatpush1.msra.mxu0 0.0
  %4150 = vmatprep.subr.mxu0 0.0
  %4151 = vmatpush1.msra.mxu0 0.0
  %4152 = vmatprep.subr.mxu0 0.0
  %4153 = vmatpush1.msra.mxu0 0.0
  %4154 = vmatprep.subr.mxu0 0.0
  %4155 = vmatpush1.msra.mxu0 0.0
  %4156 = vmatprep.subr.mxu0 0.0
  %4157 = vmatpush1.msra.mxu0 0.0
  %4158 = vmatprep.subr.mxu0 0.0
  %4159 = vmatpush1.msra.mxu0 0.0
  %4160 = vmatprep.subr.mxu0 0.0
  %4161 = vmatpush1.msra.mxu0 0.0
  %4162 = vmatprep.subr.mxu0 0.0
  %4163 = vmatpush1.msra.mxu0 0.0
  %4164 = vmatprep.mubr.f32.mxu0 0.0
  %4165 = vmatmul.mubr.f32.gmra.mrb[0].mxu0 %v4095
  %v4166 = vpop.f32.mrb[0].mxu0
  %v4167 = vadd.f32 %v4093, %v4166
  %v4168 = vpop.f32.mrb[0].mxu0
  %4169 = vmatprep.mubr.f32.mxu0 0.0
  %4170 = vmatmul.mubr.f32.gmra.mrb[0].mxu0 %v4098
  %v4171 = vpop.f32.mrb[0].mxu0
  %v4172 = vadd.f32 %v4093, %v4171
  %v4173 = vpop.f32.mrb[0].mxu0
  %4174 = vdwg.mxu0
  %v4175 = vlaneseq
  %v4176 = vshrl.u32 %v4175, 7
  %v4177 = vsub.s32 5, %v4176
  %v4178 = vrot.slane %v3024, %v4177
  %4183 = vrot.lane.b32.xlu0 %v3013, 96
  %v4184 = vpop.permute.xlu0 %4183
  %4185 = vrot.lane.b32.xlu0 %v3016, 96
  %v4186 = vpop.permute.xlu0 %4185
  %4187 = vrot.lane.b32.xlu0 %v3019, 96
  %v4188 = vpop.permute.xlu0 %4187
  %4189 = vrot.lane.b32.xlu0 %v3022, 96
  %v4190 = vpop.permute.xlu0 %4189
  %v4196 = vsel %vm1164, %v3007, 0
  %4198 = vmatprep.subr.mxu0 0.0
  %4199 = vmatpush1.msra.mxu0 %v4184
  %4200 = vmatprep.subr.mxu0 0.0
  %4201 = vmatpush1.msra.mxu0 %v4186
  %4202 = vmatprep.subr.mxu0 0.0
  %4203 = vmatpush1.msra.mxu0 %v4188
  %4204 = vmatprep.subr.mxu0 0.0
  %4205 = vmatpush1.msra.mxu0 %v4190
  %4206 = vmatprep.subr.mxu0 0.0
  %4207 = vmatpush1.msra.mxu0 0.0
  %4208 = vmatprep.subr.mxu0 0.0
  %4209 = vmatpush1.msra.mxu0 0.0
  %4210 = vmatprep.subr.mxu0 0.0
  %4211 = vmatpush1.msra.mxu0 0.0
  %4212 = vmatprep.subr.mxu0 0.0
  %4213 = vmatpush1.msra.mxu0 0.0
  %4214 = vmatprep.subr.mxu0 0.0
  %4215 = vmatpush1.msra.mxu0 0.0
  %4216 = vmatprep.subr.mxu0 0.0
  %4217 = vmatpush1.msra.mxu0 0.0
  %4218 = vmatprep.subr.mxu0 0.0
  %4219 = vmatpush1.msra.mxu0 0.0
  %4220 = vmatprep.subr.mxu0 0.0
  %4221 = vmatpush1.msra.mxu0 0.0
  %4222 = vmatprep.subr.mxu0 0.0
  %4223 = vmatpush1.msra.mxu0 0.0
  %4224 = vmatprep.subr.mxu0 0.0
  %4225 = vmatpush1.msra.mxu0 0.0
  %4226 = vmatprep.subr.mxu0 0.0
  %4227 = vmatpush1.msra.mxu0 0.0
  %4228 = vmatprep.subr.mxu0 0.0
  %4229 = vmatpush1.msra.mxu0 0.0
  %4230 = vmatprep.subr.mxu0 0.0
  %4231 = vmatpush1.msra.mxu0 0.0
  %4232 = vmatprep.subr.mxu0 0.0
  %4233 = vmatpush1.msra.mxu0 0.0
  %4234 = vmatprep.subr.mxu0 0.0
  %4235 = vmatpush1.msra.mxu0 0.0
  %4236 = vmatprep.subr.mxu0 0.0
  %4237 = vmatpush1.msra.mxu0 0.0
  %4238 = vmatprep.subr.mxu0 0.0
  %4239 = vmatpush1.msra.mxu0 0.0
  %4240 = vmatprep.subr.mxu0 0.0
  %4241 = vmatpush1.msra.mxu0 0.0
  %4242 = vmatprep.subr.mxu0 0.0
  %4243 = vmatpush1.msra.mxu0 0.0
  %4244 = vmatprep.subr.mxu0 0.0
  %4245 = vmatpush1.msra.mxu0 0.0
  %4246 = vmatprep.subr.mxu0 0.0
  %4247 = vmatpush1.msra.mxu0 0.0
  %4248 = vmatprep.subr.mxu0 0.0
  %4249 = vmatpush1.msra.mxu0 0.0
  %4250 = vmatprep.subr.mxu0 0.0
  %4251 = vmatpush1.msra.mxu0 0.0
  %4252 = vmatprep.subr.mxu0 0.0
  %4253 = vmatpush1.msra.mxu0 0.0
  %4254 = vmatprep.subr.mxu0 0.0
  %4255 = vmatpush1.msra.mxu0 0.0
  %4256 = vmatprep.subr.mxu0 0.0
  %4257 = vmatpush1.msra.mxu0 0.0
  %4258 = vmatprep.subr.mxu0 0.0
  %4259 = vmatpush1.msra.mxu0 0.0
  %4260 = vmatprep.subr.mxu0 0.0
  %4261 = vmatpush1.msra.mxu0 0.0
  %4262 = vmatprep.mubr.f32.mxu0 0.0
  %4263 = vmatmul.mubr.f32.gmra.mrb[0].mxu0 %v4196
  %v4264 = vpop.f32.mrb[0].mxu0
  %v4265 = vadd.f32 %v4178, %v4264
  %v4266 = vpop.f32.mrb[0].mxu0
  %4267 = vdwg.mxu0
  %v4269 = vsel %vm3117, %v4167, 0
  %v4272 = vsel %vm3117, %v4172, 0
  %v4275 = vsel %vm3117, %v4265, 0
  %4277 = vmatprep.subr.mxu0 0.0
  %4278 = vmatpush1.xpose.msra.mxu0 %v4275
  %4279 = vmatprep.subr.mxu0 0.0
  %4280 = vmatpush1.xpose.msra.mxu0 0.0
  %4281 = vmatprep.subr.mxu0 0.0
  %4282 = vmatpush1.xpose.msra.mxu0 0.0
  %4283 = vmatprep.subr.mxu0 0.0
  %4284 = vmatpush1.xpose.msra.mxu0 0.0
  %4285 = vmatprep.subr.mxu0 0.0
  %4286 = vmatpush1.xpose.msra.mxu0 0.0
  %4287 = vmatprep.subr.mxu0 0.0
  %4288 = vmatpush1.xpose.msra.mxu0 0.0
  %4289 = vmatprep.subr.mxu0 0.0
  %4290 = vmatpush1.xpose.msra.mxu0 0.0
  %4291 = vmatprep.subr.mxu0 0.0
  %4292 = vmatpush1.xpose.msra.mxu0 0.0
  %4293 = vmatprep.subr.mxu0 0.0
  %4294 = vmatpush1.xpose.msra.mxu0 0.0
  %4295 = vmatprep.subr.mxu0 0.0
  %4296 = vmatpush1.xpose.msra.mxu0 0.0
  %4297 = vmatprep.subr.mxu0 0.0
  %4298 = vmatpush1.xpose.msra.mxu0 0.0
  %4299 = vmatprep.subr.mxu0 0.0
  %4300 = vmatpush1.xpose.msra.mxu0 0.0
  %4301 = vmatprep.subr.mxu0 0.0
  %4302 = vmatpush1.xpose.msra.mxu0 0.0
  %4303 = vmatprep.subr.mxu0 0.0
  %4304 = vmatpush1.xpose.msra.mxu0 0.0
  %4305 = vmatprep.subr.mxu0 0.0
  %4306 = vmatpush1.xpose.msra.mxu0 0.0
  %4307 = vmatprep.subr.mxu0 0.0
  %4308 = vmatpush1.xpose.msra.mxu0 0.0
  %4309 = vmatprep.subr.mxu0 0.0
  %4310 = vmatpush1.xpose.msra.mxu0 0.0
  %4311 = vmatprep.subr.mxu0 0.0
  %4312 = vmatpush1.xpose.msra.mxu0 0.0
  %4313 = vmatprep.subr.mxu0 0.0
  %4314 = vmatpush1.xpose.msra.mxu0 0.0
  %4315 = vmatprep.subr.mxu0 0.0
  %4316 = vmatpush1.xpose.msra.mxu0 0.0
  %4317 = vmatprep.subr.mxu0 0.0
  %4318 = vmatpush1.xpose.msra.mxu0 0.0
  %4319 = vmatprep.subr.mxu0 0.0
  %4320 = vmatpush1.xpose.msra.mxu0 0.0
  %4321 = vmatprep.subr.mxu0 0.0
  %4322 = vmatpush1.xpose.msra.mxu0 0.0
  %4323 = vmatprep.subr.mxu0 0.0
  %4324 = vmatpush1.xpose.msra.mxu0 0.0
  %4325 = vmatprep.subr.mxu0 0.0
  %4326 = vmatpush1.xpose.msra.mxu0 0.0
  %4327 = vmatprep.subr.mxu0 0.0
  %4328 = vmatpush1.xpose.msra.mxu0 0.0
  %4329 = vmatprep.subr.mxu0 0.0
  %4330 = vmatpush1.xpose.msra.mxu0 0.0
  %4331 = vmatprep.subr.mxu0 0.0
  %4332 = vmatpush1.xpose.msra.mxu0 0.0
  %4333 = vmatprep.subr.mxu0 0.0
  %4334 = vmatpush1.xpose.msra.mxu0 0.0
  %4335 = vmatprep.subr.mxu0 0.0
  %4336 = vmatpush1.xpose.msra.mxu0 0.0
  %4337 = vmatprep.subr.mxu0 0.0
  %4338 = vmatpush1.xpose.msra.mxu0 0.0
  %4339 = vmatprep.subr.mxu0 0.0
  %4340 = vmatpush1.xpose.msra.mxu0 0.0
  %4341 = vmatprep.mubr.f32.mxu0 0.0
  %4342 = vmatmul.mubr.f32.gmra.mrb[0].mxu0 %v4269
  %v4343 = vpop.f32.mrb[0].mxu0
  %v4344 = vadd.f32 %v54, %v4343
  %v4345 = vpop.f32.mrb[0].mxu0
  %4346 = vmatprep.mubr.f32.mxu0 0.0
  %4347 = vmatmul.mubr.f32.gmra.mrb[0].mxu0 %v4272
  %v4348 = vpop.f32.mrb[0].mxu0
  %v4349 = vadd.f32 %v55, %v4348
  %v4350 = vpop.f32.mrb[0].mxu0
  %4351 = vdwg.mxu0
  %v4352 = vsel %vm3117, %v4344, -inf
  %4353 = vmax.xlane.f32.xlu0 %v4352
  %v4354 = vpop.xlane.xlu0 %4353
  %vm4355 = vcmask 60416
  %v4356 = vsel %vm4355, %v4349, -inf
  %4357 = vmax.xlane.f32.xlu0 %v4356
  %v4358 = vpop.xlane.xlu0 %4357
  %v4359 = vsub.f32 %v4344, %v4354
  %v4360 = vsub.f32 %v4349, %v4358
  %v4361 = vmul.f32 %v4359, 1.442695
  %v4362 = vpow.pop %v4361
  %v4363 = vmul.f32 %v4360, 1.442695
  %v4364 = vpow.pop %v4363
  %v4365 = vsel %vm3117, %v4362, 0.0
  %4366 = vadd.xlane.f32.xlu0 %v4365
  %v4367 = vpop.xlane.xlu0 %4366
  %v4368 = vsel %vm4355, %v4364, 0.0
  %4369 = vadd.xlane.f32.xlu0 %v4368
  %v4370 = vpop.xlane.xlu0 %4369
  %v4371 = vrcp.pop %v4367
  %v4372 = vrcp.pop %v4370
  %v4373 = vmul.f32 %v4362, %v4371
  %v4374 = vmul.f32 %v4364, %v4372
  %4375 = vrot.lane.b32.xlu0 %v4265, 96
  %v4376 = vpop.permute.xlu0 %4375
  %v4379 = vsel %vm3117, %v4373, 0
  %v4382 = vsel %vm3117, %v4374, 0
  %4384 = vmatprep.subr.mxu0 0.0
  %4385 = vmatpush1.msra.mxu0 %v4376
  %4386 = vmatprep.subr.mxu0 0.0
  %4387 = vmatpush1.msra.mxu0 0.0
  %4388 = vmatprep.subr.mxu0 0.0
  %4389 = vmatpush1.msra.mxu0 0.0
  %4390 = vmatprep.subr.mxu0 0.0
  %4391 = vmatpush1.msra.mxu0 0.0
  %4392 = vmatprep.subr.mxu0 0.0
  %4393 = vmatpush1.msra.mxu0 0.0
  %4394 = vmatprep.subr.mxu0 0.0
  %4395 = vmatpush1.msra.mxu0 0.0
  %4396 = vmatprep.subr.mxu0 0.0
  %4397 = vmatpush1.msra.mxu0 0.0
  %4398 = vmatprep.subr.mxu0 0.0
  %4399 = vmatpush1.msra.mxu0 0.0
  %4400 = vmatprep.subr.mxu0 0.0
  %4401 = vmatpush1.msra.mxu0 0.0
  %4402 = vmatprep.subr.mxu0 0.0
  %4403 = vmatpush1.msra.mxu0 0.0
  %4404 = vmatprep.subr.mxu0 0.0
  %4405 = vmatpush1.msra.mxu0 0.0
  %4406 = vmatprep.subr.mxu0 0.0
  %4407 = vmatpush1.msra.mxu0 0.0
  %4408 = vmatprep.subr.mxu0 0.0
  %4409 = vmatpush1.msra.mxu0 0.0
  %4410 = vmatprep.subr.mxu0 0.0
  %4411 = vmatpush1.msra.mxu0 0.0
  %4412 = vmatprep.subr.mxu0 0.0
  %4413 = vmatpush1.msra.mxu0 0.0
  %4414 = vmatprep.subr.mxu0 0.0
  %4415 = vmatpush1.msra.mxu0 0.0
  %4416 = vmatprep.subr.mxu0 0.0
  %4417 = vmatpush1.msra.mxu0 0.0
  %4418 = vmatprep.subr.mxu0 0.0
  %4419 = vmatpush1.msra.mxu0 0.0
  %4420 = vmatprep.subr.mxu0 0.0
  %4421 = vmatpush1.msra.mxu0 0.0
  %4422 = vmatprep.subr.mxu0 0.0
  %4423 = vmatpush1.msra.mxu0 0.0
  %4424 = vmatprep.subr.mxu0 0.0
  %4425 = vmatpush1.msra.mxu0 0.0
  %4426 = vmatprep.subr.mxu0 0.0
  %4427 = vmatpush1.msra.mxu0 0.0
  %4428 = vmatprep.subr.mxu0 0.0
  %4429 = vmatpush1.msra.mxu0 0.0
  %4430 = vmatprep.subr.mxu0 0.0
  %4431 = vmatpush1.msra.mxu0 0.0
  %4432 = vmatprep.subr.mxu0 0.0
  %4433 = vmatpush1.msra.mxu0 0.0
  %4434 = vmatprep.subr.mxu0 0.0
  %4435 = vmatpush1.msra.mxu0 0.0
  %4436 = vmatprep.subr.mxu0 0.0
  %4437 = vmatpush1.msra.mxu0 0.0
  %4438 = vmatprep.subr.mxu0 0.0
  %4439 = vmatpush1.msra.mxu0 0.0
  %4440 = vmatprep.subr.mxu0 0.0
  %4441 = vmatpush1.msra.mxu0 0.0
  %4442 = vmatprep.subr.mxu0 0.0
  %4443 = vmatpush1.msra.mxu0 0.0
  %4444 = vmatprep.subr.mxu0 0.0
  %4445 = vmatpush1.msra.mxu0 0.0
  %4446 = vmatprep.subr.mxu0 0.0
  %4447 = vmatpush1.msra.mxu0 0.0
  %4448 = vmatprep.mubr.f32.mxu0 0.0
  %4449 = vmatmul.mubr.f32.gmra.mrb[0].mxu0 %v4379
  %v4450 = vpop.f32.mrb[0].mxu0
  %v4451 = vadd.f32 0.0, %v4450
  %v4452 = vpop.f32.mrb[0].mxu0
  %4453 = vmatprep.mubr.f32.mxu0 0.0
  %4454 = vmatmul.mubr.f32.gmra.mrb[0].mxu0 %v4382
  %v4455 = vpop.f32.mrb[0].mxu0
  %v4456 = vadd.f32 0.0, %v4455
  %v4457 = vpop.f32.mrb[0].mxu0
  %4458 = vdwg.mxu0
  %4459 = vrot.lane.b32.xlu0 %v4167, 120
  %v4460 = vpop.permute.xlu0 %4459
  %4461 = vrot.lane.b32.xlu0 %v4172, 120
  %v4462 = vpop.permute.xlu0 %4461
  %4463 = vrot.lane.b32.xlu0 %v4265, 120
  %v4464 = vpop.permute.xlu0 %4463
  %v4465 = vsel %vm3117, %v4460, 0
  %v4467 = vsel %vm3117, %v4462, 0
  %v4469 = vsel %vm3117, %v4464, 0
  %4471 = vmatprep.subr.mxu0 0.0
  %4472 = vmatpush1.xpose.msra.mxu0 %v4469
  %4473 = vmatprep.subr.mxu0 0.0
  %4474 = vmatpush1.xpose.msra.mxu0 0.0
  %4475 = vmatprep.subr.mxu0 0.0
  %4476 = vmatpush1.xpose.msra.mxu0 0.0
  %4477 = vmatprep.subr.mxu0 0.0
  %4478 = vmatpush1.xpose.msra.mxu0 0.0
  %4479 = vmatprep.subr.mxu0 0.0
  %4480 = vmatpush1.xpose.msra.mxu0 0.0
  %4481 = vmatprep.subr.mxu0 0.0
  %4482 = vmatpush1.xpose.msra.mxu0 0.0
  %4483 = vmatprep.subr.mxu0 0.0
  %4484 = vmatpush1.xpose.msra.mxu0 0.0
  %4485 = vmatprep.subr.mxu0 0.0
  %4486 = vmatpush1.xpose.msra.mxu0 0.0
  %4487 = vmatprep.subr.mxu0 0.0
  %4488 = vmatpush1.xpose.msra.mxu0 0.0
  %4489 = vmatprep.subr.mxu0 0.0
  %4490 = vmatpush1.xpose.msra.mxu0 0.0
  %4491 = vmatprep.subr.mxu0 0.0
  %4492 = vmatpush1.xpose.msra.mxu0 0.0
  %4493 = vmatprep.subr.mxu0 0.0
  %4494 = vmatpush1.xpose.msra.mxu0 0.0
  %4495 = vmatprep.subr.mxu0 0.0
  %4496 = vmatpush1.xpose.msra.mxu0 0.0
  %4497 = vmatprep.subr.mxu0 0.0
  %4498 = vmatpush1.xpose.msra.mxu0 0.0
  %4499 = vmatprep.subr.mxu0 0.0
  %4500 = vmatpush1.xpose.msra.mxu0 0.0
  %4501 = vmatprep.subr.mxu0 0.0
  %4502 = vmatpush1.xpose.msra.mxu0 0.0
  %4503 = vmatprep.subr.mxu0 0.0
  %4504 = vmatpush1.xpose.msra.mxu0 0.0
  %4505 = vmatprep.subr.mxu0 0.0
  %4506 = vmatpush1.xpose.msra.mxu0 0.0
  %4507 = vmatprep.subr.mxu0 0.0
  %4508 = vmatpush1.xpose.msra.mxu0 0.0
  %4509 = vmatprep.subr.mxu0 0.0
  %4510 = vmatpush1.xpose.msra.mxu0 0.0
  %4511 = vmatprep.subr.mxu0 0.0
  %4512 = vmatpush1.xpose.msra.mxu0 0.0
  %4513 = vmatprep.subr.mxu0 0.0
  %4514 = vmatpush1.xpose.msra.mxu0 0.0
  %4515 = vmatprep.subr.mxu0 0.0
  %4516 = vmatpush1.xpose.msra.mxu0 0.0
  %4517 = vmatprep.subr.mxu0 0.0
  %4518 = vmatpush1.xpose.msra.mxu0 0.0
  %4519 = vmatprep.subr.mxu0 0.0
  %4520 = vmatpush1.xpose.msra.mxu0 0.0
  %4521 = vmatprep.subr.mxu0 0.0
  %4522 = vmatpush1.xpose.msra.mxu0 0.0
  %4523 = vmatprep.subr.mxu0 0.0
  %4524 = vmatpush1.xpose.msra.mxu0 0.0
  %4525 = vmatprep.subr.mxu0 0.0
  %4526 = vmatpush1.xpose.msra.mxu0 0.0
  %4527 = vmatprep.subr.mxu0 0.0
  %4528 = vmatpush1.xpose.msra.mxu0 0.0
  %4529 = vmatprep.subr.mxu0 0.0
  %4530 = vmatpush1.xpose.msra.mxu0 0.0
  %4531 = vmatprep.subr.mxu0 0.0
  %4532 = vmatpush1.xpose.msra.mxu0 0.0
  %4533 = vmatprep.subr.mxu0 0.0
  %4534 = vmatpush1.xpose.msra.mxu0 0.0
  %4535 = vmatprep.mubr.f32.mxu0 0.0
  %4536 = vmatmul.mubr.f32.gmra.mrb[0].mxu0 %v4465
  %v4537 = vpop.f32.mrb[0].mxu0
  %v4538 = vadd.f32 %v54, %v4537
  %v4539 = vpop.f32.mrb[0].mxu0
  %4540 = vmatprep.mubr.f32.mxu0 0.0
  %4541 = vmatmul.mubr.f32.gmra.mrb[0].mxu0 %v4467
  %v4542 = vpop.f32.mrb[0].mxu0
  %v4543 = vadd.f32 %v55, %v4542
  %v4544 = vpop.f32.mrb[0].mxu0
  %4545 = vdwg.mxu0
  %v4546 = vsel %vm3117, %v4538, -inf
  %4547 = vmax.xlane.f32.xlu0 %v4546
  %v4548 = vpop.xlane.xlu0 %4547
  %v4549 = vsel %vm4355, %v4543, -inf
  %4550 = vmax.xlane.f32.xlu0 %v4549
  %v4551 = vpop.xlane.xlu0 %4550
  %v4552 = vsub.f32 %v4538, %v4548
  %v4553 = vsub.f32 %v4543, %v4551
  %v4554 = vmul.f32 %v4552, 1.442695
  %v4555 = vpow.pop %v4554
  %v4556 = vmul.f32 %v4553, 1.442695
  %v4557 = vpow.pop %v4556
  %v4558 = vsel %vm3117, %v4555, 0.0
  %4559 = vadd.xlane.f32.xlu0 %v4558
  %v4560 = vpop.xlane.xlu0 %4559
  %v4561 = vsel %vm4355, %v4557, 0.0
  %4562 = vadd.xlane.f32.xlu0 %v4561
  %v4563 = vpop.xlane.xlu0 %4562
  %v4564 = vrcp.pop %v4560
  %v4565 = vrcp.pop %v4563
  %v4566 = vmul.f32 %v4555, %v4564
  %v4567 = vmul.f32 %v4557, %v4565
  %4568 = vrot.lane.b32.xlu0 %v4265, 88
  %v4569 = vpop.permute.xlu0 %4568
  %v4572 = vsel %vm3117, %v4566, 0
  %v4575 = vsel %vm3117, %v4567, 0
  %4577 = vmatprep.subr.mxu0 0.0
  %4578 = vmatpush1.msra.mxu0 %v4569
  %4579 = vmatprep.subr.mxu0 0.0
  %4580 = vmatpush1.msra.mxu0 0.0
  %4581 = vmatprep.subr.mxu0 0.0
  %4582 = vmatpush1.msra.mxu0 0.0
  %4583 = vmatprep.subr.mxu0 0.0
  %4584 = vmatpush1.msra.mxu0 0.0
  %4585 = vmatprep.subr.mxu0 0.0
  %4586 = vmatpush1.msra.mxu0 0.0
  %4587 = vmatprep.subr.mxu0 0.0
  %4588 = vmatpush1.msra.mxu0 0.0
  %4589 = vmatprep.subr.mxu0 0.0
  %4590 = vmatpush1.msra.mxu0 0.0
  %4591 = vmatprep.subr.mxu0 0.0
  %4592 = vmatpush1.msra.mxu0 0.0
  %4593 = vmatprep.subr.mxu0 0.0
  %4594 = vmatpush1.msra.mxu0 0.0
  %4595 = vmatprep.subr.mxu0 0.0
  %4596 = vmatpush1.msra.mxu0 0.0
  %4597 = vmatprep.subr.mxu0 0.0
  %4598 = vmatpush1.msra.mxu0 0.0
  %4599 = vmatprep.subr.mxu0 0.0
  %4600 = vmatpush1.msra.mxu0 0.0
  %4601 = vmatprep.subr.mxu0 0.0
  %4602 = vmatpush1.msra.mxu0 0.0
  %4603 = vmatprep.subr.mxu0 0.0
  %4604 = vmatpush1.msra.mxu0 0.0
  %4605 = vmatprep.subr.mxu0 0.0
  %4606 = vmatpush1.msra.mxu0 0.0
  %4607 = vmatprep.subr.mxu0 0.0
  %4608 = vmatpush1.msra.mxu0 0.0
  %4609 = vmatprep.subr.mxu0 0.0
  %4610 = vmatpush1.msra.mxu0 0.0
  %4611 = vmatprep.subr.mxu0 0.0
  %4612 = vmatpush1.msra.mxu0 0.0
  %4613 = vmatprep.subr.mxu0 0.0
  %4614 = vmatpush1.msra.mxu0 0.0
  %4615 = vmatprep.subr.mxu0 0.0
  %4616 = vmatpush1.msra.mxu0 0.0
  %4617 = vmatprep.subr.mxu0 0.0
  %4618 = vmatpush1.msra.mxu0 0.0
  %4619 = vmatprep.subr.mxu0 0.0
  %4620 = vmatpush1.msra.mxu0 0.0
  %4621 = vmatprep.subr.mxu0 0.0
  %4622 = vmatpush1.msra.mxu0 0.0
  %4623 = vmatprep.subr.mxu0 0.0
  %4624 = vmatpush1.msra.mxu0 0.0
  %4625 = vmatprep.subr.mxu0 0.0
  %4626 = vmatpush1.msra.mxu0 0.0
  %4627 = vmatprep.subr.mxu0 0.0
  %4628 = vmatpush1.msra.mxu0 0.0
  %4629 = vmatprep.subr.mxu0 0.0
  %4630 = vmatpush1.msra.mxu0 0.0
  %4631 = vmatprep.subr.mxu0 0.0
  %4632 = vmatpush1.msra.mxu0 0.0
  %4633 = vmatprep.subr.mxu0 0.0
  %4634 = vmatpush1.msra.mxu0 0.0
  %4635 = vmatprep.subr.mxu0 0.0
  %4636 = vmatpush1.msra.mxu0 0.0
  %4637 = vmatprep.subr.mxu0 0.0
  %4638 = vmatpush1.msra.mxu0 0.0
  %4639 = vmatprep.subr.mxu0 0.0
  %4640 = vmatpush1.msra.mxu0 0.0
  %4641 = vmatprep.mubr.f32.mxu0 0.0
  %4642 = vmatmul.mubr.f32.gmra.mrb[0].mxu0 %v4572
  %v4643 = vpop.f32.mrb[0].mxu0
  %v4644 = vadd.f32 0.0, %v4643
  %v4645 = vpop.f32.mrb[0].mxu0
  %4646 = vmatprep.mubr.f32.mxu0 0.0
  %4647 = vmatmul.mubr.f32.gmra.mrb[0].mxu0 %v4575
  %v4648 = vpop.f32.mrb[0].mxu0
  %v4649 = vadd.f32 0.0, %v4648
  %v4650 = vpop.f32.mrb[0].mxu0
  %4651 = vdwg.mxu0
  %4652 = vrot.lane.b32.xlu0 %v4167, 112
  %v4653 = vpop.permute.xlu0 %4652
  %4654 = vrot.lane.b32.xlu0 %v4172, 112
  %v4655 = vpop.permute.xlu0 %4654
  %4656 = vrot.lane.b32.xlu0 %v4265, 112
  %v4657 = vpop.permute.xlu0 %4656
  %v4658 = vsel %vm3117, %v4653, 0
  %v4660 = vsel %vm3117, %v4655, 0
  %v4662 = vsel %vm3117, %v4657, 0
  %4664 = vmatprep.subr.mxu0 0.0
  %4665 = vmatpush1.xpose.msra.mxu0 %v4662
  %4666 = vmatprep.subr.mxu0 0.0
  %4667 = vmatpush1.xpose.msra.mxu0 0.0
  %4668 = vmatprep.subr.mxu0 0.0
  %4669 = vmatpush1.xpose.msra.mxu0 0.0
  %4670 = vmatprep.subr.mxu0 0.0
  %4671 = vmatpush1.xpose.msra.mxu0 0.0
  %4672 = vmatprep.subr.mxu0 0.0
  %4673 = vmatpush1.xpose.msra.mxu0 0.0
  %4674 = vmatprep.subr.mxu0 0.0
  %4675 = vmatpush1.xpose.msra.mxu0 0.0
  %4676 = vmatprep.subr.mxu0 0.0
  %4677 = vmatpush1.xpose.msra.mxu0 0.0
  %4678 = vmatprep.subr.mxu0 0.0
  %4679 = vmatpush1.xpose.msra.mxu0 0.0
  %4680 = vmatprep.subr.mxu0 0.0
  %4681 = vmatpush1.xpose.msra.mxu0 0.0
  %4682 = vmatprep.subr.mxu0 0.0
  %4683 = vmatpush1.xpose.msra.mxu0 0.0
  %4684 = vmatprep.subr.mxu0 0.0
  %4685 = vmatpush1.xpose.msra.mxu0 0.0
  %4686 = vmatprep.subr.mxu0 0.0
  %4687 = vmatpush1.xpose.msra.mxu0 0.0
  %4688 = vmatprep.subr.mxu0 0.0
  %4689 = vmatpush1.xpose.msra.mxu0 0.0
  %4690 = vmatprep.subr.mxu0 0.0
  %4691 = vmatpush1.xpose.msra.mxu0 0.0
  %4692 = vmatprep.subr.mxu0 0.0
  %4693 = vmatpush1.xpose.msra.mxu0 0.0
  %4694 = vmatprep.subr.mxu0 0.0
  %4695 = vmatpush1.xpose.msra.mxu0 0.0
  %4696 = vmatprep.subr.mxu0 0.0
  %4697 = vmatpush1.xpose.msra.mxu0 0.0
  %4698 = vmatprep.subr.mxu0 0.0
  %4699 = vmatpush1.xpose.msra.mxu0 0.0
  %4700 = vmatprep.subr.mxu0 0.0
  %4701 = vmatpush1.xpose.msra.mxu0 0.0
  %4702 = vmatprep.subr.mxu0 0.0
  %4703 = vmatpush1.xpose.msra.mxu0 0.0
  %4704 = vmatprep.subr.mxu0 0.0
  %4705 = vmatpush1.xpose.msra.mxu0 0.0
  %4706 = vmatprep.subr.mxu0 0.0
  %4707 = vmatpush1.xpose.msra.mxu0 0.0
  %4708 = vmatprep.subr.mxu0 0.0
  %4709 = vmatpush1.xpose.msra.mxu0 0.0
  %4710 = vmatprep.subr.mxu0 0.0
  %4711 = vmatpush1.xpose.msra.mxu0 0.0
  %4712 = vmatprep.subr.mxu0 0.0
  %4713 = vmatpush1.xpose.msra.mxu0 0.0
  %4714 = vmatprep.subr.mxu0 0.0
  %4715 = vmatpush1.xpose.msra.mxu0 0.0
  %4716 = vmatprep.subr.mxu0 0.0
  %4717 = vmatpush1.xpose.msra.mxu0 0.0
  %4718 = vmatprep.subr.mxu0 0.0
  %4719 = vmatpush1.xpose.msra.mxu0 0.0
  %4720 = vmatprep.subr.mxu0 0.0
  %4721 = vmatpush1.xpose.msra.mxu0 0.0
  %4722 = vmatprep.subr.mxu0 0.0
  %4723 = vmatpush1.xpose.msra.mxu0 0.0
  %4724 = vmatprep.subr.mxu0 0.0
  %4725 = vmatpush1.xpose.msra.mxu0 0.0
  %4726 = vmatprep.subr.mxu0 0.0
  %4727 = vmatpush1.xpose.msra.mxu0 0.0
  %4728 = vmatprep.mubr.f32.mxu0 0.0
  %4729 = vmatmul.mubr.f32.gmra.mrb[0].mxu0 %v4658
  %v4730 = vpop.f32.mrb[0].mxu0
  %v4731 = vadd.f32 %v54, %v4730
  %v4732 = vpop.f32.mrb[0].mxu0
  %4733 = vmatprep.mubr.f32.mxu0 0.0
  %4734 = vmatmul.mubr.f32.gmra.mrb[0].mxu0 %v4660
  %v4735 = vpop.f32.mrb[0].mxu0
  %v4736 = vadd.f32 %v55, %v4735
  %v4737 = vpop.f32.mrb[0].mxu0
  %4738 = vdwg.mxu0
  %v4739 = vsel %vm3117, %v4731, -inf
  %4740 = vmax.xlane.f32.xlu0 %v4739
  %v4741 = vpop.xlane.xlu0 %4740
  %v4742 = vsel %vm4355, %v4736, -inf
  %4743 = vmax.xlane.f32.xlu0 %v4742
  %v4744 = vpop.xlane.xlu0 %4743
  %v4745 = vsub.f32 %v4731, %v4741
  %v4746 = vsub.f32 %v4736, %v4744
  %v4747 = vmul.f32 %v4745, 1.442695
  %v4748 = vpow.pop %v4747
  %v4749 = vmul.f32 %v4746, 1.442695
  %v4750 = vpow.pop %v4749
  %v4751 = vsel %vm3117, %v4748, 0.0
  %4752 = vadd.xlane.f32.xlu0 %v4751
  %v4753 = vpop.xlane.xlu0 %4752
  %v4754 = vsel %vm4355, %v4750, 0.0
  %4755 = vadd.xlane.f32.xlu0 %v4754
  %v4756 = vpop.xlane.xlu0 %4755
  %v4757 = vrcp.pop %v4753
  %v4758 = vrcp.pop %v4756
  %v4759 = vmul.f32 %v4748, %v4757
  %v4760 = vmul.f32 %v4750, %v4758
  %4761 = vrot.lane.b32.xlu0 %v4265, 80
  %v4762 = vpop.permute.xlu0 %4761
  %v4765 = vsel %vm3117, %v4759, 0
  %v4768 = vsel %vm3117, %v4760, 0
  %4770 = vmatprep.subr.mxu0 0.0
  %4771 = vmatpush1.msra.mxu0 %v4762
  %4772 = vmatprep.subr.mxu0 0.0
  %4773 = vmatpush1.msra.mxu0 0.0
  %4774 = vmatprep.subr.mxu0 0.0
  %4775 = vmatpush1.msra.mxu0 0.0
  %4776 = vmatprep.subr.mxu0 0.0
  %4777 = vmatpush1.msra.mxu0 0.0
  %4778 = vmatprep.subr.mxu0 0.0
  %4779 = vmatpush1.msra.mxu0 0.0
  %4780 = vmatprep.subr.mxu0 0.0
  %4781 = vmatpush1.msra.mxu0 0.0
  %4782 = vmatprep.subr.mxu0 0.0
  %4783 = vmatpush1.msra.mxu0 0.0
  %4784 = vmatprep.subr.mxu0 0.0
  %4785 = vmatpush1.msra.mxu0 0.0
  %4786 = vmatprep.subr.mxu0 0.0
  %4787 = vmatpush1.msra.mxu0 0.0
  %4788 = vmatprep.subr.mxu0 0.0
  %4789 = vmatpush1.msra.mxu0 0.0
  %4790 = vmatprep.subr.mxu0 0.0
  %4791 = vmatpush1.msra.mxu0 0.0
  %4792 = vmatprep.subr.mxu0 0.0
  %4793 = vmatpush1.msra.mxu0 0.0
  %4794 = vmatprep.subr.mxu0 0.0
  %4795 = vmatpush1.msra.mxu0 0.0
  %4796 = vmatprep.subr.mxu0 0.0
  %4797 = vmatpush1.msra.mxu0 0.0
  %4798 = vmatprep.subr.mxu0 0.0
  %4799 = vmatpush1.msra.mxu0 0.0
  %4800 = vmatprep.subr.mxu0 0.0
  %4801 = vmatpush1.msra.mxu0 0.0
  %4802 = vmatprep.subr.mxu0 0.0
  %4803 = vmatpush1.msra.mxu0 0.0
  %4804 = vmatprep.subr.mxu0 0.0
  %4805 = vmatpush1.msra.mxu0 0.0
  %4806 = vmatprep.subr.mxu0 0.0
  %4807 = vmatpush1.msra.mxu0 0.0
  %4808 = vmatprep.subr.mxu0 0.0
  %4809 = vmatpush1.msra.mxu0 0.0
  %4810 = vmatprep.subr.mxu0 0.0
  %4811 = vmatpush1.msra.mxu0 0.0
  %4812 = vmatprep.subr.mxu0 0.0
  %4813 = vmatpush1.msra.mxu0 0.0
  %4814 = vmatprep.subr.mxu0 0.0
  %4815 = vmatpush1.msra.mxu0 0.0
  %4816 = vmatprep.subr.mxu0 0.0
  %4817 = vmatpush1.msra.mxu0 0.0
  %4818 = vmatprep.subr.mxu0 0.0
  %4819 = vmatpush1.msra.mxu0 0.0
  %4820 = vmatprep.subr.mxu0 0.0
  %4821 = vmatpush1.msra.mxu0 0.0
  %4822 = vmatprep.subr.mxu0 0.0
  %4823 = vmatpush1.msra.mxu0 0.0
  %4824 = vmatprep.subr.mxu0 0.0
  %4825 = vmatpush1.msra.mxu0 0.0
  %4826 = vmatprep.subr.mxu0 0.0
  %4827 = vmatpush1.msra.mxu0 0.0
  %4828 = vmatprep.subr.mxu0 0.0
  %4829 = vmatpush1.msra.mxu0 0.0
  %4830 = vmatprep.subr.mxu0 0.0
  %4831 = vmatpush1.msra.mxu0 0.0
  %4832 = vmatprep.subr.mxu0 0.0
  %4833 = vmatpush1.msra.mxu0 0.0
  %4834 = vmatprep.mubr.f32.mxu0 0.0
  %4835 = vmatmul.mubr.f32.gmra.mrb[0].mxu0 %v4765
  %v4836 = vpop.f32.mrb[0].mxu0
  %v4837 = vadd.f32 0.0, %v4836
  %v4838 = vpop.f32.mrb[0].mxu0
  %4839 = vmatprep.mubr.f32.mxu0 0.0
  %4840 = vmatmul.mubr.f32.gmra.mrb[0].mxu0 %v4768
  %v4841 = vpop.f32.mrb[0].mxu0
  %v4842 = vadd.f32 0.0, %v4841
  %v4843 = vpop.f32.mrb[0].mxu0
  %4844 = vdwg.mxu0
  %4845 = vrot.lane.b32.xlu0 %v4167, 104
  %v4846 = vpop.permute.xlu0 %4845
  %4847 = vrot.lane.b32.xlu0 %v4172, 104
  %v4848 = vpop.permute.xlu0 %4847
  %4849 = vrot.lane.b32.xlu0 %v4265, 104
  %v4850 = vpop.permute.xlu0 %4849
  %v4851 = vsel %vm3117, %v4846, 0
  %v4853 = vsel %vm3117, %v4848, 0
  %v4855 = vsel %vm3117, %v4850, 0
  %4857 = vmatprep.subr.mxu0 0.0
  %4858 = vmatpush1.xpose.msra.mxu0 %v4855
  %4859 = vmatprep.subr.mxu0 0.0
  %4860 = vmatpush1.xpose.msra.mxu0 0.0
  %4861 = vmatprep.subr.mxu0 0.0
  %4862 = vmatpush1.xpose.msra.mxu0 0.0
  %4863 = vmatprep.subr.mxu0 0.0
  %4864 = vmatpush1.xpose.msra.mxu0 0.0
  %4865 = vmatprep.subr.mxu0 0.0
  %4866 = vmatpush1.xpose.msra.mxu0 0.0
  %4867 = vmatprep.subr.mxu0 0.0
  %4868 = vmatpush1.xpose.msra.mxu0 0.0
  %4869 = vmatprep.subr.mxu0 0.0
  %4870 = vmatpush1.xpose.msra.mxu0 0.0
  %4871 = vmatprep.subr.mxu0 0.0
  %4872 = vmatpush1.xpose.msra.mxu0 0.0
  %4873 = vmatprep.subr.mxu0 0.0
  %4874 = vmatpush1.xpose.msra.mxu0 0.0
  %4875 = vmatprep.subr.mxu0 0.0
  %4876 = vmatpush1.xpose.msra.mxu0 0.0
  %4877 = vmatprep.subr.mxu0 0.0
  %4878 = vmatpush1.xpose.msra.mxu0 0.0
  %4879 = vmatprep.subr.mxu0 0.0
  %4880 = vmatpush1.xpose.msra.mxu0 0.0
  %4881 = vmatprep.subr.mxu0 0.0
  %4882 = vmatpush1.xpose.msra.mxu0 0.0
  %4883 = vmatprep.subr.mxu0 0.0
  %4884 = vmatpush1.xpose.msra.mxu0 0.0
  %4885 = vmatprep.subr.mxu0 0.0
  %4886 = vmatpush1.xpose.msra.mxu0 0.0
  %4887 = vmatprep.subr.mxu0 0.0
  %4888 = vmatpush1.xpose.msra.mxu0 0.0
  %4889 = vmatprep.subr.mxu0 0.0
  %4890 = vmatpush1.xpose.msra.mxu0 0.0
  %4891 = vmatprep.subr.mxu0 0.0
  %4892 = vmatpush1.xpose.msra.mxu0 0.0
  %4893 = vmatprep.subr.mxu0 0.0
  %4894 = vmatpush1.xpose.msra.mxu0 0.0
  %4895 = vmatprep.subr.mxu0 0.0
  %4896 = vmatpush1.xpose.msra.mxu0 0.0
  %4897 = vmatprep.subr.mxu0 0.0
  %4898 = vmatpush1.xpose.msra.mxu0 0.0
  %4899 = vmatprep.subr.mxu0 0.0
  %4900 = vmatpush1.xpose.msra.mxu0 0.0
  %4901 = vmatprep.subr.mxu0 0.0
  %4902 = vmatpush1.xpose.msra.mxu0 0.0
  %4903 = vmatprep.subr.mxu0 0.0
  %4904 = vmatpush1.xpose.msra.mxu0 0.0
  %4905 = vmatprep.subr.mxu0 0.0
  %4906 = vmatpush1.xpose.msra.mxu0 0.0
  %4907 = vmatprep.subr.mxu0 0.0
  %4908 = vmatpush1.xpose.msra.mxu0 0.0
  %4909 = vmatprep.subr.mxu0 0.0
  %4910 = vmatpush1.xpose.msra.mxu0 0.0
  %4911 = vmatprep.subr.mxu0 0.0
  %4912 = vmatpush1.xpose.msra.mxu0 0.0
  %4913 = vmatprep.subr.mxu0 0.0
  %4914 = vmatpush1.xpose.msra.mxu0 0.0
  %4915 = vmatprep.subr.mxu0 0.0
  %4916 = vmatpush1.xpose.msra.mxu0 0.0
  %4917 = vmatprep.subr.mxu0 0.0
  %4918 = vmatpush1.xpose.msra.mxu0 0.0
  %4919 = vmatprep.subr.mxu0 0.0
  %4920 = vmatpush1.xpose.msra.mxu0 0.0
  %4921 = vmatprep.mubr.f32.mxu0 0.0
  %4922 = vmatmul.mubr.f32.gmra.mrb[0].mxu0 %v4851
  %v4923 = vpop.f32.mrb[0].mxu0
  %v4924 = vadd.f32 %v54, %v4923
  %v4925 = vpop.f32.mrb[0].mxu0
  %4926 = vmatprep.mubr.f32.mxu0 0.0
  %4927 = vmatmul.mubr.f32.gmra.mrb[0].mxu0 %v4853
  %v4928 = vpop.f32.mrb[0].mxu0
  %v4929 = vadd.f32 %v55, %v4928
  %v4930 = vpop.f32.mrb[0].mxu0
  %4931 = vdwg.mxu0
  %v4932 = vsel %vm3117, %v4924, -inf
  %4933 = vmax.xlane.f32.xlu0 %v4932
  %v4934 = vpop.xlane.xlu0 %4933
  %v4935 = vsel %vm4355, %v4929, -inf
  %4936 = vmax.xlane.f32.xlu0 %v4935
  %v4937 = vpop.xlane.xlu0 %4936
  %v4938 = vsub.f32 %v4924, %v4934
  %v4939 = vsub.f32 %v4929, %v4937
  %v4940 = vmul.f32 %v4938, 1.442695
  %v4941 = vpow.pop %v4940
  %v4942 = vmul.f32 %v4939, 1.442695
  %v4943 = vpow.pop %v4942
  %v4944 = vsel %vm3117, %v4941, 0.0
  %4945 = vadd.xlane.f32.xlu0 %v4944
  %v4946 = vpop.xlane.xlu0 %4945
  %v4947 = vsel %vm4355, %v4943, 0.0
  %4948 = vadd.xlane.f32.xlu0 %v4947
  %v4949 = vpop.xlane.xlu0 %4948
  %v4950 = vrcp.pop %v4946
  %v4951 = vrcp.pop %v4949
  %v4952 = vmul.f32 %v4941, %v4950
  %v4953 = vmul.f32 %v4943, %v4951
  %4954 = vrot.lane.b32.xlu0 %v4265, 72
  %v4955 = vpop.permute.xlu0 %4954
  %v4958 = vsel %vm3117, %v4952, 0
  %v4961 = vsel %vm3117, %v4953, 0
  %4963 = vmatprep.subr.mxu0 0.0
  %4964 = vmatpush1.msra.mxu0 %v4955
  %4965 = vmatprep.subr.mxu0 0.0
  %4966 = vmatpush1.msra.mxu0 0.0
  %4967 = vmatprep.subr.mxu0 0.0
  %4968 = vmatpush1.msra.mxu0 0.0
  %4969 = vmatprep.subr.mxu0 0.0
  %4970 = vmatpush1.msra.mxu0 0.0
  %4971 = vmatprep.subr.mxu0 0.0
  %4972 = vmatpush1.msra.mxu0 0.0
  %4973 = vmatprep.subr.mxu0 0.0
  %4974 = vmatpush1.msra.mxu0 0.0
  %4975 = vmatprep.subr.mxu0 0.0
  %4976 = vmatpush1.msra.mxu0 0.0
  %4977 = vmatprep.subr.mxu0 0.0
  %4978 = vmatpush1.msra.mxu0 0.0
  %4979 = vmatprep.subr.mxu0 0.0
  %4980 = vmatpush1.msra.mxu0 0.0
  %4981 = vmatprep.subr.mxu0 0.0
  %4982 = vmatpush1.msra.mxu0 0.0
  %4983 = vmatprep.subr.mxu0 0.0
  %4984 = vmatpush1.msra.mxu0 0.0
  %4985 = vmatprep.subr.mxu0 0.0
  %4986 = vmatpush1.msra.mxu0 0.0
  %4987 = vmatprep.subr.mxu0 0.0
  %4988 = vmatpush1.msra.mxu0 0.0
  %4989 = vmatprep.subr.mxu0 0.0
  %4990 = vmatpush1.msra.mxu0 0.0
  %4991 = vmatprep.subr.mxu0 0.0
  %4992 = vmatpush1.msra.mxu0 0.0
  %4993 = vmatprep.subr.mxu0 0.0
  %4994 = vmatpush1.msra.mxu0 0.0
  %4995 = vmatprep.subr.mxu0 0.0
  %4996 = vmatpush1.msra.mxu0 0.0
  %4997 = vmatprep.subr.mxu0 0.0
  %4998 = vmatpush1.msra.mxu0 0.0
  %4999 = vmatprep.subr.mxu0 0.0
  %5000 = vmatpush1.msra.mxu0 0.0
  %5001 = vmatprep.subr.mxu0 0.0
  %5002 = vmatpush1.msra.mxu0 0.0
  %5003 = vmatprep.subr.mxu0 0.0
  %5004 = vmatpush1.msra.mxu0 0.0
  %5005 = vmatprep.subr.mxu0 0.0
  %5006 = vmatpush1.msra.mxu0 0.0
  %5007 = vmatprep.subr.mxu0 0.0
  %5008 = vmatpush1.msra.mxu0 0.0
  %5009 = vmatprep.subr.mxu0 0.0
  %5010 = vmatpush1.msra.mxu0 0.0
  %5011 = vmatprep.subr.mxu0 0.0
  %5012 = vmatpush1.msra.mxu0 0.0
  %5013 = vmatprep.subr.mxu0 0.0
  %5014 = vmatpush1.msra.mxu0 0.0
  %5015 = vmatprep.subr.mxu0 0.0
  %5016 = vmatpush1.msra.mxu0 0.0
  %5017 = vmatprep.subr.mxu0 0.0
  %5018 = vmatpush1.msra.mxu0 0.0
  %5019 = vmatprep.subr.mxu0 0.0
  %5020 = vmatpush1.msra.mxu0 0.0
  %5021 = vmatprep.subr.mxu0 0.0
  %5022 = vmatpush1.msra.mxu0 0.0
  %5023 = vmatprep.subr.mxu0 0.0
  %5024 = vmatpush1.msra.mxu0 0.0
  %5025 = vmatprep.subr.mxu0 0.0
  %5026 = vmatpush1.msra.mxu0 0.0
  %5027 = vmatprep.mubr.f32.mxu0 0.0
  %5028 = vmatmul.mubr.f32.gmra.mrb[0].mxu0 %v4958
  %v5029 = vpop.f32.mrb[0].mxu0
  %v5030 = vadd.f32 0.0, %v5029
  %v5031 = vpop.f32.mrb[0].mxu0
  %5032 = vmatprep.mubr.f32.mxu0 0.0
  %5033 = vmatmul.mubr.f32.gmra.mrb[0].mxu0 %v4961
  %v5034 = vpop.f32.mrb[0].mxu0
  %v5035 = vadd.f32 0.0, %v5034
  %v5036 = vpop.f32.mrb[0].mxu0
  %5037 = vdwg.mxu0
  %5040 = vrot.lane.b32.xlu0 %v4644, 8
  %v5041 = vpop.permute.xlu0 %5040
  %5042 = vrot.lane.b32.xlu0 %v4649, 8
  %v5043 = vpop.permute.xlu0 %5042
  %5048 = vrot.lane.b32.xlu0 %v4837, 16
  %v5049 = vpop.permute.xlu0 %5048
  %5050 = vrot.lane.b32.xlu0 %v4842, 16
  %v5051 = vpop.permute.xlu0 %5050
  %5056 = vrot.lane.b32.xlu0 %v5030, 24
  %v5057 = vpop.permute.xlu0 %5056
  %5058 = vrot.lane.b32.xlu0 %v5035, 24
  %v5059 = vpop.permute.xlu0 %5058
  %v5062 = vsel %vm3117, %v4451, %v5041
  %v5063 = vsel %vm3117, %v4456, %v5043
  %v5064 = vsel %vm341, %v5062, %v5049
  %v5065 = vsel %vm341, %v5063, %v5051
  %v5066 = vsel %vm3944, %v5064, %v5057
  %v5067 = vsel %vm3944, %v5065, %v5059
  %v5068 = vlaneseq
  %v5069 = vshrl.u32 %v5068, 7
  %v5070 = vsub.s32 6, %v5069
  %v5071 = vrot.slane %v3024, %v5070
  %5072 = vrot.lane.b32.xlu0 %v3013, 32
  %v5073 = vpop.permute.xlu0 %5072
  %5074 = vrot.lane.b32.xlu0 %v3016, 32
  %v5075 = vpop.permute.xlu0 %5074
  %5076 = vrot.lane.b32.xlu0 %v3019, 32
  %v5077 = vpop.permute.xlu0 %5076
  %5078 = vrot.lane.b32.xlu0 %v3022, 32
  %v5079 = vpop.permute.xlu0 %5078
  %v5085 = vsel %vm1164, %v5066, 0
  %v5088 = vsel %vm1164, %v5067, 0
  %5090 = vmatprep.subr.mxu0 0.0
  %5091 = vmatpush1.msra.mxu0 %v5073
  %5092 = vmatprep.subr.mxu0 0.0
  %5093 = vmatpush1.msra.mxu0 %v5075
  %5094 = vmatprep.subr.mxu0 0.0
  %5095 = vmatpush1.msra.mxu0 %v5077
  %5096 = vmatprep.subr.mxu0 0.0
  %5097 = vmatpush1.msra.mxu0 %v5079
  %5098 = vmatprep.subr.mxu0 0.0
  %5099 = vmatpush1.msra.mxu0 0.0
  %5100 = vmatprep.subr.mxu0 0.0
  %5101 = vmatpush1.msra.mxu0 0.0
  %5102 = vmatprep.subr.mxu0 0.0
  %5103 = vmatpush1.msra.mxu0 0.0
  %5104 = vmatprep.subr.mxu0 0.0
  %5105 = vmatpush1.msra.mxu0 0.0
  %5106 = vmatprep.subr.mxu0 0.0
  %5107 = vmatpush1.msra.mxu0 0.0
  %5108 = vmatprep.subr.mxu0 0.0
  %5109 = vmatpush1.msra.mxu0 0.0
  %5110 = vmatprep.subr.mxu0 0.0
  %5111 = vmatpush1.msra.mxu0 0.0
  %5112 = vmatprep.subr.mxu0 0.0
  %5113 = vmatpush1.msra.mxu0 0.0
  %5114 = vmatprep.subr.mxu0 0.0
  %5115 = vmatpush1.msra.mxu0 0.0
  %5116 = vmatprep.subr.mxu0 0.0
  %5117 = vmatpush1.msra.mxu0 0.0
  %5118 = vmatprep.subr.mxu0 0.0
  %5119 = vmatpush1.msra.mxu0 0.0
  %5120 = vmatprep.subr.mxu0 0.0
  %5121 = vmatpush1.msra.mxu0 0.0
  %5122 = vmatprep.subr.mxu0 0.0
  %5123 = vmatpush1.msra.mxu0 0.0
  %5124 = vmatprep.subr.mxu0 0.0
  %5125 = vmatpush1.msra.mxu0 0.0
  %5126 = vmatprep.subr.mxu0 0.0
  %5127 = vmatpush1.msra.mxu0 0.0
  %5128 = vmatprep.subr.mxu0 0.0
  %5129 = vmatpush1.msra.mxu0 0.0
  %5130 = vmatprep.subr.mxu0 0.0
  %5131 = vmatpush1.msra.mxu0 0.0
  %5132 = vmatprep.subr.mxu0 0.0
  %5133 = vmatpush1.msra.mxu0 0.0
  %5134 = vmatprep.subr.mxu0 0.0
  %5135 = vmatpush1.msra.mxu0 0.0
  %5136 = vmatprep.subr.mxu0 0.0
  %5137 = vmatpush1.msra.mxu0 0.0
  %5138 = vmatprep.subr.mxu0 0.0
  %5139 = vmatpush1.msra.mxu0 0.0
  %5140 = vmatprep.subr.mxu0 0.0
  %5141 = vmatpush1.msra.mxu0 0.0
  %5142 = vmatprep.subr.mxu0 0.0
  %5143 = vmatpush1.msra.mxu0 0.0
  %5144 = vmatprep.subr.mxu0 0.0
  %5145 = vmatpush1.msra.mxu0 0.0
  %5146 = vmatprep.subr.mxu0 0.0
  %5147 = vmatpush1.msra.mxu0 0.0
  %5148 = vmatprep.subr.mxu0 0.0
  %5149 = vmatpush1.msra.mxu0 0.0
  %5150 = vmatprep.subr.mxu0 0.0
  %5151 = vmatpush1.msra.mxu0 0.0
  %5152 = vmatprep.subr.mxu0 0.0
  %5153 = vmatpush1.msra.mxu0 0.0
  %5154 = vmatprep.mubr.f32.mxu0 0.0
  %5155 = vmatmul.mubr.f32.gmra.mrb[0].mxu0 %v5085
  %v5156 = vpop.f32.mrb[0].mxu0
  %v5157 = vadd.f32 %v5071, %v5156
  %v5158 = vpop.f32.mrb[0].mxu0
  %5159 = vmatprep.mubr.f32.mxu0 0.0
  %5160 = vmatmul.mubr.f32.gmra.mrb[0].mxu0 %v5088
  %v5161 = vpop.f32.mrb[0].mxu0
  %v5162 = vadd.f32 %v5071, %v5161
  %v5163 = vpop.f32.mrb[0].mxu0
  %5164 = vdwg.mxu0
  %v5165 = vadd.f32 %v4088, %v5157
  %v5166 = vadd.f32 %v4089, %v5162
  %v5167 = vsel %vm1164, %v5165, 0.0
  %5168 = vadd.xlane.f32.xlu0 %v5167
  %v5169 = vpop.xlane.xlu0 %5168
  %v5170 = vsel %vm4053, %v5166, 0.0
  %5171 = vadd.xlane.f32.xlu0 %v5170
  %v5172 = vpop.xlane.xlu0 %5171
  %v5173 = vmul.f32 %v5169, %v4057
  %v5174 = vmul.f32 %v5172, %v4057
  %v5175 = vsub.f32 %v5165, %v5173
  %v5176 = vsub.f32 %v5166, %v5174
  %v5177 = vmul.f32 %v5175, %v5175
  %v5178 = vmul.f32 %v5176, %v5176
  %v5179 = vsel %vm1164, %v5177, 0.0
  %5180 = vadd.xlane.f32.xlu0 %v5179
  %v5181 = vpop.xlane.xlu0 %5180
  %v5182 = vsel %vm4053, %v5178, 0.0
  %5183 = vadd.xlane.f32.xlu0 %v5182
  %v5184 = vpop.xlane.xlu0 %5183
  %v5185 = vmul.f32 %v5181, %v4057
  %v5186 = vmul.f32 %v5184, %v4057
  %v5187 = vadd.f32 %v5185, 1e-05
  %v5188 = vadd.f32 %v5186, 1e-05
  %v5189 = vrsqrt.pop %v5187
  %v5190 = vrsqrt.pop %v5188
  %v5191 = vmul.f32 %v5175, %v5189
  %v5192 = vmul.f32 %v5176, %v5190
  %v5193 = vlaneseq
  %v5194 = vshrl.u32 %v5193, 7
  %v5195 = vsub.s32 7, %v5194
  %v5196 = vrot.slane %v3024, %v5195
  %v5197 = vmul.f32 %v5191, %v5196
  %v5198 = vmul.f32 %v5192, %v5196
  %v5199 = vlaneseq
  %v5200 = vshrl.u32 %v5199, 7
  %v5201 = vsub.s32 0, %v5200
  %v5202 = vrot.slane %v3025, %v5201
  %v5203 = vadd.f32 %v5197, %v5202
  %v5204 = vadd.f32 %v5198, %v5202
  %v5205 = vlaneseq
  %v5206 = vshrl.u32 %v5205, 7
  %v5207 = vsub.s32 1, %v5206
  %v5208 = vrot.slane %v3025, %v5207
  %v5210 = vsel %vm1164, %v5203, 0
  %v5213 = vsel %vm1164, %v5204, 0
  %5215 = vmatprep.subr.mxu0 0.0
  %5216 = vmatpush1.msra.mxu0 %v3014
  %5217 = vmatprep.subr.mxu0 0.0
  %5218 = vmatpush1.msra.mxu0 %v3017
  %5219 = vmatprep.subr.mxu0 0.0
  %5220 = vmatpush1.msra.mxu0 %v3020
  %5221 = vmatprep.subr.mxu0 0.0
  %5222 = vmatpush1.msra.mxu0 %v3023
  %5223 = vmatprep.subr.mxu0 0.0
  %5224 = vmatpush1.msra.mxu0 0.0
  %5225 = vmatprep.subr.mxu0 0.0
  %5226 = vmatpush1.msra.mxu0 0.0
  %5227 = vmatprep.subr.mxu0 0.0
  %5228 = vmatpush1.msra.mxu0 0.0
  %5229 = vmatprep.subr.mxu0 0.0
  %5230 = vmatpush1.msra.mxu0 0.0
  %5231 = vmatprep.subr.mxu0 0.0
  %5232 = vmatpush1.msra.mxu0 0.0
  %5233 = vmatprep.subr.mxu0 0.0
  %5234 = vmatpush1.msra.mxu0 0.0
  %5235 = vmatprep.subr.mxu0 0.0
  %5236 = vmatpush1.msra.mxu0 0.0
  %5237 = vmatprep.subr.mxu0 0.0
  %5238 = vmatpush1.msra.mxu0 0.0
  %5239 = vmatprep.subr.mxu0 0.0
  %5240 = vmatpush1.msra.mxu0 0.0
  %5241 = vmatprep.subr.mxu0 0.0
  %5242 = vmatpush1.msra.mxu0 0.0
  %5243 = vmatprep.subr.mxu0 0.0
  %5244 = vmatpush1.msra.mxu0 0.0
  %5245 = vmatprep.subr.mxu0 0.0
  %5246 = vmatpush1.msra.mxu0 0.0
  %5247 = vmatprep.subr.mxu0 0.0
  %5248 = vmatpush1.msra.mxu0 0.0
  %5249 = vmatprep.subr.mxu0 0.0
  %5250 = vmatpush1.msra.mxu0 0.0
  %5251 = vmatprep.subr.mxu0 0.0
  %5252 = vmatpush1.msra.mxu0 0.0
  %5253 = vmatprep.subr.mxu0 0.0
  %5254 = vmatpush1.msra.mxu0 0.0
  %5255 = vmatprep.subr.mxu0 0.0
  %5256 = vmatpush1.msra.mxu0 0.0
  %5257 = vmatprep.subr.mxu0 0.0
  %5258 = vmatpush1.msra.mxu0 0.0
  %5259 = vmatprep.subr.mxu0 0.0
  %5260 = vmatpush1.msra.mxu0 0.0
  %5261 = vmatprep.subr.mxu0 0.0
  %5262 = vmatpush1.msra.mxu0 0.0
  %5263 = vmatprep.subr.mxu0 0.0
  %5264 = vmatpush1.msra.mxu0 0.0
  %5265 = vmatprep.subr.mxu0 0.0
  %5266 = vmatpush1.msra.mxu0 0.0
  %5267 = vmatprep.subr.mxu0 0.0
  %5268 = vmatpush1.msra.mxu0 0.0
  %5269 = vmatprep.subr.mxu0 0.0
  %5270 = vmatpush1.msra.mxu0 0.0
  %5271 = vmatprep.subr.mxu0 0.0
  %5272 = vmatpush1.msra.mxu0 0.0
  %5273 = vmatprep.subr.mxu0 0.0
  %5274 = vmatpush1.msra.mxu0 0.0
  %5275 = vmatprep.subr.mxu0 0.0
  %5276 = vmatpush1.msra.mxu0 0.0
  %5277 = vmatprep.subr.mxu0 0.0
  %5278 = vmatpush1.msra.mxu0 0.0
  %5279 = vmatprep.mubr.f32.mxu0 0.0
  %5280 = vmatmul.mubr.f32.gmra.mrb[0].mxu0 %v5210
  %v5281 = vpop.f32.mrb[0].mxu0
  %v5282 = vadd.f32 %v5208, %v5281
  %v5283 = vpop.f32.mrb[0].mxu0
  %5284 = vmatprep.mubr.f32.mxu0 0.0
  %5285 = vmatmul.mubr.f32.gmra.mrb[0].mxu0 %v5213
  %v5286 = vpop.f32.mrb[0].mxu0
  %v5287 = vadd.f32 %v5208, %v5286
  %v5288 = vpop.f32.mrb[0].mxu0
  %5289 = vdwg.mxu0
  %v5290 = vmax.f32 %v5282, 0.0
  %v5291 = vmax.f32 %v5287, 0.0
  %v5292 = vld [vmem:[%s12] sm:$0xff]
  %v5293 = vld [vmem:[%s12 + $0x8] sm:$0xff]
  %v5294 = vld [vmem:[%s12 + $0x10] sm:$0xff]
  %v5295 = vld [vmem:[%s12 + $0x18] sm:$0xff]
  %v5296 = vld [vmem:[%s12 + $0x20] sm:$0xff]
  %v5297 = vld [vmem:[%s12 + $0x28] sm:$0xff]
  %v5298 = vld [vmem:[%s12 + $0x30] sm:$0xff]
  %v5299 = vld [vmem:[%s12 + $0x38] sm:$0xff]
  %v5300 = vlaneseq
  %v5301 = vshrl.u32 %v5300, 7
  %v5302 = vsub.s32 2, %v5301
  %v5303 = vrot.slane %v3025, %v5302
  %v5305 = vsel %vm82, %v5290, 0
  %v5308 = vsel %vm82, %v5291, 0
  %5310 = vmatprep.subr.mxu0 0.0
  %5311 = vmatpush1.msra.mxu0 %v5292
  %5312 = vmatprep.subr.mxu0 0.0
  %5313 = vmatpush1.msra.mxu0 %v5293
  %5314 = vmatprep.subr.mxu0 0.0
  %5315 = vmatpush1.msra.mxu0 %v5294
  %5316 = vmatprep.subr.mxu0 0.0
  %5317 = vmatpush1.msra.mxu0 %v5295
  %5318 = vmatprep.subr.mxu0 0.0
  %5319 = vmatpush1.msra.mxu0 %v5296
  %5320 = vmatprep.subr.mxu0 0.0
  %5321 = vmatpush1.msra.mxu0 %v5297
  %5322 = vmatprep.subr.mxu0 0.0
  %5323 = vmatpush1.msra.mxu0 %v5298
  %5324 = vmatprep.subr.mxu0 0.0
  %5325 = vmatpush1.msra.mxu0 %v5299
  %5326 = vmatprep.subr.mxu0 0.0
  %5327 = vmatpush1.msra.mxu0 0.0
  %5328 = vmatprep.subr.mxu0 0.0
  %5329 = vmatpush1.msra.mxu0 0.0
  %5330 = vmatprep.subr.mxu0 0.0
  %5331 = vmatpush1.msra.mxu0 0.0
  %5332 = vmatprep.subr.mxu0 0.0
  %5333 = vmatpush1.msra.mxu0 0.0
  %5334 = vmatprep.subr.mxu0 0.0
  %5335 = vmatpush1.msra.mxu0 0.0
  %5336 = vmatprep.subr.mxu0 0.0
  %5337 = vmatpush1.msra.mxu0 0.0
  %5338 = vmatprep.subr.mxu0 0.0
  %5339 = vmatpush1.msra.mxu0 0.0
  %5340 = vmatprep.subr.mxu0 0.0
  %5341 = vmatpush1.msra.mxu0 0.0
  %5342 = vmatprep.subr.mxu0 0.0
  %5343 = vmatpush1.msra.mxu0 0.0
  %5344 = vmatprep.subr.mxu0 0.0
  %5345 = vmatpush1.msra.mxu0 0.0
  %5346 = vmatprep.subr.mxu0 0.0
  %5347 = vmatpush1.msra.mxu0 0.0
  %5348 = vmatprep.subr.mxu0 0.0
  %5349 = vmatpush1.msra.mxu0 0.0
  %5350 = vmatprep.subr.mxu0 0.0
  %5351 = vmatpush1.msra.mxu0 0.0
  %5352 = vmatprep.subr.mxu0 0.0
  %5353 = vmatpush1.msra.mxu0 0.0
  %5354 = vmatprep.subr.mxu0 0.0
  %5355 = vmatpush1.msra.mxu0 0.0
  %5356 = vmatprep.subr.mxu0 0.0
  %5357 = vmatpush1.msra.mxu0 0.0
  %5358 = vmatprep.subr.mxu0 0.0
  %5359 = vmatpush1.msra.mxu0 0.0
  %5360 = vmatprep.subr.mxu0 0.0
  %5361 = vmatpush1.msra.mxu0 0.0
  %5362 = vmatprep.subr.mxu0 0.0
  %5363 = vmatpush1.msra.mxu0 0.0
  %5364 = vmatprep.subr.mxu0 0.0
  %5365 = vmatpush1.msra.mxu0 0.0
  %5366 = vmatprep.subr.mxu0 0.0
  %5367 = vmatpush1.msra.mxu0 0.0
  %5368 = vmatprep.subr.mxu0 0.0
  %5369 = vmatpush1.msra.mxu0 0.0
  %5370 = vmatprep.subr.mxu0 0.0
  %5371 = vmatpush1.msra.mxu0 0.0
  %5372 = vmatprep.subr.mxu0 0.0
  %5373 = vmatpush1.msra.mxu0 0.0
  %5374 = vmatprep.mubr.f32.mxu0 0.0
  %5375 = vmatmul.mubr.f32.gmra.mrb[0].mxu0 %v5305
  %v5376 = vpop.f32.mrb[0].mxu0
  %v5377 = vadd.f32 %v5303, %v5376
  %v5378 = vpop.f32.mrb[0].mxu0
  %5379 = vmatprep.mubr.f32.mxu0 0.0
  %5380 = vmatmul.mubr.f32.gmra.mrb[0].mxu0 %v5308
  %v5381 = vpop.f32.mrb[0].mxu0
  %v5382 = vadd.f32 %v5303, %v5381
  %v5383 = vpop.f32.mrb[0].mxu0
  %5384 = vdwg.mxu0
  %v5385 = vadd.f32 %v5203, %v5377
  %v5386 = vadd.f32 %v5204, %v5382
  %v5387 = vsel %vm1164, %v5385, 0.0
  %5388 = vadd.xlane.f32.xlu0 %v5387
  %v5389 = vpop.xlane.xlu0 %5388
  %v5390 = vsel %vm4053, %v5386, 0.0
  %5391 = vadd.xlane.f32.xlu0 %v5390
  %v5392 = vpop.xlane.xlu0 %5391
  %v5393 = vmul.f32 %v5389, %v4057
  %v5394 = vmul.f32 %v5392, %v4057
  %v5395 = vsub.f32 %v5385, %v5393
  %v5396 = vsub.f32 %v5386, %v5394
  %v5397 = vmul.f32 %v5395, %v5395
  %v5398 = vmul.f32 %v5396, %v5396
  %v5399 = vsel %vm1164, %v5397, 0.0
  %5400 = vadd.xlane.f32.xlu0 %v5399
  %v5401 = vpop.xlane.xlu0 %5400
  %v5402 = vsel %vm4053, %v5398, 0.0
  %5403 = vadd.xlane.f32.xlu0 %v5402
  %v5404 = vpop.xlane.xlu0 %5403
  %v5405 = vmul.f32 %v5401, %v4057
  %v5406 = vmul.f32 %v5404, %v4057
  %v5407 = vadd.f32 %v5405, 1e-05
  %v5408 = vadd.f32 %v5406, 1e-05
  %v5409 = vrsqrt.pop %v5407
  %v5410 = vrsqrt.pop %v5408
  %v5411 = vmul.f32 %v5395, %v5409
  %v5412 = vmul.f32 %v5396, %v5410
  %v5413 = vlaneseq
  %v5414 = vshrl.u32 %v5413, 7
  %v5415 = vsub.s32 3, %v5414
  %v5416 = vrot.slane %v3025, %v5415
  %v5417 = vmul.f32 %v5411, %v5416
  %v5418 = vmul.f32 %v5412, %v5416
  %v5419 = vlaneseq
  %v5420 = vshrl.u32 %v5419, 7
  %v5421 = vsub.s32 4, %v5420
  %v5422 = vrot.slane %v3025, %v5421
  %v5423 = vadd.f32 %v5417, %v5422
  %v5424 = vadd.f32 %v5418, %v5422
  %s5425 = scalar_lea.vmem %s11, 96
  %v5426 = vld [vmem:[%s5425] sm:$0xff]
  %v5427 = vld [vmem:[%s5425 + $0x8] sm:$0xff]
  %v5428 = vld [vmem:[%s5425 + $0x10] sm:$0xff]
  %v5429 = vld [vmem:[%s5425 + $0x18] sm:$0xff]
  %v5430 = vld [vmem:[%s5425 + $0x20] sm:$0xff]
  %v5431 = vld [vmem:[%s5425 + $0x28] sm:$0xff]
  %v5432 = vld [vmem:[%s5425 + $0x30] sm:$0xff]
  %v5433 = vld [vmem:[%s5425 + $0x38] sm:$0xff]
  %v5434 = vld [vmem:[%s5425 + $0x40] sm:$0xff]
  %v5435 = vld [vmem:[%s5425 + $0x48] sm:$0xff]
  %v5436 = vld [vmem:[%s5425 + $0x50] sm:$0xff]
  %v5437 = vld [vmem:[%s5425 + $0x58] sm:$0xff]
  %s5438 = scalar_lea.vmem %s13, 16
  %v5439 = vld [vmem:[%s5438] sm:$0xff]
  %v5440 = vld [vmem:[%s5438 + $0x8] sm:$0x1f]
  %v5441 = vlaneseq
  %v5442 = vshrl.u32 %v5441, 7
  %v5443 = vsub.s32 0, %v5442
  %v5444 = vrot.slane %v5439, %v5443
  %v5446 = vsel %vm1164, %v5423, 0
  %v5449 = vsel %vm1164, %v5424, 0
  %5451 = vmatprep.subr.mxu0 0.0
  %5452 = vmatpush1.msra.mxu0 %v5426
  %5453 = vmatprep.subr.mxu0 0.0
  %5454 = vmatpush1.msra.mxu0 %v5429
  %5455 = vmatprep.subr.mxu0 0.0
  %5456 = vmatpush1.msra.mxu0 %v5432
  %5457 = vmatprep.subr.mxu0 0.0
  %5458 = vmatpush1.msra.mxu0 %v5435
  %5459 = vmatprep.subr.mxu0 0.0
  %5460 = vmatpush1.msra.mxu0 0.0
  %5461 = vmatprep.subr.mxu0 0.0
  %5462 = vmatpush1.msra.mxu0 0.0
  %5463 = vmatprep.subr.mxu0 0.0
  %5464 = vmatpush1.msra.mxu0 0.0
  %5465 = vmatprep.subr.mxu0 0.0
  %5466 = vmatpush1.msra.mxu0 0.0
  %5467 = vmatprep.subr.mxu0 0.0
  %5468 = vmatpush1.msra.mxu0 0.0
  %5469 = vmatprep.subr.mxu0 0.0
  %5470 = vmatpush1.msra.mxu0 0.0
  %5471 = vmatprep.subr.mxu0 0.0
  %5472 = vmatpush1.msra.mxu0 0.0
  %5473 = vmatprep.subr.mxu0 0.0
  %5474 = vmatpush1.msra.mxu0 0.0
  %5475 = vmatprep.subr.mxu0 0.0
  %5476 = vmatpush1.msra.mxu0 0.0
  %5477 = vmatprep.subr.mxu0 0.0
  %5478 = vmatpush1.msra.mxu0 0.0
  %5479 = vmatprep.subr.mxu0 0.0
  %5480 = vmatpush1.msra.mxu0 0.0
  %5481 = vmatprep.subr.mxu0 0.0
  %5482 = vmatpush1.msra.mxu0 0.0
  %5483 = vmatprep.subr.mxu0 0.0
  %5484 = vmatpush1.msra.mxu0 0.0
  %5485 = vmatprep.subr.mxu0 0.0
  %5486 = vmatpush1.msra.mxu0 0.0
  %5487 = vmatprep.subr.mxu0 0.0
  %5488 = vmatpush1.msra.mxu0 0.0
  %5489 = vmatprep.subr.mxu0 0.0
  %5490 = vmatpush1.msra.mxu0 0.0
  %5491 = vmatprep.subr.mxu0 0.0
  %5492 = vmatpush1.msra.mxu0 0.0
  %5493 = vmatprep.subr.mxu0 0.0
  %5494 = vmatpush1.msra.mxu0 0.0
  %5495 = vmatprep.subr.mxu0 0.0
  %5496 = vmatpush1.msra.mxu0 0.0
  %5497 = vmatprep.subr.mxu0 0.0
  %5498 = vmatpush1.msra.mxu0 0.0
  %5499 = vmatprep.subr.mxu0 0.0
  %5500 = vmatpush1.msra.mxu0 0.0
  %5501 = vmatprep.subr.mxu0 0.0
  %5502 = vmatpush1.msra.mxu0 0.0
  %5503 = vmatprep.subr.mxu0 0.0
  %5504 = vmatpush1.msra.mxu0 0.0
  %5505 = vmatprep.subr.mxu0 0.0
  %5506 = vmatpush1.msra.mxu0 0.0
  %5507 = vmatprep.subr.mxu0 0.0
  %5508 = vmatpush1.msra.mxu0 0.0
  %5509 = vmatprep.subr.mxu0 0.0
  %5510 = vmatpush1.msra.mxu0 0.0
  %5511 = vmatprep.subr.mxu0 0.0
  %5512 = vmatpush1.msra.mxu0 0.0
  %5513 = vmatprep.subr.mxu0 0.0
  %5514 = vmatpush1.msra.mxu0 0.0
  %5515 = vmatprep.mubr.f32.mxu0 0.0
  %5516 = vmatmul.mubr.f32.gmra.mrb[0].mxu0 %v5446
  %v5517 = vpop.f32.mrb[0].mxu0
  %v5518 = vadd.f32 %v5444, %v5517
  %v5519 = vpop.f32.mrb[0].mxu0
  %5520 = vmatprep.mubr.f32.mxu0 0.0
  %5521 = vmatmul.mubr.f32.gmra.mrb[0].mxu0 %v5449
  %v5522 = vpop.f32.mrb[0].mxu0
  %v5523 = vadd.f32 %v5444, %v5522
  %v5524 = vpop.f32.mrb[0].mxu0
  %5525 = vdwg.mxu0
  %5528 = vrot.lane.b32.xlu0 %v5518, 96
  %v5529 = vpop.permute.xlu0 %5528
  %5530 = vrot.lane.b32.xlu0 %v5523, 96
  %v5531 = vpop.permute.xlu0 %5530
  %v5532 = vsel %vm3117, %v5518, 0
  %v5534 = vsel %vm3117, %v5523, 0
  %v5536 = vsel %vm3117, %v5529, 0
  %v5538 = vsel %vm3117, %v5531, 0
  %5540 = vmatprep.subr.mxu0 0.0
  %5541 = vmatpush1.xpose.msra.mxu0 %v5536
  %5542 = vmatprep.subr.mxu0 0.0
  %5543 = vmatpush1.xpose.msra.mxu0 %v5538
  %5544 = vmatprep.subr.mxu0 0.0
  %5545 = vmatpush1.xpose.msra.mxu0 0.0
  %5546 = vmatprep.subr.mxu0 0.0
  %5547 = vmatpush1.xpose.msra.mxu0 0.0
  %5548 = vmatprep.subr.mxu0 0.0
  %5549 = vmatpush1.xpose.msra.mxu0 0.0
  %5550 = vmatprep.subr.mxu0 0.0
  %5551 = vmatpush1.xpose.msra.mxu0 0.0
  %5552 = vmatprep.subr.mxu0 0.0
  %5553 = vmatpush1.xpose.msra.mxu0 0.0
  %5554 = vmatprep.subr.mxu0 0.0
  %5555 = vmatpush1.xpose.msra.mxu0 0.0
  %5556 = vmatprep.subr.mxu0 0.0
  %5557 = vmatpush1.xpose.msra.mxu0 0.0
  %5558 = vmatprep.subr.mxu0 0.0
  %5559 = vmatpush1.xpose.msra.mxu0 0.0
  %5560 = vmatprep.subr.mxu0 0.0
  %5561 = vmatpush1.xpose.msra.mxu0 0.0
  %5562 = vmatprep.subr.mxu0 0.0
  %5563 = vmatpush1.xpose.msra.mxu0 0.0
  %5564 = vmatprep.subr.mxu0 0.0
  %5565 = vmatpush1.xpose.msra.mxu0 0.0
  %5566 = vmatprep.subr.mxu0 0.0
  %5567 = vmatpush1.xpose.msra.mxu0 0.0
  %5568 = vmatprep.subr.mxu0 0.0
  %5569 = vmatpush1.xpose.msra.mxu0 0.0
  %5570 = vmatprep.subr.mxu0 0.0
  %5571 = vmatpush1.xpose.msra.mxu0 0.0
  %5572 = vmatprep.subr.mxu0 0.0
  %5573 = vmatpush1.xpose.msra.mxu0 0.0
  %5574 = vmatprep.subr.mxu0 0.0
  %5575 = vmatpush1.xpose.msra.mxu0 0.0
  %5576 = vmatprep.subr.mxu0 0.0
  %5577 = vmatpush1.xpose.msra.mxu0 0.0
  %5578 = vmatprep.subr.mxu0 0.0
  %5579 = vmatpush1.xpose.msra.mxu0 0.0
  %5580 = vmatprep.subr.mxu0 0.0
  %5581 = vmatpush1.xpose.msra.mxu0 0.0
  %5582 = vmatprep.subr.mxu0 0.0
  %5583 = vmatpush1.xpose.msra.mxu0 0.0
  %5584 = vmatprep.subr.mxu0 0.0
  %5585 = vmatpush1.xpose.msra.mxu0 0.0
  %5586 = vmatprep.subr.mxu0 0.0
  %5587 = vmatpush1.xpose.msra.mxu0 0.0
  %5588 = vmatprep.subr.mxu0 0.0
  %5589 = vmatpush1.xpose.msra.mxu0 0.0
  %5590 = vmatprep.subr.mxu0 0.0
  %5591 = vmatpush1.xpose.msra.mxu0 0.0
  %5592 = vmatprep.subr.mxu0 0.0
  %5593 = vmatpush1.xpose.msra.mxu0 0.0
  %5594 = vmatprep.subr.mxu0 0.0
  %5595 = vmatpush1.xpose.msra.mxu0 0.0
  %5596 = vmatprep.subr.mxu0 0.0
  %5597 = vmatpush1.xpose.msra.mxu0 0.0
  %5598 = vmatprep.subr.mxu0 0.0
  %5599 = vmatpush1.xpose.msra.mxu0 0.0
  %5600 = vmatprep.subr.mxu0 0.0
  %5601 = vmatpush1.xpose.msra.mxu0 0.0
  %5602 = vmatprep.subr.mxu0 0.0
  %5603 = vmatpush1.xpose.msra.mxu0 0.0
  %5604 = vmatprep.mubr.f32.mxu0 0.0
  %5605 = vmatmul.mubr.f32.gmra.mrb[0].mxu0 %v5532
  %v5606 = vpop.f32.mrb[0].mxu0
  %v5607 = vadd.f32 %v52, %v5606
  %v5608 = vpop.f32.mrb[0].mxu0
  %5609 = vmatprep.mubr.f32.mxu0 0.0
  %5610 = vmatmul.mubr.f32.gmra.mrb[0].mxu0 %v5534
  %v5611 = vpop.f32.mrb[0].mxu0
  %v5612 = vadd.f32 %v53, %v5611
  %v5613 = vpop.f32.mrb[0].mxu0
  %5614 = vdwg.mxu0
  %v5615 = vsel %vm3201, %v5607, -inf
  %5616 = vmax.xlane.f32.xlu0 %v5615
  %v5617 = vpop.xlane.xlu0 %5616
  %v5618 = vsel %vm3205, %v5612, -inf
  %5619 = vmax.xlane.f32.xlu0 %v5618
  %v5620 = vpop.xlane.xlu0 %5619
  %v5621 = vsub.f32 %v5607, %v5617
  %v5622 = vsub.f32 %v5612, %v5620
  %v5623 = vmul.f32 %v5621, 1.442695
  %v5624 = vpow.pop %v5623
  %v5625 = vmul.f32 %v5622, 1.442695
  %v5626 = vpow.pop %v5625
  %v5627 = vsel %vm3201, %v5624, 0.0
  %5628 = vadd.xlane.f32.xlu0 %v5627
  %v5629 = vpop.xlane.xlu0 %5628
  %v5630 = vsel %vm3205, %v5626, 0.0
  %5631 = vadd.xlane.f32.xlu0 %v5630
  %v5632 = vpop.xlane.xlu0 %5631
  %v5633 = vrcp.pop %v5629
  %v5634 = vrcp.pop %v5632
  %v5635 = vmul.f32 %v5624, %v5633
  %v5636 = vmul.f32 %v5626, %v5634
  %5637 = vrot.lane.b32.xlu0 %v5518, 64
  %v5638 = vpop.permute.xlu0 %5637
  %5639 = vrot.lane.b32.xlu0 %v5523, 64
  %v5640 = vpop.permute.xlu0 %5639
  %v5643 = vsel %vm3201, %v5635, 0
  %v5646 = vsel %vm3201, %v5636, 0
  %v5648 = vsel %vm2922, %v5640, 0
  %5650 = vmatprep.subr.mxu0 0.0
  %5651 = vmatpush1.msra.mxu0 %v5638
  %5652 = vmatprep.subr.mxu0 0.0
  %5653 = vmatpush1.msra.mxu0 %v5648
  %5654 = vmatprep.subr.mxu0 0.0
  %5655 = vmatpush1.msra.mxu0 0.0
  %5656 = vmatprep.subr.mxu0 0.0
  %5657 = vmatpush1.msra.mxu0 0.0
  %5658 = vmatprep.subr.mxu0 0.0
  %5659 = vmatpush1.msra.mxu0 0.0
  %5660 = vmatprep.subr.mxu0 0.0
  %5661 = vmatpush1.msra.mxu0 0.0
  %5662 = vmatprep.subr.mxu0 0.0
  %5663 = vmatpush1.msra.mxu0 0.0
  %5664 = vmatprep.subr.mxu0 0.0
  %5665 = vmatpush1.msra.mxu0 0.0
  %5666 = vmatprep.subr.mxu0 0.0
  %5667 = vmatpush1.msra.mxu0 0.0
  %5668 = vmatprep.subr.mxu0 0.0
  %5669 = vmatpush1.msra.mxu0 0.0
  %5670 = vmatprep.subr.mxu0 0.0
  %5671 = vmatpush1.msra.mxu0 0.0
  %5672 = vmatprep.subr.mxu0 0.0
  %5673 = vmatpush1.msra.mxu0 0.0
  %5674 = vmatprep.subr.mxu0 0.0
  %5675 = vmatpush1.msra.mxu0 0.0
  %5676 = vmatprep.subr.mxu0 0.0
  %5677 = vmatpush1.msra.mxu0 0.0
  %5678 = vmatprep.subr.mxu0 0.0
  %5679 = vmatpush1.msra.mxu0 0.0
  %5680 = vmatprep.subr.mxu0 0.0
  %5681 = vmatpush1.msra.mxu0 0.0
  %5682 = vmatprep.subr.mxu0 0.0
  %5683 = vmatpush1.msra.mxu0 0.0
  %5684 = vmatprep.subr.mxu0 0.0
  %5685 = vmatpush1.msra.mxu0 0.0
  %5686 = vmatprep.subr.mxu0 0.0
  %5687 = vmatpush1.msra.mxu0 0.0
  %5688 = vmatprep.subr.mxu0 0.0
  %5689 = vmatpush1.msra.mxu0 0.0
  %5690 = vmatprep.subr.mxu0 0.0
  %5691 = vmatpush1.msra.mxu0 0.0
  %5692 = vmatprep.subr.mxu0 0.0
  %5693 = vmatpush1.msra.mxu0 0.0
  %5694 = vmatprep.subr.mxu0 0.0
  %5695 = vmatpush1.msra.mxu0 0.0
  %5696 = vmatprep.subr.mxu0 0.0
  %5697 = vmatpush1.msra.mxu0 0.0
  %5698 = vmatprep.subr.mxu0 0.0
  %5699 = vmatpush1.msra.mxu0 0.0
  %5700 = vmatprep.subr.mxu0 0.0
  %5701 = vmatpush1.msra.mxu0 0.0
  %5702 = vmatprep.subr.mxu0 0.0
  %5703 = vmatpush1.msra.mxu0 0.0
  %5704 = vmatprep.subr.mxu0 0.0
  %5705 = vmatpush1.msra.mxu0 0.0
  %5706 = vmatprep.subr.mxu0 0.0
  %5707 = vmatpush1.msra.mxu0 0.0
  %5708 = vmatprep.subr.mxu0 0.0
  %5709 = vmatpush1.msra.mxu0 0.0
  %5710 = vmatprep.subr.mxu0 0.0
  %5711 = vmatpush1.msra.mxu0 0.0
  %5712 = vmatprep.subr.mxu0 0.0
  %5713 = vmatpush1.msra.mxu0 0.0
  %5714 = vmatprep.mubr.f32.mxu0 0.0
  %5715 = vmatmul.mubr.f32.gmra.mrb[0].mxu0 %v5643
  %v5716 = vpop.f32.mrb[0].mxu0
  %v5717 = vadd.f32 0.0, %v5716
  %v5718 = vpop.f32.mrb[0].mxu0
  %5719 = vmatprep.mubr.f32.mxu0 0.0
  %5720 = vmatmul.mubr.f32.gmra.mrb[0].mxu0 %v5646
  %v5721 = vpop.f32.mrb[0].mxu0
  %v5722 = vadd.f32 0.0, %v5721
  %v5723 = vpop.f32.mrb[0].mxu0
  %5724 = vdwg.mxu0
  %5725 = vrot.lane.b32.xlu0 %v5518, 120
  %v5726 = vpop.permute.xlu0 %5725
  %5727 = vrot.lane.b32.xlu0 %v5523, 120
  %v5728 = vpop.permute.xlu0 %5727
  %5729 = vrot.lane.b32.xlu0 %v5518, 88
  %v5730 = vpop.permute.xlu0 %5729
  %5731 = vrot.lane.b32.xlu0 %v5523, 88
  %v5732 = vpop.permute.xlu0 %5731
  %v5733 = vsel %vm3117, %v5726, 0
  %v5735 = vsel %vm3117, %v5728, 0
  %v5737 = vsel %vm3117, %v5730, 0
  %v5739 = vsel %vm3117, %v5732, 0
  %5741 = vmatprep.subr.mxu0 0.0
  %5742 = vmatpush1.xpose.msra.mxu0 %v5737
  %5743 = vmatprep.subr.mxu0 0.0
  %5744 = vmatpush1.xpose.msra.mxu0 %v5739
  %5745 = vmatprep.subr.mxu0 0.0
  %5746 = vmatpush1.xpose.msra.mxu0 0.0
  %5747 = vmatprep.subr.mxu0 0.0
  %5748 = vmatpush1.xpose.msra.mxu0 0.0
  %5749 = vmatprep.subr.mxu0 0.0
  %5750 = vmatpush1.xpose.msra.mxu0 0.0
  %5751 = vmatprep.subr.mxu0 0.0
  %5752 = vmatpush1.xpose.msra.mxu0 0.0
  %5753 = vmatprep.subr.mxu0 0.0
  %5754 = vmatpush1.xpose.msra.mxu0 0.0
  %5755 = vmatprep.subr.mxu0 0.0
  %5756 = vmatpush1.xpose.msra.mxu0 0.0
  %5757 = vmatprep.subr.mxu0 0.0
  %5758 = vmatpush1.xpose.msra.mxu0 0.0
  %5759 = vmatprep.subr.mxu0 0.0
  %5760 = vmatpush1.xpose.msra.mxu0 0.0
  %5761 = vmatprep.subr.mxu0 0.0
  %5762 = vmatpush1.xpose.msra.mxu0 0.0
  %5763 = vmatprep.subr.mxu0 0.0
  %5764 = vmatpush1.xpose.msra.mxu0 0.0
  %5765 = vmatprep.subr.mxu0 0.0
  %5766 = vmatpush1.xpose.msra.mxu0 0.0
  %5767 = vmatprep.subr.mxu0 0.0
  %5768 = vmatpush1.xpose.msra.mxu0 0.0
  %5769 = vmatprep.subr.mxu0 0.0
  %5770 = vmatpush1.xpose.msra.mxu0 0.0
  %5771 = vmatprep.subr.mxu0 0.0
  %5772 = vmatpush1.xpose.msra.mxu0 0.0
  %5773 = vmatprep.subr.mxu0 0.0
  %5774 = vmatpush1.xpose.msra.mxu0 0.0
  %5775 = vmatprep.subr.mxu0 0.0
  %5776 = vmatpush1.xpose.msra.mxu0 0.0
  %5777 = vmatprep.subr.mxu0 0.0
  %5778 = vmatpush1.xpose.msra.mxu0 0.0
  %5779 = vmatprep.subr.mxu0 0.0
  %5780 = vmatpush1.xpose.msra.mxu0 0.0
  %5781 = vmatprep.subr.mxu0 0.0
  %5782 = vmatpush1.xpose.msra.mxu0 0.0
  %5783 = vmatprep.subr.mxu0 0.0
  %5784 = vmatpush1.xpose.msra.mxu0 0.0
  %5785 = vmatprep.subr.mxu0 0.0
  %5786 = vmatpush1.xpose.msra.mxu0 0.0
  %5787 = vmatprep.subr.mxu0 0.0
  %5788 = vmatpush1.xpose.msra.mxu0 0.0
  %5789 = vmatprep.subr.mxu0 0.0
  %5790 = vmatpush1.xpose.msra.mxu0 0.0
  %5791 = vmatprep.subr.mxu0 0.0
  %5792 = vmatpush1.xpose.msra.mxu0 0.0
  %5793 = vmatprep.subr.mxu0 0.0
  %5794 = vmatpush1.xpose.msra.mxu0 0.0
  %5795 = vmatprep.subr.mxu0 0.0
  %5796 = vmatpush1.xpose.msra.mxu0 0.0
  %5797 = vmatprep.subr.mxu0 0.0
  %5798 = vmatpush1.xpose.msra.mxu0 0.0
  %5799 = vmatprep.subr.mxu0 0.0
  %5800 = vmatpush1.xpose.msra.mxu0 0.0
  %5801 = vmatprep.subr.mxu0 0.0
  %5802 = vmatpush1.xpose.msra.mxu0 0.0
  %5803 = vmatprep.subr.mxu0 0.0
  %5804 = vmatpush1.xpose.msra.mxu0 0.0
  %5805 = vmatprep.mubr.f32.mxu0 0.0
  %5806 = vmatmul.mubr.f32.gmra.mrb[0].mxu0 %v5733
  %v5807 = vpop.f32.mrb[0].mxu0
  %v5808 = vadd.f32 %v52, %v5807
  %v5809 = vpop.f32.mrb[0].mxu0
  %5810 = vmatprep.mubr.f32.mxu0 0.0
  %5811 = vmatmul.mubr.f32.gmra.mrb[0].mxu0 %v5735
  %v5812 = vpop.f32.mrb[0].mxu0
  %v5813 = vadd.f32 %v53, %v5812
  %v5814 = vpop.f32.mrb[0].mxu0
  %5815 = vdwg.mxu0
  %v5816 = vsel %vm3201, %v5808, -inf
  %5817 = vmax.xlane.f32.xlu0 %v5816
  %v5818 = vpop.xlane.xlu0 %5817
  %v5819 = vsel %vm3205, %v5813, -inf
  %5820 = vmax.xlane.f32.xlu0 %v5819
  %v5821 = vpop.xlane.xlu0 %5820
  %v5822 = vsub.f32 %v5808, %v5818
  %v5823 = vsub.f32 %v5813, %v5821
  %v5824 = vmul.f32 %v5822, 1.442695
  %v5825 = vpow.pop %v5824
  %v5826 = vmul.f32 %v5823, 1.442695
  %v5827 = vpow.pop %v5826
  %v5828 = vsel %vm3201, %v5825, 0.0
  %5829 = vadd.xlane.f32.xlu0 %v5828
  %v5830 = vpop.xlane.xlu0 %5829
  %v5831 = vsel %vm3205, %v5827, 0.0
  %5832 = vadd.xlane.f32.xlu0 %v5831
  %v5833 = vpop.xlane.xlu0 %5832
  %v5834 = vrcp.pop %v5830
  %v5835 = vrcp.pop %v5833
  %v5836 = vmul.f32 %v5825, %v5834
  %v5837 = vmul.f32 %v5827, %v5835
  %5838 = vrot.lane.b32.xlu0 %v5518, 56
  %v5839 = vpop.permute.xlu0 %5838
  %5840 = vrot.lane.b32.xlu0 %v5523, 56
  %v5841 = vpop.permute.xlu0 %5840
  %v5844 = vsel %vm3201, %v5836, 0
  %v5847 = vsel %vm3201, %v5837, 0
  %v5849 = vsel %vm2922, %v5841, 0
  %5851 = vmatprep.subr.mxu0 0.0
  %5852 = vmatpush1.msra.mxu0 %v5839
  %5853 = vmatprep.subr.mxu0 0.0
  %5854 = vmatpush1.msra.mxu0 %v5849
  %5855 = vmatprep.subr.mxu0 0.0
  %5856 = vmatpush1.msra.mxu0 0.0
  %5857 = vmatprep.subr.mxu0 0.0
  %5858 = vmatpush1.msra.mxu0 0.0
  %5859 = vmatprep.subr.mxu0 0.0
  %5860 = vmatpush1.msra.mxu0 0.0
  %5861 = vmatprep.subr.mxu0 0.0
  %5862 = vmatpush1.msra.mxu0 0.0
  %5863 = vmatprep.subr.mxu0 0.0
  %5864 = vmatpush1.msra.mxu0 0.0
  %5865 = vmatprep.subr.mxu0 0.0
  %5866 = vmatpush1.msra.mxu0 0.0
  %5867 = vmatprep.subr.mxu0 0.0
  %5868 = vmatpush1.msra.mxu0 0.0
  %5869 = vmatprep.subr.mxu0 0.0
  %5870 = vmatpush1.msra.mxu0 0.0
  %5871 = vmatprep.subr.mxu0 0.0
  %5872 = vmatpush1.msra.mxu0 0.0
  %5873 = vmatprep.subr.mxu0 0.0
  %5874 = vmatpush1.msra.mxu0 0.0
  %5875 = vmatprep.subr.mxu0 0.0
  %5876 = vmatpush1.msra.mxu0 0.0
  %5877 = vmatprep.subr.mxu0 0.0
  %5878 = vmatpush1.msra.mxu0 0.0
  %5879 = vmatprep.subr.mxu0 0.0
  %5880 = vmatpush1.msra.mxu0 0.0
  %5881 = vmatprep.subr.mxu0 0.0
  %5882 = vmatpush1.msra.mxu0 0.0
  %5883 = vmatprep.subr.mxu0 0.0
  %5884 = vmatpush1.msra.mxu0 0.0
  %5885 = vmatprep.subr.mxu0 0.0
  %5886 = vmatpush1.msra.mxu0 0.0
  %5887 = vmatprep.subr.mxu0 0.0
  %5888 = vmatpush1.msra.mxu0 0.0
  %5889 = vmatprep.subr.mxu0 0.0
  %5890 = vmatpush1.msra.mxu0 0.0
  %5891 = vmatprep.subr.mxu0 0.0
  %5892 = vmatpush1.msra.mxu0 0.0
  %5893 = vmatprep.subr.mxu0 0.0
  %5894 = vmatpush1.msra.mxu0 0.0
  %5895 = vmatprep.subr.mxu0 0.0
  %5896 = vmatpush1.msra.mxu0 0.0
  %5897 = vmatprep.subr.mxu0 0.0
  %5898 = vmatpush1.msra.mxu0 0.0
  %5899 = vmatprep.subr.mxu0 0.0
  %5900 = vmatpush1.msra.mxu0 0.0
  %5901 = vmatprep.subr.mxu0 0.0
  %5902 = vmatpush1.msra.mxu0 0.0
  %5903 = vmatprep.subr.mxu0 0.0
  %5904 = vmatpush1.msra.mxu0 0.0
  %5905 = vmatprep.subr.mxu0 0.0
  %5906 = vmatpush1.msra.mxu0 0.0
  %5907 = vmatprep.subr.mxu0 0.0
  %5908 = vmatpush1.msra.mxu0 0.0
  %5909 = vmatprep.subr.mxu0 0.0
  %5910 = vmatpush1.msra.mxu0 0.0
  %5911 = vmatprep.subr.mxu0 0.0
  %5912 = vmatpush1.msra.mxu0 0.0
  %5913 = vmatprep.subr.mxu0 0.0
  %5914 = vmatpush1.msra.mxu0 0.0
  %5915 = vmatprep.mubr.f32.mxu0 0.0
  %5916 = vmatmul.mubr.f32.gmra.mrb[0].mxu0 %v5844
  %v5917 = vpop.f32.mrb[0].mxu0
  %v5918 = vadd.f32 0.0, %v5917
  %v5919 = vpop.f32.mrb[0].mxu0
  %5920 = vmatprep.mubr.f32.mxu0 0.0
  %5921 = vmatmul.mubr.f32.gmra.mrb[0].mxu0 %v5847
  %v5922 = vpop.f32.mrb[0].mxu0
  %v5923 = vadd.f32 0.0, %v5922
  %v5924 = vpop.f32.mrb[0].mxu0
  %5925 = vdwg.mxu0
  %5926 = vrot.lane.b32.xlu0 %v5518, 112
  %v5927 = vpop.permute.xlu0 %5926
  %5928 = vrot.lane.b32.xlu0 %v5523, 112
  %v5929 = vpop.permute.xlu0 %5928
  %5930 = vrot.lane.b32.xlu0 %v5518, 80
  %v5931 = vpop.permute.xlu0 %5930
  %5932 = vrot.lane.b32.xlu0 %v5523, 80
  %v5933 = vpop.permute.xlu0 %5932
  %v5934 = vsel %vm3117, %v5927, 0
  %v5936 = vsel %vm3117, %v5929, 0
  %v5938 = vsel %vm3117, %v5931, 0
  %v5940 = vsel %vm3117, %v5933, 0
  %5942 = vmatprep.subr.mxu0 0.0
  %5943 = vmatpush1.xpose.msra.mxu0 %v5938
  %5944 = vmatprep.subr.mxu0 0.0
  %5945 = vmatpush1.xpose.msra.mxu0 %v5940
  %5946 = vmatprep.subr.mxu0 0.0
  %5947 = vmatpush1.xpose.msra.mxu0 0.0
  %5948 = vmatprep.subr.mxu0 0.0
  %5949 = vmatpush1.xpose.msra.mxu0 0.0
  %5950 = vmatprep.subr.mxu0 0.0
  %5951 = vmatpush1.xpose.msra.mxu0 0.0
  %5952 = vmatprep.subr.mxu0 0.0
  %5953 = vmatpush1.xpose.msra.mxu0 0.0
  %5954 = vmatprep.subr.mxu0 0.0
  %5955 = vmatpush1.xpose.msra.mxu0 0.0
  %5956 = vmatprep.subr.mxu0 0.0
  %5957 = vmatpush1.xpose.msra.mxu0 0.0
  %5958 = vmatprep.subr.mxu0 0.0
  %5959 = vmatpush1.xpose.msra.mxu0 0.0
  %5960 = vmatprep.subr.mxu0 0.0
  %5961 = vmatpush1.xpose.msra.mxu0 0.0
  %5962 = vmatprep.subr.mxu0 0.0
  %5963 = vmatpush1.xpose.msra.mxu0 0.0
  %5964 = vmatprep.subr.mxu0 0.0
  %5965 = vmatpush1.xpose.msra.mxu0 0.0
  %5966 = vmatprep.subr.mxu0 0.0
  %5967 = vmatpush1.xpose.msra.mxu0 0.0
  %5968 = vmatprep.subr.mxu0 0.0
  %5969 = vmatpush1.xpose.msra.mxu0 0.0
  %5970 = vmatprep.subr.mxu0 0.0
  %5971 = vmatpush1.xpose.msra.mxu0 0.0
  %5972 = vmatprep.subr.mxu0 0.0
  %5973 = vmatpush1.xpose.msra.mxu0 0.0
  %5974 = vmatprep.subr.mxu0 0.0
  %5975 = vmatpush1.xpose.msra.mxu0 0.0
  %5976 = vmatprep.subr.mxu0 0.0
  %5977 = vmatpush1.xpose.msra.mxu0 0.0
  %5978 = vmatprep.subr.mxu0 0.0
  %5979 = vmatpush1.xpose.msra.mxu0 0.0
  %5980 = vmatprep.subr.mxu0 0.0
  %5981 = vmatpush1.xpose.msra.mxu0 0.0
  %5982 = vmatprep.subr.mxu0 0.0
  %5983 = vmatpush1.xpose.msra.mxu0 0.0
  %5984 = vmatprep.subr.mxu0 0.0
  %5985 = vmatpush1.xpose.msra.mxu0 0.0
  %5986 = vmatprep.subr.mxu0 0.0
  %5987 = vmatpush1.xpose.msra.mxu0 0.0
  %5988 = vmatprep.subr.mxu0 0.0
  %5989 = vmatpush1.xpose.msra.mxu0 0.0
  %5990 = vmatprep.subr.mxu0 0.0
  %5991 = vmatpush1.xpose.msra.mxu0 0.0
  %5992 = vmatprep.subr.mxu0 0.0
  %5993 = vmatpush1.xpose.msra.mxu0 0.0
  %5994 = vmatprep.subr.mxu0 0.0
  %5995 = vmatpush1.xpose.msra.mxu0 0.0
  %5996 = vmatprep.subr.mxu0 0.0
  %5997 = vmatpush1.xpose.msra.mxu0 0.0
  %5998 = vmatprep.subr.mxu0 0.0
  %5999 = vmatpush1.xpose.msra.mxu0 0.0
  %6000 = vmatprep.subr.mxu0 0.0
  %6001 = vmatpush1.xpose.msra.mxu0 0.0
  %6002 = vmatprep.subr.mxu0 0.0
  %6003 = vmatpush1.xpose.msra.mxu0 0.0
  %6004 = vmatprep.subr.mxu0 0.0
  %6005 = vmatpush1.xpose.msra.mxu0 0.0
  %6006 = vmatprep.mubr.f32.mxu0 0.0
  %6007 = vmatmul.mubr.f32.gmra.mrb[0].mxu0 %v5934
  %v6008 = vpop.f32.mrb[0].mxu0
  %v6009 = vadd.f32 %v52, %v6008
  %v6010 = vpop.f32.mrb[0].mxu0
  %6011 = vmatprep.mubr.f32.mxu0 0.0
  %6012 = vmatmul.mubr.f32.gmra.mrb[0].mxu0 %v5936
  %v6013 = vpop.f32.mrb[0].mxu0
  %v6014 = vadd.f32 %v53, %v6013
  %v6015 = vpop.f32.mrb[0].mxu0
  %6016 = vdwg.mxu0
  %v6017 = vsel %vm3201, %v6009, -inf
  %6018 = vmax.xlane.f32.xlu0 %v6017
  %v6019 = vpop.xlane.xlu0 %6018
  %v6020 = vsel %vm3205, %v6014, -inf
  %6021 = vmax.xlane.f32.xlu0 %v6020
  %v6022 = vpop.xlane.xlu0 %6021
  %v6023 = vsub.f32 %v6009, %v6019
  %v6024 = vsub.f32 %v6014, %v6022
  %v6025 = vmul.f32 %v6023, 1.442695
  %v6026 = vpow.pop %v6025
  %v6027 = vmul.f32 %v6024, 1.442695
  %v6028 = vpow.pop %v6027
  %v6029 = vsel %vm3201, %v6026, 0.0
  %6030 = vadd.xlane.f32.xlu0 %v6029
  %v6031 = vpop.xlane.xlu0 %6030
  %v6032 = vsel %vm3205, %v6028, 0.0
  %6033 = vadd.xlane.f32.xlu0 %v6032
  %v6034 = vpop.xlane.xlu0 %6033
  %v6035 = vrcp.pop %v6031
  %v6036 = vrcp.pop %v6034
  %v6037 = vmul.f32 %v6026, %v6035
  %v6038 = vmul.f32 %v6028, %v6036
  %6039 = vrot.lane.b32.xlu0 %v5518, 48
  %v6040 = vpop.permute.xlu0 %6039
  %6041 = vrot.lane.b32.xlu0 %v5523, 48
  %v6042 = vpop.permute.xlu0 %6041
  %v6045 = vsel %vm3201, %v6037, 0
  %v6048 = vsel %vm3201, %v6038, 0
  %v6050 = vsel %vm2922, %v6042, 0
  %6052 = vmatprep.subr.mxu0 0.0
  %6053 = vmatpush1.msra.mxu0 %v6040
  %6054 = vmatprep.subr.mxu0 0.0
  %6055 = vmatpush1.msra.mxu0 %v6050
  %6056 = vmatprep.subr.mxu0 0.0
  %6057 = vmatpush1.msra.mxu0 0.0
  %6058 = vmatprep.subr.mxu0 0.0
  %6059 = vmatpush1.msra.mxu0 0.0
  %6060 = vmatprep.subr.mxu0 0.0
  %6061 = vmatpush1.msra.mxu0 0.0
  %6062 = vmatprep.subr.mxu0 0.0
  %6063 = vmatpush1.msra.mxu0 0.0
  %6064 = vmatprep.subr.mxu0 0.0
  %6065 = vmatpush1.msra.mxu0 0.0
  %6066 = vmatprep.subr.mxu0 0.0
  %6067 = vmatpush1.msra.mxu0 0.0
  %6068 = vmatprep.subr.mxu0 0.0
  %6069 = vmatpush1.msra.mxu0 0.0
  %6070 = vmatprep.subr.mxu0 0.0
  %6071 = vmatpush1.msra.mxu0 0.0
  %6072 = vmatprep.subr.mxu0 0.0
  %6073 = vmatpush1.msra.mxu0 0.0
  %6074 = vmatprep.subr.mxu0 0.0
  %6075 = vmatpush1.msra.mxu0 0.0
  %6076 = vmatprep.subr.mxu0 0.0
  %6077 = vmatpush1.msra.mxu0 0.0
  %6078 = vmatprep.subr.mxu0 0.0
  %6079 = vmatpush1.msra.mxu0 0.0
  %6080 = vmatprep.subr.mxu0 0.0
  %6081 = vmatpush1.msra.mxu0 0.0
  %6082 = vmatprep.subr.mxu0 0.0
  %6083 = vmatpush1.msra.mxu0 0.0
  %6084 = vmatprep.subr.mxu0 0.0
  %6085 = vmatpush1.msra.mxu0 0.0
  %6086 = vmatprep.subr.mxu0 0.0
  %6087 = vmatpush1.msra.mxu0 0.0
  %6088 = vmatprep.subr.mxu0 0.0
  %6089 = vmatpush1.msra.mxu0 0.0
  %6090 = vmatprep.subr.mxu0 0.0
  %6091 = vmatpush1.msra.mxu0 0.0
  %6092 = vmatprep.subr.mxu0 0.0
  %6093 = vmatpush1.msra.mxu0 0.0
  %6094 = vmatprep.subr.mxu0 0.0
  %6095 = vmatpush1.msra.mxu0 0.0
  %6096 = vmatprep.subr.mxu0 0.0
  %6097 = vmatpush1.msra.mxu0 0.0
  %6098 = vmatprep.subr.mxu0 0.0
  %6099 = vmatpush1.msra.mxu0 0.0
  %6100 = vmatprep.subr.mxu0 0.0
  %6101 = vmatpush1.msra.mxu0 0.0
  %6102 = vmatprep.subr.mxu0 0.0
  %6103 = vmatpush1.msra.mxu0 0.0
  %6104 = vmatprep.subr.mxu0 0.0
  %6105 = vmatpush1.msra.mxu0 0.0
  %6106 = vmatprep.subr.mxu0 0.0
  %6107 = vmatpush1.msra.mxu0 0.0
  %6108 = vmatprep.subr.mxu0 0.0
  %6109 = vmatpush1.msra.mxu0 0.0
  %6110 = vmatprep.subr.mxu0 0.0
  %6111 = vmatpush1.msra.mxu0 0.0
  %6112 = vmatprep.subr.mxu0 0.0
  %6113 = vmatpush1.msra.mxu0 0.0
  %6114 = vmatprep.subr.mxu0 0.0
  %6115 = vmatpush1.msra.mxu0 0.0
  %6116 = vmatprep.mubr.f32.mxu0 0.0
  %6117 = vmatmul.mubr.f32.gmra.mrb[0].mxu0 %v6045
  %v6118 = vpop.f32.mrb[0].mxu0
  %v6119 = vadd.f32 0.0, %v6118
  %v6120 = vpop.f32.mrb[0].mxu0
  %6121 = vmatprep.mubr.f32.mxu0 0.0
  %6122 = vmatmul.mubr.f32.gmra.mrb[0].mxu0 %v6048
  %v6123 = vpop.f32.mrb[0].mxu0
  %v6124 = vadd.f32 0.0, %v6123
  %v6125 = vpop.f32.mrb[0].mxu0
  %6126 = vdwg.mxu0
  %6127 = vrot.lane.b32.xlu0 %v5518, 104
  %v6128 = vpop.permute.xlu0 %6127
  %6129 = vrot.lane.b32.xlu0 %v5523, 104
  %v6130 = vpop.permute.xlu0 %6129
  %6131 = vrot.lane.b32.xlu0 %v5518, 72
  %v6132 = vpop.permute.xlu0 %6131
  %6133 = vrot.lane.b32.xlu0 %v5523, 72
  %v6134 = vpop.permute.xlu0 %6133
  %v6135 = vsel %vm3117, %v6128, 0
  %v6137 = vsel %vm3117, %v6130, 0
  %v6139 = vsel %vm3117, %v6132, 0
  %v6141 = vsel %vm3117, %v6134, 0
  %6143 = vmatprep.subr.mxu0 0.0
  %6144 = vmatpush1.xpose.msra.mxu0 %v6139
  %6145 = vmatprep.subr.mxu0 0.0
  %6146 = vmatpush1.xpose.msra.mxu0 %v6141
  %6147 = vmatprep.subr.mxu0 0.0
  %6148 = vmatpush1.xpose.msra.mxu0 0.0
  %6149 = vmatprep.subr.mxu0 0.0
  %6150 = vmatpush1.xpose.msra.mxu0 0.0
  %6151 = vmatprep.subr.mxu0 0.0
  %6152 = vmatpush1.xpose.msra.mxu0 0.0
  %6153 = vmatprep.subr.mxu0 0.0
  %6154 = vmatpush1.xpose.msra.mxu0 0.0
  %6155 = vmatprep.subr.mxu0 0.0
  %6156 = vmatpush1.xpose.msra.mxu0 0.0
  %6157 = vmatprep.subr.mxu0 0.0
  %6158 = vmatpush1.xpose.msra.mxu0 0.0
  %6159 = vmatprep.subr.mxu0 0.0
  %6160 = vmatpush1.xpose.msra.mxu0 0.0
  %6161 = vmatprep.subr.mxu0 0.0
  %6162 = vmatpush1.xpose.msra.mxu0 0.0
  %6163 = vmatprep.subr.mxu0 0.0
  %6164 = vmatpush1.xpose.msra.mxu0 0.0
  %6165 = vmatprep.subr.mxu0 0.0
  %6166 = vmatpush1.xpose.msra.mxu0 0.0
  %6167 = vmatprep.subr.mxu0 0.0
  %6168 = vmatpush1.xpose.msra.mxu0 0.0
  %6169 = vmatprep.subr.mxu0 0.0
  %6170 = vmatpush1.xpose.msra.mxu0 0.0
  %6171 = vmatprep.subr.mxu0 0.0
  %6172 = vmatpush1.xpose.msra.mxu0 0.0
  %6173 = vmatprep.subr.mxu0 0.0
  %6174 = vmatpush1.xpose.msra.mxu0 0.0
  %6175 = vmatprep.subr.mxu0 0.0
  %6176 = vmatpush1.xpose.msra.mxu0 0.0
  %6177 = vmatprep.subr.mxu0 0.0
  %6178 = vmatpush1.xpose.msra.mxu0 0.0
  %6179 = vmatprep.subr.mxu0 0.0
  %6180 = vmatpush1.xpose.msra.mxu0 0.0
  %6181 = vmatprep.subr.mxu0 0.0
  %6182 = vmatpush1.xpose.msra.mxu0 0.0
  %6183 = vmatprep.subr.mxu0 0.0
  %6184 = vmatpush1.xpose.msra.mxu0 0.0
  %6185 = vmatprep.subr.mxu0 0.0
  %6186 = vmatpush1.xpose.msra.mxu0 0.0
  %6187 = vmatprep.subr.mxu0 0.0
  %6188 = vmatpush1.xpose.msra.mxu0 0.0
  %6189 = vmatprep.subr.mxu0 0.0
  %6190 = vmatpush1.xpose.msra.mxu0 0.0
  %6191 = vmatprep.subr.mxu0 0.0
  %6192 = vmatpush1.xpose.msra.mxu0 0.0
  %6193 = vmatprep.subr.mxu0 0.0
  %6194 = vmatpush1.xpose.msra.mxu0 0.0
  %6195 = vmatprep.subr.mxu0 0.0
  %6196 = vmatpush1.xpose.msra.mxu0 0.0
  %6197 = vmatprep.subr.mxu0 0.0
  %6198 = vmatpush1.xpose.msra.mxu0 0.0
  %6199 = vmatprep.subr.mxu0 0.0
  %6200 = vmatpush1.xpose.msra.mxu0 0.0
  %6201 = vmatprep.subr.mxu0 0.0
  %6202 = vmatpush1.xpose.msra.mxu0 0.0
  %6203 = vmatprep.subr.mxu0 0.0
  %6204 = vmatpush1.xpose.msra.mxu0 0.0
  %6205 = vmatprep.subr.mxu0 0.0
  %6206 = vmatpush1.xpose.msra.mxu0 0.0
  %6207 = vmatprep.mubr.f32.mxu0 0.0
  %6208 = vmatmul.mubr.f32.gmra.mrb[0].mxu0 %v6135
  %v6209 = vpop.f32.mrb[0].mxu0
  %v6210 = vadd.f32 %v52, %v6209
  %v6211 = vpop.f32.mrb[0].mxu0
  %6212 = vmatprep.mubr.f32.mxu0 0.0
  %6213 = vmatmul.mubr.f32.gmra.mrb[0].mxu0 %v6137
  %v6214 = vpop.f32.mrb[0].mxu0
  %v6215 = vadd.f32 %v53, %v6214
  %v6216 = vpop.f32.mrb[0].mxu0
  %6217 = vdwg.mxu0
  %v6218 = vsel %vm3201, %v6210, -inf
  %6219 = vmax.xlane.f32.xlu0 %v6218
  %v6220 = vpop.xlane.xlu0 %6219
  %v6221 = vsel %vm3205, %v6215, -inf
  %6222 = vmax.xlane.f32.xlu0 %v6221
  %v6223 = vpop.xlane.xlu0 %6222
  %v6224 = vsub.f32 %v6210, %v6220
  %v6225 = vsub.f32 %v6215, %v6223
  %v6226 = vmul.f32 %v6224, 1.442695
  %v6227 = vpow.pop %v6226
  %v6228 = vmul.f32 %v6225, 1.442695
  %v6229 = vpow.pop %v6228
  %v6230 = vsel %vm3201, %v6227, 0.0
  %6231 = vadd.xlane.f32.xlu0 %v6230
  %v6232 = vpop.xlane.xlu0 %6231
  %v6233 = vsel %vm3205, %v6229, 0.0
  %6234 = vadd.xlane.f32.xlu0 %v6233
  %v6235 = vpop.xlane.xlu0 %6234
  %v6236 = vrcp.pop %v6232
  %v6237 = vrcp.pop %v6235
  %v6238 = vmul.f32 %v6227, %v6236
  %v6239 = vmul.f32 %v6229, %v6237
  %6240 = vrot.lane.b32.xlu0 %v5518, 40
  %v6241 = vpop.permute.xlu0 %6240
  %6242 = vrot.lane.b32.xlu0 %v5523, 40
  %v6243 = vpop.permute.xlu0 %6242
  %v6246 = vsel %vm3201, %v6238, 0
  %v6249 = vsel %vm3201, %v6239, 0
  %v6251 = vsel %vm2922, %v6243, 0
  %6253 = vmatprep.subr.mxu0 0.0
  %6254 = vmatpush1.msra.mxu0 %v6241
  %6255 = vmatprep.subr.mxu0 0.0
  %6256 = vmatpush1.msra.mxu0 %v6251
  %6257 = vmatprep.subr.mxu0 0.0
  %6258 = vmatpush1.msra.mxu0 0.0
  %6259 = vmatprep.subr.mxu0 0.0
  %6260 = vmatpush1.msra.mxu0 0.0
  %6261 = vmatprep.subr.mxu0 0.0
  %6262 = vmatpush1.msra.mxu0 0.0
  %6263 = vmatprep.subr.mxu0 0.0
  %6264 = vmatpush1.msra.mxu0 0.0
  %6265 = vmatprep.subr.mxu0 0.0
  %6266 = vmatpush1.msra.mxu0 0.0
  %6267 = vmatprep.subr.mxu0 0.0
  %6268 = vmatpush1.msra.mxu0 0.0
  %6269 = vmatprep.subr.mxu0 0.0
  %6270 = vmatpush1.msra.mxu0 0.0
  %6271 = vmatprep.subr.mxu0 0.0
  %6272 = vmatpush1.msra.mxu0 0.0
  %6273 = vmatprep.subr.mxu0 0.0
  %6274 = vmatpush1.msra.mxu0 0.0
  %6275 = vmatprep.subr.mxu0 0.0
  %6276 = vmatpush1.msra.mxu0 0.0
  %6277 = vmatprep.subr.mxu0 0.0
  %6278 = vmatpush1.msra.mxu0 0.0
  %6279 = vmatprep.subr.mxu0 0.0
  %6280 = vmatpush1.msra.mxu0 0.0
  %6281 = vmatprep.subr.mxu0 0.0
  %6282 = vmatpush1.msra.mxu0 0.0
  %6283 = vmatprep.subr.mxu0 0.0
  %6284 = vmatpush1.msra.mxu0 0.0
  %6285 = vmatprep.subr.mxu0 0.0
  %6286 = vmatpush1.msra.mxu0 0.0
  %6287 = vmatprep.subr.mxu0 0.0
  %6288 = vmatpush1.msra.mxu0 0.0
  %6289 = vmatprep.subr.mxu0 0.0
  %6290 = vmatpush1.msra.mxu0 0.0
  %6291 = vmatprep.subr.mxu0 0.0
  %6292 = vmatpush1.msra.mxu0 0.0
  %6293 = vmatprep.subr.mxu0 0.0
  %6294 = vmatpush1.msra.mxu0 0.0
  %6295 = vmatprep.subr.mxu0 0.0
  %6296 = vmatpush1.msra.mxu0 0.0
  %6297 = vmatprep.subr.mxu0 0.0
  %6298 = vmatpush1.msra.mxu0 0.0
  %6299 = vmatprep.subr.mxu0 0.0
  %6300 = vmatpush1.msra.mxu0 0.0
  %6301 = vmatprep.subr.mxu0 0.0
  %6302 = vmatpush1.msra.mxu0 0.0
  %6303 = vmatprep.subr.mxu0 0.0
  %6304 = vmatpush1.msra.mxu0 0.0
  %6305 = vmatprep.subr.mxu0 0.0
  %6306 = vmatpush1.msra.mxu0 0.0
  %6307 = vmatprep.subr.mxu0 0.0
  %6308 = vmatpush1.msra.mxu0 0.0
  %6309 = vmatprep.subr.mxu0 0.0
  %6310 = vmatpush1.msra.mxu0 0.0
  %6311 = vmatprep.subr.mxu0 0.0
  %6312 = vmatpush1.msra.mxu0 0.0
  %6313 = vmatprep.subr.mxu0 0.0
  %6314 = vmatpush1.msra.mxu0 0.0
  %6315 = vmatprep.subr.mxu0 0.0
  %6316 = vmatpush1.msra.mxu0 0.0
  %6317 = vmatprep.mubr.f32.mxu0 0.0
  %6318 = vmatmul.mubr.f32.gmra.mrb[0].mxu0 %v6246
  %v6319 = vpop.f32.mrb[0].mxu0
  %v6320 = vadd.f32 0.0, %v6319
  %v6321 = vpop.f32.mrb[0].mxu0
  %6322 = vmatprep.mubr.f32.mxu0 0.0
  %6323 = vmatmul.mubr.f32.gmra.mrb[0].mxu0 %v6249
  %v6324 = vpop.f32.mrb[0].mxu0
  %v6325 = vadd.f32 0.0, %v6324
  %v6326 = vpop.f32.mrb[0].mxu0
  %6327 = vdwg.mxu0
  %6330 = vrot.lane.b32.xlu0 %v5918, 8
  %v6331 = vpop.permute.xlu0 %6330
  %6332 = vrot.lane.b32.xlu0 %v5923, 8
  %v6333 = vpop.permute.xlu0 %6332
  %6338 = vrot.lane.b32.xlu0 %v6119, 16
  %v6339 = vpop.permute.xlu0 %6338
  %6340 = vrot.lane.b32.xlu0 %v6124, 16
  %v6341 = vpop.permute.xlu0 %6340
  %6346 = vrot.lane.b32.xlu0 %v6320, 24
  %v6347 = vpop.permute.xlu0 %6346
  %6348 = vrot.lane.b32.xlu0 %v6325, 24
  %v6349 = vpop.permute.xlu0 %6348
  %v6352 = vsel %vm3117, %v5717, %v6331
  %v6353 = vsel %vm3117, %v5722, %v6333
  %v6354 = vsel %vm341, %v6352, %v6339
  %v6355 = vsel %vm341, %v6353, %v6341
  %v6356 = vsel %vm3944, %v6354, %v6347
  %v6357 = vsel %vm3944, %v6355, %v6349
  %v6358 = vlaneseq
  %v6359 = vshrl.u32 %v6358, 7
  %v6360 = vsub.s32 1, %v6359
  %v6361 = vrot.slane %v5439, %v6360
  %6366 = vrot.lane.b32.xlu0 %v5426, 32
  %v6367 = vpop.permute.xlu0 %6366
  %6368 = vrot.lane.b32.xlu0 %v5429, 32
  %v6369 = vpop.permute.xlu0 %6368
  %6370 = vrot.lane.b32.xlu0 %v5432, 32
  %v6371 = vpop.permute.xlu0 %6370
  %6372 = vrot.lane.b32.xlu0 %v5435, 32
  %v6373 = vpop.permute.xlu0 %6372
  %v6379 = vsel %vm1164, %v6356, 0
  %v6382 = vsel %vm1164, %v6357, 0
  %6384 = vmatprep.subr.mxu0 0.0
  %6385 = vmatpush1.msra.mxu0 %v6367
  %6386 = vmatprep.subr.mxu0 0.0
  %6387 = vmatpush1.msra.mxu0 %v6369
  %6388 = vmatprep.subr.mxu0 0.0
  %6389 = vmatpush1.msra.mxu0 %v6371
  %6390 = vmatprep.subr.mxu0 0.0
  %6391 = vmatpush1.msra.mxu0 %v6373
  %6392 = vmatprep.subr.mxu0 0.0
  %6393 = vmatpush1.msra.mxu0 0.0
  %6394 = vmatprep.subr.mxu0 0.0
  %6395 = vmatpush1.msra.mxu0 0.0
  %6396 = vmatprep.subr.mxu0 0.0
  %6397 = vmatpush1.msra.mxu0 0.0
  %6398 = vmatprep.subr.mxu0 0.0
  %6399 = vmatpush1.msra.mxu0 0.0
  %6400 = vmatprep.subr.mxu0 0.0
  %6401 = vmatpush1.msra.mxu0 0.0
  %6402 = vmatprep.subr.mxu0 0.0
  %6403 = vmatpush1.msra.mxu0 0.0
  %6404 = vmatprep.subr.mxu0 0.0
  %6405 = vmatpush1.msra.mxu0 0.0
  %6406 = vmatprep.subr.mxu0 0.0
  %6407 = vmatpush1.msra.mxu0 0.0
  %6408 = vmatprep.subr.mxu0 0.0
  %6409 = vmatpush1.msra.mxu0 0.0
  %6410 = vmatprep.subr.mxu0 0.0
  %6411 = vmatpush1.msra.mxu0 0.0
  %6412 = vmatprep.subr.mxu0 0.0
  %6413 = vmatpush1.msra.mxu0 0.0
  %6414 = vmatprep.subr.mxu0 0.0
  %6415 = vmatpush1.msra.mxu0 0.0
  %6416 = vmatprep.subr.mxu0 0.0
  %6417 = vmatpush1.msra.mxu0 0.0
  %6418 = vmatprep.subr.mxu0 0.0
  %6419 = vmatpush1.msra.mxu0 0.0
  %6420 = vmatprep.subr.mxu0 0.0
  %6421 = vmatpush1.msra.mxu0 0.0
  %6422 = vmatprep.subr.mxu0 0.0
  %6423 = vmatpush1.msra.mxu0 0.0
  %6424 = vmatprep.subr.mxu0 0.0
  %6425 = vmatpush1.msra.mxu0 0.0
  %6426 = vmatprep.subr.mxu0 0.0
  %6427 = vmatpush1.msra.mxu0 0.0
  %6428 = vmatprep.subr.mxu0 0.0
  %6429 = vmatpush1.msra.mxu0 0.0
  %6430 = vmatprep.subr.mxu0 0.0
  %6431 = vmatpush1.msra.mxu0 0.0
  %6432 = vmatprep.subr.mxu0 0.0
  %6433 = vmatpush1.msra.mxu0 0.0
  %6434 = vmatprep.subr.mxu0 0.0
  %6435 = vmatpush1.msra.mxu0 0.0
  %6436 = vmatprep.subr.mxu0 0.0
  %6437 = vmatpush1.msra.mxu0 0.0
  %6438 = vmatprep.subr.mxu0 0.0
  %6439 = vmatpush1.msra.mxu0 0.0
  %6440 = vmatprep.subr.mxu0 0.0
  %6441 = vmatpush1.msra.mxu0 0.0
  %6442 = vmatprep.subr.mxu0 0.0
  %6443 = vmatpush1.msra.mxu0 0.0
  %6444 = vmatprep.subr.mxu0 0.0
  %6445 = vmatpush1.msra.mxu0 0.0
  %6446 = vmatprep.subr.mxu0 0.0
  %6447 = vmatpush1.msra.mxu0 0.0
  %6448 = vmatprep.mubr.f32.mxu0 0.0
  %6449 = vmatmul.mubr.f32.gmra.mrb[0].mxu0 %v6379
  %v6450 = vpop.f32.mrb[0].mxu0
  %v6451 = vadd.f32 %v6361, %v6450
  %v6452 = vpop.f32.mrb[0].mxu0
  %6453 = vmatprep.mubr.f32.mxu0 0.0
  %6454 = vmatmul.mubr.f32.gmra.mrb[0].mxu0 %v6382
  %v6455 = vpop.f32.mrb[0].mxu0
  %v6456 = vadd.f32 %v6361, %v6455
  %v6457 = vpop.f32.mrb[0].mxu0
  %6458 = vdwg.mxu0
  %v6459 = vadd.f32 %v5423, %v6451
  %v6460 = vadd.f32 %v5424, %v6456
  %v6461 = vsel %vm1164, %v6459, 0.0
  %6462 = vadd.xlane.f32.xlu0 %v6461
  %v6463 = vpop.xlane.xlu0 %6462
  %v6464 = vsel %vm4053, %v6460, 0.0
  %6465 = vadd.xlane.f32.xlu0 %v6464
  %v6466 = vpop.xlane.xlu0 %6465
  %v6467 = vmul.f32 %v6463, %v4057
  %v6468 = vmul.f32 %v6466, %v4057
  %v6469 = vsub.f32 %v6459, %v6467
  %v6470 = vsub.f32 %v6460, %v6468
  %v6471 = vmul.f32 %v6469, %v6469
  %v6472 = vmul.f32 %v6470, %v6470
  %v6473 = vsel %vm1164, %v6471, 0.0
  %6474 = vadd.xlane.f32.xlu0 %v6473
  %v6475 = vpop.xlane.xlu0 %6474
  %v6476 = vsel %vm4053, %v6472, 0.0
  %6477 = vadd.xlane.f32.xlu0 %v6476
  %v6478 = vpop.xlane.xlu0 %6477
  %v6479 = vmul.f32 %v6475, %v4057
  %v6480 = vmul.f32 %v6478, %v4057
  %v6481 = vadd.f32 %v6479, 1e-05
  %v6482 = vadd.f32 %v6480, 1e-05
  %v6483 = vrsqrt.pop %v6481
  %v6484 = vrsqrt.pop %v6482
  %v6485 = vmul.f32 %v6469, %v6483
  %v6486 = vmul.f32 %v6470, %v6484
  %v6487 = vlaneseq
  %v6488 = vshrl.u32 %v6487, 7
  %v6489 = vsub.s32 2, %v6488
  %v6490 = vrot.slane %v5439, %v6489
  %v6491 = vmul.f32 %v6485, %v6490
  %v6492 = vmul.f32 %v6486, %v6490
  %v6493 = vlaneseq
  %v6494 = vshrl.u32 %v6493, 7
  %v6495 = vsub.s32 3, %v6494
  %v6496 = vrot.slane %v5439, %v6495
  %v6497 = vadd.f32 %v6491, %v6496
  %v6498 = vadd.f32 %v6492, %v6496
  %v6499 = vlaneseq
  %v6500 = vshrl.u32 %v6499, 7
  %v6501 = vsub.s32 4, %v6500
  %v6502 = vrot.slane %v5439, %v6501
  %v6504 = vsel %vm1164, %v6497, 0
  %v6507 = vsel %vm1164, %v6498, 0
  %6509 = vmatprep.subr.mxu0 0.0
  %6510 = vmatpush1.msra.mxu0 %v5427
  %6511 = vmatprep.subr.mxu0 0.0
  %6512 = vmatpush1.msra.mxu0 %v5430
  %6513 = vmatprep.subr.mxu0 0.0
  %6514 = vmatpush1.msra.mxu0 %v5433
  %6515 = vmatprep.subr.mxu0 0.0
  %6516 = vmatpush1.msra.mxu0 %v5436
  %6517 = vmatprep.subr.mxu0 0.0
  %6518 = vmatpush1.msra.mxu0 0.0
  %6519 = vmatprep.subr.mxu0 0.0
  %6520 = vmatpush1.msra.mxu0 0.0
  %6521 = vmatprep.subr.mxu0 0.0
  %6522 = vmatpush1.msra.mxu0 0.0
  %6523 = vmatprep.subr.mxu0 0.0
  %6524 = vmatpush1.msra.mxu0 0.0
  %6525 = vmatprep.subr.mxu0 0.0
  %6526 = vmatpush1.msra.mxu0 0.0
  %6527 = vmatprep.subr.mxu0 0.0
  %6528 = vmatpush1.msra.mxu0 0.0
  %6529 = vmatprep.subr.mxu0 0.0
  %6530 = vmatpush1.msra.mxu0 0.0
  %6531 = vmatprep.subr.mxu0 0.0
  %6532 = vmatpush1.msra.mxu0 0.0
  %6533 = vmatprep.subr.mxu0 0.0
  %6534 = vmatpush1.msra.mxu0 0.0
  %6535 = vmatprep.subr.mxu0 0.0
  %6536 = vmatpush1.msra.mxu0 0.0
  %6537 = vmatprep.subr.mxu0 0.0
  %6538 = vmatpush1.msra.mxu0 0.0
  %6539 = vmatprep.subr.mxu0 0.0
  %6540 = vmatpush1.msra.mxu0 0.0
  %6541 = vmatprep.subr.mxu0 0.0
  %6542 = vmatpush1.msra.mxu0 0.0
  %6543 = vmatprep.subr.mxu0 0.0
  %6544 = vmatpush1.msra.mxu0 0.0
  %6545 = vmatprep.subr.mxu0 0.0
  %6546 = vmatpush1.msra.mxu0 0.0
  %6547 = vmatprep.subr.mxu0 0.0
  %6548 = vmatpush1.msra.mxu0 0.0
  %6549 = vmatprep.subr.mxu0 0.0
  %6550 = vmatpush1.msra.mxu0 0.0
  %6551 = vmatprep.subr.mxu0 0.0
  %6552 = vmatpush1.msra.mxu0 0.0
  %6553 = vmatprep.subr.mxu0 0.0
  %6554 = vmatpush1.msra.mxu0 0.0
  %6555 = vmatprep.subr.mxu0 0.0
  %6556 = vmatpush1.msra.mxu0 0.0
  %6557 = vmatprep.subr.mxu0 0.0
  %6558 = vmatpush1.msra.mxu0 0.0
  %6559 = vmatprep.subr.mxu0 0.0
  %6560 = vmatpush1.msra.mxu0 0.0
  %6561 = vmatprep.subr.mxu0 0.0
  %6562 = vmatpush1.msra.mxu0 0.0
  %6563 = vmatprep.subr.mxu0 0.0
  %6564 = vmatpush1.msra.mxu0 0.0
  %6565 = vmatprep.subr.mxu0 0.0
  %6566 = vmatpush1.msra.mxu0 0.0
  %6567 = vmatprep.subr.mxu0 0.0
  %6568 = vmatpush1.msra.mxu0 0.0
  %6569 = vmatprep.subr.mxu0 0.0
  %6570 = vmatpush1.msra.mxu0 0.0
  %6571 = vmatprep.subr.mxu0 0.0
  %6572 = vmatpush1.msra.mxu0 0.0
  %6573 = vmatprep.mubr.f32.mxu0 0.0
  %6574 = vmatmul.mubr.f32.gmra.mrb[0].mxu0 %v6504
  %v6575 = vpop.f32.mrb[0].mxu0
  %v6576 = vadd.f32 %v6502, %v6575
  %v6577 = vpop.f32.mrb[0].mxu0
  %6578 = vmatprep.mubr.f32.mxu0 0.0
  %6579 = vmatmul.mubr.f32.gmra.mrb[0].mxu0 %v6507
  %v6580 = vpop.f32.mrb[0].mxu0
  %v6581 = vadd.f32 %v6502, %v6580
  %v6582 = vpop.f32.mrb[0].mxu0
  %6583 = vdwg.mxu0
  %v6584 = vlaneseq
  %v6585 = vshrl.u32 %v6584, 7
  %v6586 = vsub.s32 5, %v6585
  %v6587 = vrot.slane %v5439, %v6586
  %6592 = vrot.lane.b32.xlu0 %v5427, 96
  %v6593 = vpop.permute.xlu0 %6592
  %6594 = vrot.lane.b32.xlu0 %v5430, 96
  %v6595 = vpop.permute.xlu0 %6594
  %6596 = vrot.lane.b32.xlu0 %v5433, 96
  %v6597 = vpop.permute.xlu0 %6596
  %6598 = vrot.lane.b32.xlu0 %v5436, 96
  %v6599 = vpop.permute.xlu0 %6598
  %6604 = vmatprep.subr.mxu0 0.0
  %6605 = vmatpush1.msra.mxu0 %v6593
  %6606 = vmatprep.subr.mxu0 0.0
  %6607 = vmatpush1.msra.mxu0 %v6595
  %6608 = vmatprep.subr.mxu0 0.0
  %6609 = vmatpush1.msra.mxu0 %v6597
  %6610 = vmatprep.subr.mxu0 0.0
  %6611 = vmatpush1.msra.mxu0 %v6599
  %6612 = vmatprep.subr.mxu0 0.0
  %6613 = vmatpush1.msra.mxu0 0.0
  %6614 = vmatprep.subr.mxu0 0.0
  %6615 = vmatpush1.msra.mxu0 0.0
  %6616 = vmatprep.subr.mxu0 0.0
  %6617 = vmatpush1.msra.mxu0 0.0
  %6618 = vmatprep.subr.mxu0 0.0
  %6619 = vmatpush1.msra.mxu0 0.0
  %6620 = vmatprep.subr.mxu0 0.0
  %6621 = vmatpush1.msra.mxu0 0.0
  %6622 = vmatprep.subr.mxu0 0.0
  %6623 = vmatpush1.msra.mxu0 0.0
  %6624 = vmatprep.subr.mxu0 0.0
  %6625 = vmatpush1.msra.mxu0 0.0
  %6626 = vmatprep.subr.mxu0 0.0
  %6627 = vmatpush1.msra.mxu0 0.0
  %6628 = vmatprep.subr.mxu0 0.0
  %6629 = vmatpush1.msra.mxu0 0.0
  %6630 = vmatprep.subr.mxu0 0.0
  %6631 = vmatpush1.msra.mxu0 0.0
  %6632 = vmatprep.subr.mxu0 0.0
  %6633 = vmatpush1.msra.mxu0 0.0
  %6634 = vmatprep.subr.mxu0 0.0
  %6635 = vmatpush1.msra.mxu0 0.0
  %6636 = vmatprep.subr.mxu0 0.0
  %6637 = vmatpush1.msra.mxu0 0.0
  %6638 = vmatprep.subr.mxu0 0.0
  %6639 = vmatpush1.msra.mxu0 0.0
  %6640 = vmatprep.subr.mxu0 0.0
  %6641 = vmatpush1.msra.mxu0 0.0
  %6642 = vmatprep.subr.mxu0 0.0
  %6643 = vmatpush1.msra.mxu0 0.0
  %6644 = vmatprep.subr.mxu0 0.0
  %6645 = vmatpush1.msra.mxu0 0.0
  %6646 = vmatprep.subr.mxu0 0.0
  %6647 = vmatpush1.msra.mxu0 0.0
  %6648 = vmatprep.subr.mxu0 0.0
  %6649 = vmatpush1.msra.mxu0 0.0
  %6650 = vmatprep.subr.mxu0 0.0
  %6651 = vmatpush1.msra.mxu0 0.0
  %6652 = vmatprep.subr.mxu0 0.0
  %6653 = vmatpush1.msra.mxu0 0.0
  %6654 = vmatprep.subr.mxu0 0.0
  %6655 = vmatpush1.msra.mxu0 0.0
  %6656 = vmatprep.subr.mxu0 0.0
  %6657 = vmatpush1.msra.mxu0 0.0
  %6658 = vmatprep.subr.mxu0 0.0
  %6659 = vmatpush1.msra.mxu0 0.0
  %6660 = vmatprep.subr.mxu0 0.0
  %6661 = vmatpush1.msra.mxu0 0.0
  %6662 = vmatprep.subr.mxu0 0.0
  %6663 = vmatpush1.msra.mxu0 0.0
  %6664 = vmatprep.subr.mxu0 0.0
  %6665 = vmatpush1.msra.mxu0 0.0
  %6666 = vmatprep.subr.mxu0 0.0
  %6667 = vmatpush1.msra.mxu0 0.0
  %6668 = vmatprep.mubr.f32.mxu0 0.0
  %6669 = vmatmul.mubr.f32.gmra.mrb[0].mxu0 %v4196
  %v6670 = vpop.f32.mrb[0].mxu0
  %v6671 = vadd.f32 %v6587, %v6670
  %v6672 = vpop.f32.mrb[0].mxu0
  %6673 = vdwg.mxu0
  %v6675 = vsel %vm3117, %v6576, 0
  %v6678 = vsel %vm3117, %v6581, 0
  %v6681 = vsel %vm3117, %v6671, 0
  %6683 = vmatprep.subr.mxu0 0.0
  %6684 = vmatpush1.xpose.msra.mxu0 %v6681
  %6685 = vmatprep.subr.mxu0 0.0
  %6686 = vmatpush1.xpose.msra.mxu0 0.0
  %6687 = vmatprep.subr.mxu0 0.0
  %6688 = vmatpush1.xpose.msra.mxu0 0.0
  %6689 = vmatprep.subr.mxu0 0.0
  %6690 = vmatpush1.xpose.msra.mxu0 0.0
  %6691 = vmatprep.subr.mxu0 0.0
  %6692 = vmatpush1.xpose.msra.mxu0 0.0
  %6693 = vmatprep.subr.mxu0 0.0
  %6694 = vmatpush1.xpose.msra.mxu0 0.0
  %6695 = vmatprep.subr.mxu0 0.0
  %6696 = vmatpush1.xpose.msra.mxu0 0.0
  %6697 = vmatprep.subr.mxu0 0.0
  %6698 = vmatpush1.xpose.msra.mxu0 0.0
  %6699 = vmatprep.subr.mxu0 0.0
  %6700 = vmatpush1.xpose.msra.mxu0 0.0
  %6701 = vmatprep.subr.mxu0 0.0
  %6702 = vmatpush1.xpose.msra.mxu0 0.0
  %6703 = vmatprep.subr.mxu0 0.0
  %6704 = vmatpush1.xpose.msra.mxu0 0.0
  %6705 = vmatprep.subr.mxu0 0.0
  %6706 = vmatpush1.xpose.msra.mxu0 0.0
  %6707 = vmatprep.subr.mxu0 0.0
  %6708 = vmatpush1.xpose.msra.mxu0 0.0
  %6709 = vmatprep.subr.mxu0 0.0
  %6710 = vmatpush1.xpose.msra.mxu0 0.0
  %6711 = vmatprep.subr.mxu0 0.0
  %6712 = vmatpush1.xpose.msra.mxu0 0.0
  %6713 = vmatprep.subr.mxu0 0.0
  %6714 = vmatpush1.xpose.msra.mxu0 0.0
  %6715 = vmatprep.subr.mxu0 0.0
  %6716 = vmatpush1.xpose.msra.mxu0 0.0
  %6717 = vmatprep.subr.mxu0 0.0
  %6718 = vmatpush1.xpose.msra.mxu0 0.0
  %6719 = vmatprep.subr.mxu0 0.0
  %6720 = vmatpush1.xpose.msra.mxu0 0.0
  %6721 = vmatprep.subr.mxu0 0.0
  %6722 = vmatpush1.xpose.msra.mxu0 0.0
  %6723 = vmatprep.subr.mxu0 0.0
  %6724 = vmatpush1.xpose.msra.mxu0 0.0
  %6725 = vmatprep.subr.mxu0 0.0
  %6726 = vmatpush1.xpose.msra.mxu0 0.0
  %6727 = vmatprep.subr.mxu0 0.0
  %6728 = vmatpush1.xpose.msra.mxu0 0.0
  %6729 = vmatprep.subr.mxu0 0.0
  %6730 = vmatpush1.xpose.msra.mxu0 0.0
  %6731 = vmatprep.subr.mxu0 0.0
  %6732 = vmatpush1.xpose.msra.mxu0 0.0
  %6733 = vmatprep.subr.mxu0 0.0
  %6734 = vmatpush1.xpose.msra.mxu0 0.0
  %6735 = vmatprep.subr.mxu0 0.0
  %6736 = vmatpush1.xpose.msra.mxu0 0.0
  %6737 = vmatprep.subr.mxu0 0.0
  %6738 = vmatpush1.xpose.msra.mxu0 0.0
  %6739 = vmatprep.subr.mxu0 0.0
  %6740 = vmatpush1.xpose.msra.mxu0 0.0
  %6741 = vmatprep.subr.mxu0 0.0
  %6742 = vmatpush1.xpose.msra.mxu0 0.0
  %6743 = vmatprep.subr.mxu0 0.0
  %6744 = vmatpush1.xpose.msra.mxu0 0.0
  %6745 = vmatprep.subr.mxu0 0.0
  %6746 = vmatpush1.xpose.msra.mxu0 0.0
  %6747 = vmatprep.mubr.f32.mxu0 0.0
  %6748 = vmatmul.mubr.f32.gmra.mrb[0].mxu0 %v6675
  %v6749 = vpop.f32.mrb[0].mxu0
  %v6750 = vadd.f32 %v54, %v6749
  %v6751 = vpop.f32.mrb[0].mxu0
  %6752 = vmatprep.mubr.f32.mxu0 0.0
  %6753 = vmatmul.mubr.f32.gmra.mrb[0].mxu0 %v6678
  %v6754 = vpop.f32.mrb[0].mxu0
  %v6755 = vadd.f32 %v55, %v6754
  %v6756 = vpop.f32.mrb[0].mxu0
  %6757 = vdwg.mxu0
  %v6758 = vsel %vm3117, %v6750, -inf
  %6759 = vmax.xlane.f32.xlu0 %v6758
  %v6760 = vpop.xlane.xlu0 %6759
  %v6761 = vsel %vm4355, %v6755, -inf
  %6762 = vmax.xlane.f32.xlu0 %v6761
  %v6763 = vpop.xlane.xlu0 %6762
  %v6764 = vsub.f32 %v6750, %v6760
  %v6765 = vsub.f32 %v6755, %v6763
  %v6766 = vmul.f32 %v6764, 1.442695
  %v6767 = vpow.pop %v6766
  %v6768 = vmul.f32 %v6765, 1.442695
  %v6769 = vpow.pop %v6768
  %v6770 = vsel %vm3117, %v6767, 0.0
  %6771 = vadd.xlane.f32.xlu0 %v6770
  %v6772 = vpop.xlane.xlu0 %6771
  %v6773 = vsel %vm4355, %v6769, 0.0
  %6774 = vadd.xlane.f32.xlu0 %v6773
  %v6775 = vpop.xlane.xlu0 %6774
  %v6776 = vrcp.pop %v6772
  %v6777 = vrcp.pop %v6775
  %v6778 = vmul.f32 %v6767, %v6776
  %v6779 = vmul.f32 %v6769, %v6777
  %6780 = vrot.lane.b32.xlu0 %v6671, 96
  %v6781 = vpop.permute.xlu0 %6780
  %v6784 = vsel %vm3117, %v6778, 0
  %v6787 = vsel %vm3117, %v6779, 0
  %6789 = vmatprep.subr.mxu0 0.0
  %6790 = vmatpush1.msra.mxu0 %v6781
  %6791 = vmatprep.subr.mxu0 0.0
  %6792 = vmatpush1.msra.mxu0 0.0
  %6793 = vmatprep.subr.mxu0 0.0
  %6794 = vmatpush1.msra.mxu0 0.0
  %6795 = vmatprep.subr.mxu0 0.0
  %6796 = vmatpush1.msra.mxu0 0.0
  %6797 = vmatprep.subr.mxu0 0.0
  %6798 = vmatpush1.msra.mxu0 0.0
  %6799 = vmatprep.subr.mxu0 0.0
  %6800 = vmatpush1.msra.mxu0 0.0
  %6801 = vmatprep.subr.mxu0 0.0
  %6802 = vmatpush1.msra.mxu0 0.0
  %6803 = vmatprep.subr.mxu0 0.0
  %6804 = vmatpush1.msra.mxu0 0.0
  %6805 = vmatprep.subr.mxu0 0.0
  %6806 = vmatpush1.msra.mxu0 0.0
  %6807 = vmatprep.subr.mxu0 0.0
  %6808 = vmatpush1.msra.mxu0 0.0
  %6809 = vmatprep.subr.mxu0 0.0
  %6810 = vmatpush1.msra.mxu0 0.0
  %6811 = vmatprep.subr.mxu0 0.0
  %6812 = vmatpush1.msra.mxu0 0.0
  %6813 = vmatprep.subr.mxu0 0.0
  %6814 = vmatpush1.msra.mxu0 0.0
  %6815 = vmatprep.subr.mxu0 0.0
  %6816 = vmatpush1.msra.mxu0 0.0
  %6817 = vmatprep.subr.mxu0 0.0
  %6818 = vmatpush1.msra.mxu0 0.0
  %6819 = vmatprep.subr.mxu0 0.0
  %6820 = vmatpush1.msra.mxu0 0.0
  %6821 = vmatprep.subr.mxu0 0.0
  %6822 = vmatpush1.msra.mxu0 0.0
  %6823 = vmatprep.subr.mxu0 0.0
  %6824 = vmatpush1.msra.mxu0 0.0
  %6825 = vmatprep.subr.mxu0 0.0
  %6826 = vmatpush1.msra.mxu0 0.0
  %6827 = vmatprep.subr.mxu0 0.0
  %6828 = vmatpush1.msra.mxu0 0.0
  %6829 = vmatprep.subr.mxu0 0.0
  %6830 = vmatpush1.msra.mxu0 0.0
  %6831 = vmatprep.subr.mxu0 0.0
  %6832 = vmatpush1.msra.mxu0 0.0
  %6833 = vmatprep.subr.mxu0 0.0
  %6834 = vmatpush1.msra.mxu0 0.0
  %6835 = vmatprep.subr.mxu0 0.0
  %6836 = vmatpush1.msra.mxu0 0.0
  %6837 = vmatprep.subr.mxu0 0.0
  %6838 = vmatpush1.msra.mxu0 0.0
  %6839 = vmatprep.subr.mxu0 0.0
  %6840 = vmatpush1.msra.mxu0 0.0
  %6841 = vmatprep.subr.mxu0 0.0
  %6842 = vmatpush1.msra.mxu0 0.0
  %6843 = vmatprep.subr.mxu0 0.0
  %6844 = vmatpush1.msra.mxu0 0.0
  %6845 = vmatprep.subr.mxu0 0.0
  %6846 = vmatpush1.msra.mxu0 0.0
  %6847 = vmatprep.subr.mxu0 0.0
  %6848 = vmatpush1.msra.mxu0 0.0
  %6849 = vmatprep.subr.mxu0 0.0
  %6850 = vmatpush1.msra.mxu0 0.0
  %6851 = vmatprep.subr.mxu0 0.0
  %6852 = vmatpush1.msra.mxu0 0.0
  %6853 = vmatprep.mubr.f32.mxu0 0.0
  %6854 = vmatmul.mubr.f32.gmra.mrb[0].mxu0 %v6784
  %v6855 = vpop.f32.mrb[0].mxu0
  %v6856 = vadd.f32 0.0, %v6855
  %v6857 = vpop.f32.mrb[0].mxu0
  %6858 = vmatprep.mubr.f32.mxu0 0.0
  %6859 = vmatmul.mubr.f32.gmra.mrb[0].mxu0 %v6787
  %v6860 = vpop.f32.mrb[0].mxu0
  %v6861 = vadd.f32 0.0, %v6860
  %v6862 = vpop.f32.mrb[0].mxu0
  %6863 = vdwg.mxu0
  %6864 = vrot.lane.b32.xlu0 %v6576, 120
  %v6865 = vpop.permute.xlu0 %6864
  %6866 = vrot.lane.b32.xlu0 %v6581, 120
  %v6867 = vpop.permute.xlu0 %6866
  %6868 = vrot.lane.b32.xlu0 %v6671, 120
  %v6869 = vpop.permute.xlu0 %6868
  %v6870 = vsel %vm3117, %v6865, 0
  %v6872 = vsel %vm3117, %v6867, 0
  %v6874 = vsel %vm3117, %v6869, 0
  %6876 = vmatprep.subr.mxu0 0.0
  %6877 = vmatpush1.xpose.msra.mxu0 %v6874
  %6878 = vmatprep.subr.mxu0 0.0
  %6879 = vmatpush1.xpose.msra.mxu0 0.0
  %6880 = vmatprep.subr.mxu0 0.0
  %6881 = vmatpush1.xpose.msra.mxu0 0.0
  %6882 = vmatprep.subr.mxu0 0.0
  %6883 = vmatpush1.xpose.msra.mxu0 0.0
  %6884 = vmatprep.subr.mxu0 0.0
  %6885 = vmatpush1.xpose.msra.mxu0 0.0
  %6886 = vmatprep.subr.mxu0 0.0
  %6887 = vmatpush1.xpose.msra.mxu0 0.0
  %6888 = vmatprep.subr.mxu0 0.0
  %6889 = vmatpush1.xpose.msra.mxu0 0.0
  %6890 = vmatprep.subr.mxu0 0.0
  %6891 = vmatpush1.xpose.msra.mxu0 0.0
  %6892 = vmatprep.subr.mxu0 0.0
  %6893 = vmatpush1.xpose.msra.mxu0 0.0
  %6894 = vmatprep.subr.mxu0 0.0
  %6895 = vmatpush1.xpose.msra.mxu0 0.0
  %6896 = vmatprep.subr.mxu0 0.0
  %6897 = vmatpush1.xpose.msra.mxu0 0.0
  %6898 = vmatprep.subr.mxu0 0.0
  %6899 = vmatpush1.xpose.msra.mxu0 0.0
  %6900 = vmatprep.subr.mxu0 0.0
  %6901 = vmatpush1.xpose.msra.mxu0 0.0
  %6902 = vmatprep.subr.mxu0 0.0
  %6903 = vmatpush1.xpose.msra.mxu0 0.0
  %6904 = vmatprep.subr.mxu0 0.0
  %6905 = vmatpush1.xpose.msra.mxu0 0.0
  %6906 = vmatprep.subr.mxu0 0.0
  %6907 = vmatpush1.xpose.msra.mxu0 0.0
  %6908 = vmatprep.subr.mxu0 0.0
  %6909 = vmatpush1.xpose.msra.mxu0 0.0
  %6910 = vmatprep.subr.mxu0 0.0
  %6911 = vmatpush1.xpose.msra.mxu0 0.0
  %6912 = vmatprep.subr.mxu0 0.0
  %6913 = vmatpush1.xpose.msra.mxu0 0.0
  %6914 = vmatprep.subr.mxu0 0.0
  %6915 = vmatpush1.xpose.msra.mxu0 0.0
  %6916 = vmatprep.subr.mxu0 0.0
  %6917 = vmatpush1.xpose.msra.mxu0 0.0
  %6918 = vmatprep.subr.mxu0 0.0
  %6919 = vmatpush1.xpose.msra.mxu0 0.0
  %6920 = vmatprep.subr.mxu0 0.0
  %6921 = vmatpush1.xpose.msra.mxu0 0.0
  %6922 = vmatprep.subr.mxu0 0.0
  %6923 = vmatpush1.xpose.msra.mxu0 0.0
  %6924 = vmatprep.subr.mxu0 0.0
  %6925 = vmatpush1.xpose.msra.mxu0 0.0
  %6926 = vmatprep.subr.mxu0 0.0
  %6927 = vmatpush1.xpose.msra.mxu0 0.0
  %6928 = vmatprep.subr.mxu0 0.0
  %6929 = vmatpush1.xpose.msra.mxu0 0.0
  %6930 = vmatprep.subr.mxu0 0.0
  %6931 = vmatpush1.xpose.msra.mxu0 0.0
  %6932 = vmatprep.subr.mxu0 0.0
  %6933 = vmatpush1.xpose.msra.mxu0 0.0
  %6934 = vmatprep.subr.mxu0 0.0
  %6935 = vmatpush1.xpose.msra.mxu0 0.0
  %6936 = vmatprep.subr.mxu0 0.0
  %6937 = vmatpush1.xpose.msra.mxu0 0.0
  %6938 = vmatprep.subr.mxu0 0.0
  %6939 = vmatpush1.xpose.msra.mxu0 0.0
  %6940 = vmatprep.mubr.f32.mxu0 0.0
  %6941 = vmatmul.mubr.f32.gmra.mrb[0].mxu0 %v6870
  %v6942 = vpop.f32.mrb[0].mxu0
  %v6943 = vadd.f32 %v54, %v6942
  %v6944 = vpop.f32.mrb[0].mxu0
  %6945 = vmatprep.mubr.f32.mxu0 0.0
  %6946 = vmatmul.mubr.f32.gmra.mrb[0].mxu0 %v6872
  %v6947 = vpop.f32.mrb[0].mxu0
  %v6948 = vadd.f32 %v55, %v6947
  %v6949 = vpop.f32.mrb[0].mxu0
  %6950 = vdwg.mxu0
  %v6951 = vsel %vm3117, %v6943, -inf
  %6952 = vmax.xlane.f32.xlu0 %v6951
  %v6953 = vpop.xlane.xlu0 %6952
  %v6954 = vsel %vm4355, %v6948, -inf
  %6955 = vmax.xlane.f32.xlu0 %v6954
  %v6956 = vpop.xlane.xlu0 %6955
  %v6957 = vsub.f32 %v6943, %v6953
  %v6958 = vsub.f32 %v6948, %v6956
  %v6959 = vmul.f32 %v6957, 1.442695
  %v6960 = vpow.pop %v6959
  %v6961 = vmul.f32 %v6958, 1.442695
  %v6962 = vpow.pop %v6961
  %v6963 = vsel %vm3117, %v6960, 0.0
  %6964 = vadd.xlane.f32.xlu0 %v6963
  %v6965 = vpop.xlane.xlu0 %6964
  %v6966 = vsel %vm4355, %v6962, 0.0
  %6967 = vadd.xlane.f32.xlu0 %v6966
  %v6968 = vpop.xlane.xlu0 %6967
  %v6969 = vrcp.pop %v6965
  %v6970 = vrcp.pop %v6968
  %v6971 = vmul.f32 %v6960, %v6969
  %v6972 = vmul.f32 %v6962, %v6970
  %6973 = vrot.lane.b32.xlu0 %v6671, 88
  %v6974 = vpop.permute.xlu0 %6973
  %v6977 = vsel %vm3117, %v6971, 0
  %v6980 = vsel %vm3117, %v6972, 0
  %6982 = vmatprep.subr.mxu0 0.0
  %6983 = vmatpush1.msra.mxu0 %v6974
  %6984 = vmatprep.subr.mxu0 0.0
  %6985 = vmatpush1.msra.mxu0 0.0
  %6986 = vmatprep.subr.mxu0 0.0
  %6987 = vmatpush1.msra.mxu0 0.0
  %6988 = vmatprep.subr.mxu0 0.0
  %6989 = vmatpush1.msra.mxu0 0.0
  %6990 = vmatprep.subr.mxu0 0.0
  %6991 = vmatpush1.msra.mxu0 0.0
  %6992 = vmatprep.subr.mxu0 0.0
  %6993 = vmatpush1.msra.mxu0 0.0
  %6994 = vmatprep.subr.mxu0 0.0
  %6995 = vmatpush1.msra.mxu0 0.0
  %6996 = vmatprep.subr.mxu0 0.0
  %6997 = vmatpush1.msra.mxu0 0.0
  %6998 = vmatprep.subr.mxu0 0.0
  %6999 = vmatpush1.msra.mxu0 0.0
  %7000 = vmatprep.subr.mxu0 0.0
  %7001 = vmatpush1.msra.mxu0 0.0
  %7002 = vmatprep.subr.mxu0 0.0
  %7003 = vmatpush1.msra.mxu0 0.0
  %7004 = vmatprep.subr.mxu0 0.0
  %7005 = vmatpush1.msra.mxu0 0.0
  %7006 = vmatprep.subr.mxu0 0.0
  %7007 = vmatpush1.msra.mxu0 0.0
  %7008 = vmatprep.subr.mxu0 0.0
  %7009 = vmatpush1.msra.mxu0 0.0
  %7010 = vmatprep.subr.mxu0 0.0
  %7011 = vmatpush1.msra.mxu0 0.0
  %7012 = vmatprep.subr.mxu0 0.0
  %7013 = vmatpush1.msra.mxu0 0.0
  %7014 = vmatprep.subr.mxu0 0.0
  %7015 = vmatpush1.msra.mxu0 0.0
  %7016 = vmatprep.subr.mxu0 0.0
  %7017 = vmatpush1.msra.mxu0 0.0
  %7018 = vmatprep.subr.mxu0 0.0
  %7019 = vmatpush1.msra.mxu0 0.0
  %7020 = vmatprep.subr.mxu0 0.0
  %7021 = vmatpush1.msra.mxu0 0.0
  %7022 = vmatprep.subr.mxu0 0.0
  %7023 = vmatpush1.msra.mxu0 0.0
  %7024 = vmatprep.subr.mxu0 0.0
  %7025 = vmatpush1.msra.mxu0 0.0
  %7026 = vmatprep.subr.mxu0 0.0
  %7027 = vmatpush1.msra.mxu0 0.0
  %7028 = vmatprep.subr.mxu0 0.0
  %7029 = vmatpush1.msra.mxu0 0.0
  %7030 = vmatprep.subr.mxu0 0.0
  %7031 = vmatpush1.msra.mxu0 0.0
  %7032 = vmatprep.subr.mxu0 0.0
  %7033 = vmatpush1.msra.mxu0 0.0
  %7034 = vmatprep.subr.mxu0 0.0
  %7035 = vmatpush1.msra.mxu0 0.0
  %7036 = vmatprep.subr.mxu0 0.0
  %7037 = vmatpush1.msra.mxu0 0.0
  %7038 = vmatprep.subr.mxu0 0.0
  %7039 = vmatpush1.msra.mxu0 0.0
  %7040 = vmatprep.subr.mxu0 0.0
  %7041 = vmatpush1.msra.mxu0 0.0
  %7042 = vmatprep.subr.mxu0 0.0
  %7043 = vmatpush1.msra.mxu0 0.0
  %7044 = vmatprep.subr.mxu0 0.0
  %7045 = vmatpush1.msra.mxu0 0.0
  %7046 = vmatprep.mubr.f32.mxu0 0.0
  %7047 = vmatmul.mubr.f32.gmra.mrb[0].mxu0 %v6977
  %v7048 = vpop.f32.mrb[0].mxu0
  %v7049 = vadd.f32 0.0, %v7048
  %v7050 = vpop.f32.mrb[0].mxu0
  %7051 = vmatprep.mubr.f32.mxu0 0.0
  %7052 = vmatmul.mubr.f32.gmra.mrb[0].mxu0 %v6980
  %v7053 = vpop.f32.mrb[0].mxu0
  %v7054 = vadd.f32 0.0, %v7053
  %v7055 = vpop.f32.mrb[0].mxu0
  %7056 = vdwg.mxu0
  %7057 = vrot.lane.b32.xlu0 %v6576, 112
  %v7058 = vpop.permute.xlu0 %7057
  %7059 = vrot.lane.b32.xlu0 %v6581, 112
  %v7060 = vpop.permute.xlu0 %7059
  %7061 = vrot.lane.b32.xlu0 %v6671, 112
  %v7062 = vpop.permute.xlu0 %7061
  %v7063 = vsel %vm3117, %v7058, 0
  %v7065 = vsel %vm3117, %v7060, 0
  %v7067 = vsel %vm3117, %v7062, 0
  %7069 = vmatprep.subr.mxu0 0.0
  %7070 = vmatpush1.xpose.msra.mxu0 %v7067
  %7071 = vmatprep.subr.mxu0 0.0
  %7072 = vmatpush1.xpose.msra.mxu0 0.0
  %7073 = vmatprep.subr.mxu0 0.0
  %7074 = vmatpush1.xpose.msra.mxu0 0.0
  %7075 = vmatprep.subr.mxu0 0.0
  %7076 = vmatpush1.xpose.msra.mxu0 0.0
  %7077 = vmatprep.subr.mxu0 0.0
  %7078 = vmatpush1.xpose.msra.mxu0 0.0
  %7079 = vmatprep.subr.mxu0 0.0
  %7080 = vmatpush1.xpose.msra.mxu0 0.0
  %7081 = vmatprep.subr.mxu0 0.0
  %7082 = vmatpush1.xpose.msra.mxu0 0.0
  %7083 = vmatprep.subr.mxu0 0.0
  %7084 = vmatpush1.xpose.msra.mxu0 0.0
  %7085 = vmatprep.subr.mxu0 0.0
  %7086 = vmatpush1.xpose.msra.mxu0 0.0
  %7087 = vmatprep.subr.mxu0 0.0
  %7088 = vmatpush1.xpose.msra.mxu0 0.0
  %7089 = vmatprep.subr.mxu0 0.0
  %7090 = vmatpush1.xpose.msra.mxu0 0.0
  %7091 = vmatprep.subr.mxu0 0.0
  %7092 = vmatpush1.xpose.msra.mxu0 0.0
  %7093 = vmatprep.subr.mxu0 0.0
  %7094 = vmatpush1.xpose.msra.mxu0 0.0
  %7095 = vmatprep.subr.mxu0 0.0
  %7096 = vmatpush1.xpose.msra.mxu0 0.0
  %7097 = vmatprep.subr.mxu0 0.0
  %7098 = vmatpush1.xpose.msra.mxu0 0.0
  %7099 = vmatprep.subr.mxu0 0.0
  %7100 = vmatpush1.xpose.msra.mxu0 0.0
  %7101 = vmatprep.subr.mxu0 0.0
  %7102 = vmatpush1.xpose.msra.mxu0 0.0
  %7103 = vmatprep.subr.mxu0 0.0
  %7104 = vmatpush1.xpose.msra.mxu0 0.0
  %7105 = vmatprep.subr.mxu0 0.0
  %7106 = vmatpush1.xpose.msra.mxu0 0.0
  %7107 = vmatprep.subr.mxu0 0.0
  %7108 = vmatpush1.xpose.msra.mxu0 0.0
  %7109 = vmatprep.subr.mxu0 0.0
  %7110 = vmatpush1.xpose.msra.mxu0 0.0
  %7111 = vmatprep.subr.mxu0 0.0
  %7112 = vmatpush1.xpose.msra.mxu0 0.0
  %7113 = vmatprep.subr.mxu0 0.0
  %7114 = vmatpush1.xpose.msra.mxu0 0.0
  %7115 = vmatprep.subr.mxu0 0.0
  %7116 = vmatpush1.xpose.msra.mxu0 0.0
  %7117 = vmatprep.subr.mxu0 0.0
  %7118 = vmatpush1.xpose.msra.mxu0 0.0
  %7119 = vmatprep.subr.mxu0 0.0
  %7120 = vmatpush1.xpose.msra.mxu0 0.0
  %7121 = vmatprep.subr.mxu0 0.0
  %7122 = vmatpush1.xpose.msra.mxu0 0.0
  %7123 = vmatprep.subr.mxu0 0.0
  %7124 = vmatpush1.xpose.msra.mxu0 0.0
  %7125 = vmatprep.subr.mxu0 0.0
  %7126 = vmatpush1.xpose.msra.mxu0 0.0
  %7127 = vmatprep.subr.mxu0 0.0
  %7128 = vmatpush1.xpose.msra.mxu0 0.0
  %7129 = vmatprep.subr.mxu0 0.0
  %7130 = vmatpush1.xpose.msra.mxu0 0.0
  %7131 = vmatprep.subr.mxu0 0.0
  %7132 = vmatpush1.xpose.msra.mxu0 0.0
  %7133 = vmatprep.mubr.f32.mxu0 0.0
  %7134 = vmatmul.mubr.f32.gmra.mrb[0].mxu0 %v7063
  %v7135 = vpop.f32.mrb[0].mxu0
  %v7136 = vadd.f32 %v54, %v7135
  %v7137 = vpop.f32.mrb[0].mxu0
  %7138 = vmatprep.mubr.f32.mxu0 0.0
  %7139 = vmatmul.mubr.f32.gmra.mrb[0].mxu0 %v7065
  %v7140 = vpop.f32.mrb[0].mxu0
  %v7141 = vadd.f32 %v55, %v7140
  %v7142 = vpop.f32.mrb[0].mxu0
  %7143 = vdwg.mxu0
  %v7144 = vsel %vm3117, %v7136, -inf
  %7145 = vmax.xlane.f32.xlu0 %v7144
  %v7146 = vpop.xlane.xlu0 %7145
  %v7147 = vsel %vm4355, %v7141, -inf
  %7148 = vmax.xlane.f32.xlu0 %v7147
  %v7149 = vpop.xlane.xlu0 %7148
  %v7150 = vsub.f32 %v7136, %v7146
  %v7151 = vsub.f32 %v7141, %v7149
  %v7152 = vmul.f32 %v7150, 1.442695
  %v7153 = vpow.pop %v7152
  %v7154 = vmul.f32 %v7151, 1.442695
  %v7155 = vpow.pop %v7154
  %v7156 = vsel %vm3117, %v7153, 0.0
  %7157 = vadd.xlane.f32.xlu0 %v7156
  %v7158 = vpop.xlane.xlu0 %7157
  %v7159 = vsel %vm4355, %v7155, 0.0
  %7160 = vadd.xlane.f32.xlu0 %v7159
  %v7161 = vpop.xlane.xlu0 %7160
  %v7162 = vrcp.pop %v7158
  %v7163 = vrcp.pop %v7161
  %v7164 = vmul.f32 %v7153, %v7162
  %v7165 = vmul.f32 %v7155, %v7163
  %7166 = vrot.lane.b32.xlu0 %v6671, 80
  %v7167 = vpop.permute.xlu0 %7166
  %v7170 = vsel %vm3117, %v7164, 0
  %v7173 = vsel %vm3117, %v7165, 0
  %7175 = vmatprep.subr.mxu0 0.0
  %7176 = vmatpush1.msra.mxu0 %v7167
  %7177 = vmatprep.subr.mxu0 0.0
  %7178 = vmatpush1.msra.mxu0 0.0
  %7179 = vmatprep.subr.mxu0 0.0
  %7180 = vmatpush1.msra.mxu0 0.0
  %7181 = vmatprep.subr.mxu0 0.0
  %7182 = vmatpush1.msra.mxu0 0.0
  %7183 = vmatprep.subr.mxu0 0.0
  %7184 = vmatpush1.msra.mxu0 0.0
  %7185 = vmatprep.subr.mxu0 0.0
  %7186 = vmatpush1.msra.mxu0 0.0
  %7187 = vmatprep.subr.mxu0 0.0
  %7188 = vmatpush1.msra.mxu0 0.0
  %7189 = vmatprep.subr.mxu0 0.0
  %7190 = vmatpush1.msra.mxu0 0.0
  %7191 = vmatprep.subr.mxu0 0.0
  %7192 = vmatpush1.msra.mxu0 0.0
  %7193 = vmatprep.subr.mxu0 0.0
  %7194 = vmatpush1.msra.mxu0 0.0
  %7195 = vmatprep.subr.mxu0 0.0
  %7196 = vmatpush1.msra.mxu0 0.0
  %7197 = vmatprep.subr.mxu0 0.0
  %7198 = vmatpush1.msra.mxu0 0.0
  %7199 = vmatprep.subr.mxu0 0.0
  %7200 = vmatpush1.msra.mxu0 0.0
  %7201 = vmatprep.subr.mxu0 0.0
  %7202 = vmatpush1.msra.mxu0 0.0
  %7203 = vmatprep.subr.mxu0 0.0
  %7204 = vmatpush1.msra.mxu0 0.0
  %7205 = vmatprep.subr.mxu0 0.0
  %7206 = vmatpush1.msra.mxu0 0.0
  %7207 = vmatprep.subr.mxu0 0.0
  %7208 = vmatpush1.msra.mxu0 0.0
  %7209 = vmatprep.subr.mxu0 0.0
  %7210 = vmatpush1.msra.mxu0 0.0
  %7211 = vmatprep.subr.mxu0 0.0
  %7212 = vmatpush1.msra.mxu0 0.0
  %7213 = vmatprep.subr.mxu0 0.0
  %7214 = vmatpush1.msra.mxu0 0.0
  %7215 = vmatprep.subr.mxu0 0.0
  %7216 = vmatpush1.msra.mxu0 0.0
  %7217 = vmatprep.subr.mxu0 0.0
  %7218 = vmatpush1.msra.mxu0 0.0
  %7219 = vmatprep.subr.mxu0 0.0
  %7220 = vmatpush1.msra.mxu0 0.0
  %7221 = vmatprep.subr.mxu0 0.0
  %7222 = vmatpush1.msra.mxu0 0.0
  %7223 = vmatprep.subr.mxu0 0.0
  %7224 = vmatpush1.msra.mxu0 0.0
  %7225 = vmatprep.subr.mxu0 0.0
  %7226 = vmatpush1.msra.mxu0 0.0
  %7227 = vmatprep.subr.mxu0 0.0
  %7228 = vmatpush1.msra.mxu0 0.0
  %7229 = vmatprep.subr.mxu0 0.0
  %7230 = vmatpush1.msra.mxu0 0.0
  %7231 = vmatprep.subr.mxu0 0.0
  %7232 = vmatpush1.msra.mxu0 0.0
  %7233 = vmatprep.subr.mxu0 0.0
  %7234 = vmatpush1.msra.mxu0 0.0
  %7235 = vmatprep.subr.mxu0 0.0
  %7236 = vmatpush1.msra.mxu0 0.0
  %7237 = vmatprep.subr.mxu0 0.0
  %7238 = vmatpush1.msra.mxu0 0.0
  %7239 = vmatprep.mubr.f32.mxu0 0.0
  %7240 = vmatmul.mubr.f32.gmra.mrb[0].mxu0 %v7170
  %v7241 = vpop.f32.mrb[0].mxu0
  %v7242 = vadd.f32 0.0, %v7241
  %v7243 = vpop.f32.mrb[0].mxu0
  %7244 = vmatprep.mubr.f32.mxu0 0.0
  %7245 = vmatmul.mubr.f32.gmra.mrb[0].mxu0 %v7173
  %v7246 = vpop.f32.mrb[0].mxu0
  %v7247 = vadd.f32 0.0, %v7246
  %v7248 = vpop.f32.mrb[0].mxu0
  %7249 = vdwg.mxu0
  %7250 = vrot.lane.b32.xlu0 %v6576, 104
  %v7251 = vpop.permute.xlu0 %7250
  %7252 = vrot.lane.b32.xlu0 %v6581, 104
  %v7253 = vpop.permute.xlu0 %7252
  %7254 = vrot.lane.b32.xlu0 %v6671, 104
  %v7255 = vpop.permute.xlu0 %7254
  %v7256 = vsel %vm3117, %v7251, 0
  %v7258 = vsel %vm3117, %v7253, 0
  %v7260 = vsel %vm3117, %v7255, 0
  %7262 = vmatprep.subr.mxu0 0.0
  %7263 = vmatpush1.xpose.msra.mxu0 %v7260
  %7264 = vmatprep.subr.mxu0 0.0
  %7265 = vmatpush1.xpose.msra.mxu0 0.0
  %7266 = vmatprep.subr.mxu0 0.0
  %7267 = vmatpush1.xpose.msra.mxu0 0.0
  %7268 = vmatprep.subr.mxu0 0.0
  %7269 = vmatpush1.xpose.msra.mxu0 0.0
  %7270 = vmatprep.subr.mxu0 0.0
  %7271 = vmatpush1.xpose.msra.mxu0 0.0
  %7272 = vmatprep.subr.mxu0 0.0
  %7273 = vmatpush1.xpose.msra.mxu0 0.0
  %7274 = vmatprep.subr.mxu0 0.0
  %7275 = vmatpush1.xpose.msra.mxu0 0.0
  %7276 = vmatprep.subr.mxu0 0.0
  %7277 = vmatpush1.xpose.msra.mxu0 0.0
  %7278 = vmatprep.subr.mxu0 0.0
  %7279 = vmatpush1.xpose.msra.mxu0 0.0
  %7280 = vmatprep.subr.mxu0 0.0
  %7281 = vmatpush1.xpose.msra.mxu0 0.0
  %7282 = vmatprep.subr.mxu0 0.0
  %7283 = vmatpush1.xpose.msra.mxu0 0.0
  %7284 = vmatprep.subr.mxu0 0.0
  %7285 = vmatpush1.xpose.msra.mxu0 0.0
  %7286 = vmatprep.subr.mxu0 0.0
  %7287 = vmatpush1.xpose.msra.mxu0 0.0
  %7288 = vmatprep.subr.mxu0 0.0
  %7289 = vmatpush1.xpose.msra.mxu0 0.0
  %7290 = vmatprep.subr.mxu0 0.0
  %7291 = vmatpush1.xpose.msra.mxu0 0.0
  %7292 = vmatprep.subr.mxu0 0.0
  %7293 = vmatpush1.xpose.msra.mxu0 0.0
  %7294 = vmatprep.subr.mxu0 0.0
  %7295 = vmatpush1.xpose.msra.mxu0 0.0
  %7296 = vmatprep.subr.mxu0 0.0
  %7297 = vmatpush1.xpose.msra.mxu0 0.0
  %7298 = vmatprep.subr.mxu0 0.0
  %7299 = vmatpush1.xpose.msra.mxu0 0.0
  %7300 = vmatprep.subr.mxu0 0.0
  %7301 = vmatpush1.xpose.msra.mxu0 0.0
  %7302 = vmatprep.subr.mxu0 0.0
  %7303 = vmatpush1.xpose.msra.mxu0 0.0
  %7304 = vmatprep.subr.mxu0 0.0
  %7305 = vmatpush1.xpose.msra.mxu0 0.0
  %7306 = vmatprep.subr.mxu0 0.0
  %7307 = vmatpush1.xpose.msra.mxu0 0.0
  %7308 = vmatprep.subr.mxu0 0.0
  %7309 = vmatpush1.xpose.msra.mxu0 0.0
  %7310 = vmatprep.subr.mxu0 0.0
  %7311 = vmatpush1.xpose.msra.mxu0 0.0
  %7312 = vmatprep.subr.mxu0 0.0
  %7313 = vmatpush1.xpose.msra.mxu0 0.0
  %7314 = vmatprep.subr.mxu0 0.0
  %7315 = vmatpush1.xpose.msra.mxu0 0.0
  %7316 = vmatprep.subr.mxu0 0.0
  %7317 = vmatpush1.xpose.msra.mxu0 0.0
  %7318 = vmatprep.subr.mxu0 0.0
  %7319 = vmatpush1.xpose.msra.mxu0 0.0
  %7320 = vmatprep.subr.mxu0 0.0
  %7321 = vmatpush1.xpose.msra.mxu0 0.0
  %7322 = vmatprep.subr.mxu0 0.0
  %7323 = vmatpush1.xpose.msra.mxu0 0.0
  %7324 = vmatprep.subr.mxu0 0.0
  %7325 = vmatpush1.xpose.msra.mxu0 0.0
  %7326 = vmatprep.mubr.f32.mxu0 0.0
  %7327 = vmatmul.mubr.f32.gmra.mrb[0].mxu0 %v7256
  %v7328 = vpop.f32.mrb[0].mxu0
  %v7329 = vadd.f32 %v54, %v7328
  %v7330 = vpop.f32.mrb[0].mxu0
  %7331 = vmatprep.mubr.f32.mxu0 0.0
  %7332 = vmatmul.mubr.f32.gmra.mrb[0].mxu0 %v7258
  %v7333 = vpop.f32.mrb[0].mxu0
  %v7334 = vadd.f32 %v55, %v7333
  %v7335 = vpop.f32.mrb[0].mxu0
  %7336 = vdwg.mxu0
  %v7337 = vsel %vm3117, %v7329, -inf
  %7338 = vmax.xlane.f32.xlu0 %v7337
  %v7339 = vpop.xlane.xlu0 %7338
  %v7340 = vsel %vm4355, %v7334, -inf
  %7341 = vmax.xlane.f32.xlu0 %v7340
  %v7342 = vpop.xlane.xlu0 %7341
  %v7343 = vsub.f32 %v7329, %v7339
  %v7344 = vsub.f32 %v7334, %v7342
  %v7345 = vmul.f32 %v7343, 1.442695
  %v7346 = vpow.pop %v7345
  %v7347 = vmul.f32 %v7344, 1.442695
  %v7348 = vpow.pop %v7347
  %v7349 = vsel %vm3117, %v7346, 0.0
  %7350 = vadd.xlane.f32.xlu0 %v7349
  %v7351 = vpop.xlane.xlu0 %7350
  %v7352 = vsel %vm4355, %v7348, 0.0
  %7353 = vadd.xlane.f32.xlu0 %v7352
  %v7354 = vpop.xlane.xlu0 %7353
  %v7355 = vrcp.pop %v7351
  %v7356 = vrcp.pop %v7354
  %v7357 = vmul.f32 %v7346, %v7355
  %v7358 = vmul.f32 %v7348, %v7356
  %7359 = vrot.lane.b32.xlu0 %v6671, 72
  %v7360 = vpop.permute.xlu0 %7359
  %v7363 = vsel %vm3117, %v7357, 0
  %v7366 = vsel %vm3117, %v7358, 0
  %7368 = vmatprep.subr.mxu0 0.0
  %7369 = vmatpush1.msra.mxu0 %v7360
  %7370 = vmatprep.subr.mxu0 0.0
  %7371 = vmatpush1.msra.mxu0 0.0
  %7372 = vmatprep.subr.mxu0 0.0
  %7373 = vmatpush1.msra.mxu0 0.0
  %7374 = vmatprep.subr.mxu0 0.0
  %7375 = vmatpush1.msra.mxu0 0.0
  %7376 = vmatprep.subr.mxu0 0.0
  %7377 = vmatpush1.msra.mxu0 0.0
  %7378 = vmatprep.subr.mxu0 0.0
  %7379 = vmatpush1.msra.mxu0 0.0
  %7380 = vmatprep.subr.mxu0 0.0
  %7381 = vmatpush1.msra.mxu0 0.0
  %7382 = vmatprep.subr.mxu0 0.0
  %7383 = vmatpush1.msra.mxu0 0.0
  %7384 = vmatprep.subr.mxu0 0.0
  %7385 = vmatpush1.msra.mxu0 0.0
  %7386 = vmatprep.subr.mxu0 0.0
  %7387 = vmatpush1.msra.mxu0 0.0
  %7388 = vmatprep.subr.mxu0 0.0
  %7389 = vmatpush1.msra.mxu0 0.0
  %7390 = vmatprep.subr.mxu0 0.0
  %7391 = vmatpush1.msra.mxu0 0.0
  %7392 = vmatprep.subr.mxu0 0.0
  %7393 = vmatpush1.msra.mxu0 0.0
  %7394 = vmatprep.subr.mxu0 0.0
  %7395 = vmatpush1.msra.mxu0 0.0
  %7396 = vmatprep.subr.mxu0 0.0
  %7397 = vmatpush1.msra.mxu0 0.0
  %7398 = vmatprep.subr.mxu0 0.0
  %7399 = vmatpush1.msra.mxu0 0.0
  %7400 = vmatprep.subr.mxu0 0.0
  %7401 = vmatpush1.msra.mxu0 0.0
  %7402 = vmatprep.subr.mxu0 0.0
  %7403 = vmatpush1.msra.mxu0 0.0
  %7404 = vmatprep.subr.mxu0 0.0
  %7405 = vmatpush1.msra.mxu0 0.0
  %7406 = vmatprep.subr.mxu0 0.0
  %7407 = vmatpush1.msra.mxu0 0.0
  %7408 = vmatprep.subr.mxu0 0.0
  %7409 = vmatpush1.msra.mxu0 0.0
  %7410 = vmatprep.subr.mxu0 0.0
  %7411 = vmatpush1.msra.mxu0 0.0
  %7412 = vmatprep.subr.mxu0 0.0
  %7413 = vmatpush1.msra.mxu0 0.0
  %7414 = vmatprep.subr.mxu0 0.0
  %7415 = vmatpush1.msra.mxu0 0.0
  %7416 = vmatprep.subr.mxu0 0.0
  %7417 = vmatpush1.msra.mxu0 0.0
  %7418 = vmatprep.subr.mxu0 0.0
  %7419 = vmatpush1.msra.mxu0 0.0
  %7420 = vmatprep.subr.mxu0 0.0
  %7421 = vmatpush1.msra.mxu0 0.0
  %7422 = vmatprep.subr.mxu0 0.0
  %7423 = vmatpush1.msra.mxu0 0.0
  %7424 = vmatprep.subr.mxu0 0.0
  %7425 = vmatpush1.msra.mxu0 0.0
  %7426 = vmatprep.subr.mxu0 0.0
  %7427 = vmatpush1.msra.mxu0 0.0
  %7428 = vmatprep.subr.mxu0 0.0
  %7429 = vmatpush1.msra.mxu0 0.0
  %7430 = vmatprep.subr.mxu0 0.0
  %7431 = vmatpush1.msra.mxu0 0.0
  %7432 = vmatprep.mubr.f32.mxu0 0.0
  %7433 = vmatmul.mubr.f32.gmra.mrb[0].mxu0 %v7363
  %v7434 = vpop.f32.mrb[0].mxu0
  %v7435 = vadd.f32 0.0, %v7434
  %v7436 = vpop.f32.mrb[0].mxu0
  %7437 = vmatprep.mubr.f32.mxu0 0.0
  %7438 = vmatmul.mubr.f32.gmra.mrb[0].mxu0 %v7366
  %v7439 = vpop.f32.mrb[0].mxu0
  %v7440 = vadd.f32 0.0, %v7439
  %v7441 = vpop.f32.mrb[0].mxu0
  %7442 = vdwg.mxu0
  %7445 = vrot.lane.b32.xlu0 %v7049, 8
  %v7446 = vpop.permute.xlu0 %7445
  %7447 = vrot.lane.b32.xlu0 %v7054, 8
  %v7448 = vpop.permute.xlu0 %7447
  %7453 = vrot.lane.b32.xlu0 %v7242, 16
  %v7454 = vpop.permute.xlu0 %7453
  %7455 = vrot.lane.b32.xlu0 %v7247, 16
  %v7456 = vpop.permute.xlu0 %7455
  %7461 = vrot.lane.b32.xlu0 %v7435, 24
  %v7462 = vpop.permute.xlu0 %7461
  %7463 = vrot.lane.b32.xlu0 %v7440, 24
  %v7464 = vpop.permute.xlu0 %7463
  %v7467 = vsel %vm3117, %v6856, %v7446
  %v7468 = vsel %vm3117, %v6861, %v7448
  %v7469 = vsel %vm341, %v7467, %v7454
  %v7470 = vsel %vm341, %v7468, %v7456
  %v7471 = vsel %vm3944, %v7469, %v7462
  %v7472 = vsel %vm3944, %v7470, %v7464
  %v7473 = vlaneseq
  %v7474 = vshrl.u32 %v7473, 7
  %v7475 = vsub.s32 6, %v7474
  %v7476 = vrot.slane %v5439, %v7475
  %7477 = vrot.lane.b32.xlu0 %v5427, 32
  %v7478 = vpop.permute.xlu0 %7477
  %7479 = vrot.lane.b32.xlu0 %v5430, 32
  %v7480 = vpop.permute.xlu0 %7479
  %7481 = vrot.lane.b32.xlu0 %v5433, 32
  %v7482 = vpop.permute.xlu0 %7481
  %7483 = vrot.lane.b32.xlu0 %v5436, 32
  %v7484 = vpop.permute.xlu0 %7483
  %v7490 = vsel %vm1164, %v7471, 0
  %v7493 = vsel %vm1164, %v7472, 0
  %7495 = vmatprep.subr.mxu0 0.0
  %7496 = vmatpush1.msra.mxu0 %v7478
  %7497 = vmatprep.subr.mxu0 0.0
  %7498 = vmatpush1.msra.mxu0 %v7480
  %7499 = vmatprep.subr.mxu0 0.0
  %7500 = vmatpush1.msra.mxu0 %v7482
  %7501 = vmatprep.subr.mxu0 0.0
  %7502 = vmatpush1.msra.mxu0 %v7484
  %7503 = vmatprep.subr.mxu0 0.0
  %7504 = vmatpush1.msra.mxu0 0.0
  %7505 = vmatprep.subr.mxu0 0.0
  %7506 = vmatpush1.msra.mxu0 0.0
  %7507 = vmatprep.subr.mxu0 0.0
  %7508 = vmatpush1.msra.mxu0 0.0
  %7509 = vmatprep.subr.mxu0 0.0
  %7510 = vmatpush1.msra.mxu0 0.0
  %7511 = vmatprep.subr.mxu0 0.0
  %7512 = vmatpush1.msra.mxu0 0.0
  %7513 = vmatprep.subr.mxu0 0.0
  %7514 = vmatpush1.msra.mxu0 0.0
  %7515 = vmatprep.subr.mxu0 0.0
  %7516 = vmatpush1.msra.mxu0 0.0
  %7517 = vmatprep.subr.mxu0 0.0
  %7518 = vmatpush1.msra.mxu0 0.0
  %7519 = vmatprep.subr.mxu0 0.0
  %7520 = vmatpush1.msra.mxu0 0.0
  %7521 = vmatprep.subr.mxu0 0.0
  %7522 = vmatpush1.msra.mxu0 0.0
  %7523 = vmatprep.subr.mxu0 0.0
  %7524 = vmatpush1.msra.mxu0 0.0
  %7525 = vmatprep.subr.mxu0 0.0
  %7526 = vmatpush1.msra.mxu0 0.0
  %7527 = vmatprep.subr.mxu0 0.0
  %7528 = vmatpush1.msra.mxu0 0.0
  %7529 = vmatprep.subr.mxu0 0.0
  %7530 = vmatpush1.msra.mxu0 0.0
  %7531 = vmatprep.subr.mxu0 0.0
  %7532 = vmatpush1.msra.mxu0 0.0
  %7533 = vmatprep.subr.mxu0 0.0
  %7534 = vmatpush1.msra.mxu0 0.0
  %7535 = vmatprep.subr.mxu0 0.0
  %7536 = vmatpush1.msra.mxu0 0.0
  %7537 = vmatprep.subr.mxu0 0.0
  %7538 = vmatpush1.msra.mxu0 0.0
  %7539 = vmatprep.subr.mxu0 0.0
  %7540 = vmatpush1.msra.mxu0 0.0
  %7541 = vmatprep.subr.mxu0 0.0
  %7542 = vmatpush1.msra.mxu0 0.0
  %7543 = vmatprep.subr.mxu0 0.0
  %7544 = vmatpush1.msra.mxu0 0.0
  %7545 = vmatprep.subr.mxu0 0.0
  %7546 = vmatpush1.msra.mxu0 0.0
  %7547 = vmatprep.subr.mxu0 0.0
  %7548 = vmatpush1.msra.mxu0 0.0
  %7549 = vmatprep.subr.mxu0 0.0
  %7550 = vmatpush1.msra.mxu0 0.0
  %7551 = vmatprep.subr.mxu0 0.0
  %7552 = vmatpush1.msra.mxu0 0.0
  %7553 = vmatprep.subr.mxu0 0.0
  %7554 = vmatpush1.msra.mxu0 0.0
  %7555 = vmatprep.subr.mxu0 0.0
  %7556 = vmatpush1.msra.mxu0 0.0
  %7557 = vmatprep.subr.mxu0 0.0
  %7558 = vmatpush1.msra.mxu0 0.0
  %7559 = vmatprep.mubr.f32.mxu0 0.0
  %7560 = vmatmul.mubr.f32.gmra.mrb[0].mxu0 %v7490
  %v7561 = vpop.f32.mrb[0].mxu0
  %v7562 = vadd.f32 %v7476, %v7561
  %v7563 = vpop.f32.mrb[0].mxu0
  %7564 = vmatprep.mubr.f32.mxu0 0.0
  %7565 = vmatmul.mubr.f32.gmra.mrb[0].mxu0 %v7493
  %v7566 = vpop.f32.mrb[0].mxu0
  %v7567 = vadd.f32 %v7476, %v7566
  %v7568 = vpop.f32.mrb[0].mxu0
  %7569 = vdwg.mxu0
  %v7570 = vadd.f32 %v6497, %v7562
  %v7571 = vadd.f32 %v6498, %v7567
  %v7572 = vsel %vm1164, %v7570, 0.0
  %7573 = vadd.xlane.f32.xlu0 %v7572
  %v7574 = vpop.xlane.xlu0 %7573
  %v7575 = vsel %vm4053, %v7571, 0.0
  %7576 = vadd.xlane.f32.xlu0 %v7575
  %v7577 = vpop.xlane.xlu0 %7576
  %v7578 = vmul.f32 %v7574, %v4057
  %v7579 = vmul.f32 %v7577, %v4057
  %v7580 = vsub.f32 %v7570, %v7578
  %v7581 = vsub.f32 %v7571, %v7579
  %v7582 = vmul.f32 %v7580, %v7580
  %v7583 = vmul.f32 %v7581, %v7581
  %v7584 = vsel %vm1164, %v7582, 0.0
  %7585 = vadd.xlane.f32.xlu0 %v7584
  %v7586 = vpop.xlane.xlu0 %7585
  %v7587 = vsel %vm4053, %v7583, 0.0
  %7588 = vadd.xlane.f32.xlu0 %v7587
  %v7589 = vpop.xlane.xlu0 %7588
  %v7590 = vmul.f32 %v7586, %v4057
  %v7591 = vmul.f32 %v7589, %v4057
  %v7592 = vadd.f32 %v7590, 1e-05
  %v7593 = vadd.f32 %v7591, 1e-05
  %v7594 = vrsqrt.pop %v7592
  %v7595 = vrsqrt.pop %v7593
  %v7596 = vmul.f32 %v7580, %v7594
  %v7597 = vmul.f32 %v7581, %v7595
  %v7598 = vlaneseq
  %v7599 = vshrl.u32 %v7598, 7
  %v7600 = vsub.s32 7, %v7599
  %v7601 = vrot.slane %v5439, %v7600
  %v7602 = vmul.f32 %v7596, %v7601
  %v7603 = vmul.f32 %v7597, %v7601
  %v7604 = vlaneseq
  %v7605 = vshrl.u32 %v7604, 7
  %v7606 = vsub.s32 0, %v7605
  %v7607 = vrot.slane %v5440, %v7606
  %v7608 = vadd.f32 %v7602, %v7607
  %v7609 = vadd.f32 %v7603, %v7607
  %v7610 = vlaneseq
  %v7611 = vshrl.u32 %v7610, 7
  %v7612 = vsub.s32 1, %v7611
  %v7613 = vrot.slane %v5440, %v7612
  %v7615 = vsel %vm1164, %v7608, 0
  %v7618 = vsel %vm1164, %v7609, 0
  %7620 = vmatprep.subr.mxu0 0.0
  %7621 = vmatpush1.msra.mxu0 %v5428
  %7622 = vmatprep.subr.mxu0 0.0
  %7623 = vmatpush1.msra.mxu0 %v5431
  %7624 = vmatprep.subr.mxu0 0.0
  %7625 = vmatpush1.msra.mxu0 %v5434
  %7626 = vmatprep.subr.mxu0 0.0
  %7627 = vmatpush1.msra.mxu0 %v5437
  %7628 = vmatprep.subr.mxu0 0.0
  %7629 = vmatpush1.msra.mxu0 0.0
  %7630 = vmatprep.subr.mxu0 0.0
  %7631 = vmatpush1.msra.mxu0 0.0
  %7632 = vmatprep.subr.mxu0 0.0
  %7633 = vmatpush1.msra.mxu0 0.0
  %7634 = vmatprep.subr.mxu0 0.0
  %7635 = vmatpush1.msra.mxu0 0.0
  %7636 = vmatprep.subr.mxu0 0.0
  %7637 = vmatpush1.msra.mxu0 0.0
  %7638 = vmatprep.subr.mxu0 0.0
  %7639 = vmatpush1.msra.mxu0 0.0
  %7640 = vmatprep.subr.mxu0 0.0
  %7641 = vmatpush1.msra.mxu0 0.0
  %7642 = vmatprep.subr.mxu0 0.0
  %7643 = vmatpush1.msra.mxu0 0.0
  %7644 = vmatprep.subr.mxu0 0.0
  %7645 = vmatpush1.msra.mxu0 0.0
  %7646 = vmatprep.subr.mxu0 0.0
  %7647 = vmatpush1.msra.mxu0 0.0
  %7648 = vmatprep.subr.mxu0 0.0
  %7649 = vmatpush1.msra.mxu0 0.0
  %7650 = vmatprep.subr.mxu0 0.0
  %7651 = vmatpush1.msra.mxu0 0.0
  %7652 = vmatprep.subr.mxu0 0.0
  %7653 = vmatpush1.msra.mxu0 0.0
  %7654 = vmatprep.subr.mxu0 0.0
  %7655 = vmatpush1.msra.mxu0 0.0
  %7656 = vmatprep.subr.mxu0 0.0
  %7657 = vmatpush1.msra.mxu0 0.0
  %7658 = vmatprep.subr.mxu0 0.0
  %7659 = vmatpush1.msra.mxu0 0.0
  %7660 = vmatprep.subr.mxu0 0.0
  %7661 = vmatpush1.msra.mxu0 0.0
  %7662 = vmatprep.subr.mxu0 0.0
  %7663 = vmatpush1.msra.mxu0 0.0
  %7664 = vmatprep.subr.mxu0 0.0
  %7665 = vmatpush1.msra.mxu0 0.0
  %7666 = vmatprep.subr.mxu0 0.0
  %7667 = vmatpush1.msra.mxu0 0.0
  %7668 = vmatprep.subr.mxu0 0.0
  %7669 = vmatpush1.msra.mxu0 0.0
  %7670 = vmatprep.subr.mxu0 0.0
  %7671 = vmatpush1.msra.mxu0 0.0
  %7672 = vmatprep.subr.mxu0 0.0
  %7673 = vmatpush1.msra.mxu0 0.0
  %7674 = vmatprep.subr.mxu0 0.0
  %7675 = vmatpush1.msra.mxu0 0.0
  %7676 = vmatprep.subr.mxu0 0.0
  %7677 = vmatpush1.msra.mxu0 0.0
  %7678 = vmatprep.subr.mxu0 0.0
  %7679 = vmatpush1.msra.mxu0 0.0
  %7680 = vmatprep.subr.mxu0 0.0
  %7681 = vmatpush1.msra.mxu0 0.0
  %7682 = vmatprep.subr.mxu0 0.0
  %7683 = vmatpush1.msra.mxu0 0.0
  %7684 = vmatprep.mubr.f32.mxu0 0.0
  %7685 = vmatmul.mubr.f32.gmra.mrb[0].mxu0 %v7615
  %v7686 = vpop.f32.mrb[0].mxu0
  %v7687 = vadd.f32 %v7613, %v7686
  %v7688 = vpop.f32.mrb[0].mxu0
  %7689 = vmatprep.mubr.f32.mxu0 0.0
  %7690 = vmatmul.mubr.f32.gmra.mrb[0].mxu0 %v7618
  %v7691 = vpop.f32.mrb[0].mxu0
  %v7692 = vadd.f32 %v7613, %v7691
  %v7693 = vpop.f32.mrb[0].mxu0
  %7694 = vdwg.mxu0
  %v7695 = vmax.f32 %v7687, 0.0
  %v7696 = vmax.f32 %v7692, 0.0
  %s7697 = scalar_lea.vmem %s12, 64
  %v7698 = vld [vmem:[%s7697] sm:$0xff]
  %v7699 = vld [vmem:[%s7697 + $0x8] sm:$0xff]
  %v7700 = vld [vmem:[%s7697 + $0x10] sm:$0xff]
  %v7701 = vld [vmem:[%s7697 + $0x18] sm:$0xff]
  %v7702 = vld [vmem:[%s7697 + $0x20] sm:$0xff]
  %v7703 = vld [vmem:[%s7697 + $0x28] sm:$0xff]
  %v7704 = vld [vmem:[%s7697 + $0x30] sm:$0xff]
  %v7705 = vld [vmem:[%s7697 + $0x38] sm:$0xff]
  %v7706 = vlaneseq
  %v7707 = vshrl.u32 %v7706, 7
  %v7708 = vsub.s32 2, %v7707
  %v7709 = vrot.slane %v5440, %v7708
  %v7711 = vsel %vm82, %v7695, 0
  %v7714 = vsel %vm82, %v7696, 0
  %7716 = vmatprep.subr.mxu0 0.0
  %7717 = vmatpush1.msra.mxu0 %v7698
  %7718 = vmatprep.subr.mxu0 0.0
  %7719 = vmatpush1.msra.mxu0 %v7699
  %7720 = vmatprep.subr.mxu0 0.0
  %7721 = vmatpush1.msra.mxu0 %v7700
  %7722 = vmatprep.subr.mxu0 0.0
  %7723 = vmatpush1.msra.mxu0 %v7701
  %7724 = vmatprep.subr.mxu0 0.0
  %7725 = vmatpush1.msra.mxu0 %v7702
  %7726 = vmatprep.subr.mxu0 0.0
  %7727 = vmatpush1.msra.mxu0 %v7703
  %7728 = vmatprep.subr.mxu0 0.0
  %7729 = vmatpush1.msra.mxu0 %v7704
  %7730 = vmatprep.subr.mxu0 0.0
  %7731 = vmatpush1.msra.mxu0 %v7705
  %7732 = vmatprep.subr.mxu0 0.0
  %7733 = vmatpush1.msra.mxu0 0.0
  %7734 = vmatprep.subr.mxu0 0.0
  %7735 = vmatpush1.msra.mxu0 0.0
  %7736 = vmatprep.subr.mxu0 0.0
  %7737 = vmatpush1.msra.mxu0 0.0
  %7738 = vmatprep.subr.mxu0 0.0
  %7739 = vmatpush1.msra.mxu0 0.0
  %7740 = vmatprep.subr.mxu0 0.0
  %7741 = vmatpush1.msra.mxu0 0.0
  %7742 = vmatprep.subr.mxu0 0.0
  %7743 = vmatpush1.msra.mxu0 0.0
  %7744 = vmatprep.subr.mxu0 0.0
  %7745 = vmatpush1.msra.mxu0 0.0
  %7746 = vmatprep.subr.mxu0 0.0
  %7747 = vmatpush1.msra.mxu0 0.0
  %7748 = vmatprep.subr.mxu0 0.0
  %7749 = vmatpush1.msra.mxu0 0.0
  %7750 = vmatprep.subr.mxu0 0.0
  %7751 = vmatpush1.msra.mxu0 0.0
  %7752 = vmatprep.subr.mxu0 0.0
  %7753 = vmatpush1.msra.mxu0 0.0
  %7754 = vmatprep.subr.mxu0 0.0
  %7755 = vmatpush1.msra.mxu0 0.0
  %7756 = vmatprep.subr.mxu0 0.0
  %7757 = vmatpush1.msra.mxu0 0.0
  %7758 = vmatprep.subr.mxu0 0.0
  %7759 = vmatpush1.msra.mxu0 0.0
  %7760 = vmatprep.subr.mxu0 0.0
  %7761 = vmatpush1.msra.mxu0 0.0
  %7762 = vmatprep.subr.mxu0 0.0
  %7763 = vmatpush1.msra.mxu0 0.0
  %7764 = vmatprep.subr.mxu0 0.0
  %7765 = vmatpush1.msra.mxu0 0.0
  %7766 = vmatprep.subr.mxu0 0.0
  %7767 = vmatpush1.msra.mxu0 0.0
  %7768 = vmatprep.subr.mxu0 0.0
  %7769 = vmatpush1.msra.mxu0 0.0
  %7770 = vmatprep.subr.mxu0 0.0
  %7771 = vmatpush1.msra.mxu0 0.0
  %7772 = vmatprep.subr.mxu0 0.0
  %7773 = vmatpush1.msra.mxu0 0.0
  %7774 = vmatprep.subr.mxu0 0.0
  %7775 = vmatpush1.msra.mxu0 0.0
  %7776 = vmatprep.subr.mxu0 0.0
  %7777 = vmatpush1.msra.mxu0 0.0
  %7778 = vmatprep.subr.mxu0 0.0
  %7779 = vmatpush1.msra.mxu0 0.0
  %7780 = vmatprep.mubr.f32.mxu0 0.0
  %7781 = vmatmul.mubr.f32.gmra.mrb[0].mxu0 %v7711
  %v7782 = vpop.f32.mrb[0].mxu0
  %v7783 = vadd.f32 %v7709, %v7782
  %v7784 = vpop.f32.mrb[0].mxu0
  %7785 = vmatprep.mubr.f32.mxu0 0.0
  %7786 = vmatmul.mubr.f32.gmra.mrb[0].mxu0 %v7714
  %v7787 = vpop.f32.mrb[0].mxu0
  %v7788 = vadd.f32 %v7709, %v7787
  %v7789 = vpop.f32.mrb[0].mxu0
  %7790 = vdwg.mxu0
  %v7791 = vadd.f32 %v7608, %v7783
  %v7792 = vadd.f32 %v7609, %v7788
  %v7793 = vsel %vm1164, %v7791, 0.0
  %7794 = vadd.xlane.f32.xlu0 %v7793
  %v7795 = vpop.xlane.xlu0 %7794
  %v7796 = vsel %vm4053, %v7792, 0.0
  %7797 = vadd.xlane.f32.xlu0 %v7796
  %v7798 = vpop.xlane.xlu0 %7797
  %v7799 = vmul.f32 %v7795, %v4057
  %v7800 = vmul.f32 %v7798, %v4057
  %v7801 = vsub.f32 %v7791, %v7799
  %v7802 = vsub.f32 %v7792, %v7800
  %v7803 = vmul.f32 %v7801, %v7801
  %v7804 = vmul.f32 %v7802, %v7802
  %v7805 = vsel %vm1164, %v7803, 0.0
  %7806 = vadd.xlane.f32.xlu0 %v7805
  %v7807 = vpop.xlane.xlu0 %7806
  %v7808 = vsel %vm4053, %v7804, 0.0
  %7809 = vadd.xlane.f32.xlu0 %v7808
  %v7810 = vpop.xlane.xlu0 %7809
  %v7811 = vmul.f32 %v7807, %v4057
  %v7812 = vmul.f32 %v7810, %v4057
  %v7813 = vadd.f32 %v7811, 1e-05
  %v7814 = vadd.f32 %v7812, 1e-05
  %v7815 = vrsqrt.pop %v7813
  %v7816 = vrsqrt.pop %v7814
  %v7817 = vmul.f32 %v7801, %v7815
  %v7818 = vmul.f32 %v7802, %v7816
  %v7819 = vlaneseq
  %v7820 = vshrl.u32 %v7819, 7
  %v7821 = vsub.s32 3, %v7820
  %v7822 = vrot.slane %v5440, %v7821
  %v7823 = vmul.f32 %v7817, %v7822
  %v7824 = vmul.f32 %v7818, %v7822
  %v7825 = vlaneseq
  %v7826 = vshrl.u32 %v7825, 7
  %v7827 = vsub.s32 4, %v7826
  %v7828 = vrot.slane %v5440, %v7827
  %v7829 = vadd.f32 %v7823, %v7828
  %v7830 = vadd.f32 %v7824, %v7828
  %v7831 = vld [vmem:[%s14] sm:$0xff]
  %v7832 = vld [vmem:[%s14 + $0x8] sm:$0xff]
  %v7833 = vld [vmem:[%s14 + $0x10] sm:$0xff]
  %v7834 = vld [vmem:[%s14 + $0x18] sm:$0xff]
  %v7835 = vld [vmem:[%s6 + $0x2] sm:$0x1]
  %v7836 = vlaneseq
  %v7837 = vshrl.u32 %v7836, 7
  %v7838 = vsub.s32 0, %v7837
  %v7839 = vrot.slane %v7835, %v7838
  %v7841 = vsel %vm1164, %v7829, 0
  %v7844 = vsel %vm1164, %v7830, 0
  %7846 = vmatprep.subr.mxu0 0.0
  %7847 = vmatpush1.msra.mxu0 %v7831
  %7848 = vmatprep.subr.mxu0 0.0
  %7849 = vmatpush1.msra.mxu0 %v7832
  %7850 = vmatprep.subr.mxu0 0.0
  %7851 = vmatpush1.msra.mxu0 %v7833
  %7852 = vmatprep.subr.mxu0 0.0
  %7853 = vmatpush1.msra.mxu0 %v7834
  %7854 = vmatprep.subr.mxu0 0.0
  %7855 = vmatpush1.msra.mxu0 0.0
  %7856 = vmatprep.subr.mxu0 0.0
  %7857 = vmatpush1.msra.mxu0 0.0
  %7858 = vmatprep.subr.mxu0 0.0
  %7859 = vmatpush1.msra.mxu0 0.0
  %7860 = vmatprep.subr.mxu0 0.0
  %7861 = vmatpush1.msra.mxu0 0.0
  %7862 = vmatprep.subr.mxu0 0.0
  %7863 = vmatpush1.msra.mxu0 0.0
  %7864 = vmatprep.subr.mxu0 0.0
  %7865 = vmatpush1.msra.mxu0 0.0
  %7866 = vmatprep.subr.mxu0 0.0
  %7867 = vmatpush1.msra.mxu0 0.0
  %7868 = vmatprep.subr.mxu0 0.0
  %7869 = vmatpush1.msra.mxu0 0.0
  %7870 = vmatprep.subr.mxu0 0.0
  %7871 = vmatpush1.msra.mxu0 0.0
  %7872 = vmatprep.subr.mxu0 0.0
  %7873 = vmatpush1.msra.mxu0 0.0
  %7874 = vmatprep.subr.mxu0 0.0
  %7875 = vmatpush1.msra.mxu0 0.0
  %7876 = vmatprep.subr.mxu0 0.0
  %7877 = vmatpush1.msra.mxu0 0.0
  %7878 = vmatprep.subr.mxu0 0.0
  %7879 = vmatpush1.msra.mxu0 0.0
  %7880 = vmatprep.subr.mxu0 0.0
  %7881 = vmatpush1.msra.mxu0 0.0
  %7882 = vmatprep.subr.mxu0 0.0
  %7883 = vmatpush1.msra.mxu0 0.0
  %7884 = vmatprep.subr.mxu0 0.0
  %7885 = vmatpush1.msra.mxu0 0.0
  %7886 = vmatprep.subr.mxu0 0.0
  %7887 = vmatpush1.msra.mxu0 0.0
  %7888 = vmatprep.subr.mxu0 0.0
  %7889 = vmatpush1.msra.mxu0 0.0
  %7890 = vmatprep.subr.mxu0 0.0
  %7891 = vmatpush1.msra.mxu0 0.0
  %7892 = vmatprep.subr.mxu0 0.0
  %7893 = vmatpush1.msra.mxu0 0.0
  %7894 = vmatprep.subr.mxu0 0.0
  %7895 = vmatpush1.msra.mxu0 0.0
  %7896 = vmatprep.subr.mxu0 0.0
  %7897 = vmatpush1.msra.mxu0 0.0
  %7898 = vmatprep.subr.mxu0 0.0
  %7899 = vmatpush1.msra.mxu0 0.0
  %7900 = vmatprep.subr.mxu0 0.0
  %7901 = vmatpush1.msra.mxu0 0.0
  %7902 = vmatprep.subr.mxu0 0.0
  %7903 = vmatpush1.msra.mxu0 0.0
  %7904 = vmatprep.subr.mxu0 0.0
  %7905 = vmatpush1.msra.mxu0 0.0
  %7906 = vmatprep.subr.mxu0 0.0
  %7907 = vmatpush1.msra.mxu0 0.0
  %7908 = vmatprep.subr.mxu0 0.0
  %7909 = vmatpush1.msra.mxu0 0.0
  %7910 = vmatprep.mubr.f32.mxu0 0.0
  %7911 = vmatmul.mubr.f32.gmra.mrb[0].mxu0 %v7841
  %v7912 = vpop.f32.mrb[0].mxu0
  %v7913 = vadd.f32 %v7839, %v7912
  %v7914 = vpop.f32.mrb[0].mxu0
  %7915 = vmatprep.mubr.f32.mxu0 0.0
  %7916 = vmatmul.mubr.f32.gmra.mrb[0].mxu0 %v7844
  %v7917 = vpop.f32.mrb[0].mxu0
  %v7918 = vadd.f32 %v7839, %v7917
  %v7919 = vpop.f32.mrb[0].mxu0
  %7920 = vdwg.mxu0
  %7921 = vst [vmem:[%s15] sm:$0xff] %v7913
  %7922 = vst [vmem:[%s15 + $0x8] sm:$0xf] %v7918
  // Predicated region
  $region62: #{vit_transformer_forward.1} parent=0 // pred_check
    _
  $region63: #{vit_transformer_forward.1} parent=0 // pred_check_branch
    %7924 = sbr.rel (0) target = $region65
  $region64: #{vit_transformer_forward.1} parent=0 // pred_region
    _
  $region65: #{vit_transformer_forward.1} parent=0 // pred_fallthru
    _
  // Predicated region
  $region66: #{vit_transformer_forward.1} parent=0 // pred_check
    _
  $region67: #{vit_transformer_forward.1} parent=0 // pred_check_branch
    %7926 = sbr.rel (0) target = $region69
  $region68: #{vit_transformer_forward.1} parent=0 // pred_region
    _
  $region69: #{vit_transformer_forward.1} parent=0 // pred_fallthru
    _

</llo_original>
